<compile_context>
chip_gen: v7x
topology: tpu7x:2x2x1
jax: 0.10.0
libtpu: 0.0.40
codegen_flags: <defaults>
</compile_context>

<pallas_src>
import functools

import jax
import jax.numpy as jnp
from jax import lax
from jax.experimental import pallas as pl
from jax.experimental.pallas import tpu as pltpu

LEAKINESS = 0.333   # scn default leakiness (LeakyReLU / BatchNormLeakyReLU)
BN_EPS = 1e-4       # scn BatchNormalization default eps


def _pack_factor(c):
    return max(1, 128 // c)


# --------------------------------------------------------------------------- #
# Pallas kernel: fused submanifold conv + BN shift + mask + (residual) + act
# --------------------------------------------------------------------------- #
def _subm_conv_kernel(x_ref, w_ref, shift_ref, mask_ref, *rest,
                      R, C, Hp, Wp, apply_act, leaky, add_residual):
    # x_ref:     (1, 1, P, C)        bf16 flattened padded D-tile, P=(TD+3)*Hp*Wp
    # w_ref:     (27*C, C)           bf16 weights (BN scale folded in), tap-major
    # shift_ref: (1, pack*C)         f32 fused BN shift, tiled to packed lanes
    # mask_ref:  (1, 1, Rp, pack*C)  bf16 active-site mask, packed pseudo layout
    # res_ref:   (1, 1, Rp, pack*C)  bf16 residual (present only if add_residual)
    # o_ref:     (1, 1, Rp, pack*C)  bf16 output, packed pseudo layout
    if add_residual:
        res_ref, o_ref = rest
    else:
        (o_ref,) = rest

    plane = Hp * Wp
    xf = x_ref[0, 0]                                      # (P, C) bf16

    # On-chip im2col: in the flattened padded tile, tap (dz,dy,dx) of every pseudo
    # output row sits at a fixed row offset, so each tap is one contiguous row
    # window; lane-concatenate the 27 windows into a K-dense patch matrix.
    cols = []
    for dz in range(3):
        for dy in range(3):
            for dx in range(3):
                off = dz * plane + dy * Wp + dx
                cols.append(xf[off:off + R, :])
    patches = jnp.concatenate(cols, axis=1)               # (R, 27*C) bf16

    # Single K-stacked MXU matmul (K = 27*C) with f32 accumulation.
    acc = jnp.dot(patches, w_ref[...],
                  preferred_element_type=jnp.float32)     # (R, C) f32

    # Lane-dense packing: `pack` contiguous chunks of Rp pseudo rows placed
    # side-by-side along lanes -> (Rp, pack*C), so epilogue + store are full-lane.
    Rp = o_ref.shape[2]
    pack = o_ref.shape[3] // C
    out = jnp.concatenate([acc[j * Rp:(j + 1) * Rp, :] for j in range(pack)],
                          axis=1)                         # (Rp, pack*C) f32

    out = out + shift_ref[...]                            # BN shift (scale in w)
    out = out * mask_ref[0, 0].astype(jnp.float32)        # submanifold + border mask
    if add_residual:
        out = out + res_ref[0, 0].astype(jnp.float32)     # scn.AddTable
    if apply_act:
        if leaky:
            out = jnp.where(out > 0, out, LEAKINESS * out)
        else:
            out = jnp.maximum(out, 0.0)
    o_ref[0, 0] = out.astype(o_ref.dtype)


def _subm_conv_call(x_tiles, w_mat, shift_t, mask_pk, res_pk, *,
                    apply_act, leaky, TD, H, W, vmem_limit_bytes=None):
    add_residual = res_pk is not None
    N, nD, P, C = x_tiles.shape
    Hp, Wp = H + 2, W + 2
    R = TD * Hp * Wp
    Rp, lanes = mask_pk.shape[2], mask_pk.shape[3]

    in_specs = [
        pl.BlockSpec((1, 1, P, C), lambda n, t: (n, t, 0, 0)),
        pl.BlockSpec(w_mat.shape, lambda n, t: (0, 0)),
        pl.BlockSpec(shift_t.shape, lambda n, t: (0, 0)),
        pl.BlockSpec((1, 1, Rp, lanes), lambda n, t: (n, t, 0, 0)),
    ]
    args = [x_tiles, w_mat, shift_t, mask_pk]
    if add_residual:
        in_specs.append(pl.BlockSpec((1, 1, Rp, lanes), lambda n, t: (n, t, 0, 0)))
        args.append(res_pk)

    kernel = functools.partial(
        _subm_conv_kernel, R=R, C=C, Hp=Hp, Wp=Wp,
        apply_act=apply_act, leaky=leaky, add_residual=add_residual)

    cp = dict(dimension_semantics=("parallel", "parallel"))
    if vmem_limit_bytes is not None:      # raise scoped-VMEM limit for large tiles (v6e)
        cp["vmem_limit_bytes"] = vmem_limit_bytes

    return pl.pallas_call(
        kernel,
        out_shape=jax.ShapeDtypeStruct((N, nD, Rp, lanes), jnp.bfloat16),
        grid_spec=pltpu.PrefetchScalarGridSpec(
            num_scalar_prefetch=0,
            grid=(N, nD),
            in_specs=in_specs,
            out_specs=pl.BlockSpec((1, 1, Rp, lanes), lambda n, t: (n, t, 0, 0)),
        ),
        compiler_params=pltpu.CompilerParams(**cp),
    )(*args)


# --------------------------------------------------------------------------- #
# Wrapper-side layout helpers
# --------------------------------------------------------------------------- #
def _make_conv_tiles(x, TD):
    """(N, D, H, W, C) bf16 -> flattened overlapping padded D-tiles (N, nD, P, C)."""
    N, D, H, W, C = x.shape
    nD = D // TD
    Hp, Wp = H + 2, W + 2
    # z padded by (1, 2): 1-halo each side + one slack plane so every tap's static
    # R-row window stays in bounds (slack rows never reach valid output rows).
    xp = jnp.pad(x, ((0, 0), (1, 2), (1, 1), (1, 1), (0, 0)))
    tiles = [xp[:, t * TD: t * TD + TD + 3] for t in range(nD)]
    xt = jnp.stack(tiles, axis=1)                          # (N, nD, TD+3, Hp, Wp, C)
    return xt.reshape(N, nD, (TD + 3) * Hp * Wp, C)


def _pack_pseudo(a, TD, pack):
    """(N, D, H, W, K) -> packed pseudo layout (N, nD, Rp, pack*K).

    Pseudo rows enumerate per-tile (z, y, x) with padded y/x strides (the conv
    kernel's natural output ordering); `pack` contiguous chunks of Rp = R // pack
    rows are placed side-by-side along lanes."""
    N, D, H, W, K = a.shape
    nD = D // TD
    Hp, Wp = H + 2, W + 2
    R = TD * Hp * Wp
    Rp = R // pack
    ap = jnp.pad(a, ((0, 0), (0, 0), (0, 2), (0, 2), (0, 0)))    # (N, D, Hp, Wp, K)
    ap = ap.reshape(N, nD, pack, Rp, K)
    ap = jnp.transpose(ap, (0, 1, 3, 2, 4))
    return ap.reshape(N, nD, Rp, pack * K)


def _unpack_pseudo(o_pk, TD, H, W, C):
    """Packed pseudo output (N, nD, Rp, pack*C) -> dense features (N, D, H, W, C)."""
    N, nD, Rp, L = o_pk.shape
    pack = L // C
    Hp, Wp = H + 2, W + 2
    o = o_pk.reshape(N, nD, Rp, pack, C)
    o = jnp.transpose(o, (0, 1, 3, 2, 4)).reshape(N, nD, TD, Hp, Wp, C)
    return o[:, :, :, :H, :W, :].reshape(N, nD * TD, H, W, C)


# --------------------------------------------------------------------------- #
# Parameter init / preparation (deterministic, mirrors module __init__ shapes)
# --------------------------------------------------------------------------- #
def _init_affine(key, c, batch_norm):
    if not batch_norm:
        return jnp.ones((c,), jnp.float32), jnp.zeros((c,), jnp.float32)
    k1, k2, k3, k4 = jax.random.split(key, 4)
    gamma = 1.0 + 0.1 * jax.random.normal(k1, (c,), jnp.float32)
    beta = 0.05 * jax.random.normal(k2, (c,), jnp.float32)
    rmean = 0.05 * jax.random.normal(k3, (c,), jnp.float32)
    rvar = 1.0 + 0.1 * jnp.abs(jax.random.normal(k4, (c,), jnp.float32))
    scale = gamma / jnp.sqrt(rvar + BN_EPS)
    shift = beta - rmean * scale
    return scale, shift


def init_params(key, inplanes, n_blocks, batch_norm, residual):
    params = []
    std = (2.0 / (27.0 * inplanes)) ** 0.5
    for _ in range(n_blocks):
        key, kw1, kw2, ka1, ka2 = jax.random.split(key, 5)
        p = {"w1": std * jax.random.normal(kw1, (27, inplanes, inplanes), jnp.float32)}
        p["scale1"], p["shift1"] = _init_affine(ka1, inplanes, batch_norm)
        if residual:
            p["w2"] = std * jax.random.normal(kw2, (27, inplanes, inplanes), jnp.float32)
            p["scale2"], p["shift2"] = _init_affine(ka2, inplanes, batch_norm)
        params.append(p)
    return params


def prepare_params(params, channels, residual):
    """Fold the BN scale into the conv weights, cast to bf16, pre-tile the shift."""
    pack = _pack_factor(channels)
    prepared = []
    for p in params:
        q = {}
        for i in ("1", "2") if residual else ("1",):
            w = p["w" + i] * p["scale" + i][None, None, :]          # (27, Cin, Cout)
            q["w" + i] = w.reshape(27 * channels, channels).astype(jnp.bfloat16)
            q["shift" + i] = p["shift" + i].astype(jnp.float32)     # (C,) for reference
            q["shift" + i + "_t"] = jnp.tile(p["shift" + i], pack)[None, :].astype(jnp.float32)
        prepared.append(q)
    return prepared


# --------------------------------------------------------------------------- #
# SparseBlockSeries forward
# --------------------------------------------------------------------------- #
def sparse_block_series(x_ncdhw, mask_ndhw, prepared, *, leaky_relu, residual,
                        tile_d=4, vmem_limit_bytes=None):
    """x_ncdhw: (N,C,D,H,W) dense features of the sparse tensor.
       mask_ndhw: (N,D,H,W) bool active-site mask.  Returns NCDHW float32."""
    N, C, D, H, W = x_ncdhw.shape
    Hp, Wp = H + 2, W + 2
    pack = _pack_factor(C)
    assert 128 % C == 0 or C % 128 == 0, "channel count must tile the 128-lane dim"

    # Largest D-tile <= tile_d that keeps the grid and lane packing exact.
    TD = min(tile_d, D)
    while TD > 1 and (D % TD or (TD * Hp * Wp) % pack):
        TD -= 1
    assert D % TD == 0 and (TD * Hp * Wp) % pack == 0

    m = mask_ndhw.astype(jnp.float32)[..., None]                        # (N,D,H,W,1)
    x = jnp.transpose(x_ncdhw, (0, 2, 3, 4, 1)).astype(jnp.float32) * m
    x = x.astype(jnp.bfloat16)                                          # NDHWC bf16

    mask_bc = jnp.broadcast_to(m, (N, D, H, W, C)).astype(jnp.bfloat16)
    mask_pk = _pack_pseudo(mask_bc, TD, pack)     # shared by every conv in the series

    for p in prepared:
        if residual:
            # SparseResidualBlock: conv1 -> bn1/act -> conv2 -> bn2 -> +res -> act
            h_pk = _subm_conv_call(_make_conv_tiles(x, TD), p["w1"], p["shift1_t"],
                                   mask_pk, None, apply_act=True, leaky=leaky_relu,
                                   TD=TD, H=H, W=W, vmem_limit_bytes=vmem_limit_bytes)
            h = _unpack_pseudo(h_pk, TD, H, W, C)
            o_pk = _subm_conv_call(_make_conv_tiles(h, TD), p["w2"], p["shift2_t"],
                                   mask_pk, _pack_pseudo(x, TD, pack),
                                   apply_act=True, leaky=leaky_relu,
                                   TD=TD, H=H, W=W, vmem_limit_bytes=vmem_limit_bytes)
            x = _unpack_pseudo(o_pk, TD, H, W, C)
        else:
            # SparseBlock: conv1 -> bn1/act
            o_pk = _subm_conv_call(_make_conv_tiles(x, TD), p["w1"], p["shift1_t"],
                                   mask_pk, None, apply_act=True, leaky=leaky_relu,
                                   TD=TD, H=H, W=W, vmem_limit_bytes=vmem_limit_bytes)
            x = _unpack_pseudo(o_pk, TD, H, W, C)

    return jnp.transpose(x.astype(jnp.float32), (0, 4, 1, 2, 3))        # NCDHW


# --------------------------------------------------------------------------- #
# Pure-JAX reference (same bf16-quantization points as the kernel path)
# --------------------------------------------------------------------------- #
def _ref_conv(x, w_mat, C):
    w = w_mat.reshape(3, 3, 3, C, C)        # DHWIO, same folded bf16 weights
    return lax.conv_general_dilated(
        x, w, window_strides=(1, 1, 1), padding="SAME",
        dimension_numbers=("NDHWC", "DHWIO", "NDHWC"),
        preferred_element_type=jnp.float32)


def _ref_act(x, leaky):
    return jnp.where(x > 0, x, LEAKINESS * x) if leaky else jnp.maximum(x, 0.0)


def ref_series(x_ncdhw, mask_ndhw, prepared, *, leaky_relu, residual):
    N, C, D, H, W = x_ncdhw.shape
    m = mask_ndhw.astype(jnp.float32)[..., None]
    x = (jnp.transpose(x_ncdhw, (0, 2, 3, 4, 1)).astype(jnp.float32) * m)
    x = x.astype(jnp.bfloat16)
    for p in prepared:
        if residual:
            h = _ref_conv(x, p["w1"], C)
            h = (h + p["shift1"]) * m
            h = _ref_act(h, leaky_relu).astype(jnp.bfloat16)
            o = _ref_conv(h, p["w2"], C)
            o = (o + p["shift2"]) * m
            o = o + x.astype(jnp.float32)
            x = _ref_act(o, leaky_relu).astype(jnp.bfloat16)
        else:
            o = _ref_conv(x, p["w1"], C)
            o = (o + p["shift1"]) * m
            x = _ref_act(o, leaky_relu).astype(jnp.bfloat16)
    return jnp.transpose(x.astype(jnp.float32), (0, 4, 1, 2, 3))


# --------------------------------------------------------------------------- #
if __name__ == "__main__":
    # Module config: inplanes=16, n_blocks=2, batch_norm=True, leaky_relu=True,
    # residual=True; dense sparse-tensor volume (N, C, D, H, W) = (2, 16, 8, 8, 8).
    N, C, D, H, W = 2, 16, 8, 8, 8
    n_blocks = 2
    batch_norm, leaky_relu, residual = True, True, True

    key = jax.random.PRNGKey(0)
    kx, km, kp = jax.random.split(key, 3)
    x = jax.random.normal(kx, (N, C, D, H, W), jnp.float32)
    mask = jax.random.uniform(km, (N, D, H, W)) < 0.3      # ~30% active voxels
    raw = init_params(kp, C, n_blocks, batch_norm, residual)
    params = prepare_params(raw, C, residual)

    fwd = jax.jit(functools.partial(sparse_block_series, leaky_relu=leaky_relu,
                                    residual=residual, tile_d=4))
    out = jax.block_until_ready(fwd(x, mask, params))

    ref = ref_series(x, mask, params, leaky_relu=leaky_relu, residual=residual)
    assert out.shape == (N, C, D, H, W)
    err = float(jnp.max(jnp.abs(out - ref)))
    assert jnp.allclose(out, ref, atol=5e-2, rtol=5e-2), err
    print("KERNEL_OK")
</pallas_src>

<mosaic_0001>
module attributes {stable_mosaic.version = 11 : i64} {
  func.func @_subm_conv_kernel(%arg0: i32, %arg1: i32, %arg2: memref<1x1x700x16xbf16, #tpu.memory_space<vmem>>, %arg3: memref<432x16xbf16, #tpu.memory_space<vmem>>, %arg4: memref<1x128xf32, #tpu.memory_space<vmem>>, %arg5: memref<1x1x50x128xbf16, #tpu.memory_space<vmem>>, %arg6: memref<1x1x50x128xbf16, #tpu.memory_space<vmem>>) attributes {dimension_semantics = [#tpu.dimension_semantics<parallel>, #tpu.dimension_semantics<parallel>], iteration_bounds = array<i64: 2, 2>, scalar_prefetch = 0 : i64, scratch_operands = 0 : i64, tpu.core_type = #tpu.core_type<tc>, window_params = [{transform_indices = @transform_0, window_bounds = array<i64: 1, 1, 700, 16>}, {pipeline_mode = #tpu.pipeline_mode<synchronous>, transform_indices = @transform_1, window_bounds = array<i64: 432, 16>}, {pipeline_mode = #tpu.pipeline_mode<synchronous>, transform_indices = @transform_2, window_bounds = array<i64: 1, 128>}, {transform_indices = @transform_3, window_bounds = array<i64: 1, 1, 50, 128>}, {transform_indices = @transform_4, window_bounds = array<i64: 1, 1, 50, 128>}]} {
    %c0 = arith.constant 0 : index
    %c0_0 = arith.constant 0 : index
    %c0_1 = arith.constant 0 : index
    %c0_2 = arith.constant 0 : index
    %0 = vector.load %arg2[%c0, %c0_0, %c0_1, %c0_2] : memref<1x1x700x16xbf16, #tpu.memory_space<vmem>>, vector<1x1x700x16xbf16>
    %1 = vector.shape_cast %0 : vector<1x1x700x16xbf16> to vector<700x16xbf16>
    %2 = vector.extract_strided_slice %1 {offsets = [0, 0], sizes = [400, 16], strides = [1, 1]} : vector<700x16xbf16> to vector<400x16xbf16>
    %3 = vector.extract_strided_slice %1 {offsets = [1, 0], sizes = [400, 16], strides = [1, 1]} : vector<700x16xbf16> to vector<400x16xbf16>
    %4 = vector.extract_strided_slice %1 {offsets = [2, 0], sizes = [400, 16], strides = [1, 1]} : vector<700x16xbf16> to vector<400x16xbf16>
    %5 = vector.extract_strided_slice %1 {offsets = [10, 0], sizes = [400, 16], strides = [1, 1]} : vector<700x16xbf16> to vector<400x16xbf16>
    %6 = vector.extract_strided_slice %1 {offsets = [11, 0], sizes = [400, 16], strides = [1, 1]} : vector<700x16xbf16> to vector<400x16xbf16>
    %7 = vector.extract_strided_slice %1 {offsets = [12, 0], sizes = [400, 16], strides = [1, 1]} : vector<700x16xbf16> to vector<400x16xbf16>
    %8 = vector.extract_strided_slice %1 {offsets = [20, 0], sizes = [400, 16], strides = [1, 1]} : vector<700x16xbf16> to vector<400x16xbf16>
    %9 = vector.extract_strided_slice %1 {offsets = [21, 0], sizes = [400, 16], strides = [1, 1]} : vector<700x16xbf16> to vector<400x16xbf16>
    %10 = vector.extract_strided_slice %1 {offsets = [22, 0], sizes = [400, 16], strides = [1, 1]} : vector<700x16xbf16> to vector<400x16xbf16>
    %11 = vector.extract_strided_slice %1 {offsets = [100, 0], sizes = [400, 16], strides = [1, 1]} : vector<700x16xbf16> to vector<400x16xbf16>
    %12 = vector.extract_strided_slice %1 {offsets = [101, 0], sizes = [400, 16], strides = [1, 1]} : vector<700x16xbf16> to vector<400x16xbf16>
    %13 = vector.extract_strided_slice %1 {offsets = [102, 0], sizes = [400, 16], strides = [1, 1]} : vector<700x16xbf16> to vector<400x16xbf16>
    %14 = vector.extract_strided_slice %1 {offsets = [110, 0], sizes = [400, 16], strides = [1, 1]} : vector<700x16xbf16> to vector<400x16xbf16>
    %15 = vector.extract_strided_slice %1 {offsets = [111, 0], sizes = [400, 16], strides = [1, 1]} : vector<700x16xbf16> to vector<400x16xbf16>
    %16 = vector.extract_strided_slice %1 {offsets = [112, 0], sizes = [400, 16], strides = [1, 1]} : vector<700x16xbf16> to vector<400x16xbf16>
    %17 = vector.extract_strided_slice %1 {offsets = [120, 0], sizes = [400, 16], strides = [1, 1]} : vector<700x16xbf16> to vector<400x16xbf16>
    %18 = vector.extract_strided_slice %1 {offsets = [121, 0], sizes = [400, 16], strides = [1, 1]} : vector<700x16xbf16> to vector<400x16xbf16>
    %19 = vector.extract_strided_slice %1 {offsets = [122, 0], sizes = [400, 16], strides = [1, 1]} : vector<700x16xbf16> to vector<400x16xbf16>
    %20 = vector.extract_strided_slice %1 {offsets = [200, 0], sizes = [400, 16], strides = [1, 1]} : vector<700x16xbf16> to vector<400x16xbf16>
    %21 = vector.extract_strided_slice %1 {offsets = [201, 0], sizes = [400, 16], strides = [1, 1]} : vector<700x16xbf16> to vector<400x16xbf16>
    %22 = vector.extract_strided_slice %1 {offsets = [202, 0], sizes = [400, 16], strides = [1, 1]} : vector<700x16xbf16> to vector<400x16xbf16>
    %23 = vector.extract_strided_slice %1 {offsets = [210, 0], sizes = [400, 16], strides = [1, 1]} : vector<700x16xbf16> to vector<400x16xbf16>
    %24 = vector.extract_strided_slice %1 {offsets = [211, 0], sizes = [400, 16], strides = [1, 1]} : vector<700x16xbf16> to vector<400x16xbf16>
    %25 = vector.extract_strided_slice %1 {offsets = [212, 0], sizes = [400, 16], strides = [1, 1]} : vector<700x16xbf16> to vector<400x16xbf16>
    %26 = vector.extract_strided_slice %1 {offsets = [220, 0], sizes = [400, 16], strides = [1, 1]} : vector<700x16xbf16> to vector<400x16xbf16>
    %27 = vector.extract_strided_slice %1 {offsets = [221, 0], sizes = [400, 16], strides = [1, 1]} : vector<700x16xbf16> to vector<400x16xbf16>
    %28 = vector.extract_strided_slice %1 {offsets = [222, 0], sizes = [400, 16], strides = [1, 1]} : vector<700x16xbf16> to vector<400x16xbf16>
    %29 = tpu.concatenate %2, %3, %4, %5, %6, %7, %8, %9, %10, %11, %12, %13, %14, %15, %16, %17 in 1 : vector<400x16xbf16>, vector<400x16xbf16>, vector<400x16xbf16>, vector<400x16xbf16>, vector<400x16xbf16>, vector<400x16xbf16>, vector<400x16xbf16>, vector<400x16xbf16>, vector<400x16xbf16>, vector<400x16xbf16>, vector<400x16xbf16>, vector<400x16xbf16>, vector<400x16xbf16>, vector<400x16xbf16>, vector<400x16xbf16>, vector<400x16xbf16> -> vector<400x256xbf16>
    %30 = tpu.concatenate %18, %19, %20, %21, %22, %23, %24, %25, %26, %27, %28 in 1 : vector<400x16xbf16>, vector<400x16xbf16>, vector<400x16xbf16>, vector<400x16xbf16>, vector<400x16xbf16>, vector<400x16xbf16>, vector<400x16xbf16>, vector<400x16xbf16>, vector<400x16xbf16>, vector<400x16xbf16>, vector<400x16xbf16> -> vector<400x176xbf16>
    %31 = tpu.concatenate %29, %30 in 1 : vector<400x256xbf16>, vector<400x176xbf16> -> vector<400x432xbf16>
    %c0_3 = arith.constant 0 : index
    %c0_4 = arith.constant 0 : index
    %32 = vector.load %arg3[%c0_3, %c0_4] : memref<432x16xbf16, #tpu.memory_space<vmem>>, vector<432x16xbf16>
    %cst = arith.constant dense<0.000000e+00> : vector<400x16xf32>
    %33 = tpu.matmul %31, %32, %cst {dimension_numbers = #tpu.dot_dimension_numbers<[1], [0], [0], [1], [0, 0, 1, 1], [], []>} : vector<400x432xbf16>, vector<432x16xbf16>, vector<400x16xf32> -> vector<400x16xf32>
    %34 = vector.extract_strided_slice %33 {offsets = [0, 0], sizes = [50, 16], strides = [1, 1]} : vector<400x16xf32> to vector<50x16xf32>
    %35 = vector.extract_strided_slice %33 {offsets = [50, 0], sizes = [50, 16], strides = [1, 1]} : vector<400x16xf32> to vector<50x16xf32>
    %36 = vector.extract_strided_slice %33 {offsets = [100, 0], sizes = [50, 16], strides = [1, 1]} : vector<400x16xf32> to vector<50x16xf32>
    %37 = vector.extract_strided_slice %33 {offsets = [150, 0], sizes = [50, 16], strides = [1, 1]} : vector<400x16xf32> to vector<50x16xf32>
    %38 = vector.extract_strided_slice %33 {offsets = [200, 0], sizes = [50, 16], strides = [1, 1]} : vector<400x16xf32> to vector<50x16xf32>
    %39 = vector.extract_strided_slice %33 {offsets = [250, 0], sizes = [50, 16], strides = [1, 1]} : vector<400x16xf32> to vector<50x16xf32>
    %40 = vector.extract_strided_slice %33 {offsets = [300, 0], sizes = [50, 16], strides = [1, 1]} : vector<400x16xf32> to vector<50x16xf32>
    %41 = vector.extract_strided_slice %33 {offsets = [350, 0], sizes = [50, 16], strides = [1, 1]} : vector<400x16xf32> to vector<50x16xf32>
    %42 = tpu.concatenate %34, %35, %36, %37, %38, %39, %40, %41 in 1 : vector<50x16xf32>, vector<50x16xf32>, vector<50x16xf32>, vector<50x16xf32>, vector<50x16xf32>, vector<50x16xf32>, vector<50x16xf32>, vector<50x16xf32> -> vector<50x128xf32>
    %c0_5 = arith.constant 0 : index
    %c0_6 = arith.constant 0 : index
    %43 = vector.load %arg4[%c0_5, %c0_6] : memref<1x128xf32, #tpu.memory_space<vmem>>, vector<1x128xf32>
    %44 = vector.broadcast %43 : vector<1x128xf32> to vector<50x128xf32>
    %45 = arith.addf %42, %44 : vector<50x128xf32>
    %c0_7 = arith.constant 0 : index
    %c0_8 = arith.constant 0 : index
    %c0_9 = arith.constant 0 : index
    %c0_10 = arith.constant 0 : index
    %46 = vector.load %arg5[%c0_7, %c0_8, %c0_9, %c0_10] : memref<1x1x50x128xbf16, #tpu.memory_space<vmem>>, vector<1x1x50x128xbf16>
    %47 = vector.shape_cast %46 : vector<1x1x50x128xbf16> to vector<50x128xbf16>
    %48 = arith.extf %47 : vector<50x128xbf16> to vector<50x128xf32>
    %49 = arith.mulf %45, %48 : vector<50x128xf32>
    %cst_11 = arith.constant 0.000000e+00 : f32
    %50 = vector.broadcast %cst_11 : f32 to vector<50x128xf32>
    %51 = arith.cmpf ogt, %49, %50 : vector<50x128xf32>
    %cst_12 = arith.constant 3.330000e-01 : f32
    %52 = vector.broadcast %cst_12 : f32 to vector<50x128xf32>
    %53 = arith.mulf %52, %49 : vector<50x128xf32>
    %54 = arith.select %51, %49, %53 : vector<50x128xi1>, vector<50x128xf32>
    %55 = arith.truncf %54 : vector<50x128xf32> to vector<50x128xbf16>
    %c0_13 = arith.constant 0 : index
    %c0_14 = arith.constant 0 : index
    %c0_15 = arith.constant 0 : index
    %c0_16 = arith.constant 0 : index
    %56 = vector.load %arg6[%c0_13, %c0_14, %c0_15, %c0_16] : memref<1x1x50x128xbf16, #tpu.memory_space<vmem>>, vector<1x1x50x128xbf16>
    %57 = vector.shape_cast %56 : vector<1x1x50x128xbf16> to vector<50x128xbf16>
    %58 = vector.shape_cast %55 : vector<50x128xbf16> to vector<1x1x50x128xbf16>
    tpu.vector_store %arg6[%c0_13, %c0_14, %c0_15, %c0_16], %58 {strides = array<i32>} : memref<1x1x50x128xbf16, #tpu.memory_space<vmem>>, vector<1x1x50x128xbf16>,
    return
  }
  func.func @transform_0(%arg0: i32, %arg1: i32) -> (i32, i32, i32, i32) {
    %c0_i32 = arith.constant 0 : i32
    %c0_i32_0 = arith.constant 0 : i32
    %c0_i32_1 = arith.constant 0 : i32
    return %arg0, %arg1, %c0_i32, %c0_i32_0 : i32, i32, i32, i32
  }
  func.func @transform_1(%arg0: i32, %arg1: i32) -> (i32, i32) {
    %c0_i32 = arith.constant 0 : i32
    %c0_i32_0 = arith.constant 0 : i32
    %c0_i32_1 = arith.constant 0 : i32
    return %c0_i32, %c0_i32_0 : i32, i32
  }
  func.func @transform_2(%arg0: i32, %arg1: i32) -> (i32, i32) {
    %c0_i32 = arith.constant 0 : i32
    %c0_i32_0 = arith.constant 0 : i32
    %c0_i32_1 = arith.constant 0 : i32
    return %c0_i32, %c0_i32_0 : i32, i32
  }
  func.func @transform_3(%arg0: i32, %arg1: i32) -> (i32, i32, i32, i32) {
    %c0_i32 = arith.constant 0 : i32
    %c0_i32_0 = arith.constant 0 : i32
    %c0_i32_1 = arith.constant 0 : i32
    return %arg0, %arg1, %c0_i32, %c0_i32_0 : i32, i32, i32, i32
  }
  func.func @transform_4(%arg0: i32, %arg1: i32) -> (i32, i32, i32, i32) {
    %c0_i32 = arith.constant 0 : i32
    %c0_i32_0 = arith.constant 0 : i32
    %c0_i32_1 = arith.constant 0 : i32
    return %arg0, %arg1, %c0_i32, %c0_i32_0 : i32, i32, i32, i32
  }
}

module attributes {stable_mosaic.version = 11 : i64} {
  func.func @_subm_conv_kernel(%arg0: i32, %arg1: i32, %arg2: memref<1x1x700x16xbf16, #tpu.memory_space<vmem>>, %arg3: memref<432x16xbf16, #tpu.memory_space<vmem>>, %arg4: memref<1x128xf32, #tpu.memory_space<vmem>>, %arg5: memref<1x1x50x128xbf16, #tpu.memory_space<vmem>>, %arg6: memref<1x1x50x128xbf16, #tpu.memory_space<vmem>>, %arg7: memref<1x1x50x128xbf16, #tpu.memory_space<vmem>>) attributes {dimension_semantics = [#tpu.dimension_semantics<parallel>, #tpu.dimension_semantics<parallel>], iteration_bounds = array<i64: 2, 2>, scalar_prefetch = 0 : i64, scratch_operands = 0 : i64, tpu.core_type = #tpu.core_type<tc>, window_params = [{transform_indices = @transform_0, window_bounds = array<i64: 1, 1, 700, 16>}, {pipeline_mode = #tpu.pipeline_mode<synchronous>, transform_indices = @transform_1, window_bounds = array<i64: 432, 16>}, {pipeline_mode = #tpu.pipeline_mode<synchronous>, transform_indices = @transform_2, window_bounds = array<i64: 1, 128>}, {transform_indices = @transform_3, window_bounds = array<i64: 1, 1, 50, 128>}, {transform_indices = @transform_4, window_bounds = array<i64: 1, 1, 50, 128>}, {transform_indices = @transform_5, window_bounds = array<i64: 1, 1, 50, 128>}]} {
    %c0 = arith.constant 0 : index
    %c0_0 = arith.constant 0 : index
    %c0_1 = arith.constant 0 : index
    %c0_2 = arith.constant 0 : index
    %0 = vector.load %arg2[%c0, %c0_0, %c0_1, %c0_2] : memref<1x1x700x16xbf16, #tpu.memory_space<vmem>>, vector<1x1x700x16xbf16>
    %1 = vector.shape_cast %0 : vector<1x1x700x16xbf16> to vector<700x16xbf16>
    %2 = vector.extract_strided_slice %1 {offsets = [0, 0], sizes = [400, 16], strides = [1, 1]} : vector<700x16xbf16> to vector<400x16xbf16>
    %3 = vector.extract_strided_slice %1 {offsets = [1, 0], sizes = [400, 16], strides = [1, 1]} : vector<700x16xbf16> to vector<400x16xbf16>
    %4 = vector.extract_strided_slice %1 {offsets = [2, 0], sizes = [400, 16], strides = [1, 1]} : vector<700x16xbf16> to vector<400x16xbf16>
    %5 = vector.extract_strided_slice %1 {offsets = [10, 0], sizes = [400, 16], strides = [1, 1]} : vector<700x16xbf16> to vector<400x16xbf16>
    %6 = vector.extract_strided_slice %1 {offsets = [11, 0], sizes = [400, 16], strides = [1, 1]} : vector<700x16xbf16> to vector<400x16xbf16>
    %7 = vector.extract_strided_slice %1 {offsets = [12, 0], sizes = [400, 16], strides = [1, 1]} : vector<700x16xbf16> to vector<400x16xbf16>
    %8 = vector.extract_strided_slice %1 {offsets = [20, 0], sizes = [400, 16], strides = [1, 1]} : vector<700x16xbf16> to vector<400x16xbf16>
    %9 = vector.extract_strided_slice %1 {offsets = [21, 0], sizes = [400, 16], strides = [1, 1]} : vector<700x16xbf16> to vector<400x16xbf16>
    %10 = vector.extract_strided_slice %1 {offsets = [22, 0], sizes = [400, 16], strides = [1, 1]} : vector<700x16xbf16> to vector<400x16xbf16>
    %11 = vector.extract_strided_slice %1 {offsets = [100, 0], sizes = [400, 16], strides = [1, 1]} : vector<700x16xbf16> to vector<400x16xbf16>
    %12 = vector.extract_strided_slice %1 {offsets = [101, 0], sizes = [400, 16], strides = [1, 1]} : vector<700x16xbf16> to vector<400x16xbf16>
    %13 = vector.extract_strided_slice %1 {offsets = [102, 0], sizes = [400, 16], strides = [1, 1]} : vector<700x16xbf16> to vector<400x16xbf16>
    %14 = vector.extract_strided_slice %1 {offsets = [110, 0], sizes = [400, 16], strides = [1, 1]} : vector<700x16xbf16> to vector<400x16xbf16>
    %15 = vector.extract_strided_slice %1 {offsets = [111, 0], sizes = [400, 16], strides = [1, 1]} : vector<700x16xbf16> to vector<400x16xbf16>
    %16 = vector.extract_strided_slice %1 {offsets = [112, 0], sizes = [400, 16], strides = [1, 1]} : vector<700x16xbf16> to vector<400x16xbf16>
    %17 = vector.extract_strided_slice %1 {offsets = [120, 0], sizes = [400, 16], strides = [1, 1]} : vector<700x16xbf16> to vector<400x16xbf16>
    %18 = vector.extract_strided_slice %1 {offsets = [121, 0], sizes = [400, 16], strides = [1, 1]} : vector<700x16xbf16> to vector<400x16xbf16>
    %19 = vector.extract_strided_slice %1 {offsets = [122, 0], sizes = [400, 16], strides = [1, 1]} : vector<700x16xbf16> to vector<400x16xbf16>
    %20 = vector.extract_strided_slice %1 {offsets = [200, 0], sizes = [400, 16], strides = [1, 1]} : vector<700x16xbf16> to vector<400x16xbf16>
    %21 = vector.extract_strided_slice %1 {offsets = [201, 0], sizes = [400, 16], strides = [1, 1]} : vector<700x16xbf16> to vector<400x16xbf16>
    %22 = vector.extract_strided_slice %1 {offsets = [202, 0], sizes = [400, 16], strides = [1, 1]} : vector<700x16xbf16> to vector<400x16xbf16>
    %23 = vector.extract_strided_slice %1 {offsets = [210, 0], sizes = [400, 16], strides = [1, 1]} : vector<700x16xbf16> to vector<400x16xbf16>
    %24 = vector.extract_strided_slice %1 {offsets = [211, 0], sizes = [400, 16], strides = [1, 1]} : vector<700x16xbf16> to vector<400x16xbf16>
    %25 = vector.extract_strided_slice %1 {offsets = [212, 0], sizes = [400, 16], strides = [1, 1]} : vector<700x16xbf16> to vector<400x16xbf16>
    %26 = vector.extract_strided_slice %1 {offsets = [220, 0], sizes = [400, 16], strides = [1, 1]} : vector<700x16xbf16> to vector<400x16xbf16>
    %27 = vector.extract_strided_slice %1 {offsets = [221, 0], sizes = [400, 16], strides = [1, 1]} : vector<700x16xbf16> to vector<400x16xbf16>
    %28 = vector.extract_strided_slice %1 {offsets = [222, 0], sizes = [400, 16], strides = [1, 1]} : vector<700x16xbf16> to vector<400x16xbf16>
    %29 = tpu.concatenate %2, %3, %4, %5, %6, %7, %8, %9, %10, %11, %12, %13, %14, %15, %16, %17 in 1 : vector<400x16xbf16>, vector<400x16xbf16>, vector<400x16xbf16>, vector<400x16xbf16>, vector<400x16xbf16>, vector<400x16xbf16>, vector<400x16xbf16>, vector<400x16xbf16>, vector<400x16xbf16>, vector<400x16xbf16>, vector<400x16xbf16>, vector<400x16xbf16>, vector<400x16xbf16>, vector<400x16xbf16>, vector<400x16xbf16>, vector<400x16xbf16> -> vector<400x256xbf16>
    %30 = tpu.concatenate %18, %19, %20, %21, %22, %23, %24, %25, %26, %27, %28 in 1 : vector<400x16xbf16>, vector<400x16xbf16>, vector<400x16xbf16>, vector<400x16xbf16>, vector<400x16xbf16>, vector<400x16xbf16>, vector<400x16xbf16>, vector<400x16xbf16>, vector<400x16xbf16>, vector<400x16xbf16>, vector<400x16xbf16> -> vector<400x176xbf16>
    %31 = tpu.concatenate %29, %30 in 1 : vector<400x256xbf16>, vector<400x176xbf16> -> vector<400x432xbf16>
    %c0_3 = arith.constant 0 : index
    %c0_4 = arith.constant 0 : index
    %32 = vector.load %arg3[%c0_3, %c0_4] : memref<432x16xbf16, #tpu.memory_space<vmem>>, vector<432x16xbf16>
    %cst = arith.constant dense<0.000000e+00> : vector<400x16xf32>
    %33 = tpu.matmul %31, %32, %cst {dimension_numbers = #tpu.dot_dimension_numbers<[1], [0], [0], [1], [0, 0, 1, 1], [], []>} : vector<400x432xbf16>, vector<432x16xbf16>, vector<400x16xf32> -> vector<400x16xf32>
    %34 = vector.extract_strided_slice %33 {offsets = [0, 0], sizes = [50, 16], strides = [1, 1]} : vector<400x16xf32> to vector<50x16xf32>
    %35 = vector.extract_strided_slice %33 {offsets = [50, 0], sizes = [50, 16], strides = [1, 1]} : vector<400x16xf32> to vector<50x16xf32>
    %36 = vector.extract_strided_slice %33 {offsets = [100, 0], sizes = [50, 16], strides = [1, 1]} : vector<400x16xf32> to vector<50x16xf32>
    %37 = vector.extract_strided_slice %33 {offsets = [150, 0], sizes = [50, 16], strides = [1, 1]} : vector<400x16xf32> to vector<50x16xf32>
    %38 = vector.extract_strided_slice %33 {offsets = [200, 0], sizes = [50, 16], strides = [1, 1]} : vector<400x16xf32> to vector<50x16xf32>
    %39 = vector.extract_strided_slice %33 {offsets = [250, 0], sizes = [50, 16], strides = [1, 1]} : vector<400x16xf32> to vector<50x16xf32>
    %40 = vector.extract_strided_slice %33 {offsets = [300, 0], sizes = [50, 16], strides = [1, 1]} : vector<400x16xf32> to vector<50x16xf32>
    %41 = vector.extract_strided_slice %33 {offsets = [350, 0], sizes = [50, 16], strides = [1, 1]} : vector<400x16xf32> to vector<50x16xf32>
    %42 = tpu.concatenate %34, %35, %36, %37, %38, %39, %40, %41 in 1 : vector<50x16xf32>, vector<50x16xf32>, vector<50x16xf32>, vector<50x16xf32>, vector<50x16xf32>, vector<50x16xf32>, vector<50x16xf32>, vector<50x16xf32> -> vector<50x128xf32>
    %c0_5 = arith.constant 0 : index
    %c0_6 = arith.constant 0 : index
    %43 = vector.load %arg4[%c0_5, %c0_6] : memref<1x128xf32, #tpu.memory_space<vmem>>, vector<1x128xf32>
    %44 = vector.broadcast %43 : vector<1x128xf32> to vector<50x128xf32>
    %45 = arith.addf %42, %44 : vector<50x128xf32>
    %c0_7 = arith.constant 0 : index
    %c0_8 = arith.constant 0 : index
    %c0_9 = arith.constant 0 : index
    %c0_10 = arith.constant 0 : index
    %46 = vector.load %arg5[%c0_7, %c0_8, %c0_9, %c0_10] : memref<1x1x50x128xbf16, #tpu.memory_space<vmem>>, vector<1x1x50x128xbf16>
    %47 = vector.shape_cast %46 : vector<1x1x50x128xbf16> to vector<50x128xbf16>
    %48 = arith.extf %47 : vector<50x128xbf16> to vector<50x128xf32>
    %49 = arith.mulf %45, %48 : vector<50x128xf32>
    %c0_11 = arith.constant 0 : index
    %c0_12 = arith.constant 0 : index
    %c0_13 = arith.constant 0 : index
    %c0_14 = arith.constant 0 : index
    %50 = vector.load %arg6[%c0_11, %c0_12, %c0_13, %c0_14] : memref<1x1x50x128xbf16, #tpu.memory_space<vmem>>, vector<1x1x50x128xbf16>
    %51 = vector.shape_cast %50 : vector<1x1x50x128xbf16> to vector<50x128xbf16>
    %52 = arith.extf %51 : vector<50x128xbf16> to vector<50x128xf32>
    %53 = arith.addf %49, %52 : vector<50x128xf32>
    %cst_15 = arith.constant 0.000000e+00 : f32
    %54 = vector.broadcast %cst_15 : f32 to vector<50x128xf32>
    %55 = arith.cmpf ogt, %53, %54 : vector<50x128xf32>
    %cst_16 = arith.constant 3.330000e-01 : f32
    %56 = vector.broadcast %cst_16 : f32 to vector<50x128xf32>
    %57 = arith.mulf %56, %53 : vector<50x128xf32>
    %58 = arith.select %55, %53, %57 : vector<50x128xi1>, vector<50x128xf32>
    %59 = arith.truncf %58 : vector<50x128xf32> to vector<50x128xbf16>
    %c0_17 = arith.constant 0 : index
    %c0_18 = arith.constant 0 : index
    %c0_19 = arith.constant 0 : index
    %c0_20 = arith.constant 0 : index
    %60 = vector.load %arg7[%c0_17, %c0_18, %c0_19, %c0_20] : memref<1x1x50x128xbf16, #tpu.memory_space<vmem>>, vector<1x1x50x128xbf16>
    %61 = vector.shape_cast %60 : vector<1x1x50x128xbf16> to vector<50x128xbf16>
    %62 = vector.shape_cast %59 : vector<50x128xbf16> to vector<1x1x50x128xbf16>
    tpu.vector_store %arg7[%c0_17, %c0_18, %c0_19, %c0_20], %62 {strides = array<i32>} : memref<1x1x50x128xbf16, #tpu.memory_space<vmem>>, vector<1x1x50x128xbf16>,
    return
  }
  func.func @transform_0(%arg0: i32, %arg1: i32) -> (i32, i32, i32, i32) {
    %c0_i32 = arith.constant 0 : i32
    %c0_i32_0 = arith.constant 0 : i32
    %c0_i32_1 = arith.constant 0 : i32
    return %arg0, %arg1, %c0_i32, %c0_i32_0 : i32, i32, i32, i32
  }
  func.func @transform_1(%arg0: i32, %arg1: i32) -> (i32, i32) {
    %c0_i32 = arith.constant 0 : i32
    %c0_i32_0 = arith.constant 0 : i32
    %c0_i32_1 = arith.constant 0 : i32
    return %c0_i32, %c0_i32_0 : i32, i32
  }
  func.func @transform_2(%arg0: i32, %arg1: i32) -> (i32, i32) {
    %c0_i32 = arith.constant 0 : i32
    %c0_i32_0 = arith.constant 0 : i32
    %c0_i32_1 = arith.constant 0 : i32
    return %c0_i32, %c0_i32_0 : i32, i32
  }
  func.func @transform_3(%arg0: i32, %arg1: i32) -> (i32, i32, i32, i32) {
    %c0_i32 = arith.constant 0 : i32
    %c0_i32_0 = arith.constant 0 : i32
    %c0_i32_1 = arith.constant 0 : i32
    return %arg0, %arg1, %c0_i32, %c0_i32_0 : i32, i32, i32, i32
  }
  func.func @transform_4(%arg0: i32, %arg1: i32) -> (i32, i32, i32, i32) {
    %c0_i32 = arith.constant 0 : i32
    %c0_i32_0 = arith.constant 0 : i32
    %c0_i32_1 = arith.constant 0 : i32
    return %arg0, %arg1, %c0_i32, %c0_i32_0 : i32, i32, i32, i32
  }
  func.func @transform_5(%arg0: i32, %arg1: i32) -> (i32, i32, i32, i32) {
    %c0_i32 = arith.constant 0 : i32
    %c0_i32_0 = arith.constant 0 : i32
    %c0_i32_1 = arith.constant 0 : i32
    return %arg0, %arg1, %c0_i32, %c0_i32_0 : i32, i32, i32, i32
  }
}

</mosaic_0001>

<llo_original>
// kernel: sparse_block_series.4
$region0: #{sparse_block_series.4}
  #allocation0 [shape = 'u32[]', space=smem, size = 0x4, offset = 0x4, fixed_abs, tag = 'smem constant byte address 0x4 - core index']
  #allocation1 [shape = 'u32[144,128]{1,0:T(1,128)}', space=vmem, size = 0x12000, scoped, tag = 'internal scratch']
  %s0 = inlined_call_operand.vmem [shape: bf16[2,2,700,16], index: 0, kind: input, shape index: {}]
  %s1 = inlined_call_operand.vmem [shape: bf16[432,16], index: 1, kind: input, shape index: {}]
  %s2 = inlined_call_operand.vmem [shape: f32[1,128], index: 2, kind: input, shape index: {}]
  %s3 = inlined_call_operand.vmem [shape: bf16[2,2,50,128], index: 3, kind: input, shape index: {}]
  %s4 = inlined_call_operand.vmem [shape: bf16[2,2,50,128], index: 4, kind: output, shape index: {}]
  %s5 = sld [smem:[#allocation0]]
  $region49: #{sparse_block_series.4} parent=0
    _
  %s7 = ssub.s32 1, %s5
  %s8 = scalar_select 0, %s7, %s5
  loop: start=0, step=1, limit=6
  $region2: #{sparse_block_series.4} parent=0 // loop_pre_header
    _
  $region3: #{sparse_block_series.4} parent=0 // loop_header
    %s10 = sphi 0, %s14
    %p11 = scmp.ge.s32.totalorder %s10, 6
    %s17 = sphi 0, %s29
    %s18 = sphi 0, %s25
    %s19 = sphi 0, %s17
    %s20 = sphi 0, %s18
    %s21 = sphi 0, %s19
    %s22 = sphi 0, %s20
    %s34 = sphi 0, %s36
    %s37 = sphi 0, %s34
    %s38 = sphi 0, %s37
    %s54 = sphi 0, %s38
    %s58 = sphi 0, %s58
    %s60 = sphi 0, %s58
    %s61 = sphi 0, %s60
    %s75 = sphi 0, %s61
    %s79 = sphi 0, %s79
    %s81 = sphi 0, %s79
    %s82 = sphi 0, %s81
    %s96 = sphi 0, %s82
    %s104 = sphi 0, %s106
    %s107 = sphi 0, %s104
    %s108 = sphi 0, %s107
    %s124 = sphi 0, %s108
    %s132 = sphi 0, %s134
    %s135 = sphi 0, %s132
    %s136 = sphi 0, %s135
    %s152 = sphi 0, %s136
  $region4: #{sparse_block_series.4} parent=0 // loop_header_branch
    %13 = sbr.rel (%p11) target = $region8
  $region5: #{sparse_block_series.4} parent=0 // loop_body
    %s15 = ssub.s32 %s10, 1
    %s16 = ssub.s32 %s10, 2
    %s23 = sadd.s32 1, %s18
    %p24 = scmp.ge.s32.totalorder %s23, 2
    %s25 = scalar_select %p24, 0, %s23
    %s26 = sadd.s32 1, %s17
    %s27 = scalar_select %p24, %s26, %s17
    %p28 = scmp.ge.s32.totalorder %s27, 2
    %s29 = scalar_select %p28, 0, %s27
    %s30 = ssub.s32 %s17, %s29
    %s31 = ssub.s32 %s18, %s25
    %s32 = sor.u32 %s30, %s31
    %p33 = scmp.eq.s32.totalorder %s32, 0
    %s35 = sadd.s32 %s34, 1
    %s36 = scalar_select %p33, %s34, %s35
    %p39 = pneg %p33
    %p40 = scmp.eq.s32.totalorder %s10, 3
    %p41 = por %p39, %p40
    %p42 = scmp.ne.s32.totalorder %s34, %s37
    %p43 = scmp.eq.s32.totalorder %s10, 0
    %p44 = por %p42, %p43
    %p45 = scmp.ne.s32.totalorder %s34, %s37
    %p46 = scmp.eq.s32.totalorder %s15, 3
    %p47 = por %p45, %p46
    %p48 = scmp.ne.s32.totalorder %s37, %s38
    %p49 = scmp.eq.s32.totalorder %s15, 0
    %p50 = por %p48, %p49
    %p51 = scmp.ne.s32.totalorder %s37, %s38
    %p52 = scmp.eq.s32.totalorder %s16, 3
    %p53 = por %p51, %p52
    %p55 = scmp.ne.s32.totalorder %s38, %s54
    %p56 = scmp.eq.s32.totalorder %s16, 0
    %p57 = por %p55, %p56
    %s59 = sadd.s32 %s58, 1
    %p62 = scmp.eq.s32.totalorder %s10, 3
    %p63 = scmp.ne.s32.totalorder %s58, %s60
    %p64 = scmp.eq.s32.totalorder %s10, 0
    %p65 = por %p63, %p64
    %p66 = scmp.ne.s32.totalorder %s58, %s60
    %p67 = scmp.eq.s32.totalorder %s15, 3
    %p68 = por %p66, %p67
    %p69 = scmp.ne.s32.totalorder %s60, %s61
    %p70 = scmp.eq.s32.totalorder %s15, 0
    %p71 = por %p69, %p70
    %p72 = scmp.ne.s32.totalorder %s60, %s61
    %p73 = scmp.eq.s32.totalorder %s16, 3
    %p74 = por %p72, %p73
    %p76 = scmp.ne.s32.totalorder %s61, %s75
    %p77 = scmp.eq.s32.totalorder %s16, 0
    %p78 = por %p76, %p77
    %s80 = sadd.s32 %s79, 1
    %p83 = scmp.eq.s32.totalorder %s10, 3
    %p84 = scmp.ne.s32.totalorder %s79, %s81
    %p85 = scmp.eq.s32.totalorder %s10, 0
    %p86 = por %p84, %p85
    %p87 = scmp.ne.s32.totalorder %s79, %s81
    %p88 = scmp.eq.s32.totalorder %s15, 3
    %p89 = por %p87, %p88
    %p90 = scmp.ne.s32.totalorder %s81, %s82
    %p91 = scmp.eq.s32.totalorder %s15, 0
    %p92 = por %p90, %p91
    %p93 = scmp.ne.s32.totalorder %s81, %s82
    %p94 = scmp.eq.s32.totalorder %s16, 3
    %p95 = por %p93, %p94
    %p97 = scmp.ne.s32.totalorder %s82, %s96
    %p98 = scmp.eq.s32.totalorder %s16, 0
    %p99 = por %p97, %p98
    %s100 = ssub.s32 %s17, %s29
    %s101 = ssub.s32 %s18, %s25
    %s102 = sor.u32 %s100, %s101
    %p103 = scmp.eq.s32.totalorder %s102, 0
    %s105 = sadd.s32 %s104, 1
    %s106 = scalar_select %p103, %s104, %s105
    %p109 = pneg %p103
    %p110 = scmp.eq.s32.totalorder %s10, 3
    %p111 = por %p109, %p110
    %p112 = scmp.ne.s32.totalorder %s104, %s107
    %p113 = scmp.eq.s32.totalorder %s10, 0
    %p114 = por %p112, %p113
    %p115 = scmp.ne.s32.totalorder %s104, %s107
    %p116 = scmp.eq.s32.totalorder %s15, 3
    %p117 = por %p115, %p116
    %p118 = scmp.ne.s32.totalorder %s107, %s108
    %p119 = scmp.eq.s32.totalorder %s15, 0
    %p120 = por %p118, %p119
    %p121 = scmp.ne.s32.totalorder %s107, %s108
    %p122 = scmp.eq.s32.totalorder %s16, 3
    %p123 = por %p121, %p122
    %p125 = scmp.ne.s32.totalorder %s108, %s124
    %p126 = scmp.eq.s32.totalorder %s16, 0
    %p127 = por %p125, %p126
    %s128 = ssub.s32 %s17, %s29
    %s129 = ssub.s32 %s18, %s25
    %s130 = sor.u32 %s128, %s129
    %p131 = scmp.eq.s32.totalorder %s130, 0
    %s133 = sadd.s32 %s132, 1
    %s134 = scalar_select %p131, %s132, %s133
    %p137 = pneg %p131
    %p138 = scmp.eq.s32.totalorder %s10, 3
    %p139 = por %p137, %p138
    %p140 = scmp.ne.s32.totalorder %s132, %s135
    %p141 = scmp.eq.s32.totalorder %s10, 0
    %p142 = por %p140, %p141
    %p143 = scmp.ne.s32.totalorder %s132, %s135
    %p144 = scmp.eq.s32.totalorder %s15, 3
    %p145 = por %p143, %p144
    %p146 = scmp.ne.s32.totalorder %s135, %s136
    %p147 = scmp.eq.s32.totalorder %s15, 0
    %p148 = por %p146, %p147
    %p149 = scmp.ne.s32.totalorder %s135, %s136
    %p150 = scmp.eq.s32.totalorder %s16, 3
    %p151 = por %p149, %p150
    %p153 = scmp.ne.s32.totalorder %s136, %s152
    %p154 = scmp.eq.s32.totalorder %s16, 0
    %p155 = por %p153, %p154
    %p156 = scmp.le.s32.totalorder 1, %s10
    %p157 = scmp.lt.s32.totalorder %s10, 5
    %p158 = pnand %p156, %p157
    %p159 = pneg %p158
    // Predicated region
    $region9: #{sparse_block_series.4} parent=5 // pred_check
      _
    $region10: #{sparse_block_series.4} parent=5 // pred_check_branch
      %161 = sbr.rel (%p158) target = $region12
    $region11: #{sparse_block_series.4} parent=5 // pred_region
      %s162 = ssub.s32 %s10, 1
      // Predicated region
      $region13: #{sparse_block_series.4} parent=11 // pred_check
        %p163 = pneg %p71
      $region14: #{sparse_block_series.4} parent=11 // pred_check_branch
        %165 = sbr.rel (%p163) target = $region16
      $region15: #{sparse_block_series.4} parent=11 // pred_region
        _
      $region16: #{sparse_block_series.4} parent=11 // pred_fallthru
        _
      // Predicated region
      $region17: #{sparse_block_series.4} parent=11 // pred_check
        %p166 = pneg %p92
      $region18: #{sparse_block_series.4} parent=11 // pred_check_branch
        %168 = sbr.rel (%p166) target = $region20
      $region19: #{sparse_block_series.4} parent=11 // pred_region
        _
      $region20: #{sparse_block_series.4} parent=11 // pred_fallthru
        _
    $region12: #{sparse_block_series.4} parent=5 // pred_fallthru
      _
    %p169 = scmp.lt.s32.totalorder %s10, 4
    // Predicated region
    $region21: #{sparse_block_series.4} parent=5 // pred_check
      %p170 = pneg %p169
    $region22: #{sparse_block_series.4} parent=5 // pred_check_branch
      %172 = sbr.rel (%p170) target = $region24
    $region23: #{sparse_block_series.4} parent=5 // pred_region
      // Predicated region
      $region25: #{sparse_block_series.4} parent=23 // pred_check
        %p173 = pneg %p44
      $region26: #{sparse_block_series.4} parent=23 // pred_check_branch
        %175 = sbr.rel (%p173) target = $region28
      $region27: #{sparse_block_series.4} parent=23 // pred_region
        %p176 = scmp.lt.s32.totalorder %s17, 1
        %s177 = scalar_select %p176, %s17, 1
        %p178 = scmp.lt.s32.totalorder %s18, 1
        %s179 = scalar_select %p178, %s18, 1
        %s180 = smul.addr %s179, 88
        %s181 = smul.addr %s177, 176
        %s182 = sadd.s32 %s180, %s181
        %s183 = smul.addr %s182, 4
        %s184 = scalar_lea.vmem %s0, %s183
      $region28: #{sparse_block_series.4} parent=23 // pred_fallthru
        _
      // Predicated region
      $region29: #{sparse_block_series.4} parent=23 // pred_check
        %p185 = pneg %p114
      $region30: #{sparse_block_series.4} parent=23 // pred_check_branch
        %187 = sbr.rel (%p185) target = $region32
      $region31: #{sparse_block_series.4} parent=23 // pred_region
        %p188 = scmp.lt.s32.totalorder %s17, 1
        %s189 = scalar_select %p188, %s17, 1
        %p190 = scmp.lt.s32.totalorder %s18, 1
        %s191 = scalar_select %p190, %s18, 1
        %s192 = smul.addr %s191, 7
        %s193 = smul.addr %s189, 14
        %s194 = sadd.s32 %s192, %s193
        %s195 = smul.addr %s194, 4
        %s196 = scalar_lea.vmem %s3, %s195
      $region32: #{sparse_block_series.4} parent=23 // pred_fallthru
        _
    $region24: #{sparse_block_series.4} parent=5 // pred_fallthru
      _
    %p197 = scmp.le.s32.totalorder 1, %s10
    %p198 = scmp.lt.s32.totalorder %s10, 5
    %p199 = pnand %p197, %p198
    %p200 = pneg %p199
    // Predicated region
    $region33: #{sparse_block_series.4} parent=5 // pred_check
      _
    $region34: #{sparse_block_series.4} parent=5 // pred_check_branch
      %202 = sbr.rel (%p199) target = $region36
    $region35: #{sparse_block_series.4} parent=5 // pred_region
      %s203 = ssub.s32 %s10, 1
      %p204 = scmp.lt.s32.totalorder %s19, 1
      %s205 = scalar_select %p204, %s19, 1
      %p206 = scmp.lt.s32.totalorder %s20, 1
      %s207 = scalar_select %p206, %s20, 1
      %s208 = smul.addr %s207, 88
      %s209 = smul.addr %s205, 176
      %s210 = sadd.s32 %s208, %s209
      %s211 = smul.addr %s210, 4
      %s212 = scalar_lea.vmem %s0, %s211
      %p213 = pneg %p50
      %p214 = pneg %p47
      %p215 = pneg %p71
      %p216 = pneg %p68
      %p217 = pneg %p92
      %p218 = pneg %p89
      %p219 = scmp.lt.s32.totalorder %s19, 1
      %s220 = scalar_select %p219, %s19, 1
      %p221 = scmp.lt.s32.totalorder %s20, 1
      %s222 = scalar_select %p221, %s20, 1
      %s223 = smul.addr %s222, 7
      %s224 = smul.addr %s220, 14
      %s225 = sadd.s32 %s223, %s224
      %s226 = smul.addr %s225, 4
      %s227 = scalar_lea.vmem %s3, %s226
      %p228 = pneg %p120
      %p229 = pneg %p117
      %p230 = pneg %p148
      %p231 = pneg %p145
      %p232 = scmp.lt.s32.totalorder %s19, 1
      %s233 = scalar_select %p232, %s19, 1
      %p234 = scmp.lt.s32.totalorder %s20, 1
      %s235 = scalar_select %p234, %s20, 1
      %s236 = smul.addr %s235, 7
      %s237 = smul.addr %s233, 14
      %s238 = sadd.s32 %s236, %s237
      %s239 = smul.addr %s238, 4
      %s240 = scalar_lea.vmem %s4, %s239
      %p241 = scmp.lt.s32.totalorder %s19, 1
      %s242 = scalar_select %p241, %s19, 1
      %p243 = scmp.lt.s32.totalorder %s20, 1
      %s244 = scalar_select %p243, %s20, 1
      %s245 = smul.addr %s244, 88
      %s246 = smul.addr %s242, 176
      %s247 = sadd.s32 %s245, %s246
      %s248 = smul.addr %s247, 4
      %s249 = scalar_lea.vmem %s0, %s248
      %p250 = scmp.lt.s32.totalorder %s19, 1
      %s251 = scalar_select %p250, %s19, 1
      %p252 = scmp.lt.s32.totalorder %s20, 1
      %s253 = scalar_select %p252, %s20, 1
      %s254 = smul.addr %s253, 7
      %s255 = smul.addr %s251, 14
      %s256 = sadd.s32 %s254, %s255
      %s257 = smul.addr %s256, 4
      %s258 = scalar_lea.vmem %s3, %s257
      %p259 = scmp.lt.s32.totalorder %s19, 1
      %s260 = scalar_select %p259, %s19, 1
      %p261 = scmp.lt.s32.totalorder %s20, 1
      %s262 = scalar_select %p261, %s20, 1
      %s263 = smul.addr %s262, 7
      %s264 = smul.addr %s260, 14
      %s265 = sadd.s32 %s263, %s264
      %s266 = smul.addr %s265, 4
      %s267 = scalar_lea.vmem %s4, %s266
      %v269 = vld [vmem:[%s249] sm:$0xf]
      %v270 = vld [vmem:[%s249 + $0x4] sm:$0xf]
      %v271 = vld [vmem:[%s249 + $0x8] sm:$0xf]
      %v272 = vld [vmem:[%s249 + $0xc] sm:$0xf]
      %v273 = vld [vmem:[%s249 + $0x10] sm:$0xf]
      %v274 = vld [vmem:[%s249 + $0x14] sm:$0xf]
      %v275 = vld [vmem:[%s249 + $0x18] sm:$0xf]
      %v276 = vld [vmem:[%s249 + $0x1c] sm:$0xf]
      %v277 = vld [vmem:[%s249 + $0x20] sm:$0xf]
      %v278 = vld [vmem:[%s249 + $0x24] sm:$0xf]
      %v279 = vld [vmem:[%s249 + $0x28] sm:$0xf]
      %v280 = vld [vmem:[%s249 + $0x2c] sm:$0xf]
      %v281 = vld [vmem:[%s249 + $0x30] sm:$0xf]
      %v282 = vld [vmem:[%s249 + $0x34] sm:$0xf]
      %v283 = vld [vmem:[%s249 + $0x38] sm:$0xf]
      %v284 = vld [vmem:[%s249 + $0x3c] sm:$0xf]
      %v285 = vld [vmem:[%s249 + $0x40] sm:$0xf]
      %v286 = vld [vmem:[%s249 + $0x44] sm:$0xf]
      %v287 = vld [vmem:[%s249 + $0x48] sm:$0xf]
      %v288 = vld [vmem:[%s249 + $0x4c] sm:$0xf]
      %v289 = vld [vmem:[%s249 + $0x50] sm:$0xf]
      %v290 = vld [vmem:[%s249 + $0x54] sm:$0xf]
      %v291 = vld [vmem:[%s249 + $0x58] sm:$0xf]
      %v292 = vld [vmem:[%s249 + $0x5c] sm:$0xf]
      %v293 = vld [vmem:[%s249 + $0x60] sm:$0xf]
      %v294 = vld [vmem:[%s249 + $0x64] sm:$0xf]
      %v295 = vld [vmem:[%s249 + $0x68] sm:$0xf]
      %v296 = vld [vmem:[%s249 + $0x6c] sm:$0xf]
      %v297 = vld [vmem:[%s249 + $0x70] sm:$0xf]
      %v298 = vld [vmem:[%s249 + $0x74] sm:$0xf]
      %v299 = vld [vmem:[%s249 + $0x78] sm:$0xf]
      %v300 = vld [vmem:[%s249 + $0x7c] sm:$0xf]
      %v301 = vld [vmem:[%s249 + $0x80] sm:$0xf]
      %v302 = vld [vmem:[%s249 + $0x84] sm:$0xf]
      %v303 = vld [vmem:[%s249 + $0x88] sm:$0xf]
      %v304 = vld [vmem:[%s249 + $0x8c] sm:$0xf]
      %v305 = vld [vmem:[%s249 + $0x90] sm:$0xf]
      %v306 = vld [vmem:[%s249 + $0x94] sm:$0xf]
      %v307 = vld [vmem:[%s249 + $0x98] sm:$0xf]
      %v308 = vld [vmem:[%s249 + $0x9c] sm:$0xf]
      %v309 = vld [vmem:[%s249 + $0xa0] sm:$0xf]
      %v310 = vld [vmem:[%s249 + $0xa4] sm:$0xf]
      %v311 = vld [vmem:[%s249 + $0xa8] sm:$0xf]
      %v312 = vld [vmem:[%s249 + $0xac] sm:$0xf]
      %v313 = vld [vmem:[%s249 + $0xb0] sm:$0xf]
      %v314 = vld [vmem:[%s249 + $0xb4] sm:$0xf]
      %v315 = vld [vmem:[%s249 + $0xb8] sm:$0xf]
      %v316 = vld [vmem:[%s249 + $0xbc] sm:$0xf]
      %v317 = vld [vmem:[%s249 + $0xc0] sm:$0xf]
      %v318 = vld [vmem:[%s249 + $0xc4] sm:$0xf]
      %v319 = vld [vmem:[%s249 + $0xc8] sm:$0xf]
      %v320 = vld [vmem:[%s249 + $0xcc] sm:$0xf]
      %v321 = vld [vmem:[%s249 + $0xd0] sm:$0xf]
      %v322 = vld [vmem:[%s249 + $0xd4] sm:$0xf]
      %v323 = vld [vmem:[%s249 + $0xd8] sm:$0xf]
      %v324 = vld [vmem:[%s249 + $0xdc] sm:$0xf]
      %v325 = vld [vmem:[%s249 + $0xe0] sm:$0xf]
      %v326 = vld [vmem:[%s249 + $0xe4] sm:$0xf]
      %v327 = vld [vmem:[%s249 + $0xe8] sm:$0xf]
      %v328 = vld [vmem:[%s249 + $0xec] sm:$0xf]
      %v329 = vld [vmem:[%s249 + $0xf0] sm:$0xf]
      %v330 = vld [vmem:[%s249 + $0xf4] sm:$0xf]
      %v331 = vld [vmem:[%s249 + $0xf8] sm:$0xf]
      %v332 = vld [vmem:[%s249 + $0xfc] sm:$0xf]
      %v333 = vld [vmem:[%s249 + $0x100] sm:$0xf]
      %v334 = vld [vmem:[%s249 + $0x104] sm:$0xf]
      %v335 = vld [vmem:[%s249 + $0x108] sm:$0xf]
      %v336 = vld [vmem:[%s249 + $0x10c] sm:$0xf]
      %v337 = vld [vmem:[%s249 + $0x110] sm:$0xf]
      %v338 = vld [vmem:[%s249 + $0x114] sm:$0xf]
      %v339 = vld [vmem:[%s249 + $0x118] sm:$0xf]
      %v340 = vld [vmem:[%s249 + $0x11c] sm:$0xf]
      %v341 = vld [vmem:[%s249 + $0x120] sm:$0xf]
      %v342 = vld [vmem:[%s249 + $0x124] sm:$0xf]
      %v343 = vld [vmem:[%s249 + $0x128] sm:$0xf]
      %v344 = vld [vmem:[%s249 + $0x12c] sm:$0xf]
      %v345 = vld [vmem:[%s249 + $0x130] sm:$0xf]
      %v346 = vld [vmem:[%s249 + $0x134] sm:$0xf]
      %v397 = vunpack.c.l.b16 %v269
      %v398 = vunpack.c.l.b16 %v270
      %v399 = vunpack.c.l.b16 %v271
      %v400 = vunpack.c.l.b16 %v272
      %v401 = vunpack.c.l.b16 %v273
      %v402 = vunpack.c.l.b16 %v274
      %v403 = vunpack.c.l.b16 %v275
      %v404 = vunpack.c.l.b16 %v276
      %v405 = vunpack.c.l.b16 %v277
      %v406 = vunpack.c.l.b16 %v278
      %v407 = vunpack.c.l.b16 %v279
      %v408 = vunpack.c.l.b16 %v280
      %v409 = vunpack.c.l.b16 %v281
      %v410 = vunpack.c.l.b16 %v282
      %v411 = vunpack.c.l.b16 %v283
      %v412 = vunpack.c.l.b16 %v284
      %v413 = vunpack.c.l.b16 %v285
      %v414 = vunpack.c.l.b16 %v286
      %v415 = vunpack.c.l.b16 %v287
      %v416 = vunpack.c.l.b16 %v288
      %v417 = vunpack.c.l.b16 %v289
      %v418 = vunpack.c.l.b16 %v290
      %v419 = vunpack.c.l.b16 %v291
      %v420 = vunpack.c.l.b16 %v292
      %v421 = vunpack.c.l.b16 %v293
      %v422 = vunpack.c.l.b16 %v294
      %v423 = vunpack.c.l.b16 %v295
      %v424 = vunpack.c.l.b16 %v296
      %v425 = vunpack.c.l.b16 %v297
      %v426 = vunpack.c.l.b16 %v298
      %v427 = vunpack.c.l.b16 %v299
      %v428 = vunpack.c.l.b16 %v300
      %v429 = vunpack.c.l.b16 %v301
      %v430 = vunpack.c.l.b16 %v302
      %v431 = vunpack.c.l.b16 %v303
      %v432 = vunpack.c.l.b16 %v304
      %v433 = vunpack.c.l.b16 %v305
      %v434 = vunpack.c.l.b16 %v306
      %v435 = vunpack.c.l.b16 %v307
      %v436 = vunpack.c.l.b16 %v308
      %v437 = vunpack.c.l.b16 %v309
      %v438 = vunpack.c.l.b16 %v310
      %v439 = vunpack.c.l.b16 %v311
      %v440 = vunpack.c.l.b16 %v312
      %v441 = vunpack.c.l.b16 %v313
      %v442 = vunpack.c.l.b16 %v314
      %v443 = vunpack.c.l.b16 %v315
      %v444 = vunpack.c.l.b16 %v316
      %v445 = vunpack.c.l.b16 %v317
      %v446 = vunpack.c.l.b16 %v318
      %v447 = vpack.c.b16 %v398, %v397
      %v448 = vpack.c.b16 %v400, %v399
      %v449 = vpack.c.b16 %v402, %v401
      %v450 = vpack.c.b16 %v404, %v403
      %v451 = vpack.c.b16 %v406, %v405
      %v452 = vpack.c.b16 %v408, %v407
      %v453 = vpack.c.b16 %v410, %v409
      %v454 = vpack.c.b16 %v412, %v411
      %v455 = vpack.c.b16 %v414, %v413
      %v456 = vpack.c.b16 %v416, %v415
      %v457 = vpack.c.b16 %v418, %v417
      %v458 = vpack.c.b16 %v420, %v419
      %v459 = vpack.c.b16 %v422, %v421
      %v460 = vpack.c.b16 %v424, %v423
      %v461 = vpack.c.b16 %v426, %v425
      %v462 = vpack.c.b16 %v428, %v427
      %v463 = vpack.c.b16 %v430, %v429
      %v464 = vpack.c.b16 %v432, %v431
      %v465 = vpack.c.b16 %v434, %v433
      %v466 = vpack.c.b16 %v436, %v435
      %v467 = vpack.c.b16 %v438, %v437
      %v468 = vpack.c.b16 %v440, %v439
      %v469 = vpack.c.b16 %v442, %v441
      %v470 = vpack.c.b16 %v444, %v443
      %v471 = vpack.c.b16 %v446, %v445
      %v473 = vunpack.c.l.b16 %v319
      %v474 = vpack.c.b16 %v473, %v473
      %vm475 = vsmask.f32 7424
      %v477 = vshrl.u32 %v447, 16
      %v479 = vshll.u32 %v447, 16
      %v481 = vrot.slane %v479, 1
      %v482 = vor.u32 %v477, %v481
      %v484 = vshll.u32 %v448, 16
      %v486 = vrot.slane %v484, 1
      %v487 = vsel %vm475, %v482, %v486
      %v488 = vshrl.u32 %v448, 16
      %v490 = vor.u32 %v488, %v486
      %v492 = vshll.u32 %v449, 16
      %v494 = vrot.slane %v492, 1
      %v495 = vsel %vm475, %v490, %v494
      %v496 = vshrl.u32 %v449, 16
      %v498 = vor.u32 %v496, %v494
      %v500 = vshll.u32 %v450, 16
      %v502 = vrot.slane %v500, 1
      %v503 = vsel %vm475, %v498, %v502
      %v504 = vshrl.u32 %v450, 16
      %v506 = vor.u32 %v504, %v502
      %v508 = vshll.u32 %v451, 16
      %v510 = vrot.slane %v508, 1
      %v511 = vsel %vm475, %v506, %v510
      %v512 = vshrl.u32 %v451, 16
      %v514 = vor.u32 %v512, %v510
      %v516 = vshll.u32 %v452, 16
      %v518 = vrot.slane %v516, 1
      %v519 = vsel %vm475, %v514, %v518
      %v520 = vshrl.u32 %v452, 16
      %v522 = vor.u32 %v520, %v518
      %v524 = vshll.u32 %v453, 16
      %v526 = vrot.slane %v524, 1
      %v527 = vsel %vm475, %v522, %v526
      %v528 = vshrl.u32 %v453, 16
      %v530 = vor.u32 %v528, %v526
      %v532 = vshll.u32 %v454, 16
      %v534 = vrot.slane %v532, 1
      %v535 = vsel %vm475, %v530, %v534
      %v536 = vshrl.u32 %v454, 16
      %v538 = vor.u32 %v536, %v534
      %v540 = vshll.u32 %v455, 16
      %v542 = vrot.slane %v540, 1
      %v543 = vsel %vm475, %v538, %v542
      %v544 = vshrl.u32 %v455, 16
      %v546 = vor.u32 %v544, %v542
      %v548 = vshll.u32 %v456, 16
      %v550 = vrot.slane %v548, 1
      %v551 = vsel %vm475, %v546, %v550
      %v552 = vshrl.u32 %v456, 16
      %v554 = vor.u32 %v552, %v550
      %v556 = vshll.u32 %v457, 16
      %v558 = vrot.slane %v556, 1
      %v559 = vsel %vm475, %v554, %v558
      %v560 = vshrl.u32 %v457, 16
      %v562 = vor.u32 %v560, %v558
      %v564 = vshll.u32 %v458, 16
      %v566 = vrot.slane %v564, 1
      %v567 = vsel %vm475, %v562, %v566
      %v568 = vshrl.u32 %v458, 16
      %v570 = vor.u32 %v568, %v566
      %v572 = vshll.u32 %v459, 16
      %v574 = vrot.slane %v572, 1
      %v575 = vsel %vm475, %v570, %v574
      %v576 = vshrl.u32 %v459, 16
      %v578 = vor.u32 %v576, %v574
      %v580 = vshll.u32 %v460, 16
      %v582 = vrot.slane %v580, 1
      %v583 = vsel %vm475, %v578, %v582
      %v584 = vshrl.u32 %v460, 16
      %v586 = vor.u32 %v584, %v582
      %v588 = vshll.u32 %v461, 16
      %v590 = vrot.slane %v588, 1
      %v591 = vsel %vm475, %v586, %v590
      %v592 = vshrl.u32 %v461, 16
      %v594 = vor.u32 %v592, %v590
      %v596 = vshll.u32 %v462, 16
      %v598 = vrot.slane %v596, 1
      %v599 = vsel %vm475, %v594, %v598
      %v600 = vshrl.u32 %v462, 16
      %v602 = vor.u32 %v600, %v598
      %v604 = vshll.u32 %v463, 16
      %v606 = vrot.slane %v604, 1
      %v607 = vsel %vm475, %v602, %v606
      %v608 = vshrl.u32 %v463, 16
      %v610 = vor.u32 %v608, %v606
      %v612 = vshll.u32 %v464, 16
      %v614 = vrot.slane %v612, 1
      %v615 = vsel %vm475, %v610, %v614
      %v616 = vshrl.u32 %v464, 16
      %v618 = vor.u32 %v616, %v614
      %v620 = vshll.u32 %v465, 16
      %v622 = vrot.slane %v620, 1
      %v623 = vsel %vm475, %v618, %v622
      %v624 = vshrl.u32 %v465, 16
      %v626 = vor.u32 %v624, %v622
      %v628 = vshll.u32 %v466, 16
      %v630 = vrot.slane %v628, 1
      %v631 = vsel %vm475, %v626, %v630
      %v632 = vshrl.u32 %v466, 16
      %v634 = vor.u32 %v632, %v630
      %v636 = vshll.u32 %v467, 16
      %v638 = vrot.slane %v636, 1
      %v639 = vsel %vm475, %v634, %v638
      %v640 = vshrl.u32 %v467, 16
      %v642 = vor.u32 %v640, %v638
      %v644 = vshll.u32 %v468, 16
      %v646 = vrot.slane %v644, 1
      %v647 = vsel %vm475, %v642, %v646
      %v648 = vshrl.u32 %v468, 16
      %v650 = vor.u32 %v648, %v646
      %v652 = vshll.u32 %v469, 16
      %v654 = vrot.slane %v652, 1
      %v655 = vsel %vm475, %v650, %v654
      %v656 = vshrl.u32 %v469, 16
      %v658 = vor.u32 %v656, %v654
      %v660 = vshll.u32 %v470, 16
      %v662 = vrot.slane %v660, 1
      %v663 = vsel %vm475, %v658, %v662
      %v664 = vshrl.u32 %v470, 16
      %v666 = vor.u32 %v664, %v662
      %v668 = vshll.u32 %v471, 16
      %v670 = vrot.slane %v668, 1
      %v671 = vsel %vm475, %v666, %v670
      %v672 = vshrl.u32 %v471, 16
      %v674 = vor.u32 %v672, %v670
      %v676 = vshll.u32 %v474, 16
      %v678 = vrot.slane %v676, 1
      %v679 = vsel %vm475, %v674, %v678
      %680 = vrot.lane.b32.xlu0 %v487, 16
      %v681 = vpop.permute.xlu0 %680
      %682 = vrot.lane.b32.xlu0 %v495, 16
      %v683 = vpop.permute.xlu0 %682
      %684 = vrot.lane.b32.xlu0 %v503, 16
      %v685 = vpop.permute.xlu0 %684
      %686 = vrot.lane.b32.xlu0 %v511, 16
      %v687 = vpop.permute.xlu0 %686
      %688 = vrot.lane.b32.xlu0 %v519, 16
      %v689 = vpop.permute.xlu0 %688
      %690 = vrot.lane.b32.xlu0 %v527, 16
      %v691 = vpop.permute.xlu0 %690
      %692 = vrot.lane.b32.xlu0 %v535, 16
      %v693 = vpop.permute.xlu0 %692
      %694 = vrot.lane.b32.xlu0 %v543, 16
      %v695 = vpop.permute.xlu0 %694
      %696 = vrot.lane.b32.xlu0 %v551, 16
      %v697 = vpop.permute.xlu0 %696
      %698 = vrot.lane.b32.xlu0 %v559, 16
      %v699 = vpop.permute.xlu0 %698
      %700 = vrot.lane.b32.xlu0 %v567, 16
      %v701 = vpop.permute.xlu0 %700
      %702 = vrot.lane.b32.xlu0 %v575, 16
      %v703 = vpop.permute.xlu0 %702
      %704 = vrot.lane.b32.xlu0 %v583, 16
      %v705 = vpop.permute.xlu0 %704
      %706 = vrot.lane.b32.xlu0 %v591, 16
      %v707 = vpop.permute.xlu0 %706
      %708 = vrot.lane.b32.xlu0 %v599, 16
      %v709 = vpop.permute.xlu0 %708
      %710 = vrot.lane.b32.xlu0 %v607, 16
      %v711 = vpop.permute.xlu0 %710
      %712 = vrot.lane.b32.xlu0 %v615, 16
      %v713 = vpop.permute.xlu0 %712
      %714 = vrot.lane.b32.xlu0 %v623, 16
      %v715 = vpop.permute.xlu0 %714
      %716 = vrot.lane.b32.xlu0 %v631, 16
      %v717 = vpop.permute.xlu0 %716
      %718 = vrot.lane.b32.xlu0 %v639, 16
      %v719 = vpop.permute.xlu0 %718
      %720 = vrot.lane.b32.xlu0 %v647, 16
      %v721 = vpop.permute.xlu0 %720
      %722 = vrot.lane.b32.xlu0 %v655, 16
      %v723 = vpop.permute.xlu0 %722
      %724 = vrot.lane.b32.xlu0 %v663, 16
      %v725 = vpop.permute.xlu0 %724
      %726 = vrot.lane.b32.xlu0 %v671, 16
      %v727 = vpop.permute.xlu0 %726
      %728 = vrot.lane.b32.xlu0 %v679, 16
      %v729 = vpop.permute.xlu0 %728
      %vm730 = vcmask 1046528
      %v731 = vrot.slane %v447, 1
      %v732 = vrot.slane %v448, 1
      %v733 = vsel %vm730, %v731, %v732
      %v734 = vrot.slane %v449, 1
      %v735 = vsel %vm730, %v732, %v734
      %v736 = vrot.slane %v450, 1
      %v737 = vsel %vm730, %v734, %v736
      %v738 = vrot.slane %v451, 1
      %v739 = vsel %vm730, %v736, %v738
      %v740 = vrot.slane %v452, 1
      %v741 = vsel %vm730, %v738, %v740
      %v742 = vrot.slane %v453, 1
      %v743 = vsel %vm730, %v740, %v742
      %v744 = vrot.slane %v454, 1
      %v745 = vsel %vm730, %v742, %v744
      %v746 = vrot.slane %v455, 1
      %v747 = vsel %vm730, %v744, %v746
      %v748 = vrot.slane %v456, 1
      %v749 = vsel %vm730, %v746, %v748
      %v750 = vrot.slane %v457, 1
      %v751 = vsel %vm730, %v748, %v750
      %v752 = vrot.slane %v458, 1
      %v753 = vsel %vm730, %v750, %v752
      %v754 = vrot.slane %v459, 1
      %v755 = vsel %vm730, %v752, %v754
      %v756 = vrot.slane %v460, 1
      %v757 = vsel %vm730, %v754, %v756
      %v758 = vrot.slane %v461, 1
      %v759 = vsel %vm730, %v756, %v758
      %v760 = vrot.slane %v462, 1
      %v761 = vsel %vm730, %v758, %v760
      %v762 = vrot.slane %v463, 1
      %v763 = vsel %vm730, %v760, %v762
      %v764 = vrot.slane %v464, 1
      %v765 = vsel %vm730, %v762, %v764
      %v766 = vrot.slane %v465, 1
      %v767 = vsel %vm730, %v764, %v766
      %v768 = vrot.slane %v466, 1
      %v769 = vsel %vm730, %v766, %v768
      %v770 = vrot.slane %v467, 1
      %v771 = vsel %vm730, %v768, %v770
      %v772 = vrot.slane %v468, 1
      %v773 = vsel %vm730, %v770, %v772
      %v774 = vrot.slane %v469, 1
      %v775 = vsel %vm730, %v772, %v774
      %v776 = vrot.slane %v470, 1
      %v777 = vsel %vm730, %v774, %v776
      %v778 = vrot.slane %v471, 1
      %v779 = vsel %vm730, %v776, %v778
      %v780 = vrot.slane %v474, 1
      %v781 = vsel %vm730, %v778, %v780
      %782 = vrot.lane.b32.xlu0 %v733, 32
      %v783 = vpop.permute.xlu0 %782
      %784 = vrot.lane.b32.xlu0 %v735, 32
      %v785 = vpop.permute.xlu0 %784
      %786 = vrot.lane.b32.xlu0 %v737, 32
      %v787 = vpop.permute.xlu0 %786
      %788 = vrot.lane.b32.xlu0 %v739, 32
      %v789 = vpop.permute.xlu0 %788
      %790 = vrot.lane.b32.xlu0 %v741, 32
      %v791 = vpop.permute.xlu0 %790
      %792 = vrot.lane.b32.xlu0 %v743, 32
      %v793 = vpop.permute.xlu0 %792
      %794 = vrot.lane.b32.xlu0 %v745, 32
      %v795 = vpop.permute.xlu0 %794
      %796 = vrot.lane.b32.xlu0 %v747, 32
      %v797 = vpop.permute.xlu0 %796
      %798 = vrot.lane.b32.xlu0 %v749, 32
      %v799 = vpop.permute.xlu0 %798
      %800 = vrot.lane.b32.xlu0 %v751, 32
      %v801 = vpop.permute.xlu0 %800
      %802 = vrot.lane.b32.xlu0 %v753, 32
      %v803 = vpop.permute.xlu0 %802
      %804 = vrot.lane.b32.xlu0 %v755, 32
      %v805 = vpop.permute.xlu0 %804
      %806 = vrot.lane.b32.xlu0 %v757, 32
      %v807 = vpop.permute.xlu0 %806
      %808 = vrot.lane.b32.xlu0 %v759, 32
      %v809 = vpop.permute.xlu0 %808
      %810 = vrot.lane.b32.xlu0 %v761, 32
      %v811 = vpop.permute.xlu0 %810
      %812 = vrot.lane.b32.xlu0 %v763, 32
      %v813 = vpop.permute.xlu0 %812
      %814 = vrot.lane.b32.xlu0 %v765, 32
      %v815 = vpop.permute.xlu0 %814
      %816 = vrot.lane.b32.xlu0 %v767, 32
      %v817 = vpop.permute.xlu0 %816
      %818 = vrot.lane.b32.xlu0 %v769, 32
      %v819 = vpop.permute.xlu0 %818
      %820 = vrot.lane.b32.xlu0 %v771, 32
      %v821 = vpop.permute.xlu0 %820
      %822 = vrot.lane.b32.xlu0 %v773, 32
      %v823 = vpop.permute.xlu0 %822
      %824 = vrot.lane.b32.xlu0 %v775, 32
      %v825 = vpop.permute.xlu0 %824
      %826 = vrot.lane.b32.xlu0 %v777, 32
      %v827 = vpop.permute.xlu0 %826
      %828 = vrot.lane.b32.xlu0 %v779, 32
      %v829 = vpop.permute.xlu0 %828
      %830 = vrot.lane.b32.xlu0 %v781, 32
      %v831 = vpop.permute.xlu0 %830
      %v833 = vunpack.c.l.b16 %v320
      %v834 = vpack.c.b16 %v399, %v398
      %v835 = vpack.c.b16 %v401, %v400
      %v836 = vpack.c.b16 %v403, %v402
      %v837 = vpack.c.b16 %v405, %v404
      %v838 = vpack.c.b16 %v407, %v406
      %v839 = vpack.c.b16 %v409, %v408
      %v840 = vpack.c.b16 %v411, %v410
      %v841 = vpack.c.b16 %v413, %v412
      %v842 = vpack.c.b16 %v415, %v414
      %v843 = vpack.c.b16 %v417, %v416
      %v844 = vpack.c.b16 %v419, %v418
      %v845 = vpack.c.b16 %v421, %v420
      %v846 = vpack.c.b16 %v423, %v422
      %v847 = vpack.c.b16 %v425, %v424
      %v848 = vpack.c.b16 %v427, %v426
      %v849 = vpack.c.b16 %v429, %v428
      %v850 = vpack.c.b16 %v431, %v430
      %v851 = vpack.c.b16 %v433, %v432
      %v852 = vpack.c.b16 %v435, %v434
      %v853 = vpack.c.b16 %v437, %v436
      %v854 = vpack.c.b16 %v439, %v438
      %v855 = vpack.c.b16 %v441, %v440
      %v856 = vpack.c.b16 %v443, %v442
      %v857 = vpack.c.b16 %v445, %v444
      %v858 = vpack.c.b16 %v473, %v446
      %v859 = vpack.c.b16 %v833, %v833
      %v860 = vrot.slane %v834, 1
      %v861 = vrot.slane %v835, 1
      %v862 = vsel %vm730, %v860, %v861
      %v863 = vrot.slane %v836, 1
      %v864 = vsel %vm730, %v861, %v863
      %v865 = vrot.slane %v837, 1
      %v866 = vsel %vm730, %v863, %v865
      %v867 = vrot.slane %v838, 1
      %v868 = vsel %vm730, %v865, %v867
      %v869 = vrot.slane %v839, 1
      %v870 = vsel %vm730, %v867, %v869
      %v871 = vrot.slane %v840, 1
      %v872 = vsel %vm730, %v869, %v871
      %v873 = vrot.slane %v841, 1
      %v874 = vsel %vm730, %v871, %v873
      %v875 = vrot.slane %v842, 1
      %v876 = vsel %vm730, %v873, %v875
      %v877 = vrot.slane %v843, 1
      %v878 = vsel %vm730, %v875, %v877
      %v879 = vrot.slane %v844, 1
      %v880 = vsel %vm730, %v877, %v879
      %v881 = vrot.slane %v845, 1
      %v882 = vsel %vm730, %v879, %v881
      %v883 = vrot.slane %v846, 1
      %v884 = vsel %vm730, %v881, %v883
      %v885 = vrot.slane %v847, 1
      %v886 = vsel %vm730, %v883, %v885
      %v887 = vrot.slane %v848, 1
      %v888 = vsel %vm730, %v885, %v887
      %v889 = vrot.slane %v849, 1
      %v890 = vsel %vm730, %v887, %v889
      %v891 = vrot.slane %v850, 1
      %v892 = vsel %vm730, %v889, %v891
      %v893 = vrot.slane %v851, 1
      %v894 = vsel %vm730, %v891, %v893
      %v895 = vrot.slane %v852, 1
      %v896 = vsel %vm730, %v893, %v895
      %v897 = vrot.slane %v853, 1
      %v898 = vsel %vm730, %v895, %v897
      %v899 = vrot.slane %v854, 1
      %v900 = vsel %vm730, %v897, %v899
      %v901 = vrot.slane %v855, 1
      %v902 = vsel %vm730, %v899, %v901
      %v903 = vrot.slane %v856, 1
      %v904 = vsel %vm730, %v901, %v903
      %v905 = vrot.slane %v857, 1
      %v906 = vsel %vm730, %v903, %v905
      %v907 = vrot.slane %v858, 1
      %v908 = vsel %vm730, %v905, %v907
      %v909 = vrot.slane %v859, 1
      %v910 = vsel %vm730, %v907, %v909
      %911 = vrot.lane.b32.xlu0 %v862, 48
      %v912 = vpop.permute.xlu0 %911
      %913 = vrot.lane.b32.xlu0 %v864, 48
      %v914 = vpop.permute.xlu0 %913
      %915 = vrot.lane.b32.xlu0 %v866, 48
      %v916 = vpop.permute.xlu0 %915
      %917 = vrot.lane.b32.xlu0 %v868, 48
      %v918 = vpop.permute.xlu0 %917
      %919 = vrot.lane.b32.xlu0 %v870, 48
      %v920 = vpop.permute.xlu0 %919
      %921 = vrot.lane.b32.xlu0 %v872, 48
      %v922 = vpop.permute.xlu0 %921
      %923 = vrot.lane.b32.xlu0 %v874, 48
      %v924 = vpop.permute.xlu0 %923
      %925 = vrot.lane.b32.xlu0 %v876, 48
      %v926 = vpop.permute.xlu0 %925
      %927 = vrot.lane.b32.xlu0 %v878, 48
      %v928 = vpop.permute.xlu0 %927
      %929 = vrot.lane.b32.xlu0 %v880, 48
      %v930 = vpop.permute.xlu0 %929
      %931 = vrot.lane.b32.xlu0 %v882, 48
      %v932 = vpop.permute.xlu0 %931
      %933 = vrot.lane.b32.xlu0 %v884, 48
      %v934 = vpop.permute.xlu0 %933
      %935 = vrot.lane.b32.xlu0 %v886, 48
      %v936 = vpop.permute.xlu0 %935
      %937 = vrot.lane.b32.xlu0 %v888, 48
      %v938 = vpop.permute.xlu0 %937
      %939 = vrot.lane.b32.xlu0 %v890, 48
      %v940 = vpop.permute.xlu0 %939
      %941 = vrot.lane.b32.xlu0 %v892, 48
      %v942 = vpop.permute.xlu0 %941
      %943 = vrot.lane.b32.xlu0 %v894, 48
      %v944 = vpop.permute.xlu0 %943
      %945 = vrot.lane.b32.xlu0 %v896, 48
      %v946 = vpop.permute.xlu0 %945
      %947 = vrot.lane.b32.xlu0 %v898, 48
      %v948 = vpop.permute.xlu0 %947
      %949 = vrot.lane.b32.xlu0 %v900, 48
      %v950 = vpop.permute.xlu0 %949
      %951 = vrot.lane.b32.xlu0 %v902, 48
      %v952 = vpop.permute.xlu0 %951
      %953 = vrot.lane.b32.xlu0 %v904, 48
      %v954 = vpop.permute.xlu0 %953
      %955 = vrot.lane.b32.xlu0 %v906, 48
      %v956 = vpop.permute.xlu0 %955
      %957 = vrot.lane.b32.xlu0 %v908, 48
      %v958 = vpop.permute.xlu0 %957
      %959 = vrot.lane.b32.xlu0 %v910, 48
      %v960 = vpop.permute.xlu0 %959
      %vm961 = vsmask.f32 6400
      %v963 = vshrl.u32 %v834, 16
      %v965 = vrot.slane %v963, 1
      %v966 = vshll.u32 %v834, 16
      %v968 = vrot.slane %v966, 2
      %v969 = vor.u32 %v965, %v968
      %v971 = vshrl.u32 %v835, 16
      %v973 = vrot.slane %v971, 1
      %v974 = vshll.u32 %v835, 16
      %v976 = vrot.slane %v974, 2
      %v977 = vor.u32 %v973, %v976
      %v978 = vsel %vm961, %v969, %v977
      %v980 = vshrl.u32 %v836, 16
      %v982 = vrot.slane %v980, 1
      %v983 = vshll.u32 %v836, 16
      %v985 = vrot.slane %v983, 2
      %v986 = vor.u32 %v982, %v985
      %v987 = vsel %vm961, %v977, %v986
      %v989 = vshrl.u32 %v837, 16
      %v991 = vrot.slane %v989, 1
      %v992 = vshll.u32 %v837, 16
      %v994 = vrot.slane %v992, 2
      %v995 = vor.u32 %v991, %v994
      %v996 = vsel %vm961, %v986, %v995
      %v998 = vshrl.u32 %v838, 16
      %v1000 = vrot.slane %v998, 1
      %v1001 = vshll.u32 %v838, 16
      %v1003 = vrot.slane %v1001, 2
      %v1004 = vor.u32 %v1000, %v1003
      %v1005 = vsel %vm961, %v995, %v1004
      %v1007 = vshrl.u32 %v839, 16
      %v1009 = vrot.slane %v1007, 1
      %v1010 = vshll.u32 %v839, 16
      %v1012 = vrot.slane %v1010, 2
      %v1013 = vor.u32 %v1009, %v1012
      %v1014 = vsel %vm961, %v1004, %v1013
      %v1016 = vshrl.u32 %v840, 16
      %v1018 = vrot.slane %v1016, 1
      %v1019 = vshll.u32 %v840, 16
      %v1021 = vrot.slane %v1019, 2
      %v1022 = vor.u32 %v1018, %v1021
      %v1023 = vsel %vm961, %v1013, %v1022
      %v1025 = vshrl.u32 %v841, 16
      %v1027 = vrot.slane %v1025, 1
      %v1028 = vshll.u32 %v841, 16
      %v1030 = vrot.slane %v1028, 2
      %v1031 = vor.u32 %v1027, %v1030
      %v1032 = vsel %vm961, %v1022, %v1031
      %v1034 = vshrl.u32 %v842, 16
      %v1036 = vrot.slane %v1034, 1
      %v1037 = vshll.u32 %v842, 16
      %v1039 = vrot.slane %v1037, 2
      %v1040 = vor.u32 %v1036, %v1039
      %v1041 = vsel %vm961, %v1031, %v1040
      %v1043 = vshrl.u32 %v843, 16
      %v1045 = vrot.slane %v1043, 1
      %v1046 = vshll.u32 %v843, 16
      %v1048 = vrot.slane %v1046, 2
      %v1049 = vor.u32 %v1045, %v1048
      %v1050 = vsel %vm961, %v1040, %v1049
      %v1052 = vshrl.u32 %v844, 16
      %v1054 = vrot.slane %v1052, 1
      %v1055 = vshll.u32 %v844, 16
      %v1057 = vrot.slane %v1055, 2
      %v1058 = vor.u32 %v1054, %v1057
      %v1059 = vsel %vm961, %v1049, %v1058
      %v1061 = vshrl.u32 %v845, 16
      %v1063 = vrot.slane %v1061, 1
      %v1064 = vshll.u32 %v845, 16
      %v1066 = vrot.slane %v1064, 2
      %v1067 = vor.u32 %v1063, %v1066
      %v1068 = vsel %vm961, %v1058, %v1067
      %v1070 = vshrl.u32 %v846, 16
      %v1072 = vrot.slane %v1070, 1
      %v1073 = vshll.u32 %v846, 16
      %v1075 = vrot.slane %v1073, 2
      %v1076 = vor.u32 %v1072, %v1075
      %v1077 = vsel %vm961, %v1067, %v1076
      %v1079 = vshrl.u32 %v847, 16
      %v1081 = vrot.slane %v1079, 1
      %v1082 = vshll.u32 %v847, 16
      %v1084 = vrot.slane %v1082, 2
      %v1085 = vor.u32 %v1081, %v1084
      %v1086 = vsel %vm961, %v1076, %v1085
      %v1088 = vshrl.u32 %v848, 16
      %v1090 = vrot.slane %v1088, 1
      %v1091 = vshll.u32 %v848, 16
      %v1093 = vrot.slane %v1091, 2
      %v1094 = vor.u32 %v1090, %v1093
      %v1095 = vsel %vm961, %v1085, %v1094
      %v1097 = vshrl.u32 %v849, 16
      %v1099 = vrot.slane %v1097, 1
      %v1100 = vshll.u32 %v849, 16
      %v1102 = vrot.slane %v1100, 2
      %v1103 = vor.u32 %v1099, %v1102
      %v1104 = vsel %vm961, %v1094, %v1103
      %v1106 = vshrl.u32 %v850, 16
      %v1108 = vrot.slane %v1106, 1
      %v1109 = vshll.u32 %v850, 16
      %v1111 = vrot.slane %v1109, 2
      %v1112 = vor.u32 %v1108, %v1111
      %v1113 = vsel %vm961, %v1103, %v1112
      %v1115 = vshrl.u32 %v851, 16
      %v1117 = vrot.slane %v1115, 1
      %v1118 = vshll.u32 %v851, 16
      %v1120 = vrot.slane %v1118, 2
      %v1121 = vor.u32 %v1117, %v1120
      %v1122 = vsel %vm961, %v1112, %v1121
      %v1124 = vshrl.u32 %v852, 16
      %v1126 = vrot.slane %v1124, 1
      %v1127 = vshll.u32 %v852, 16
      %v1129 = vrot.slane %v1127, 2
      %v1130 = vor.u32 %v1126, %v1129
      %v1131 = vsel %vm961, %v1121, %v1130
      %v1133 = vshrl.u32 %v853, 16
      %v1135 = vrot.slane %v1133, 1
      %v1136 = vshll.u32 %v853, 16
      %v1138 = vrot.slane %v1136, 2
      %v1139 = vor.u32 %v1135, %v1138
      %v1140 = vsel %vm961, %v1130, %v1139
      %v1142 = vshrl.u32 %v854, 16
      %v1144 = vrot.slane %v1142, 1
      %v1145 = vshll.u32 %v854, 16
      %v1147 = vrot.slane %v1145, 2
      %v1148 = vor.u32 %v1144, %v1147
      %v1149 = vsel %vm961, %v1139, %v1148
      %v1151 = vshrl.u32 %v855, 16
      %v1153 = vrot.slane %v1151, 1
      %v1154 = vshll.u32 %v855, 16
      %v1156 = vrot.slane %v1154, 2
      %v1157 = vor.u32 %v1153, %v1156
      %v1158 = vsel %vm961, %v1148, %v1157
      %v1160 = vshrl.u32 %v856, 16
      %v1162 = vrot.slane %v1160, 1
      %v1163 = vshll.u32 %v856, 16
      %v1165 = vrot.slane %v1163, 2
      %v1166 = vor.u32 %v1162, %v1165
      %v1167 = vsel %vm961, %v1157, %v1166
      %v1169 = vshrl.u32 %v857, 16
      %v1171 = vrot.slane %v1169, 1
      %v1172 = vshll.u32 %v857, 16
      %v1174 = vrot.slane %v1172, 2
      %v1175 = vor.u32 %v1171, %v1174
      %v1176 = vsel %vm961, %v1166, %v1175
      %v1178 = vshrl.u32 %v858, 16
      %v1180 = vrot.slane %v1178, 1
      %v1181 = vshll.u32 %v858, 16
      %v1183 = vrot.slane %v1181, 2
      %v1184 = vor.u32 %v1180, %v1183
      %v1185 = vsel %vm961, %v1175, %v1184
      %v1187 = vshrl.u32 %v859, 16
      %v1189 = vrot.slane %v1187, 1
      %v1190 = vshll.u32 %v859, 16
      %v1192 = vrot.slane %v1190, 2
      %v1193 = vor.u32 %v1189, %v1192
      %v1194 = vsel %vm961, %v1184, %v1193
      %1195 = vrot.lane.b32.xlu0 %v978, 64
      %v1196 = vpop.permute.xlu0 %1195
      %1197 = vrot.lane.b32.xlu0 %v987, 64
      %v1198 = vpop.permute.xlu0 %1197
      %1199 = vrot.lane.b32.xlu0 %v996, 64
      %v1200 = vpop.permute.xlu0 %1199
      %1201 = vrot.lane.b32.xlu0 %v1005, 64
      %v1202 = vpop.permute.xlu0 %1201
      %1203 = vrot.lane.b32.xlu0 %v1014, 64
      %v1204 = vpop.permute.xlu0 %1203
      %1205 = vrot.lane.b32.xlu0 %v1023, 64
      %v1206 = vpop.permute.xlu0 %1205
      %1207 = vrot.lane.b32.xlu0 %v1032, 64
      %v1208 = vpop.permute.xlu0 %1207
      %1209 = vrot.lane.b32.xlu0 %v1041, 64
      %v1210 = vpop.permute.xlu0 %1209
      %1211 = vrot.lane.b32.xlu0 %v1050, 64
      %v1212 = vpop.permute.xlu0 %1211
      %1213 = vrot.lane.b32.xlu0 %v1059, 64
      %v1214 = vpop.permute.xlu0 %1213
      %1215 = vrot.lane.b32.xlu0 %v1068, 64
      %v1216 = vpop.permute.xlu0 %1215
      %1217 = vrot.lane.b32.xlu0 %v1077, 64
      %v1218 = vpop.permute.xlu0 %1217
      %1219 = vrot.lane.b32.xlu0 %v1086, 64
      %v1220 = vpop.permute.xlu0 %1219
      %1221 = vrot.lane.b32.xlu0 %v1095, 64
      %v1222 = vpop.permute.xlu0 %1221
      %1223 = vrot.lane.b32.xlu0 %v1104, 64
      %v1224 = vpop.permute.xlu0 %1223
      %1225 = vrot.lane.b32.xlu0 %v1113, 64
      %v1226 = vpop.permute.xlu0 %1225
      %1227 = vrot.lane.b32.xlu0 %v1122, 64
      %v1228 = vpop.permute.xlu0 %1227
      %1229 = vrot.lane.b32.xlu0 %v1131, 64
      %v1230 = vpop.permute.xlu0 %1229
      %1231 = vrot.lane.b32.xlu0 %v1140, 64
      %v1232 = vpop.permute.xlu0 %1231
      %1233 = vrot.lane.b32.xlu0 %v1149, 64
      %v1234 = vpop.permute.xlu0 %1233
      %1235 = vrot.lane.b32.xlu0 %v1158, 64
      %v1236 = vpop.permute.xlu0 %1235
      %1237 = vrot.lane.b32.xlu0 %v1167, 64
      %v1238 = vpop.permute.xlu0 %1237
      %1239 = vrot.lane.b32.xlu0 %v1176, 64
      %v1240 = vpop.permute.xlu0 %1239
      %1241 = vrot.lane.b32.xlu0 %v1185, 64
      %v1242 = vpop.permute.xlu0 %1241
      %1243 = vrot.lane.b32.xlu0 %v1194, 64
      %v1244 = vpop.permute.xlu0 %1243
      %vm1245 = vcmask 1045504
      %v1246 = vrot.slane %v834, 2
      %v1247 = vrot.slane %v835, 2
      %v1248 = vsel %vm1245, %v1246, %v1247
      %v1249 = vrot.slane %v836, 2
      %v1250 = vsel %vm1245, %v1247, %v1249
      %v1251 = vrot.slane %v837, 2
      %v1252 = vsel %vm1245, %v1249, %v1251
      %v1253 = vrot.slane %v838, 2
      %v1254 = vsel %vm1245, %v1251, %v1253
      %v1255 = vrot.slane %v839, 2
      %v1256 = vsel %vm1245, %v1253, %v1255
      %v1257 = vrot.slane %v840, 2
      %v1258 = vsel %vm1245, %v1255, %v1257
      %v1259 = vrot.slane %v841, 2
      %v1260 = vsel %vm1245, %v1257, %v1259
      %v1261 = vrot.slane %v842, 2
      %v1262 = vsel %vm1245, %v1259, %v1261
      %v1263 = vrot.slane %v843, 2
      %v1264 = vsel %vm1245, %v1261, %v1263
      %v1265 = vrot.slane %v844, 2
      %v1266 = vsel %vm1245, %v1263, %v1265
      %v1267 = vrot.slane %v845, 2
      %v1268 = vsel %vm1245, %v1265, %v1267
      %v1269 = vrot.slane %v846, 2
      %v1270 = vsel %vm1245, %v1267, %v1269
      %v1271 = vrot.slane %v847, 2
      %v1272 = vsel %vm1245, %v1269, %v1271
      %v1273 = vrot.slane %v848, 2
      %v1274 = vsel %vm1245, %v1271, %v1273
      %v1275 = vrot.slane %v849, 2
      %v1276 = vsel %vm1245, %v1273, %v1275
      %v1277 = vrot.slane %v850, 2
      %v1278 = vsel %vm1245, %v1275, %v1277
      %v1279 = vrot.slane %v851, 2
      %v1280 = vsel %vm1245, %v1277, %v1279
      %v1281 = vrot.slane %v852, 2
      %v1282 = vsel %vm1245, %v1279, %v1281
      %v1283 = vrot.slane %v853, 2
      %v1284 = vsel %vm1245, %v1281, %v1283
      %v1285 = vrot.slane %v854, 2
      %v1286 = vsel %vm1245, %v1283, %v1285
      %v1287 = vrot.slane %v855, 2
      %v1288 = vsel %vm1245, %v1285, %v1287
      %v1289 = vrot.slane %v856, 2
      %v1290 = vsel %vm1245, %v1287, %v1289
      %v1291 = vrot.slane %v857, 2
      %v1292 = vsel %vm1245, %v1289, %v1291
      %v1293 = vrot.slane %v858, 2
      %v1294 = vsel %vm1245, %v1291, %v1293
      %v1295 = vrot.slane %v859, 2
      %v1296 = vsel %vm1245, %v1293, %v1295
      %1297 = vrot.lane.b32.xlu0 %v1248, 80
      %v1298 = vpop.permute.xlu0 %1297
      %1299 = vrot.lane.b32.xlu0 %v1250, 80
      %v1300 = vpop.permute.xlu0 %1299
      %1301 = vrot.lane.b32.xlu0 %v1252, 80
      %v1302 = vpop.permute.xlu0 %1301
      %1303 = vrot.lane.b32.xlu0 %v1254, 80
      %v1304 = vpop.permute.xlu0 %1303
      %1305 = vrot.lane.b32.xlu0 %v1256, 80
      %v1306 = vpop.permute.xlu0 %1305
      %1307 = vrot.lane.b32.xlu0 %v1258, 80
      %v1308 = vpop.permute.xlu0 %1307
      %1309 = vrot.lane.b32.xlu0 %v1260, 80
      %v1310 = vpop.permute.xlu0 %1309
      %1311 = vrot.lane.b32.xlu0 %v1262, 80
      %v1312 = vpop.permute.xlu0 %1311
      %1313 = vrot.lane.b32.xlu0 %v1264, 80
      %v1314 = vpop.permute.xlu0 %1313
      %1315 = vrot.lane.b32.xlu0 %v1266, 80
      %v1316 = vpop.permute.xlu0 %1315
      %1317 = vrot.lane.b32.xlu0 %v1268, 80
      %v1318 = vpop.permute.xlu0 %1317
      %1319 = vrot.lane.b32.xlu0 %v1270, 80
      %v1320 = vpop.permute.xlu0 %1319
      %1321 = vrot.lane.b32.xlu0 %v1272, 80
      %v1322 = vpop.permute.xlu0 %1321
      %1323 = vrot.lane.b32.xlu0 %v1274, 80
      %v1324 = vpop.permute.xlu0 %1323
      %1325 = vrot.lane.b32.xlu0 %v1276, 80
      %v1326 = vpop.permute.xlu0 %1325
      %1327 = vrot.lane.b32.xlu0 %v1278, 80
      %v1328 = vpop.permute.xlu0 %1327
      %1329 = vrot.lane.b32.xlu0 %v1280, 80
      %v1330 = vpop.permute.xlu0 %1329
      %1331 = vrot.lane.b32.xlu0 %v1282, 80
      %v1332 = vpop.permute.xlu0 %1331
      %1333 = vrot.lane.b32.xlu0 %v1284, 80
      %v1334 = vpop.permute.xlu0 %1333
      %1335 = vrot.lane.b32.xlu0 %v1286, 80
      %v1336 = vpop.permute.xlu0 %1335
      %1337 = vrot.lane.b32.xlu0 %v1288, 80
      %v1338 = vpop.permute.xlu0 %1337
      %1339 = vrot.lane.b32.xlu0 %v1290, 80
      %v1340 = vpop.permute.xlu0 %1339
      %1341 = vrot.lane.b32.xlu0 %v1292, 80
      %v1342 = vpop.permute.xlu0 %1341
      %1343 = vrot.lane.b32.xlu0 %v1294, 80
      %v1344 = vpop.permute.xlu0 %1343
      %1345 = vrot.lane.b32.xlu0 %v1296, 80
      %v1346 = vpop.permute.xlu0 %1345
      %v1348 = vunpack.c.l.b16 %v321
      %v1349 = vpack.c.b16 %v833, %v473
      %v1350 = vpack.c.b16 %v1348, %v1348
      %v1351 = vrot.slane %v448, 2
      %v1352 = vrot.slane %v449, 2
      %v1353 = vsel %vm1245, %v1351, %v1352
      %v1354 = vrot.slane %v450, 2
      %v1355 = vsel %vm1245, %v1352, %v1354
      %v1356 = vrot.slane %v451, 2
      %v1357 = vsel %vm1245, %v1354, %v1356
      %v1358 = vrot.slane %v452, 2
      %v1359 = vsel %vm1245, %v1356, %v1358
      %v1360 = vrot.slane %v453, 2
      %v1361 = vsel %vm1245, %v1358, %v1360
      %v1362 = vrot.slane %v454, 2
      %v1363 = vsel %vm1245, %v1360, %v1362
      %v1364 = vrot.slane %v455, 2
      %v1365 = vsel %vm1245, %v1362, %v1364
      %v1366 = vrot.slane %v456, 2
      %v1367 = vsel %vm1245, %v1364, %v1366
      %v1368 = vrot.slane %v457, 2
      %v1369 = vsel %vm1245, %v1366, %v1368
      %v1370 = vrot.slane %v458, 2
      %v1371 = vsel %vm1245, %v1368, %v1370
      %v1372 = vrot.slane %v459, 2
      %v1373 = vsel %vm1245, %v1370, %v1372
      %v1374 = vrot.slane %v460, 2
      %v1375 = vsel %vm1245, %v1372, %v1374
      %v1376 = vrot.slane %v461, 2
      %v1377 = vsel %vm1245, %v1374, %v1376
      %v1378 = vrot.slane %v462, 2
      %v1379 = vsel %vm1245, %v1376, %v1378
      %v1380 = vrot.slane %v463, 2
      %v1381 = vsel %vm1245, %v1378, %v1380
      %v1382 = vrot.slane %v464, 2
      %v1383 = vsel %vm1245, %v1380, %v1382
      %v1384 = vrot.slane %v465, 2
      %v1385 = vsel %vm1245, %v1382, %v1384
      %v1386 = vrot.slane %v466, 2
      %v1387 = vsel %vm1245, %v1384, %v1386
      %v1388 = vrot.slane %v467, 2
      %v1389 = vsel %vm1245, %v1386, %v1388
      %v1390 = vrot.slane %v468, 2
      %v1391 = vsel %vm1245, %v1388, %v1390
      %v1392 = vrot.slane %v469, 2
      %v1393 = vsel %vm1245, %v1390, %v1392
      %v1394 = vrot.slane %v470, 2
      %v1395 = vsel %vm1245, %v1392, %v1394
      %v1396 = vrot.slane %v471, 2
      %v1397 = vsel %vm1245, %v1394, %v1396
      %v1398 = vrot.slane %v1349, 2
      %v1399 = vsel %vm1245, %v1396, %v1398
      %v1400 = vrot.slane %v1350, 2
      %v1401 = vsel %vm1245, %v1398, %v1400
      %1402 = vrot.lane.b32.xlu0 %v1353, 96
      %v1403 = vpop.permute.xlu0 %1402
      %1404 = vrot.lane.b32.xlu0 %v1355, 96
      %v1405 = vpop.permute.xlu0 %1404
      %1406 = vrot.lane.b32.xlu0 %v1357, 96
      %v1407 = vpop.permute.xlu0 %1406
      %1408 = vrot.lane.b32.xlu0 %v1359, 96
      %v1409 = vpop.permute.xlu0 %1408
      %1410 = vrot.lane.b32.xlu0 %v1361, 96
      %v1411 = vpop.permute.xlu0 %1410
      %1412 = vrot.lane.b32.xlu0 %v1363, 96
      %v1413 = vpop.permute.xlu0 %1412
      %1414 = vrot.lane.b32.xlu0 %v1365, 96
      %v1415 = vpop.permute.xlu0 %1414
      %1416 = vrot.lane.b32.xlu0 %v1367, 96
      %v1417 = vpop.permute.xlu0 %1416
      %1418 = vrot.lane.b32.xlu0 %v1369, 96
      %v1419 = vpop.permute.xlu0 %1418
      %1420 = vrot.lane.b32.xlu0 %v1371, 96
      %v1421 = vpop.permute.xlu0 %1420
      %1422 = vrot.lane.b32.xlu0 %v1373, 96
      %v1423 = vpop.permute.xlu0 %1422
      %1424 = vrot.lane.b32.xlu0 %v1375, 96
      %v1425 = vpop.permute.xlu0 %1424
      %1426 = vrot.lane.b32.xlu0 %v1377, 96
      %v1427 = vpop.permute.xlu0 %1426
      %1428 = vrot.lane.b32.xlu0 %v1379, 96
      %v1429 = vpop.permute.xlu0 %1428
      %1430 = vrot.lane.b32.xlu0 %v1381, 96
      %v1431 = vpop.permute.xlu0 %1430
      %1432 = vrot.lane.b32.xlu0 %v1383, 96
      %v1433 = vpop.permute.xlu0 %1432
      %1434 = vrot.lane.b32.xlu0 %v1385, 96
      %v1435 = vpop.permute.xlu0 %1434
      %1436 = vrot.lane.b32.xlu0 %v1387, 96
      %v1437 = vpop.permute.xlu0 %1436
      %1438 = vrot.lane.b32.xlu0 %v1389, 96
      %v1439 = vpop.permute.xlu0 %1438
      %1440 = vrot.lane.b32.xlu0 %v1391, 96
      %v1441 = vpop.permute.xlu0 %1440
      %1442 = vrot.lane.b32.xlu0 %v1393, 96
      %v1443 = vpop.permute.xlu0 %1442
      %1444 = vrot.lane.b32.xlu0 %v1395, 96
      %v1445 = vpop.permute.xlu0 %1444
      %1446 = vrot.lane.b32.xlu0 %v1397, 96
      %v1447 = vpop.permute.xlu0 %1446
      %1448 = vrot.lane.b32.xlu0 %v1399, 96
      %v1449 = vpop.permute.xlu0 %1448
      %1450 = vrot.lane.b32.xlu0 %v1401, 96
      %v1451 = vpop.permute.xlu0 %1450
      %vm1452 = vsmask.f32 5376
      %v1453 = vrot.slane %v488, 2
      %v1454 = vrot.slane %v484, 3
      %v1455 = vor.u32 %v1453, %v1454
      %v1456 = vrot.slane %v496, 2
      %v1457 = vrot.slane %v492, 3
      %v1458 = vor.u32 %v1456, %v1457
      %v1459 = vsel %vm1452, %v1455, %v1458
      %v1460 = vrot.slane %v504, 2
      %v1461 = vrot.slane %v500, 3
      %v1462 = vor.u32 %v1460, %v1461
      %v1463 = vsel %vm1452, %v1458, %v1462
      %v1464 = vrot.slane %v512, 2
      %v1465 = vrot.slane %v508, 3
      %v1466 = vor.u32 %v1464, %v1465
      %v1467 = vsel %vm1452, %v1462, %v1466
      %v1468 = vrot.slane %v520, 2
      %v1469 = vrot.slane %v516, 3
      %v1470 = vor.u32 %v1468, %v1469
      %v1471 = vsel %vm1452, %v1466, %v1470
      %v1472 = vrot.slane %v528, 2
      %v1473 = vrot.slane %v524, 3
      %v1474 = vor.u32 %v1472, %v1473
      %v1475 = vsel %vm1452, %v1470, %v1474
      %v1476 = vrot.slane %v536, 2
      %v1477 = vrot.slane %v532, 3
      %v1478 = vor.u32 %v1476, %v1477
      %v1479 = vsel %vm1452, %v1474, %v1478
      %v1480 = vrot.slane %v544, 2
      %v1481 = vrot.slane %v540, 3
      %v1482 = vor.u32 %v1480, %v1481
      %v1483 = vsel %vm1452, %v1478, %v1482
      %v1484 = vrot.slane %v552, 2
      %v1485 = vrot.slane %v548, 3
      %v1486 = vor.u32 %v1484, %v1485
      %v1487 = vsel %vm1452, %v1482, %v1486
      %v1488 = vrot.slane %v560, 2
      %v1489 = vrot.slane %v556, 3
      %v1490 = vor.u32 %v1488, %v1489
      %v1491 = vsel %vm1452, %v1486, %v1490
      %v1492 = vrot.slane %v568, 2
      %v1493 = vrot.slane %v564, 3
      %v1494 = vor.u32 %v1492, %v1493
      %v1495 = vsel %vm1452, %v1490, %v1494
      %v1496 = vrot.slane %v576, 2
      %v1497 = vrot.slane %v572, 3
      %v1498 = vor.u32 %v1496, %v1497
      %v1499 = vsel %vm1452, %v1494, %v1498
      %v1500 = vrot.slane %v584, 2
      %v1501 = vrot.slane %v580, 3
      %v1502 = vor.u32 %v1500, %v1501
      %v1503 = vsel %vm1452, %v1498, %v1502
      %v1504 = vrot.slane %v592, 2
      %v1505 = vrot.slane %v588, 3
      %v1506 = vor.u32 %v1504, %v1505
      %v1507 = vsel %vm1452, %v1502, %v1506
      %v1508 = vrot.slane %v600, 2
      %v1509 = vrot.slane %v596, 3
      %v1510 = vor.u32 %v1508, %v1509
      %v1511 = vsel %vm1452, %v1506, %v1510
      %v1512 = vrot.slane %v608, 2
      %v1513 = vrot.slane %v604, 3
      %v1514 = vor.u32 %v1512, %v1513
      %v1515 = vsel %vm1452, %v1510, %v1514
      %v1516 = vrot.slane %v616, 2
      %v1517 = vrot.slane %v612, 3
      %v1518 = vor.u32 %v1516, %v1517
      %v1519 = vsel %vm1452, %v1514, %v1518
      %v1520 = vrot.slane %v624, 2
      %v1521 = vrot.slane %v620, 3
      %v1522 = vor.u32 %v1520, %v1521
      %v1523 = vsel %vm1452, %v1518, %v1522
      %v1524 = vrot.slane %v632, 2
      %v1525 = vrot.slane %v628, 3
      %v1526 = vor.u32 %v1524, %v1525
      %v1527 = vsel %vm1452, %v1522, %v1526
      %v1528 = vrot.slane %v640, 2
      %v1529 = vrot.slane %v636, 3
      %v1530 = vor.u32 %v1528, %v1529
      %v1531 = vsel %vm1452, %v1526, %v1530
      %v1532 = vrot.slane %v648, 2
      %v1533 = vrot.slane %v644, 3
      %v1534 = vor.u32 %v1532, %v1533
      %v1535 = vsel %vm1452, %v1530, %v1534
      %v1536 = vrot.slane %v656, 2
      %v1537 = vrot.slane %v652, 3
      %v1538 = vor.u32 %v1536, %v1537
      %v1539 = vsel %vm1452, %v1534, %v1538
      %v1540 = vrot.slane %v664, 2
      %v1541 = vrot.slane %v660, 3
      %v1542 = vor.u32 %v1540, %v1541
      %v1543 = vsel %vm1452, %v1538, %v1542
      %v1544 = vrot.slane %v672, 2
      %v1545 = vrot.slane %v668, 3
      %v1546 = vor.u32 %v1544, %v1545
      %v1547 = vsel %vm1452, %v1542, %v1546
      %v1549 = vshrl.u32 %v1349, 16
      %v1551 = vrot.slane %v1549, 2
      %v1552 = vshll.u32 %v1349, 16
      %v1554 = vrot.slane %v1552, 3
      %v1555 = vor.u32 %v1551, %v1554
      %v1556 = vsel %vm1452, %v1546, %v1555
      %v1558 = vshrl.u32 %v1350, 16
      %v1560 = vrot.slane %v1558, 2
      %v1561 = vshll.u32 %v1350, 16
      %v1563 = vrot.slane %v1561, 3
      %v1564 = vor.u32 %v1560, %v1563
      %v1565 = vsel %vm1452, %v1555, %v1564
      %1566 = vrot.lane.b32.xlu0 %v1459, 112
      %v1567 = vpop.permute.xlu0 %1566
      %1568 = vrot.lane.b32.xlu0 %v1463, 112
      %v1569 = vpop.permute.xlu0 %1568
      %1570 = vrot.lane.b32.xlu0 %v1467, 112
      %v1571 = vpop.permute.xlu0 %1570
      %1572 = vrot.lane.b32.xlu0 %v1471, 112
      %v1573 = vpop.permute.xlu0 %1572
      %1574 = vrot.lane.b32.xlu0 %v1475, 112
      %v1575 = vpop.permute.xlu0 %1574
      %1576 = vrot.lane.b32.xlu0 %v1479, 112
      %v1577 = vpop.permute.xlu0 %1576
      %1578 = vrot.lane.b32.xlu0 %v1483, 112
      %v1579 = vpop.permute.xlu0 %1578
      %1580 = vrot.lane.b32.xlu0 %v1487, 112
      %v1581 = vpop.permute.xlu0 %1580
      %1582 = vrot.lane.b32.xlu0 %v1491, 112
      %v1583 = vpop.permute.xlu0 %1582
      %1584 = vrot.lane.b32.xlu0 %v1495, 112
      %v1585 = vpop.permute.xlu0 %1584
      %1586 = vrot.lane.b32.xlu0 %v1499, 112
      %v1587 = vpop.permute.xlu0 %1586
      %1588 = vrot.lane.b32.xlu0 %v1503, 112
      %v1589 = vpop.permute.xlu0 %1588
      %1590 = vrot.lane.b32.xlu0 %v1507, 112
      %v1591 = vpop.permute.xlu0 %1590
      %1592 = vrot.lane.b32.xlu0 %v1511, 112
      %v1593 = vpop.permute.xlu0 %1592
      %1594 = vrot.lane.b32.xlu0 %v1515, 112
      %v1595 = vpop.permute.xlu0 %1594
      %1596 = vrot.lane.b32.xlu0 %v1519, 112
      %v1597 = vpop.permute.xlu0 %1596
      %1598 = vrot.lane.b32.xlu0 %v1523, 112
      %v1599 = vpop.permute.xlu0 %1598
      %1600 = vrot.lane.b32.xlu0 %v1527, 112
      %v1601 = vpop.permute.xlu0 %1600
      %1602 = vrot.lane.b32.xlu0 %v1531, 112
      %v1603 = vpop.permute.xlu0 %1602
      %1604 = vrot.lane.b32.xlu0 %v1535, 112
      %v1605 = vpop.permute.xlu0 %1604
      %1606 = vrot.lane.b32.xlu0 %v1539, 112
      %v1607 = vpop.permute.xlu0 %1606
      %1608 = vrot.lane.b32.xlu0 %v1543, 112
      %v1609 = vpop.permute.xlu0 %1608
      %1610 = vrot.lane.b32.xlu0 %v1547, 112
      %v1611 = vpop.permute.xlu0 %1610
      %1612 = vrot.lane.b32.xlu0 %v1556, 112
      %v1613 = vpop.permute.xlu0 %1612
      %1614 = vrot.lane.b32.xlu0 %v1565, 112
      %v1615 = vpop.permute.xlu0 %1614
      %vm1616 = vcmask 1044480
      %v1617 = vrot.slane %v448, 3
      %v1618 = vrot.slane %v449, 3
      %v1619 = vsel %vm1616, %v1617, %v1618
      %v1620 = vrot.slane %v450, 3
      %v1621 = vsel %vm1616, %v1618, %v1620
      %v1622 = vrot.slane %v451, 3
      %v1623 = vsel %vm1616, %v1620, %v1622
      %v1624 = vrot.slane %v452, 3
      %v1625 = vsel %vm1616, %v1622, %v1624
      %v1626 = vrot.slane %v453, 3
      %v1627 = vsel %vm1616, %v1624, %v1626
      %v1628 = vrot.slane %v454, 3
      %v1629 = vsel %vm1616, %v1626, %v1628
      %v1630 = vrot.slane %v455, 3
      %v1631 = vsel %vm1616, %v1628, %v1630
      %v1632 = vrot.slane %v456, 3
      %v1633 = vsel %vm1616, %v1630, %v1632
      %v1634 = vrot.slane %v457, 3
      %v1635 = vsel %vm1616, %v1632, %v1634
      %v1636 = vrot.slane %v458, 3
      %v1637 = vsel %vm1616, %v1634, %v1636
      %v1638 = vrot.slane %v459, 3
      %v1639 = vsel %vm1616, %v1636, %v1638
      %v1640 = vrot.slane %v460, 3
      %v1641 = vsel %vm1616, %v1638, %v1640
      %v1642 = vrot.slane %v461, 3
      %v1643 = vsel %vm1616, %v1640, %v1642
      %v1644 = vrot.slane %v462, 3
      %v1645 = vsel %vm1616, %v1642, %v1644
      %v1646 = vrot.slane %v463, 3
      %v1647 = vsel %vm1616, %v1644, %v1646
      %v1648 = vrot.slane %v464, 3
      %v1649 = vsel %vm1616, %v1646, %v1648
      %v1650 = vrot.slane %v465, 3
      %v1651 = vsel %vm1616, %v1648, %v1650
      %v1652 = vrot.slane %v466, 3
      %v1653 = vsel %vm1616, %v1650, %v1652
      %v1654 = vrot.slane %v467, 3
      %v1655 = vsel %vm1616, %v1652, %v1654
      %v1656 = vrot.slane %v468, 3
      %v1657 = vsel %vm1616, %v1654, %v1656
      %v1658 = vrot.slane %v469, 3
      %v1659 = vsel %vm1616, %v1656, %v1658
      %v1660 = vrot.slane %v470, 3
      %v1661 = vsel %vm1616, %v1658, %v1660
      %v1662 = vrot.slane %v471, 3
      %v1663 = vsel %vm1616, %v1660, %v1662
      %v1664 = vrot.slane %v1349, 3
      %v1665 = vsel %vm1616, %v1662, %v1664
      %v1666 = vrot.slane %v1350, 3
      %v1667 = vsel %vm1616, %v1664, %v1666
      %v1678 = vunpack.c.l.b16 %v322
      %v1679 = vunpack.c.l.b16 %v323
      %v1680 = vunpack.c.l.b16 %v324
      %v1681 = vunpack.c.l.b16 %v325
      %v1682 = vunpack.c.l.b16 %v326
      %v1683 = vunpack.c.l.b16 %v327
      %v1684 = vunpack.c.l.b16 %v328
      %v1685 = vunpack.c.l.b16 %v329
      %v1686 = vunpack.c.l.b16 %v330
      %v1687 = vunpack.c.l.b16 %v331
      %v1688 = vpack.c.b16 %v1678, %v1348
      %v1689 = vpack.c.b16 %v1680, %v1679
      %v1690 = vpack.c.b16 %v1682, %v1681
      %v1691 = vpack.c.b16 %v1684, %v1683
      %v1692 = vpack.c.b16 %v1686, %v1685
      %v1693 = vpack.c.b16 %v1687, %v1687
      %v1694 = vrot.slane %v1688, 2
      %v1695 = vsel %vm1245, %v1398, %v1694
      %v1696 = vrot.slane %v1689, 2
      %v1697 = vsel %vm1245, %v1694, %v1696
      %v1698 = vrot.slane %v1690, 2
      %v1699 = vsel %vm1245, %v1696, %v1698
      %v1700 = vrot.slane %v1691, 2
      %v1701 = vsel %vm1245, %v1698, %v1700
      %v1702 = vrot.slane %v1692, 2
      %v1703 = vsel %vm1245, %v1700, %v1702
      %v1704 = vrot.slane %v1693, 2
      %v1705 = vsel %vm1245, %v1702, %v1704
      %1706 = vrot.lane.b32.xlu0 %v1363, 16
      %v1707 = vpop.permute.xlu0 %1706
      %1708 = vrot.lane.b32.xlu0 %v1365, 16
      %v1709 = vpop.permute.xlu0 %1708
      %1710 = vrot.lane.b32.xlu0 %v1367, 16
      %v1711 = vpop.permute.xlu0 %1710
      %1712 = vrot.lane.b32.xlu0 %v1369, 16
      %v1713 = vpop.permute.xlu0 %1712
      %1714 = vrot.lane.b32.xlu0 %v1371, 16
      %v1715 = vpop.permute.xlu0 %1714
      %1716 = vrot.lane.b32.xlu0 %v1373, 16
      %v1717 = vpop.permute.xlu0 %1716
      %1718 = vrot.lane.b32.xlu0 %v1375, 16
      %v1719 = vpop.permute.xlu0 %1718
      %1720 = vrot.lane.b32.xlu0 %v1377, 16
      %v1721 = vpop.permute.xlu0 %1720
      %1722 = vrot.lane.b32.xlu0 %v1379, 16
      %v1723 = vpop.permute.xlu0 %1722
      %1724 = vrot.lane.b32.xlu0 %v1381, 16
      %v1725 = vpop.permute.xlu0 %1724
      %1726 = vrot.lane.b32.xlu0 %v1383, 16
      %v1727 = vpop.permute.xlu0 %1726
      %1728 = vrot.lane.b32.xlu0 %v1385, 16
      %v1729 = vpop.permute.xlu0 %1728
      %1730 = vrot.lane.b32.xlu0 %v1387, 16
      %v1731 = vpop.permute.xlu0 %1730
      %1732 = vrot.lane.b32.xlu0 %v1389, 16
      %v1733 = vpop.permute.xlu0 %1732
      %1734 = vrot.lane.b32.xlu0 %v1391, 16
      %v1735 = vpop.permute.xlu0 %1734
      %1736 = vrot.lane.b32.xlu0 %v1393, 16
      %v1737 = vpop.permute.xlu0 %1736
      %1738 = vrot.lane.b32.xlu0 %v1395, 16
      %v1739 = vpop.permute.xlu0 %1738
      %1740 = vrot.lane.b32.xlu0 %v1397, 16
      %v1741 = vpop.permute.xlu0 %1740
      %1742 = vrot.lane.b32.xlu0 %v1399, 16
      %v1743 = vpop.permute.xlu0 %1742
      %1744 = vrot.lane.b32.xlu0 %v1695, 16
      %v1745 = vpop.permute.xlu0 %1744
      %1746 = vrot.lane.b32.xlu0 %v1697, 16
      %v1747 = vpop.permute.xlu0 %1746
      %1748 = vrot.lane.b32.xlu0 %v1699, 16
      %v1749 = vpop.permute.xlu0 %1748
      %1750 = vrot.lane.b32.xlu0 %v1701, 16
      %v1751 = vpop.permute.xlu0 %1750
      %1752 = vrot.lane.b32.xlu0 %v1703, 16
      %v1753 = vpop.permute.xlu0 %1752
      %1754 = vrot.lane.b32.xlu0 %v1705, 16
      %v1755 = vpop.permute.xlu0 %1754
      %v1757 = vshrl.u32 %v1688, 16
      %v1759 = vrot.slane %v1757, 2
      %v1760 = vshll.u32 %v1688, 16
      %v1762 = vrot.slane %v1760, 3
      %v1763 = vor.u32 %v1759, %v1762
      %v1764 = vsel %vm1452, %v1555, %v1763
      %v1766 = vshrl.u32 %v1689, 16
      %v1768 = vrot.slane %v1766, 2
      %v1769 = vshll.u32 %v1689, 16
      %v1771 = vrot.slane %v1769, 3
      %v1772 = vor.u32 %v1768, %v1771
      %v1773 = vsel %vm1452, %v1763, %v1772
      %v1775 = vshrl.u32 %v1690, 16
      %v1777 = vrot.slane %v1775, 2
      %v1778 = vshll.u32 %v1690, 16
      %v1780 = vrot.slane %v1778, 3
      %v1781 = vor.u32 %v1777, %v1780
      %v1782 = vsel %vm1452, %v1772, %v1781
      %v1784 = vshrl.u32 %v1691, 16
      %v1786 = vrot.slane %v1784, 2
      %v1787 = vshll.u32 %v1691, 16
      %v1789 = vrot.slane %v1787, 3
      %v1790 = vor.u32 %v1786, %v1789
      %v1791 = vsel %vm1452, %v1781, %v1790
      %v1793 = vshrl.u32 %v1692, 16
      %v1795 = vrot.slane %v1793, 2
      %v1796 = vshll.u32 %v1692, 16
      %v1798 = vrot.slane %v1796, 3
      %v1799 = vor.u32 %v1795, %v1798
      %v1800 = vsel %vm1452, %v1790, %v1799
      %v1802 = vshrl.u32 %v1693, 16
      %v1804 = vrot.slane %v1802, 2
      %v1805 = vshll.u32 %v1693, 16
      %v1807 = vrot.slane %v1805, 3
      %v1808 = vor.u32 %v1804, %v1807
      %v1809 = vsel %vm1452, %v1799, %v1808
      %1810 = vrot.lane.b32.xlu0 %v1479, 32
      %v1811 = vpop.permute.xlu0 %1810
      %1812 = vrot.lane.b32.xlu0 %v1483, 32
      %v1813 = vpop.permute.xlu0 %1812
      %1814 = vrot.lane.b32.xlu0 %v1487, 32
      %v1815 = vpop.permute.xlu0 %1814
      %1816 = vrot.lane.b32.xlu0 %v1491, 32
      %v1817 = vpop.permute.xlu0 %1816
      %1818 = vrot.lane.b32.xlu0 %v1495, 32
      %v1819 = vpop.permute.xlu0 %1818
      %1820 = vrot.lane.b32.xlu0 %v1499, 32
      %v1821 = vpop.permute.xlu0 %1820
      %1822 = vrot.lane.b32.xlu0 %v1503, 32
      %v1823 = vpop.permute.xlu0 %1822
      %1824 = vrot.lane.b32.xlu0 %v1507, 32
      %v1825 = vpop.permute.xlu0 %1824
      %1826 = vrot.lane.b32.xlu0 %v1511, 32
      %v1827 = vpop.permute.xlu0 %1826
      %1828 = vrot.lane.b32.xlu0 %v1515, 32
      %v1829 = vpop.permute.xlu0 %1828
      %1830 = vrot.lane.b32.xlu0 %v1519, 32
      %v1831 = vpop.permute.xlu0 %1830
      %1832 = vrot.lane.b32.xlu0 %v1523, 32
      %v1833 = vpop.permute.xlu0 %1832
      %1834 = vrot.lane.b32.xlu0 %v1527, 32
      %v1835 = vpop.permute.xlu0 %1834
      %1836 = vrot.lane.b32.xlu0 %v1531, 32
      %v1837 = vpop.permute.xlu0 %1836
      %1838 = vrot.lane.b32.xlu0 %v1535, 32
      %v1839 = vpop.permute.xlu0 %1838
      %1840 = vrot.lane.b32.xlu0 %v1539, 32
      %v1841 = vpop.permute.xlu0 %1840
      %1842 = vrot.lane.b32.xlu0 %v1543, 32
      %v1843 = vpop.permute.xlu0 %1842
      %1844 = vrot.lane.b32.xlu0 %v1547, 32
      %v1845 = vpop.permute.xlu0 %1844
      %1846 = vrot.lane.b32.xlu0 %v1556, 32
      %v1847 = vpop.permute.xlu0 %1846
      %1848 = vrot.lane.b32.xlu0 %v1764, 32
      %v1849 = vpop.permute.xlu0 %1848
      %1850 = vrot.lane.b32.xlu0 %v1773, 32
      %v1851 = vpop.permute.xlu0 %1850
      %1852 = vrot.lane.b32.xlu0 %v1782, 32
      %v1853 = vpop.permute.xlu0 %1852
      %1854 = vrot.lane.b32.xlu0 %v1791, 32
      %v1855 = vpop.permute.xlu0 %1854
      %1856 = vrot.lane.b32.xlu0 %v1800, 32
      %v1857 = vpop.permute.xlu0 %1856
      %1858 = vrot.lane.b32.xlu0 %v1809, 32
      %v1859 = vpop.permute.xlu0 %1858
      %v1860 = vrot.slane %v1688, 3
      %v1861 = vsel %vm1616, %v1664, %v1860
      %v1862 = vrot.slane %v1689, 3
      %v1863 = vsel %vm1616, %v1860, %v1862
      %v1864 = vrot.slane %v1690, 3
      %v1865 = vsel %vm1616, %v1862, %v1864
      %v1866 = vrot.slane %v1691, 3
      %v1867 = vsel %vm1616, %v1864, %v1866
      %v1868 = vrot.slane %v1692, 3
      %v1869 = vsel %vm1616, %v1866, %v1868
      %v1870 = vrot.slane %v1693, 3
      %v1871 = vsel %vm1616, %v1868, %v1870
      %1872 = vrot.lane.b32.xlu0 %v1629, 48
      %v1873 = vpop.permute.xlu0 %1872
      %1874 = vrot.lane.b32.xlu0 %v1631, 48
      %v1875 = vpop.permute.xlu0 %1874
      %1876 = vrot.lane.b32.xlu0 %v1633, 48
      %v1877 = vpop.permute.xlu0 %1876
      %1878 = vrot.lane.b32.xlu0 %v1635, 48
      %v1879 = vpop.permute.xlu0 %1878
      %1880 = vrot.lane.b32.xlu0 %v1637, 48
      %v1881 = vpop.permute.xlu0 %1880
      %1882 = vrot.lane.b32.xlu0 %v1639, 48
      %v1883 = vpop.permute.xlu0 %1882
      %1884 = vrot.lane.b32.xlu0 %v1641, 48
      %v1885 = vpop.permute.xlu0 %1884
      %1886 = vrot.lane.b32.xlu0 %v1643, 48
      %v1887 = vpop.permute.xlu0 %1886
      %1888 = vrot.lane.b32.xlu0 %v1645, 48
      %v1889 = vpop.permute.xlu0 %1888
      %1890 = vrot.lane.b32.xlu0 %v1647, 48
      %v1891 = vpop.permute.xlu0 %1890
      %1892 = vrot.lane.b32.xlu0 %v1649, 48
      %v1893 = vpop.permute.xlu0 %1892
      %1894 = vrot.lane.b32.xlu0 %v1651, 48
      %v1895 = vpop.permute.xlu0 %1894
      %1896 = vrot.lane.b32.xlu0 %v1653, 48
      %v1897 = vpop.permute.xlu0 %1896
      %1898 = vrot.lane.b32.xlu0 %v1655, 48
      %v1899 = vpop.permute.xlu0 %1898
      %1900 = vrot.lane.b32.xlu0 %v1657, 48
      %v1901 = vpop.permute.xlu0 %1900
      %1902 = vrot.lane.b32.xlu0 %v1659, 48
      %v1903 = vpop.permute.xlu0 %1902
      %1904 = vrot.lane.b32.xlu0 %v1661, 48
      %v1905 = vpop.permute.xlu0 %1904
      %1906 = vrot.lane.b32.xlu0 %v1663, 48
      %v1907 = vpop.permute.xlu0 %1906
      %1908 = vrot.lane.b32.xlu0 %v1665, 48
      %v1909 = vpop.permute.xlu0 %1908
      %1910 = vrot.lane.b32.xlu0 %v1861, 48
      %v1911 = vpop.permute.xlu0 %1910
      %1912 = vrot.lane.b32.xlu0 %v1863, 48
      %v1913 = vpop.permute.xlu0 %1912
      %1914 = vrot.lane.b32.xlu0 %v1865, 48
      %v1915 = vpop.permute.xlu0 %1914
      %1916 = vrot.lane.b32.xlu0 %v1867, 48
      %v1917 = vpop.permute.xlu0 %1916
      %1918 = vrot.lane.b32.xlu0 %v1869, 48
      %v1919 = vpop.permute.xlu0 %1918
      %1920 = vrot.lane.b32.xlu0 %v1871, 48
      %v1921 = vpop.permute.xlu0 %1920
      %v1923 = vunpack.c.l.b16 %v332
      %v1924 = vpack.c.b16 %v1348, %v833
      %v1925 = vpack.c.b16 %v1679, %v1678
      %v1926 = vpack.c.b16 %v1681, %v1680
      %v1927 = vpack.c.b16 %v1683, %v1682
      %v1928 = vpack.c.b16 %v1685, %v1684
      %v1929 = vpack.c.b16 %v1687, %v1686
      %v1930 = vpack.c.b16 %v1923, %v1923
      %v1931 = vrot.slane %v840, 3
      %v1932 = vrot.slane %v841, 3
      %v1933 = vsel %vm1616, %v1931, %v1932
      %v1934 = vrot.slane %v842, 3
      %v1935 = vsel %vm1616, %v1932, %v1934
      %v1936 = vrot.slane %v843, 3
      %v1937 = vsel %vm1616, %v1934, %v1936
      %v1938 = vrot.slane %v844, 3
      %v1939 = vsel %vm1616, %v1936, %v1938
      %v1940 = vrot.slane %v845, 3
      %v1941 = vsel %vm1616, %v1938, %v1940
      %v1942 = vrot.slane %v846, 3
      %v1943 = vsel %vm1616, %v1940, %v1942
      %v1944 = vrot.slane %v847, 3
      %v1945 = vsel %vm1616, %v1942, %v1944
      %v1946 = vrot.slane %v848, 3
      %v1947 = vsel %vm1616, %v1944, %v1946
      %v1948 = vrot.slane %v849, 3
      %v1949 = vsel %vm1616, %v1946, %v1948
      %v1950 = vrot.slane %v850, 3
      %v1951 = vsel %vm1616, %v1948, %v1950
      %v1952 = vrot.slane %v851, 3
      %v1953 = vsel %vm1616, %v1950, %v1952
      %v1954 = vrot.slane %v852, 3
      %v1955 = vsel %vm1616, %v1952, %v1954
      %v1956 = vrot.slane %v853, 3
      %v1957 = vsel %vm1616, %v1954, %v1956
      %v1958 = vrot.slane %v854, 3
      %v1959 = vsel %vm1616, %v1956, %v1958
      %v1960 = vrot.slane %v855, 3
      %v1961 = vsel %vm1616, %v1958, %v1960
      %v1962 = vrot.slane %v856, 3
      %v1963 = vsel %vm1616, %v1960, %v1962
      %v1964 = vrot.slane %v857, 3
      %v1965 = vsel %vm1616, %v1962, %v1964
      %v1966 = vrot.slane %v858, 3
      %v1967 = vsel %vm1616, %v1964, %v1966
      %v1968 = vrot.slane %v1924, 3
      %v1969 = vsel %vm1616, %v1966, %v1968
      %v1970 = vrot.slane %v1925, 3
      %v1971 = vsel %vm1616, %v1968, %v1970
      %v1972 = vrot.slane %v1926, 3
      %v1973 = vsel %vm1616, %v1970, %v1972
      %v1974 = vrot.slane %v1927, 3
      %v1975 = vsel %vm1616, %v1972, %v1974
      %v1976 = vrot.slane %v1928, 3
      %v1977 = vsel %vm1616, %v1974, %v1976
      %v1978 = vrot.slane %v1929, 3
      %v1979 = vsel %vm1616, %v1976, %v1978
      %v1980 = vrot.slane %v1930, 3
      %v1981 = vsel %vm1616, %v1978, %v1980
      %1982 = vrot.lane.b32.xlu0 %v1933, 64
      %v1983 = vpop.permute.xlu0 %1982
      %1984 = vrot.lane.b32.xlu0 %v1935, 64
      %v1985 = vpop.permute.xlu0 %1984
      %1986 = vrot.lane.b32.xlu0 %v1937, 64
      %v1987 = vpop.permute.xlu0 %1986
      %1988 = vrot.lane.b32.xlu0 %v1939, 64
      %v1989 = vpop.permute.xlu0 %1988
      %1990 = vrot.lane.b32.xlu0 %v1941, 64
      %v1991 = vpop.permute.xlu0 %1990
      %1992 = vrot.lane.b32.xlu0 %v1943, 64
      %v1993 = vpop.permute.xlu0 %1992
      %1994 = vrot.lane.b32.xlu0 %v1945, 64
      %v1995 = vpop.permute.xlu0 %1994
      %1996 = vrot.lane.b32.xlu0 %v1947, 64
      %v1997 = vpop.permute.xlu0 %1996
      %1998 = vrot.lane.b32.xlu0 %v1949, 64
      %v1999 = vpop.permute.xlu0 %1998
      %2000 = vrot.lane.b32.xlu0 %v1951, 64
      %v2001 = vpop.permute.xlu0 %2000
      %2002 = vrot.lane.b32.xlu0 %v1953, 64
      %v2003 = vpop.permute.xlu0 %2002
      %2004 = vrot.lane.b32.xlu0 %v1955, 64
      %v2005 = vpop.permute.xlu0 %2004
      %2006 = vrot.lane.b32.xlu0 %v1957, 64
      %v2007 = vpop.permute.xlu0 %2006
      %2008 = vrot.lane.b32.xlu0 %v1959, 64
      %v2009 = vpop.permute.xlu0 %2008
      %2010 = vrot.lane.b32.xlu0 %v1961, 64
      %v2011 = vpop.permute.xlu0 %2010
      %2012 = vrot.lane.b32.xlu0 %v1963, 64
      %v2013 = vpop.permute.xlu0 %2012
      %2014 = vrot.lane.b32.xlu0 %v1965, 64
      %v2015 = vpop.permute.xlu0 %2014
      %2016 = vrot.lane.b32.xlu0 %v1967, 64
      %v2017 = vpop.permute.xlu0 %2016
      %2018 = vrot.lane.b32.xlu0 %v1969, 64
      %v2019 = vpop.permute.xlu0 %2018
      %2020 = vrot.lane.b32.xlu0 %v1971, 64
      %v2021 = vpop.permute.xlu0 %2020
      %2022 = vrot.lane.b32.xlu0 %v1973, 64
      %v2023 = vpop.permute.xlu0 %2022
      %2024 = vrot.lane.b32.xlu0 %v1975, 64
      %v2025 = vpop.permute.xlu0 %2024
      %2026 = vrot.lane.b32.xlu0 %v1977, 64
      %v2027 = vpop.permute.xlu0 %2026
      %2028 = vrot.lane.b32.xlu0 %v1979, 64
      %v2029 = vpop.permute.xlu0 %2028
      %2030 = vrot.lane.b32.xlu0 %v1981, 64
      %v2031 = vpop.permute.xlu0 %2030
      %vm2032 = vsmask.f32 4352
      %v2033 = vrot.slane %v1016, 3
      %v2034 = vrot.slane %v1019, 4
      %v2035 = vor.u32 %v2033, %v2034
      %v2036 = vrot.slane %v1025, 3
      %v2037 = vrot.slane %v1028, 4
      %v2038 = vor.u32 %v2036, %v2037
      %v2039 = vsel %vm2032, %v2035, %v2038
      %v2040 = vrot.slane %v1034, 3
      %v2041 = vrot.slane %v1037, 4
      %v2042 = vor.u32 %v2040, %v2041
      %v2043 = vsel %vm2032, %v2038, %v2042
      %v2044 = vrot.slane %v1043, 3
      %v2045 = vrot.slane %v1046, 4
      %v2046 = vor.u32 %v2044, %v2045
      %v2047 = vsel %vm2032, %v2042, %v2046
      %v2048 = vrot.slane %v1052, 3
      %v2049 = vrot.slane %v1055, 4
      %v2050 = vor.u32 %v2048, %v2049
      %v2051 = vsel %vm2032, %v2046, %v2050
      %v2052 = vrot.slane %v1061, 3
      %v2053 = vrot.slane %v1064, 4
      %v2054 = vor.u32 %v2052, %v2053
      %v2055 = vsel %vm2032, %v2050, %v2054
      %v2056 = vrot.slane %v1070, 3
      %v2057 = vrot.slane %v1073, 4
      %v2058 = vor.u32 %v2056, %v2057
      %v2059 = vsel %vm2032, %v2054, %v2058
      %v2060 = vrot.slane %v1079, 3
      %v2061 = vrot.slane %v1082, 4
      %v2062 = vor.u32 %v2060, %v2061
      %v2063 = vsel %vm2032, %v2058, %v2062
      %v2064 = vrot.slane %v1088, 3
      %v2065 = vrot.slane %v1091, 4
      %v2066 = vor.u32 %v2064, %v2065
      %v2067 = vsel %vm2032, %v2062, %v2066
      %v2068 = vrot.slane %v1097, 3
      %v2069 = vrot.slane %v1100, 4
      %v2070 = vor.u32 %v2068, %v2069
      %v2071 = vsel %vm2032, %v2066, %v2070
      %v2072 = vrot.slane %v1106, 3
      %v2073 = vrot.slane %v1109, 4
      %v2074 = vor.u32 %v2072, %v2073
      %v2075 = vsel %vm2032, %v2070, %v2074
      %v2076 = vrot.slane %v1115, 3
      %v2077 = vrot.slane %v1118, 4
      %v2078 = vor.u32 %v2076, %v2077
      %v2079 = vsel %vm2032, %v2074, %v2078
      %v2080 = vrot.slane %v1124, 3
      %v2081 = vrot.slane %v1127, 4
      %v2082 = vor.u32 %v2080, %v2081
      %v2083 = vsel %vm2032, %v2078, %v2082
      %v2084 = vrot.slane %v1133, 3
      %v2085 = vrot.slane %v1136, 4
      %v2086 = vor.u32 %v2084, %v2085
      %v2087 = vsel %vm2032, %v2082, %v2086
      %v2088 = vrot.slane %v1142, 3
      %v2089 = vrot.slane %v1145, 4
      %v2090 = vor.u32 %v2088, %v2089
      %v2091 = vsel %vm2032, %v2086, %v2090
      %v2092 = vrot.slane %v1151, 3
      %v2093 = vrot.slane %v1154, 4
      %v2094 = vor.u32 %v2092, %v2093
      %v2095 = vsel %vm2032, %v2090, %v2094
      %v2096 = vrot.slane %v1160, 3
      %v2097 = vrot.slane %v1163, 4
      %v2098 = vor.u32 %v2096, %v2097
      %v2099 = vsel %vm2032, %v2094, %v2098
      %v2100 = vrot.slane %v1169, 3
      %v2101 = vrot.slane %v1172, 4
      %v2102 = vor.u32 %v2100, %v2101
      %v2103 = vsel %vm2032, %v2098, %v2102
      %v2104 = vrot.slane %v1178, 3
      %v2105 = vrot.slane %v1181, 4
      %v2106 = vor.u32 %v2104, %v2105
      %v2107 = vsel %vm2032, %v2102, %v2106
      %v2109 = vshrl.u32 %v1924, 16
      %v2111 = vrot.slane %v2109, 3
      %v2112 = vshll.u32 %v1924, 16
      %v2114 = vrot.slane %v2112, 4
      %v2115 = vor.u32 %v2111, %v2114
      %v2116 = vsel %vm2032, %v2106, %v2115
      %v2118 = vshrl.u32 %v1925, 16
      %v2120 = vrot.slane %v2118, 3
      %v2121 = vshll.u32 %v1925, 16
      %v2123 = vrot.slane %v2121, 4
      %v2124 = vor.u32 %v2120, %v2123
      %v2125 = vsel %vm2032, %v2115, %v2124
      %v2127 = vshrl.u32 %v1926, 16
      %v2129 = vrot.slane %v2127, 3
      %v2130 = vshll.u32 %v1926, 16
      %v2132 = vrot.slane %v2130, 4
      %v2133 = vor.u32 %v2129, %v2132
      %v2134 = vsel %vm2032, %v2124, %v2133
      %v2136 = vshrl.u32 %v1927, 16
      %v2138 = vrot.slane %v2136, 3
      %v2139 = vshll.u32 %v1927, 16
      %v2141 = vrot.slane %v2139, 4
      %v2142 = vor.u32 %v2138, %v2141
      %v2143 = vsel %vm2032, %v2133, %v2142
      %v2145 = vshrl.u32 %v1928, 16
      %v2147 = vrot.slane %v2145, 3
      %v2148 = vshll.u32 %v1928, 16
      %v2150 = vrot.slane %v2148, 4
      %v2151 = vor.u32 %v2147, %v2150
      %v2152 = vsel %vm2032, %v2142, %v2151
      %v2154 = vshrl.u32 %v1929, 16
      %v2156 = vrot.slane %v2154, 3
      %v2157 = vshll.u32 %v1929, 16
      %v2159 = vrot.slane %v2157, 4
      %v2160 = vor.u32 %v2156, %v2159
      %v2161 = vsel %vm2032, %v2151, %v2160
      %v2163 = vshrl.u32 %v1930, 16
      %v2165 = vrot.slane %v2163, 3
      %v2166 = vshll.u32 %v1930, 16
      %v2168 = vrot.slane %v2166, 4
      %v2169 = vor.u32 %v2165, %v2168
      %v2170 = vsel %vm2032, %v2160, %v2169
      %2171 = vrot.lane.b32.xlu0 %v2039, 80
      %v2172 = vpop.permute.xlu0 %2171
      %2173 = vrot.lane.b32.xlu0 %v2043, 80
      %v2174 = vpop.permute.xlu0 %2173
      %2175 = vrot.lane.b32.xlu0 %v2047, 80
      %v2176 = vpop.permute.xlu0 %2175
      %2177 = vrot.lane.b32.xlu0 %v2051, 80
      %v2178 = vpop.permute.xlu0 %2177
      %2179 = vrot.lane.b32.xlu0 %v2055, 80
      %v2180 = vpop.permute.xlu0 %2179
      %2181 = vrot.lane.b32.xlu0 %v2059, 80
      %v2182 = vpop.permute.xlu0 %2181
      %2183 = vrot.lane.b32.xlu0 %v2063, 80
      %v2184 = vpop.permute.xlu0 %2183
      %2185 = vrot.lane.b32.xlu0 %v2067, 80
      %v2186 = vpop.permute.xlu0 %2185
      %2187 = vrot.lane.b32.xlu0 %v2071, 80
      %v2188 = vpop.permute.xlu0 %2187
      %2189 = vrot.lane.b32.xlu0 %v2075, 80
      %v2190 = vpop.permute.xlu0 %2189
      %2191 = vrot.lane.b32.xlu0 %v2079, 80
      %v2192 = vpop.permute.xlu0 %2191
      %2193 = vrot.lane.b32.xlu0 %v2083, 80
      %v2194 = vpop.permute.xlu0 %2193
      %2195 = vrot.lane.b32.xlu0 %v2087, 80
      %v2196 = vpop.permute.xlu0 %2195
      %2197 = vrot.lane.b32.xlu0 %v2091, 80
      %v2198 = vpop.permute.xlu0 %2197
      %2199 = vrot.lane.b32.xlu0 %v2095, 80
      %v2200 = vpop.permute.xlu0 %2199
      %2201 = vrot.lane.b32.xlu0 %v2099, 80
      %v2202 = vpop.permute.xlu0 %2201
      %2203 = vrot.lane.b32.xlu0 %v2103, 80
      %v2204 = vpop.permute.xlu0 %2203
      %2205 = vrot.lane.b32.xlu0 %v2107, 80
      %v2206 = vpop.permute.xlu0 %2205
      %2207 = vrot.lane.b32.xlu0 %v2116, 80
      %v2208 = vpop.permute.xlu0 %2207
      %2209 = vrot.lane.b32.xlu0 %v2125, 80
      %v2210 = vpop.permute.xlu0 %2209
      %2211 = vrot.lane.b32.xlu0 %v2134, 80
      %v2212 = vpop.permute.xlu0 %2211
      %2213 = vrot.lane.b32.xlu0 %v2143, 80
      %v2214 = vpop.permute.xlu0 %2213
      %2215 = vrot.lane.b32.xlu0 %v2152, 80
      %v2216 = vpop.permute.xlu0 %2215
      %2217 = vrot.lane.b32.xlu0 %v2161, 80
      %v2218 = vpop.permute.xlu0 %2217
      %2219 = vrot.lane.b32.xlu0 %v2170, 80
      %v2220 = vpop.permute.xlu0 %2219
      %v2221 = vpack.c.b16 %v1923, %v1687
      %2222 = vrot.lane.b32.xlu0 %v454, 96
      %v2223 = vpop.permute.xlu0 %2222
      %2224 = vrot.lane.b32.xlu0 %v455, 96
      %v2225 = vpop.permute.xlu0 %2224
      %2226 = vrot.lane.b32.xlu0 %v456, 96
      %v2227 = vpop.permute.xlu0 %2226
      %2228 = vrot.lane.b32.xlu0 %v457, 96
      %v2229 = vpop.permute.xlu0 %2228
      %2230 = vrot.lane.b32.xlu0 %v458, 96
      %v2231 = vpop.permute.xlu0 %2230
      %2232 = vrot.lane.b32.xlu0 %v459, 96
      %v2233 = vpop.permute.xlu0 %2232
      %2234 = vrot.lane.b32.xlu0 %v460, 96
      %v2235 = vpop.permute.xlu0 %2234
      %2236 = vrot.lane.b32.xlu0 %v461, 96
      %v2237 = vpop.permute.xlu0 %2236
      %2238 = vrot.lane.b32.xlu0 %v462, 96
      %v2239 = vpop.permute.xlu0 %2238
      %2240 = vrot.lane.b32.xlu0 %v463, 96
      %v2241 = vpop.permute.xlu0 %2240
      %2242 = vrot.lane.b32.xlu0 %v464, 96
      %v2243 = vpop.permute.xlu0 %2242
      %2244 = vrot.lane.b32.xlu0 %v465, 96
      %v2245 = vpop.permute.xlu0 %2244
      %2246 = vrot.lane.b32.xlu0 %v466, 96
      %v2247 = vpop.permute.xlu0 %2246
      %2248 = vrot.lane.b32.xlu0 %v467, 96
      %v2249 = vpop.permute.xlu0 %2248
      %2250 = vrot.lane.b32.xlu0 %v468, 96
      %v2251 = vpop.permute.xlu0 %2250
      %2252 = vrot.lane.b32.xlu0 %v469, 96
      %v2253 = vpop.permute.xlu0 %2252
      %2254 = vrot.lane.b32.xlu0 %v470, 96
      %v2255 = vpop.permute.xlu0 %2254
      %2256 = vrot.lane.b32.xlu0 %v471, 96
      %v2257 = vpop.permute.xlu0 %2256
      %2258 = vrot.lane.b32.xlu0 %v1349, 96
      %v2259 = vpop.permute.xlu0 %2258
      %2260 = vrot.lane.b32.xlu0 %v1688, 96
      %v2261 = vpop.permute.xlu0 %2260
      %2262 = vrot.lane.b32.xlu0 %v1689, 96
      %v2263 = vpop.permute.xlu0 %2262
      %2264 = vrot.lane.b32.xlu0 %v1690, 96
      %v2265 = vpop.permute.xlu0 %2264
      %2266 = vrot.lane.b32.xlu0 %v1691, 96
      %v2267 = vpop.permute.xlu0 %2266
      %2268 = vrot.lane.b32.xlu0 %v1692, 96
      %v2269 = vpop.permute.xlu0 %2268
      %2270 = vrot.lane.b32.xlu0 %v2221, 96
      %v2271 = vpop.permute.xlu0 %2270
      %v2273 = vunpack.c.l.b16 %v333
      %v2274 = vpack.c.b16 %v2273, %v1923
      %2275 = vrot.lane.b32.xlu0 %v841, 112
      %v2276 = vpop.permute.xlu0 %2275
      %2277 = vrot.lane.b32.xlu0 %v842, 112
      %v2278 = vpop.permute.xlu0 %2277
      %2279 = vrot.lane.b32.xlu0 %v843, 112
      %v2280 = vpop.permute.xlu0 %2279
      %2281 = vrot.lane.b32.xlu0 %v844, 112
      %v2282 = vpop.permute.xlu0 %2281
      %2283 = vrot.lane.b32.xlu0 %v845, 112
      %v2284 = vpop.permute.xlu0 %2283
      %2285 = vrot.lane.b32.xlu0 %v846, 112
      %v2286 = vpop.permute.xlu0 %2285
      %2287 = vrot.lane.b32.xlu0 %v847, 112
      %v2288 = vpop.permute.xlu0 %2287
      %2289 = vrot.lane.b32.xlu0 %v848, 112
      %v2290 = vpop.permute.xlu0 %2289
      %2291 = vrot.lane.b32.xlu0 %v849, 112
      %v2292 = vpop.permute.xlu0 %2291
      %2293 = vrot.lane.b32.xlu0 %v850, 112
      %v2294 = vpop.permute.xlu0 %2293
      %2295 = vrot.lane.b32.xlu0 %v851, 112
      %v2296 = vpop.permute.xlu0 %2295
      %2297 = vrot.lane.b32.xlu0 %v852, 112
      %v2298 = vpop.permute.xlu0 %2297
      %2299 = vrot.lane.b32.xlu0 %v853, 112
      %v2300 = vpop.permute.xlu0 %2299
      %2301 = vrot.lane.b32.xlu0 %v854, 112
      %v2302 = vpop.permute.xlu0 %2301
      %2303 = vrot.lane.b32.xlu0 %v855, 112
      %v2304 = vpop.permute.xlu0 %2303
      %2305 = vrot.lane.b32.xlu0 %v856, 112
      %v2306 = vpop.permute.xlu0 %2305
      %2307 = vrot.lane.b32.xlu0 %v857, 112
      %v2308 = vpop.permute.xlu0 %2307
      %2309 = vrot.lane.b32.xlu0 %v858, 112
      %v2310 = vpop.permute.xlu0 %2309
      %2311 = vrot.lane.b32.xlu0 %v1924, 112
      %v2312 = vpop.permute.xlu0 %2311
      %2313 = vrot.lane.b32.xlu0 %v1925, 112
      %v2314 = vpop.permute.xlu0 %2313
      %2315 = vrot.lane.b32.xlu0 %v1926, 112
      %v2316 = vpop.permute.xlu0 %2315
      %2317 = vrot.lane.b32.xlu0 %v1927, 112
      %v2318 = vpop.permute.xlu0 %2317
      %2319 = vrot.lane.b32.xlu0 %v1928, 112
      %v2320 = vpop.permute.xlu0 %2319
      %2321 = vrot.lane.b32.xlu0 %v1929, 112
      %v2322 = vpop.permute.xlu0 %2321
      %2323 = vrot.lane.b32.xlu0 %v2274, 112
      %v2324 = vpop.permute.xlu0 %2323
      %vm2325 = vcmask 130048
      %v2327 = vsel %vm2325, %v447, %v681
      %v2329 = vsel %vm2325, %v448, %v683
      %v2331 = vsel %vm2325, %v449, %v685
      %v2333 = vsel %vm2325, %v450, %v687
      %v2335 = vsel %vm2325, %v451, %v689
      %v2337 = vsel %vm2325, %v452, %v691
      %v2339 = vsel %vm2325, %v453, %v693
      %v2341 = vsel %vm2325, %v454, %v695
      %v2343 = vsel %vm2325, %v455, %v697
      %v2345 = vsel %vm2325, %v456, %v699
      %v2347 = vsel %vm2325, %v457, %v701
      %v2349 = vsel %vm2325, %v458, %v703
      %v2351 = vsel %vm2325, %v459, %v705
      %v2353 = vsel %vm2325, %v460, %v707
      %v2355 = vsel %vm2325, %v461, %v709
      %v2357 = vsel %vm2325, %v462, %v711
      %v2359 = vsel %vm2325, %v463, %v713
      %v2361 = vsel %vm2325, %v464, %v715
      %v2363 = vsel %vm2325, %v465, %v717
      %v2365 = vsel %vm2325, %v466, %v719
      %v2367 = vsel %vm2325, %v467, %v721
      %v2369 = vsel %vm2325, %v468, %v723
      %v2371 = vsel %vm2325, %v469, %v725
      %v2373 = vsel %vm2325, %v470, %v727
      %v2375 = vsel %vm2325, %v471, %v729
      %vm2376 = vcmask 261120
      %v2378 = vsel %vm2376, %v2327, %v783
      %v2380 = vsel %vm2376, %v2329, %v785
      %v2382 = vsel %vm2376, %v2331, %v787
      %v2384 = vsel %vm2376, %v2333, %v789
      %v2386 = vsel %vm2376, %v2335, %v791
      %v2388 = vsel %vm2376, %v2337, %v793
      %v2390 = vsel %vm2376, %v2339, %v795
      %v2392 = vsel %vm2376, %v2341, %v797
      %v2394 = vsel %vm2376, %v2343, %v799
      %v2396 = vsel %vm2376, %v2345, %v801
      %v2398 = vsel %vm2376, %v2347, %v803
      %v2400 = vsel %vm2376, %v2349, %v805
      %v2402 = vsel %vm2376, %v2351, %v807
      %v2404 = vsel %vm2376, %v2353, %v809
      %v2406 = vsel %vm2376, %v2355, %v811
      %v2408 = vsel %vm2376, %v2357, %v813
      %v2410 = vsel %vm2376, %v2359, %v815
      %v2412 = vsel %vm2376, %v2361, %v817
      %v2414 = vsel %vm2376, %v2363, %v819
      %v2416 = vsel %vm2376, %v2365, %v821
      %v2418 = vsel %vm2376, %v2367, %v823
      %v2420 = vsel %vm2376, %v2369, %v825
      %v2422 = vsel %vm2376, %v2371, %v827
      %v2424 = vsel %vm2376, %v2373, %v829
      %v2426 = vsel %vm2376, %v2375, %v831
      %vm2427 = vcmask 392192
      %v2429 = vsel %vm2427, %v2378, %v912
      %v2431 = vsel %vm2427, %v2380, %v914
      %v2433 = vsel %vm2427, %v2382, %v916
      %v2435 = vsel %vm2427, %v2384, %v918
      %v2437 = vsel %vm2427, %v2386, %v920
      %v2439 = vsel %vm2427, %v2388, %v922
      %v2441 = vsel %vm2427, %v2390, %v924
      %v2443 = vsel %vm2427, %v2392, %v926
      %v2445 = vsel %vm2427, %v2394, %v928
      %v2447 = vsel %vm2427, %v2396, %v930
      %v2449 = vsel %vm2427, %v2398, %v932
      %v2451 = vsel %vm2427, %v2400, %v934
      %v2453 = vsel %vm2427, %v2402, %v936
      %v2455 = vsel %vm2427, %v2404, %v938
      %v2457 = vsel %vm2427, %v2406, %v940
      %v2459 = vsel %vm2427, %v2408, %v942
      %v2461 = vsel %vm2427, %v2410, %v944
      %v2463 = vsel %vm2427, %v2412, %v946
      %v2465 = vsel %vm2427, %v2414, %v948
      %v2467 = vsel %vm2427, %v2416, %v950
      %v2469 = vsel %vm2427, %v2418, %v952
      %v2471 = vsel %vm2427, %v2420, %v954
      %v2473 = vsel %vm2427, %v2422, %v956
      %v2475 = vsel %vm2427, %v2424, %v958
      %v2477 = vsel %vm2427, %v2426, %v960
      %vm2478 = vcmask 523264
      %v2480 = vsel %vm2478, %v2429, %v1196
      %v2482 = vsel %vm2478, %v2431, %v1198
      %v2484 = vsel %vm2478, %v2433, %v1200
      %v2486 = vsel %vm2478, %v2435, %v1202
      %v2488 = vsel %vm2478, %v2437, %v1204
      %v2490 = vsel %vm2478, %v2439, %v1206
      %v2492 = vsel %vm2478, %v2441, %v1208
      %v2494 = vsel %vm2478, %v2443, %v1210
      %v2496 = vsel %vm2478, %v2445, %v1212
      %v2498 = vsel %vm2478, %v2447, %v1214
      %v2500 = vsel %vm2478, %v2449, %v1216
      %v2502 = vsel %vm2478, %v2451, %v1218
      %v2504 = vsel %vm2478, %v2453, %v1220
      %v2506 = vsel %vm2478, %v2455, %v1222
      %v2508 = vsel %vm2478, %v2457, %v1224
      %v2510 = vsel %vm2478, %v2459, %v1226
      %v2512 = vsel %vm2478, %v2461, %v1228
      %v2514 = vsel %vm2478, %v2463, %v1230
      %v2516 = vsel %vm2478, %v2465, %v1232
      %v2518 = vsel %vm2478, %v2467, %v1234
      %v2520 = vsel %vm2478, %v2469, %v1236
      %v2522 = vsel %vm2478, %v2471, %v1238
      %v2524 = vsel %vm2478, %v2473, %v1240
      %v2526 = vsel %vm2478, %v2475, %v1242
      %v2528 = vsel %vm2478, %v2477, %v1244
      %vm2529 = vcmask 654336
      %v2531 = vsel %vm2529, %v2480, %v1298
      %v2533 = vsel %vm2529, %v2482, %v1300
      %v2535 = vsel %vm2529, %v2484, %v1302
      %v2537 = vsel %vm2529, %v2486, %v1304
      %v2539 = vsel %vm2529, %v2488, %v1306
      %v2541 = vsel %vm2529, %v2490, %v1308
      %v2543 = vsel %vm2529, %v2492, %v1310
      %v2545 = vsel %vm2529, %v2494, %v1312
      %v2547 = vsel %vm2529, %v2496, %v1314
      %v2549 = vsel %vm2529, %v2498, %v1316
      %v2551 = vsel %vm2529, %v2500, %v1318
      %v2553 = vsel %vm2529, %v2502, %v1320
      %v2555 = vsel %vm2529, %v2504, %v1322
      %v2557 = vsel %vm2529, %v2506, %v1324
      %v2559 = vsel %vm2529, %v2508, %v1326
      %v2561 = vsel %vm2529, %v2510, %v1328
      %v2563 = vsel %vm2529, %v2512, %v1330
      %v2565 = vsel %vm2529, %v2514, %v1332
      %v2567 = vsel %vm2529, %v2516, %v1334
      %v2569 = vsel %vm2529, %v2518, %v1336
      %v2571 = vsel %vm2529, %v2520, %v1338
      %v2573 = vsel %vm2529, %v2522, %v1340
      %v2575 = vsel %vm2529, %v2524, %v1342
      %v2577 = vsel %vm2529, %v2526, %v1344
      %v2579 = vsel %vm2529, %v2528, %v1346
      %vm2580 = vcmask 785408
      %v2582 = vsel %vm2580, %v2531, %v1403
      %v2584 = vsel %vm2580, %v2533, %v1405
      %v2586 = vsel %vm2580, %v2535, %v1407
      %v2588 = vsel %vm2580, %v2537, %v1409
      %v2590 = vsel %vm2580, %v2539, %v1411
      %v2592 = vsel %vm2580, %v2541, %v1413
      %v2594 = vsel %vm2580, %v2543, %v1415
      %v2596 = vsel %vm2580, %v2545, %v1417
      %v2598 = vsel %vm2580, %v2547, %v1419
      %v2600 = vsel %vm2580, %v2549, %v1421
      %v2602 = vsel %vm2580, %v2551, %v1423
      %v2604 = vsel %vm2580, %v2553, %v1425
      %v2606 = vsel %vm2580, %v2555, %v1427
      %v2608 = vsel %vm2580, %v2557, %v1429
      %v2610 = vsel %vm2580, %v2559, %v1431
      %v2612 = vsel %vm2580, %v2561, %v1433
      %v2614 = vsel %vm2580, %v2563, %v1435
      %v2616 = vsel %vm2580, %v2565, %v1437
      %v2618 = vsel %vm2580, %v2567, %v1439
      %v2620 = vsel %vm2580, %v2569, %v1441
      %v2622 = vsel %vm2580, %v2571, %v1443
      %v2624 = vsel %vm2580, %v2573, %v1445
      %v2626 = vsel %vm2580, %v2575, %v1447
      %v2628 = vsel %vm2580, %v2577, %v1449
      %v2630 = vsel %vm2580, %v2579, %v1451
      %vm2631 = vcmask 916480
      %v2633 = vsel %vm2631, %v2582, %v1567
      %v2636 = vsel %vm2631, %v2584, %v1569
      %v2639 = vsel %vm2631, %v2586, %v1571
      %v2642 = vsel %vm2631, %v2588, %v1573
      %v2645 = vsel %vm2631, %v2590, %v1575
      %v2648 = vsel %vm2631, %v2592, %v1577
      %v2651 = vsel %vm2631, %v2594, %v1579
      %v2654 = vsel %vm2631, %v2596, %v1581
      %v2657 = vsel %vm2631, %v2598, %v1583
      %v2660 = vsel %vm2631, %v2600, %v1585
      %v2663 = vsel %vm2631, %v2602, %v1587
      %v2666 = vsel %vm2631, %v2604, %v1589
      %v2669 = vsel %vm2631, %v2606, %v1591
      %v2672 = vsel %vm2631, %v2608, %v1593
      %v2675 = vsel %vm2631, %v2610, %v1595
      %v2678 = vsel %vm2631, %v2612, %v1597
      %v2681 = vsel %vm2631, %v2614, %v1599
      %v2684 = vsel %vm2631, %v2616, %v1601
      %v2687 = vsel %vm2631, %v2618, %v1603
      %v2690 = vsel %vm2631, %v2620, %v1605
      %v2693 = vsel %vm2631, %v2622, %v1607
      %v2696 = vsel %vm2631, %v2624, %v1609
      %v2699 = vsel %vm2631, %v2626, %v1611
      %v2702 = vsel %vm2631, %v2628, %v1613
      %v2705 = vsel %vm2631, %v2630, %v1615
      %v2709 = vsel %vm2325, %v1619, %v1707
      %v2712 = vsel %vm2325, %v1621, %v1709
      %v2715 = vsel %vm2325, %v1623, %v1711
      %v2718 = vsel %vm2325, %v1625, %v1713
      %v2721 = vsel %vm2325, %v1627, %v1715
      %v2724 = vsel %vm2325, %v1629, %v1717
      %v2727 = vsel %vm2325, %v1631, %v1719
      %v2730 = vsel %vm2325, %v1633, %v1721
      %v2733 = vsel %vm2325, %v1635, %v1723
      %v2736 = vsel %vm2325, %v1637, %v1725
      %v2739 = vsel %vm2325, %v1639, %v1727
      %v2742 = vsel %vm2325, %v1641, %v1729
      %v2745 = vsel %vm2325, %v1643, %v1731
      %v2748 = vsel %vm2325, %v1645, %v1733
      %v2751 = vsel %vm2325, %v1647, %v1735
      %v2754 = vsel %vm2325, %v1649, %v1737
      %v2757 = vsel %vm2325, %v1651, %v1739
      %v2760 = vsel %vm2325, %v1653, %v1741
      %v2763 = vsel %vm2325, %v1655, %v1743
      %v2766 = vsel %vm2325, %v1657, %v1745
      %v2769 = vsel %vm2325, %v1659, %v1747
      %v2772 = vsel %vm2325, %v1661, %v1749
      %v2775 = vsel %vm2325, %v1663, %v1751
      %v2778 = vsel %vm2325, %v1665, %v1753
      %v2781 = vsel %vm2325, %v1667, %v1755
      %v2783 = vsel %vm2376, %v2709, %v1811
      %v2785 = vsel %vm2376, %v2712, %v1813
      %v2787 = vsel %vm2376, %v2715, %v1815
      %v2789 = vsel %vm2376, %v2718, %v1817
      %v2791 = vsel %vm2376, %v2721, %v1819
      %v2793 = vsel %vm2376, %v2724, %v1821
      %v2795 = vsel %vm2376, %v2727, %v1823
      %v2797 = vsel %vm2376, %v2730, %v1825
      %v2799 = vsel %vm2376, %v2733, %v1827
      %v2801 = vsel %vm2376, %v2736, %v1829
      %v2803 = vsel %vm2376, %v2739, %v1831
      %v2805 = vsel %vm2376, %v2742, %v1833
      %v2807 = vsel %vm2376, %v2745, %v1835
      %v2809 = vsel %vm2376, %v2748, %v1837
      %v2811 = vsel %vm2376, %v2751, %v1839
      %v2813 = vsel %vm2376, %v2754, %v1841
      %v2815 = vsel %vm2376, %v2757, %v1843
      %v2817 = vsel %vm2376, %v2760, %v1845
      %v2819 = vsel %vm2376, %v2763, %v1847
      %v2821 = vsel %vm2376, %v2766, %v1849
      %v2823 = vsel %vm2376, %v2769, %v1851
      %v2825 = vsel %vm2376, %v2772, %v1853
      %v2827 = vsel %vm2376, %v2775, %v1855
      %v2829 = vsel %vm2376, %v2778, %v1857
      %v2831 = vsel %vm2376, %v2781, %v1859
      %v2833 = vsel %vm2427, %v2783, %v1873
      %v2835 = vsel %vm2427, %v2785, %v1875
      %v2837 = vsel %vm2427, %v2787, %v1877
      %v2839 = vsel %vm2427, %v2789, %v1879
      %v2841 = vsel %vm2427, %v2791, %v1881
      %v2843 = vsel %vm2427, %v2793, %v1883
      %v2845 = vsel %vm2427, %v2795, %v1885
      %v2847 = vsel %vm2427, %v2797, %v1887
      %v2849 = vsel %vm2427, %v2799, %v1889
      %v2851 = vsel %vm2427, %v2801, %v1891
      %v2853 = vsel %vm2427, %v2803, %v1893
      %v2855 = vsel %vm2427, %v2805, %v1895
      %v2857 = vsel %vm2427, %v2807, %v1897
      %v2859 = vsel %vm2427, %v2809, %v1899
      %v2861 = vsel %vm2427, %v2811, %v1901
      %v2863 = vsel %vm2427, %v2813, %v1903
      %v2865 = vsel %vm2427, %v2815, %v1905
      %v2867 = vsel %vm2427, %v2817, %v1907
      %v2869 = vsel %vm2427, %v2819, %v1909
      %v2871 = vsel %vm2427, %v2821, %v1911
      %v2873 = vsel %vm2427, %v2823, %v1913
      %v2875 = vsel %vm2427, %v2825, %v1915
      %v2877 = vsel %vm2427, %v2827, %v1917
      %v2879 = vsel %vm2427, %v2829, %v1919
      %v2881 = vsel %vm2427, %v2831, %v1921
      %v2883 = vsel %vm2478, %v2833, %v1983
      %v2885 = vsel %vm2478, %v2835, %v1985
      %v2887 = vsel %vm2478, %v2837, %v1987
      %v2889 = vsel %vm2478, %v2839, %v1989
      %v2891 = vsel %vm2478, %v2841, %v1991
      %v2893 = vsel %vm2478, %v2843, %v1993
      %v2895 = vsel %vm2478, %v2845, %v1995
      %v2897 = vsel %vm2478, %v2847, %v1997
      %v2899 = vsel %vm2478, %v2849, %v1999
      %v2901 = vsel %vm2478, %v2851, %v2001
      %v2903 = vsel %vm2478, %v2853, %v2003
      %v2905 = vsel %vm2478, %v2855, %v2005
      %v2907 = vsel %vm2478, %v2857, %v2007
      %v2909 = vsel %vm2478, %v2859, %v2009
      %v2911 = vsel %vm2478, %v2861, %v2011
      %v2913 = vsel %vm2478, %v2863, %v2013
      %v2915 = vsel %vm2478, %v2865, %v2015
      %v2917 = vsel %vm2478, %v2867, %v2017
      %v2919 = vsel %vm2478, %v2869, %v2019
      %v2921 = vsel %vm2478, %v2871, %v2021
      %v2923 = vsel %vm2478, %v2873, %v2023
      %v2925 = vsel %vm2478, %v2875, %v2025
      %v2927 = vsel %vm2478, %v2877, %v2027
      %v2929 = vsel %vm2478, %v2879, %v2029
      %v2931 = vsel %vm2478, %v2881, %v2031
      %v2933 = vsel %vm2529, %v2883, %v2172
      %v2935 = vsel %vm2529, %v2885, %v2174
      %v2937 = vsel %vm2529, %v2887, %v2176
      %v2939 = vsel %vm2529, %v2889, %v2178
      %v2941 = vsel %vm2529, %v2891, %v2180
      %v2943 = vsel %vm2529, %v2893, %v2182
      %v2945 = vsel %vm2529, %v2895, %v2184
      %v2947 = vsel %vm2529, %v2897, %v2186
      %v2949 = vsel %vm2529, %v2899, %v2188
      %v2951 = vsel %vm2529, %v2901, %v2190
      %v2953 = vsel %vm2529, %v2903, %v2192
      %v2955 = vsel %vm2529, %v2905, %v2194
      %v2957 = vsel %vm2529, %v2907, %v2196
      %v2959 = vsel %vm2529, %v2909, %v2198
      %v2961 = vsel %vm2529, %v2911, %v2200
      %v2963 = vsel %vm2529, %v2913, %v2202
      %v2965 = vsel %vm2529, %v2915, %v2204
      %v2967 = vsel %vm2529, %v2917, %v2206
      %v2969 = vsel %vm2529, %v2919, %v2208
      %v2971 = vsel %vm2529, %v2921, %v2210
      %v2973 = vsel %vm2529, %v2923, %v2212
      %v2975 = vsel %vm2529, %v2925, %v2214
      %v2977 = vsel %vm2529, %v2927, %v2216
      %v2979 = vsel %vm2529, %v2929, %v2218
      %v2981 = vsel %vm2529, %v2931, %v2220
      %v2983 = vsel %vm2580, %v2933, %v2223
      %v2985 = vsel %vm2580, %v2935, %v2225
      %v2987 = vsel %vm2580, %v2937, %v2227
      %v2989 = vsel %vm2580, %v2939, %v2229
      %v2991 = vsel %vm2580, %v2941, %v2231
      %v2993 = vsel %vm2580, %v2943, %v2233
      %v2995 = vsel %vm2580, %v2945, %v2235
      %v2997 = vsel %vm2580, %v2947, %v2237
      %v2999 = vsel %vm2580, %v2949, %v2239
      %v3001 = vsel %vm2580, %v2951, %v2241
      %v3003 = vsel %vm2580, %v2953, %v2243
      %v3005 = vsel %vm2580, %v2955, %v2245
      %v3007 = vsel %vm2580, %v2957, %v2247
      %v3009 = vsel %vm2580, %v2959, %v2249
      %v3011 = vsel %vm2580, %v2961, %v2251
      %v3013 = vsel %vm2580, %v2963, %v2253
      %v3015 = vsel %vm2580, %v2965, %v2255
      %v3017 = vsel %vm2580, %v2967, %v2257
      %v3019 = vsel %vm2580, %v2969, %v2259
      %v3021 = vsel %vm2580, %v2971, %v2261
      %v3023 = vsel %vm2580, %v2973, %v2263
      %v3025 = vsel %vm2580, %v2975, %v2265
      %v3027 = vsel %vm2580, %v2977, %v2267
      %v3029 = vsel %vm2580, %v2979, %v2269
      %v3031 = vsel %vm2580, %v2981, %v2271
      %v3033 = vsel %vm2631, %v2983, %v2276
      %v3036 = vsel %vm2631, %v2985, %v2278
      %v3039 = vsel %vm2631, %v2987, %v2280
      %v3042 = vsel %vm2631, %v2989, %v2282
      %v3045 = vsel %vm2631, %v2991, %v2284
      %v3048 = vsel %vm2631, %v2993, %v2286
      %v3051 = vsel %vm2631, %v2995, %v2288
      %v3054 = vsel %vm2631, %v2997, %v2290
      %v3057 = vsel %vm2631, %v2999, %v2292
      %v3060 = vsel %vm2631, %v3001, %v2294
      %v3063 = vsel %vm2631, %v3003, %v2296
      %v3066 = vsel %vm2631, %v3005, %v2298
      %v3069 = vsel %vm2631, %v3007, %v2300
      %v3072 = vsel %vm2631, %v3009, %v2302
      %v3075 = vsel %vm2631, %v3011, %v2304
      %v3078 = vsel %vm2631, %v3013, %v2306
      %v3081 = vsel %vm2631, %v3015, %v2308
      %v3084 = vsel %vm2631, %v3017, %v2310
      %v3087 = vsel %vm2631, %v3019, %v2312
      %v3090 = vsel %vm2631, %v3021, %v2314
      %v3093 = vsel %vm2631, %v3023, %v2316
      %v3096 = vsel %vm2631, %v3025, %v2318
      %v3099 = vsel %vm2631, %v3027, %v2320
      %v3102 = vsel %vm2631, %v3029, %v2322
      %v3105 = vsel %vm2631, %v3031, %v2324
      %v3108 = vunpack.c.l.b16 %v334
      %v3109 = vpack.c.b16 %v3108, %v3108
      %v3110 = vrot.slane %v1028, 1
      %v3111 = vor.u32 %v1025, %v3110
      %v3112 = vrot.slane %v1037, 1
      %v3113 = vsel %vm475, %v3111, %v3112
      %v3114 = vor.u32 %v1034, %v3112
      %v3115 = vrot.slane %v1046, 1
      %v3116 = vsel %vm475, %v3114, %v3115
      %v3117 = vor.u32 %v1043, %v3115
      %v3118 = vrot.slane %v1055, 1
      %v3119 = vsel %vm475, %v3117, %v3118
      %v3120 = vor.u32 %v1052, %v3118
      %v3121 = vrot.slane %v1064, 1
      %v3122 = vsel %vm475, %v3120, %v3121
      %v3123 = vor.u32 %v1061, %v3121
      %v3124 = vrot.slane %v1073, 1
      %v3125 = vsel %vm475, %v3123, %v3124
      %v3126 = vor.u32 %v1070, %v3124
      %v3127 = vrot.slane %v1082, 1
      %v3128 = vsel %vm475, %v3126, %v3127
      %v3129 = vor.u32 %v1079, %v3127
      %v3130 = vrot.slane %v1091, 1
      %v3131 = vsel %vm475, %v3129, %v3130
      %v3132 = vor.u32 %v1088, %v3130
      %v3133 = vrot.slane %v1100, 1
      %v3134 = vsel %vm475, %v3132, %v3133
      %v3135 = vor.u32 %v1097, %v3133
      %v3136 = vrot.slane %v1109, 1
      %v3137 = vsel %vm475, %v3135, %v3136
      %v3138 = vor.u32 %v1106, %v3136
      %v3139 = vrot.slane %v1118, 1
      %v3140 = vsel %vm475, %v3138, %v3139
      %v3141 = vor.u32 %v1115, %v3139
      %v3142 = vrot.slane %v1127, 1
      %v3143 = vsel %vm475, %v3141, %v3142
      %v3144 = vor.u32 %v1124, %v3142
      %v3145 = vrot.slane %v1136, 1
      %v3146 = vsel %vm475, %v3144, %v3145
      %v3147 = vor.u32 %v1133, %v3145
      %v3148 = vrot.slane %v1145, 1
      %v3149 = vsel %vm475, %v3147, %v3148
      %v3150 = vor.u32 %v1142, %v3148
      %v3151 = vrot.slane %v1154, 1
      %v3152 = vsel %vm475, %v3150, %v3151
      %v3153 = vor.u32 %v1151, %v3151
      %v3154 = vrot.slane %v1163, 1
      %v3155 = vsel %vm475, %v3153, %v3154
      %v3156 = vor.u32 %v1160, %v3154
      %v3157 = vrot.slane %v1172, 1
      %v3158 = vsel %vm475, %v3156, %v3157
      %v3159 = vor.u32 %v1169, %v3157
      %v3160 = vrot.slane %v1181, 1
      %v3161 = vsel %vm475, %v3159, %v3160
      %v3162 = vor.u32 %v1178, %v3160
      %v3163 = vrot.slane %v2112, 1
      %v3164 = vsel %vm475, %v3162, %v3163
      %v3165 = vor.u32 %v2109, %v3163
      %v3166 = vrot.slane %v2121, 1
      %v3167 = vsel %vm475, %v3165, %v3166
      %v3168 = vor.u32 %v2118, %v3166
      %v3169 = vrot.slane %v2130, 1
      %v3170 = vsel %vm475, %v3168, %v3169
      %v3171 = vor.u32 %v2127, %v3169
      %v3172 = vrot.slane %v2139, 1
      %v3173 = vsel %vm475, %v3171, %v3172
      %v3174 = vor.u32 %v2136, %v3172
      %v3175 = vrot.slane %v2148, 1
      %v3176 = vsel %vm475, %v3174, %v3175
      %v3177 = vor.u32 %v2145, %v3175
      %v3178 = vrot.slane %v2157, 1
      %v3179 = vsel %vm475, %v3177, %v3178
      %v3180 = vor.u32 %v2154, %v3178
      %v3182 = vshll.u32 %v2274, 16
      %v3184 = vrot.slane %v3182, 1
      %v3185 = vsel %vm475, %v3180, %v3184
      %v3186 = vshrl.u32 %v2274, 16
      %v3188 = vor.u32 %v3186, %v3184
      %v3190 = vshll.u32 %v3109, 16
      %v3192 = vrot.slane %v3190, 1
      %v3193 = vsel %vm475, %v3188, %v3192
      %v3194 = vshrl.u32 %v3109, 16
      %3196 = vrot.lane.b32.xlu0 %v3113, 16
      %v3197 = vpop.permute.xlu0 %3196
      %3198 = vrot.lane.b32.xlu0 %v3116, 16
      %v3199 = vpop.permute.xlu0 %3198
      %3200 = vrot.lane.b32.xlu0 %v3119, 16
      %v3201 = vpop.permute.xlu0 %3200
      %3202 = vrot.lane.b32.xlu0 %v3122, 16
      %v3203 = vpop.permute.xlu0 %3202
      %3204 = vrot.lane.b32.xlu0 %v3125, 16
      %v3205 = vpop.permute.xlu0 %3204
      %3206 = vrot.lane.b32.xlu0 %v3128, 16
      %v3207 = vpop.permute.xlu0 %3206
      %3208 = vrot.lane.b32.xlu0 %v3131, 16
      %v3209 = vpop.permute.xlu0 %3208
      %3210 = vrot.lane.b32.xlu0 %v3134, 16
      %v3211 = vpop.permute.xlu0 %3210
      %3212 = vrot.lane.b32.xlu0 %v3137, 16
      %v3213 = vpop.permute.xlu0 %3212
      %3214 = vrot.lane.b32.xlu0 %v3140, 16
      %v3215 = vpop.permute.xlu0 %3214
      %3216 = vrot.lane.b32.xlu0 %v3143, 16
      %v3217 = vpop.permute.xlu0 %3216
      %3218 = vrot.lane.b32.xlu0 %v3146, 16
      %v3219 = vpop.permute.xlu0 %3218
      %3220 = vrot.lane.b32.xlu0 %v3149, 16
      %v3221 = vpop.permute.xlu0 %3220
      %3222 = vrot.lane.b32.xlu0 %v3152, 16
      %v3223 = vpop.permute.xlu0 %3222
      %3224 = vrot.lane.b32.xlu0 %v3155, 16
      %v3225 = vpop.permute.xlu0 %3224
      %3226 = vrot.lane.b32.xlu0 %v3158, 16
      %v3227 = vpop.permute.xlu0 %3226
      %3228 = vrot.lane.b32.xlu0 %v3161, 16
      %v3229 = vpop.permute.xlu0 %3228
      %3230 = vrot.lane.b32.xlu0 %v3164, 16
      %v3231 = vpop.permute.xlu0 %3230
      %3232 = vrot.lane.b32.xlu0 %v3167, 16
      %v3233 = vpop.permute.xlu0 %3232
      %3234 = vrot.lane.b32.xlu0 %v3170, 16
      %v3235 = vpop.permute.xlu0 %3234
      %3236 = vrot.lane.b32.xlu0 %v3173, 16
      %v3237 = vpop.permute.xlu0 %3236
      %3238 = vrot.lane.b32.xlu0 %v3176, 16
      %v3239 = vpop.permute.xlu0 %3238
      %3240 = vrot.lane.b32.xlu0 %v3179, 16
      %v3241 = vpop.permute.xlu0 %3240
      %3242 = vrot.lane.b32.xlu0 %v3185, 16
      %v3243 = vpop.permute.xlu0 %3242
      %3244 = vrot.lane.b32.xlu0 %v3193, 16
      %v3245 = vpop.permute.xlu0 %3244
      %3246 = vrot.lane.b32.xlu0 %v3194, 16
      %v3247 = vpop.permute.xlu0 %3246
      %v3257 = vunpack.c.l.b16 %v335
      %v3258 = vunpack.c.l.b16 %v336
      %v3259 = vunpack.c.l.b16 %v337
      %v3260 = vunpack.c.l.b16 %v338
      %v3261 = vunpack.c.l.b16 %v339
      %v3262 = vunpack.c.l.b16 %v340
      %v3263 = vunpack.c.l.b16 %v341
      %v3264 = vunpack.c.l.b16 %v342
      %v3265 = vunpack.c.l.b16 %v343
      %v3266 = vpack.c.b16 %v3257, %v3108
      %v3267 = vpack.c.b16 %v3259, %v3258
      %v3268 = vpack.c.b16 %v3261, %v3260
      %v3269 = vpack.c.b16 %v3263, %v3262
      %v3270 = vpack.c.b16 %v3265, %v3264
      %vm3271 = vsmask.f32 256
      %v3272 = vrot.slane %v1070, 7
      %v3273 = vor.u32 %v3272, %v1073
      %v3274 = vrot.slane %v1079, 7
      %v3275 = vor.u32 %v3274, %v1082
      %v3276 = vsel %vm3271, %v3272, %v3275
      %v3277 = vrot.slane %v1088, 7
      %v3278 = vor.u32 %v3277, %v1091
      %v3279 = vsel %vm3271, %v3274, %v3278
      %v3280 = vrot.slane %v1097, 7
      %v3281 = vor.u32 %v3280, %v1100
      %v3282 = vsel %vm3271, %v3277, %v3281
      %v3283 = vrot.slane %v1106, 7
      %v3284 = vor.u32 %v3283, %v1109
      %v3285 = vsel %vm3271, %v3280, %v3284
      %v3286 = vrot.slane %v1115, 7
      %v3287 = vor.u32 %v3286, %v1118
      %v3288 = vsel %vm3271, %v3283, %v3287
      %v3289 = vrot.slane %v1124, 7
      %v3290 = vor.u32 %v3289, %v1127
      %v3291 = vsel %vm3271, %v3286, %v3290
      %v3292 = vrot.slane %v1133, 7
      %v3293 = vor.u32 %v3292, %v1136
      %v3294 = vsel %vm3271, %v3289, %v3293
      %v3295 = vrot.slane %v1142, 7
      %v3296 = vor.u32 %v3295, %v1145
      %v3297 = vsel %vm3271, %v3292, %v3296
      %v3298 = vrot.slane %v1151, 7
      %v3299 = vor.u32 %v3298, %v1154
      %v3300 = vsel %vm3271, %v3295, %v3299
      %v3301 = vrot.slane %v1160, 7
      %v3302 = vor.u32 %v3301, %v1163
      %v3303 = vsel %vm3271, %v3298, %v3302
      %v3304 = vrot.slane %v1169, 7
      %v3305 = vor.u32 %v3304, %v1172
      %v3306 = vsel %vm3271, %v3301, %v3305
      %v3307 = vrot.slane %v1178, 7
      %v3308 = vor.u32 %v3307, %v1181
      %v3309 = vsel %vm3271, %v3304, %v3308
      %v3310 = vrot.slane %v2109, 7
      %v3311 = vor.u32 %v3310, %v2112
      %v3312 = vsel %vm3271, %v3307, %v3311
      %v3313 = vrot.slane %v2118, 7
      %v3314 = vor.u32 %v3313, %v2121
      %v3315 = vsel %vm3271, %v3310, %v3314
      %v3316 = vrot.slane %v2127, 7
      %v3317 = vor.u32 %v3316, %v2130
      %v3318 = vsel %vm3271, %v3313, %v3317
      %v3319 = vrot.slane %v2136, 7
      %v3320 = vor.u32 %v3319, %v2139
      %v3321 = vsel %vm3271, %v3316, %v3320
      %v3322 = vrot.slane %v2145, 7
      %v3323 = vor.u32 %v3322, %v2148
      %v3324 = vsel %vm3271, %v3319, %v3323
      %v3325 = vrot.slane %v2154, 7
      %v3326 = vor.u32 %v3325, %v2157
      %v3327 = vsel %vm3271, %v3322, %v3326
      %v3328 = vrot.slane %v3186, 7
      %v3329 = vor.u32 %v3328, %v3182
      %v3330 = vsel %vm3271, %v3325, %v3329
      %v3332 = vshrl.u32 %v3266, 16
      %v3334 = vrot.slane %v3332, 7
      %v3335 = vshll.u32 %v3266, 16
      %v3337 = vor.u32 %v3334, %v3335
      %v3338 = vsel %vm3271, %v3328, %v3337
      %v3340 = vshrl.u32 %v3267, 16
      %v3342 = vrot.slane %v3340, 7
      %v3343 = vshll.u32 %v3267, 16
      %v3345 = vor.u32 %v3342, %v3343
      %v3346 = vsel %vm3271, %v3334, %v3345
      %v3348 = vshrl.u32 %v3268, 16
      %v3350 = vrot.slane %v3348, 7
      %v3351 = vshll.u32 %v3268, 16
      %v3353 = vor.u32 %v3350, %v3351
      %v3354 = vsel %vm3271, %v3342, %v3353
      %v3356 = vshrl.u32 %v3269, 16
      %v3358 = vrot.slane %v3356, 7
      %v3359 = vshll.u32 %v3269, 16
      %v3361 = vor.u32 %v3358, %v3359
      %v3362 = vsel %vm3271, %v3350, %v3361
      %v3364 = vshrl.u32 %v3270, 16
      %v3366 = vrot.slane %v3364, 7
      %v3367 = vshll.u32 %v3270, 16
      %v3369 = vor.u32 %v3366, %v3367
      %v3370 = vsel %vm3271, %v3358, %v3369
      %3371 = vrot.lane.b32.xlu0 %v3273, 32
      %v3372 = vpop.permute.xlu0 %3371
      %3373 = vrot.lane.b32.xlu0 %v3276, 32
      %v3374 = vpop.permute.xlu0 %3373
      %3375 = vrot.lane.b32.xlu0 %v3279, 32
      %v3376 = vpop.permute.xlu0 %3375
      %3377 = vrot.lane.b32.xlu0 %v3282, 32
      %v3378 = vpop.permute.xlu0 %3377
      %3379 = vrot.lane.b32.xlu0 %v3285, 32
      %v3380 = vpop.permute.xlu0 %3379
      %3381 = vrot.lane.b32.xlu0 %v3288, 32
      %v3382 = vpop.permute.xlu0 %3381
      %3383 = vrot.lane.b32.xlu0 %v3291, 32
      %v3384 = vpop.permute.xlu0 %3383
      %3385 = vrot.lane.b32.xlu0 %v3294, 32
      %v3386 = vpop.permute.xlu0 %3385
      %3387 = vrot.lane.b32.xlu0 %v3297, 32
      %v3388 = vpop.permute.xlu0 %3387
      %3389 = vrot.lane.b32.xlu0 %v3300, 32
      %v3390 = vpop.permute.xlu0 %3389
      %3391 = vrot.lane.b32.xlu0 %v3303, 32
      %v3392 = vpop.permute.xlu0 %3391
      %3393 = vrot.lane.b32.xlu0 %v3306, 32
      %v3394 = vpop.permute.xlu0 %3393
      %3395 = vrot.lane.b32.xlu0 %v3309, 32
      %v3396 = vpop.permute.xlu0 %3395
      %3397 = vrot.lane.b32.xlu0 %v3312, 32
      %v3398 = vpop.permute.xlu0 %3397
      %3399 = vrot.lane.b32.xlu0 %v3315, 32
      %v3400 = vpop.permute.xlu0 %3399
      %3401 = vrot.lane.b32.xlu0 %v3318, 32
      %v3402 = vpop.permute.xlu0 %3401
      %3403 = vrot.lane.b32.xlu0 %v3321, 32
      %v3404 = vpop.permute.xlu0 %3403
      %3405 = vrot.lane.b32.xlu0 %v3324, 32
      %v3406 = vpop.permute.xlu0 %3405
      %3407 = vrot.lane.b32.xlu0 %v3327, 32
      %v3408 = vpop.permute.xlu0 %3407
      %3409 = vrot.lane.b32.xlu0 %v3330, 32
      %v3410 = vpop.permute.xlu0 %3409
      %3411 = vrot.lane.b32.xlu0 %v3338, 32
      %v3412 = vpop.permute.xlu0 %3411
      %3413 = vrot.lane.b32.xlu0 %v3346, 32
      %v3414 = vpop.permute.xlu0 %3413
      %3415 = vrot.lane.b32.xlu0 %v3354, 32
      %v3416 = vpop.permute.xlu0 %3415
      %3417 = vrot.lane.b32.xlu0 %v3362, 32
      %v3418 = vpop.permute.xlu0 %3417
      %3419 = vrot.lane.b32.xlu0 %v3370, 32
      %v3420 = vpop.permute.xlu0 %3419
      %3421 = vrot.lane.b32.xlu0 %v3366, 32
      %v3422 = vpop.permute.xlu0 %3421
      %v3424 = vunpack.c.l.b16 %v344
      %v3425 = vpack.c.b16 %v3424, %v3424
      %3426 = vrot.lane.b32.xlu0 %v846, 48
      %v3427 = vpop.permute.xlu0 %3426
      %3428 = vrot.lane.b32.xlu0 %v847, 48
      %v3429 = vpop.permute.xlu0 %3428
      %3430 = vrot.lane.b32.xlu0 %v848, 48
      %v3431 = vpop.permute.xlu0 %3430
      %3432 = vrot.lane.b32.xlu0 %v849, 48
      %v3433 = vpop.permute.xlu0 %3432
      %3434 = vrot.lane.b32.xlu0 %v850, 48
      %v3435 = vpop.permute.xlu0 %3434
      %3436 = vrot.lane.b32.xlu0 %v851, 48
      %v3437 = vpop.permute.xlu0 %3436
      %3438 = vrot.lane.b32.xlu0 %v852, 48
      %v3439 = vpop.permute.xlu0 %3438
      %3440 = vrot.lane.b32.xlu0 %v853, 48
      %v3441 = vpop.permute.xlu0 %3440
      %3442 = vrot.lane.b32.xlu0 %v854, 48
      %v3443 = vpop.permute.xlu0 %3442
      %3444 = vrot.lane.b32.xlu0 %v855, 48
      %v3445 = vpop.permute.xlu0 %3444
      %3446 = vrot.lane.b32.xlu0 %v856, 48
      %v3447 = vpop.permute.xlu0 %3446
      %3448 = vrot.lane.b32.xlu0 %v857, 48
      %v3449 = vpop.permute.xlu0 %3448
      %3450 = vrot.lane.b32.xlu0 %v858, 48
      %v3451 = vpop.permute.xlu0 %3450
      %3452 = vrot.lane.b32.xlu0 %v1924, 48
      %v3453 = vpop.permute.xlu0 %3452
      %3454 = vrot.lane.b32.xlu0 %v1925, 48
      %v3455 = vpop.permute.xlu0 %3454
      %3456 = vrot.lane.b32.xlu0 %v1926, 48
      %v3457 = vpop.permute.xlu0 %3456
      %3458 = vrot.lane.b32.xlu0 %v1927, 48
      %v3459 = vpop.permute.xlu0 %3458
      %3460 = vrot.lane.b32.xlu0 %v1928, 48
      %v3461 = vpop.permute.xlu0 %3460
      %3462 = vrot.lane.b32.xlu0 %v1929, 48
      %v3463 = vpop.permute.xlu0 %3462
      %3464 = vrot.lane.b32.xlu0 %v2274, 48
      %v3465 = vpop.permute.xlu0 %3464
      %3466 = vrot.lane.b32.xlu0 %v3266, 48
      %v3467 = vpop.permute.xlu0 %3466
      %3468 = vrot.lane.b32.xlu0 %v3267, 48
      %v3469 = vpop.permute.xlu0 %3468
      %3470 = vrot.lane.b32.xlu0 %v3268, 48
      %v3471 = vpop.permute.xlu0 %3470
      %3472 = vrot.lane.b32.xlu0 %v3269, 48
      %v3473 = vpop.permute.xlu0 %3472
      %3474 = vrot.lane.b32.xlu0 %v3270, 48
      %v3475 = vpop.permute.xlu0 %3474
      %3476 = vrot.lane.b32.xlu0 %v3425, 48
      %v3477 = vpop.permute.xlu0 %3476
      %v3478 = vrot.slane %v3335, 1
      %v3479 = vsel %vm475, %v3188, %v3478
      %v3480 = vor.u32 %v3332, %v3478
      %v3481 = vrot.slane %v3343, 1
      %v3482 = vsel %vm475, %v3480, %v3481
      %v3483 = vor.u32 %v3340, %v3481
      %v3484 = vrot.slane %v3351, 1
      %v3485 = vsel %vm475, %v3483, %v3484
      %v3486 = vor.u32 %v3348, %v3484
      %v3487 = vrot.slane %v3359, 1
      %v3488 = vsel %vm475, %v3486, %v3487
      %v3489 = vor.u32 %v3356, %v3487
      %v3490 = vrot.slane %v3367, 1
      %v3491 = vsel %vm475, %v3489, %v3490
      %v3492 = vor.u32 %v3364, %v3490
      %v3494 = vshll.u32 %v3425, 16
      %v3496 = vrot.slane %v3494, 1
      %v3497 = vsel %vm475, %v3492, %v3496
      %v3498 = vshrl.u32 %v3425, 16
      %3500 = vrot.lane.b32.xlu0 %v3128, 64
      %v3501 = vpop.permute.xlu0 %3500
      %3502 = vrot.lane.b32.xlu0 %v3131, 64
      %v3503 = vpop.permute.xlu0 %3502
      %3504 = vrot.lane.b32.xlu0 %v3134, 64
      %v3505 = vpop.permute.xlu0 %3504
      %3506 = vrot.lane.b32.xlu0 %v3137, 64
      %v3507 = vpop.permute.xlu0 %3506
      %3508 = vrot.lane.b32.xlu0 %v3140, 64
      %v3509 = vpop.permute.xlu0 %3508
      %3510 = vrot.lane.b32.xlu0 %v3143, 64
      %v3511 = vpop.permute.xlu0 %3510
      %3512 = vrot.lane.b32.xlu0 %v3146, 64
      %v3513 = vpop.permute.xlu0 %3512
      %3514 = vrot.lane.b32.xlu0 %v3149, 64
      %v3515 = vpop.permute.xlu0 %3514
      %3516 = vrot.lane.b32.xlu0 %v3152, 64
      %v3517 = vpop.permute.xlu0 %3516
      %3518 = vrot.lane.b32.xlu0 %v3155, 64
      %v3519 = vpop.permute.xlu0 %3518
      %3520 = vrot.lane.b32.xlu0 %v3158, 64
      %v3521 = vpop.permute.xlu0 %3520
      %3522 = vrot.lane.b32.xlu0 %v3161, 64
      %v3523 = vpop.permute.xlu0 %3522
      %3524 = vrot.lane.b32.xlu0 %v3164, 64
      %v3525 = vpop.permute.xlu0 %3524
      %3526 = vrot.lane.b32.xlu0 %v3167, 64
      %v3527 = vpop.permute.xlu0 %3526
      %3528 = vrot.lane.b32.xlu0 %v3170, 64
      %v3529 = vpop.permute.xlu0 %3528
      %3530 = vrot.lane.b32.xlu0 %v3173, 64
      %v3531 = vpop.permute.xlu0 %3530
      %3532 = vrot.lane.b32.xlu0 %v3176, 64
      %v3533 = vpop.permute.xlu0 %3532
      %3534 = vrot.lane.b32.xlu0 %v3179, 64
      %v3535 = vpop.permute.xlu0 %3534
      %3536 = vrot.lane.b32.xlu0 %v3185, 64
      %v3537 = vpop.permute.xlu0 %3536
      %3538 = vrot.lane.b32.xlu0 %v3479, 64
      %v3539 = vpop.permute.xlu0 %3538
      %3540 = vrot.lane.b32.xlu0 %v3482, 64
      %v3541 = vpop.permute.xlu0 %3540
      %3542 = vrot.lane.b32.xlu0 %v3485, 64
      %v3543 = vpop.permute.xlu0 %3542
      %3544 = vrot.lane.b32.xlu0 %v3488, 64
      %v3545 = vpop.permute.xlu0 %3544
      %3546 = vrot.lane.b32.xlu0 %v3491, 64
      %v3547 = vpop.permute.xlu0 %3546
      %3548 = vrot.lane.b32.xlu0 %v3497, 64
      %v3549 = vpop.permute.xlu0 %3548
      %3550 = vrot.lane.b32.xlu0 %v3498, 64
      %v3551 = vpop.permute.xlu0 %3550
      %v3553 = vunpack.c.l.b16 %v345
      %v3554 = vpack.c.b16 %v3108, %v2273
      %v3555 = vpack.c.b16 %v3258, %v3257
      %v3556 = vpack.c.b16 %v3260, %v3259
      %v3557 = vpack.c.b16 %v3262, %v3261
      %v3558 = vpack.c.b16 %v3264, %v3263
      %v3559 = vpack.c.b16 %v3424, %v3265
      %v3560 = vpack.c.b16 %v3553, %v3553
      %v3561 = vrot.slane %v1552, 1
      %v3562 = vsel %vm475, %v674, %v3561
      %v3563 = vor.u32 %v1549, %v3561
      %v3564 = vrot.slane %v1760, 1
      %v3565 = vsel %vm475, %v3563, %v3564
      %v3566 = vor.u32 %v1757, %v3564
      %v3567 = vrot.slane %v1769, 1
      %v3568 = vsel %vm475, %v3566, %v3567
      %v3569 = vor.u32 %v1766, %v3567
      %v3570 = vrot.slane %v1778, 1
      %v3571 = vsel %vm475, %v3569, %v3570
      %v3572 = vor.u32 %v1775, %v3570
      %v3573 = vrot.slane %v1787, 1
      %v3574 = vsel %vm475, %v3572, %v3573
      %v3575 = vor.u32 %v1784, %v3573
      %v3576 = vrot.slane %v1796, 1
      %v3577 = vsel %vm475, %v3575, %v3576
      %v3578 = vor.u32 %v1793, %v3576
      %v3580 = vshll.u32 %v2221, 16
      %v3582 = vrot.slane %v3580, 1
      %v3583 = vsel %vm475, %v3578, %v3582
      %v3584 = vshrl.u32 %v2221, 16
      %v3586 = vor.u32 %v3584, %v3582
      %v3588 = vshll.u32 %v3554, 16
      %v3590 = vrot.slane %v3588, 1
      %v3591 = vsel %vm475, %v3586, %v3590
      %v3592 = vshrl.u32 %v3554, 16
      %v3594 = vor.u32 %v3592, %v3590
      %v3596 = vshll.u32 %v3555, 16
      %v3598 = vrot.slane %v3596, 1
      %v3599 = vsel %vm475, %v3594, %v3598
      %v3600 = vshrl.u32 %v3555, 16
      %v3602 = vor.u32 %v3600, %v3598
      %v3604 = vshll.u32 %v3556, 16
      %v3606 = vrot.slane %v3604, 1
      %v3607 = vsel %vm475, %v3602, %v3606
      %v3608 = vshrl.u32 %v3556, 16
      %v3610 = vor.u32 %v3608, %v3606
      %v3612 = vshll.u32 %v3557, 16
      %v3614 = vrot.slane %v3612, 1
      %v3615 = vsel %vm475, %v3610, %v3614
      %v3616 = vshrl.u32 %v3557, 16
      %v3618 = vor.u32 %v3616, %v3614
      %v3620 = vshll.u32 %v3558, 16
      %v3622 = vrot.slane %v3620, 1
      %v3623 = vsel %vm475, %v3618, %v3622
      %v3624 = vshrl.u32 %v3558, 16
      %v3626 = vor.u32 %v3624, %v3622
      %v3628 = vshll.u32 %v3559, 16
      %v3630 = vrot.slane %v3628, 1
      %v3631 = vsel %vm475, %v3626, %v3630
      %v3632 = vshrl.u32 %v3559, 16
      %v3634 = vor.u32 %v3632, %v3630
      %v3636 = vshll.u32 %v3560, 16
      %v3638 = vrot.slane %v3636, 1
      %v3639 = vsel %vm475, %v3634, %v3638
      %v3640 = vshrl.u32 %v3560, 16
      %3642 = vrot.lane.b32.xlu0 %v591, 80
      %v3643 = vpop.permute.xlu0 %3642
      %3644 = vrot.lane.b32.xlu0 %v599, 80
      %v3645 = vpop.permute.xlu0 %3644
      %3646 = vrot.lane.b32.xlu0 %v607, 80
      %v3647 = vpop.permute.xlu0 %3646
      %3648 = vrot.lane.b32.xlu0 %v615, 80
      %v3649 = vpop.permute.xlu0 %3648
      %3650 = vrot.lane.b32.xlu0 %v623, 80
      %v3651 = vpop.permute.xlu0 %3650
      %3652 = vrot.lane.b32.xlu0 %v631, 80
      %v3653 = vpop.permute.xlu0 %3652
      %3654 = vrot.lane.b32.xlu0 %v639, 80
      %v3655 = vpop.permute.xlu0 %3654
      %3656 = vrot.lane.b32.xlu0 %v647, 80
      %v3657 = vpop.permute.xlu0 %3656
      %3658 = vrot.lane.b32.xlu0 %v655, 80
      %v3659 = vpop.permute.xlu0 %3658
      %3660 = vrot.lane.b32.xlu0 %v663, 80
      %v3661 = vpop.permute.xlu0 %3660
      %3662 = vrot.lane.b32.xlu0 %v671, 80
      %v3663 = vpop.permute.xlu0 %3662
      %3664 = vrot.lane.b32.xlu0 %v3562, 80
      %v3665 = vpop.permute.xlu0 %3664
      %3666 = vrot.lane.b32.xlu0 %v3565, 80
      %v3667 = vpop.permute.xlu0 %3666
      %3668 = vrot.lane.b32.xlu0 %v3568, 80
      %v3669 = vpop.permute.xlu0 %3668
      %3670 = vrot.lane.b32.xlu0 %v3571, 80
      %v3671 = vpop.permute.xlu0 %3670
      %3672 = vrot.lane.b32.xlu0 %v3574, 80
      %v3673 = vpop.permute.xlu0 %3672
      %3674 = vrot.lane.b32.xlu0 %v3577, 80
      %v3675 = vpop.permute.xlu0 %3674
      %3676 = vrot.lane.b32.xlu0 %v3583, 80
      %v3677 = vpop.permute.xlu0 %3676
      %3678 = vrot.lane.b32.xlu0 %v3591, 80
      %v3679 = vpop.permute.xlu0 %3678
      %3680 = vrot.lane.b32.xlu0 %v3599, 80
      %v3681 = vpop.permute.xlu0 %3680
      %3682 = vrot.lane.b32.xlu0 %v3607, 80
      %v3683 = vpop.permute.xlu0 %3682
      %3684 = vrot.lane.b32.xlu0 %v3615, 80
      %v3685 = vpop.permute.xlu0 %3684
      %3686 = vrot.lane.b32.xlu0 %v3623, 80
      %v3687 = vpop.permute.xlu0 %3686
      %3688 = vrot.lane.b32.xlu0 %v3631, 80
      %v3689 = vpop.permute.xlu0 %3688
      %3690 = vrot.lane.b32.xlu0 %v3639, 80
      %v3691 = vpop.permute.xlu0 %3690
      %3692 = vrot.lane.b32.xlu0 %v3640, 80
      %v3693 = vpop.permute.xlu0 %3692
      %v3694 = vrot.slane %v1349, 1
      %v3695 = vsel %vm730, %v778, %v3694
      %v3696 = vrot.slane %v1688, 1
      %v3697 = vsel %vm730, %v3694, %v3696
      %v3698 = vrot.slane %v1689, 1
      %v3699 = vsel %vm730, %v3696, %v3698
      %v3700 = vrot.slane %v1690, 1
      %v3701 = vsel %vm730, %v3698, %v3700
      %v3702 = vrot.slane %v1691, 1
      %v3703 = vsel %vm730, %v3700, %v3702
      %v3704 = vrot.slane %v1692, 1
      %v3705 = vsel %vm730, %v3702, %v3704
      %v3706 = vrot.slane %v2221, 1
      %v3707 = vsel %vm730, %v3704, %v3706
      %v3708 = vrot.slane %v3554, 1
      %v3709 = vsel %vm730, %v3706, %v3708
      %v3710 = vrot.slane %v3555, 1
      %v3711 = vsel %vm730, %v3708, %v3710
      %v3712 = vrot.slane %v3556, 1
      %v3713 = vsel %vm730, %v3710, %v3712
      %v3714 = vrot.slane %v3557, 1
      %v3715 = vsel %vm730, %v3712, %v3714
      %v3716 = vrot.slane %v3558, 1
      %v3717 = vsel %vm730, %v3714, %v3716
      %v3718 = vrot.slane %v3559, 1
      %v3719 = vsel %vm730, %v3716, %v3718
      %v3720 = vrot.slane %v3560, 1
      %v3721 = vsel %vm730, %v3718, %v3720
      %3722 = vrot.lane.b32.xlu0 %v759, 96
      %v3723 = vpop.permute.xlu0 %3722
      %3724 = vrot.lane.b32.xlu0 %v761, 96
      %v3725 = vpop.permute.xlu0 %3724
      %3726 = vrot.lane.b32.xlu0 %v763, 96
      %v3727 = vpop.permute.xlu0 %3726
      %3728 = vrot.lane.b32.xlu0 %v765, 96
      %v3729 = vpop.permute.xlu0 %3728
      %3730 = vrot.lane.b32.xlu0 %v767, 96
      %v3731 = vpop.permute.xlu0 %3730
      %3732 = vrot.lane.b32.xlu0 %v769, 96
      %v3733 = vpop.permute.xlu0 %3732
      %3734 = vrot.lane.b32.xlu0 %v771, 96
      %v3735 = vpop.permute.xlu0 %3734
      %3736 = vrot.lane.b32.xlu0 %v773, 96
      %v3737 = vpop.permute.xlu0 %3736
      %3738 = vrot.lane.b32.xlu0 %v775, 96
      %v3739 = vpop.permute.xlu0 %3738
      %3740 = vrot.lane.b32.xlu0 %v777, 96
      %v3741 = vpop.permute.xlu0 %3740
      %3742 = vrot.lane.b32.xlu0 %v779, 96
      %v3743 = vpop.permute.xlu0 %3742
      %3744 = vrot.lane.b32.xlu0 %v3695, 96
      %v3745 = vpop.permute.xlu0 %3744
      %3746 = vrot.lane.b32.xlu0 %v3697, 96
      %v3747 = vpop.permute.xlu0 %3746
      %3748 = vrot.lane.b32.xlu0 %v3699, 96
      %v3749 = vpop.permute.xlu0 %3748
      %3750 = vrot.lane.b32.xlu0 %v3701, 96
      %v3751 = vpop.permute.xlu0 %3750
      %3752 = vrot.lane.b32.xlu0 %v3703, 96
      %v3753 = vpop.permute.xlu0 %3752
      %3754 = vrot.lane.b32.xlu0 %v3705, 96
      %v3755 = vpop.permute.xlu0 %3754
      %3756 = vrot.lane.b32.xlu0 %v3707, 96
      %v3757 = vpop.permute.xlu0 %3756
      %3758 = vrot.lane.b32.xlu0 %v3709, 96
      %v3759 = vpop.permute.xlu0 %3758
      %3760 = vrot.lane.b32.xlu0 %v3711, 96
      %v3761 = vpop.permute.xlu0 %3760
      %3762 = vrot.lane.b32.xlu0 %v3713, 96
      %v3763 = vpop.permute.xlu0 %3762
      %3764 = vrot.lane.b32.xlu0 %v3715, 96
      %v3765 = vpop.permute.xlu0 %3764
      %3766 = vrot.lane.b32.xlu0 %v3717, 96
      %v3767 = vpop.permute.xlu0 %3766
      %3768 = vrot.lane.b32.xlu0 %v3719, 96
      %v3769 = vpop.permute.xlu0 %3768
      %3770 = vrot.lane.b32.xlu0 %v3721, 96
      %v3771 = vpop.permute.xlu0 %3770
      %3772 = vrot.lane.b32.xlu0 %v3720, 96
      %v3773 = vpop.permute.xlu0 %3772
      %v3774 = vrot.slane %v584, 1
      %v3775 = vrot.slane %v580, 2
      %v3776 = vor.u32 %v3774, %v3775
      %v3777 = vrot.slane %v592, 1
      %v3778 = vrot.slane %v588, 2
      %v3779 = vor.u32 %v3777, %v3778
      %v3780 = vsel %vm961, %v3776, %v3779
      %v3781 = vrot.slane %v600, 1
      %v3782 = vrot.slane %v596, 2
      %v3783 = vor.u32 %v3781, %v3782
      %v3784 = vsel %vm961, %v3779, %v3783
      %v3785 = vrot.slane %v608, 1
      %v3786 = vrot.slane %v604, 2
      %v3787 = vor.u32 %v3785, %v3786
      %v3788 = vsel %vm961, %v3783, %v3787
      %v3789 = vrot.slane %v616, 1
      %v3790 = vrot.slane %v612, 2
      %v3791 = vor.u32 %v3789, %v3790
      %v3792 = vsel %vm961, %v3787, %v3791
      %v3793 = vrot.slane %v624, 1
      %v3794 = vrot.slane %v620, 2
      %v3795 = vor.u32 %v3793, %v3794
      %v3796 = vsel %vm961, %v3791, %v3795
      %v3797 = vrot.slane %v632, 1
      %v3798 = vrot.slane %v628, 2
      %v3799 = vor.u32 %v3797, %v3798
      %v3800 = vsel %vm961, %v3795, %v3799
      %v3801 = vrot.slane %v640, 1
      %v3802 = vrot.slane %v636, 2
      %v3803 = vor.u32 %v3801, %v3802
      %v3804 = vsel %vm961, %v3799, %v3803
      %v3805 = vrot.slane %v648, 1
      %v3806 = vrot.slane %v644, 2
      %v3807 = vor.u32 %v3805, %v3806
      %v3808 = vsel %vm961, %v3803, %v3807
      %v3809 = vrot.slane %v656, 1
      %v3810 = vrot.slane %v652, 2
      %v3811 = vor.u32 %v3809, %v3810
      %v3812 = vsel %vm961, %v3807, %v3811
      %v3813 = vrot.slane %v664, 1
      %v3814 = vrot.slane %v660, 2
      %v3815 = vor.u32 %v3813, %v3814
      %v3816 = vsel %vm961, %v3811, %v3815
      %v3817 = vrot.slane %v672, 1
      %v3818 = vrot.slane %v668, 2
      %v3819 = vor.u32 %v3817, %v3818
      %v3820 = vsel %vm961, %v3815, %v3819
      %v3821 = vrot.slane %v1549, 1
      %v3822 = vrot.slane %v1552, 2
      %v3823 = vor.u32 %v3821, %v3822
      %v3824 = vsel %vm961, %v3819, %v3823
      %v3825 = vrot.slane %v1757, 1
      %v3826 = vrot.slane %v1760, 2
      %v3827 = vor.u32 %v3825, %v3826
      %v3828 = vsel %vm961, %v3823, %v3827
      %v3829 = vrot.slane %v1766, 1
      %v3830 = vrot.slane %v1769, 2
      %v3831 = vor.u32 %v3829, %v3830
      %v3832 = vsel %vm961, %v3827, %v3831
      %v3833 = vrot.slane %v1775, 1
      %v3834 = vrot.slane %v1778, 2
      %v3835 = vor.u32 %v3833, %v3834
      %v3836 = vsel %vm961, %v3831, %v3835
      %v3837 = vrot.slane %v1784, 1
      %v3838 = vrot.slane %v1787, 2
      %v3839 = vor.u32 %v3837, %v3838
      %v3840 = vsel %vm961, %v3835, %v3839
      %v3841 = vrot.slane %v1793, 1
      %v3842 = vrot.slane %v1796, 2
      %v3843 = vor.u32 %v3841, %v3842
      %v3844 = vsel %vm961, %v3839, %v3843
      %v3845 = vrot.slane %v3584, 1
      %v3846 = vrot.slane %v3580, 2
      %v3847 = vor.u32 %v3845, %v3846
      %v3848 = vsel %vm961, %v3843, %v3847
      %v3849 = vrot.slane %v3592, 1
      %v3850 = vrot.slane %v3588, 2
      %v3851 = vor.u32 %v3849, %v3850
      %v3852 = vsel %vm961, %v3847, %v3851
      %v3853 = vrot.slane %v3600, 1
      %v3854 = vrot.slane %v3596, 2
      %v3855 = vor.u32 %v3853, %v3854
      %v3856 = vsel %vm961, %v3851, %v3855
      %v3857 = vrot.slane %v3608, 1
      %v3858 = vrot.slane %v3604, 2
      %v3859 = vor.u32 %v3857, %v3858
      %v3860 = vsel %vm961, %v3855, %v3859
      %v3861 = vrot.slane %v3616, 1
      %v3862 = vrot.slane %v3612, 2
      %v3863 = vor.u32 %v3861, %v3862
      %v3864 = vsel %vm961, %v3859, %v3863
      %v3865 = vrot.slane %v3624, 1
      %v3866 = vrot.slane %v3620, 2
      %v3867 = vor.u32 %v3865, %v3866
      %v3868 = vsel %vm961, %v3863, %v3867
      %v3869 = vrot.slane %v3632, 1
      %v3870 = vrot.slane %v3628, 2
      %v3871 = vor.u32 %v3869, %v3870
      %v3872 = vsel %vm961, %v3867, %v3871
      %v3873 = vrot.slane %v3640, 1
      %v3874 = vrot.slane %v3636, 2
      %v3875 = vor.u32 %v3873, %v3874
      %v3876 = vsel %vm961, %v3871, %v3875
      %3877 = vrot.lane.b32.xlu0 %v3780, 112
      %v3878 = vpop.permute.xlu0 %3877
      %3879 = vrot.lane.b32.xlu0 %v3784, 112
      %v3880 = vpop.permute.xlu0 %3879
      %3881 = vrot.lane.b32.xlu0 %v3788, 112
      %v3882 = vpop.permute.xlu0 %3881
      %3883 = vrot.lane.b32.xlu0 %v3792, 112
      %v3884 = vpop.permute.xlu0 %3883
      %3885 = vrot.lane.b32.xlu0 %v3796, 112
      %v3886 = vpop.permute.xlu0 %3885
      %3887 = vrot.lane.b32.xlu0 %v3800, 112
      %v3888 = vpop.permute.xlu0 %3887
      %3889 = vrot.lane.b32.xlu0 %v3804, 112
      %v3890 = vpop.permute.xlu0 %3889
      %3891 = vrot.lane.b32.xlu0 %v3808, 112
      %v3892 = vpop.permute.xlu0 %3891
      %3893 = vrot.lane.b32.xlu0 %v3812, 112
      %v3894 = vpop.permute.xlu0 %3893
      %3895 = vrot.lane.b32.xlu0 %v3816, 112
      %v3896 = vpop.permute.xlu0 %3895
      %3897 = vrot.lane.b32.xlu0 %v3820, 112
      %v3898 = vpop.permute.xlu0 %3897
      %3899 = vrot.lane.b32.xlu0 %v3824, 112
      %v3900 = vpop.permute.xlu0 %3899
      %3901 = vrot.lane.b32.xlu0 %v3828, 112
      %v3902 = vpop.permute.xlu0 %3901
      %3903 = vrot.lane.b32.xlu0 %v3832, 112
      %v3904 = vpop.permute.xlu0 %3903
      %3905 = vrot.lane.b32.xlu0 %v3836, 112
      %v3906 = vpop.permute.xlu0 %3905
      %3907 = vrot.lane.b32.xlu0 %v3840, 112
      %v3908 = vpop.permute.xlu0 %3907
      %3909 = vrot.lane.b32.xlu0 %v3844, 112
      %v3910 = vpop.permute.xlu0 %3909
      %3911 = vrot.lane.b32.xlu0 %v3848, 112
      %v3912 = vpop.permute.xlu0 %3911
      %3913 = vrot.lane.b32.xlu0 %v3852, 112
      %v3914 = vpop.permute.xlu0 %3913
      %3915 = vrot.lane.b32.xlu0 %v3856, 112
      %v3916 = vpop.permute.xlu0 %3915
      %3917 = vrot.lane.b32.xlu0 %v3860, 112
      %v3918 = vpop.permute.xlu0 %3917
      %3919 = vrot.lane.b32.xlu0 %v3864, 112
      %v3920 = vpop.permute.xlu0 %3919
      %3921 = vrot.lane.b32.xlu0 %v3868, 112
      %v3922 = vpop.permute.xlu0 %3921
      %3923 = vrot.lane.b32.xlu0 %v3872, 112
      %v3924 = vpop.permute.xlu0 %3923
      %3925 = vrot.lane.b32.xlu0 %v3876, 112
      %v3926 = vpop.permute.xlu0 %3925
      %3927 = vrot.lane.b32.xlu0 %v3873, 112
      %v3928 = vpop.permute.xlu0 %3927
      %v3930 = vunpack.c.l.b16 %v346
      %v3931 = vpack.c.b16 %v3553, %v3424
      %v3932 = vpack.c.b16 %v3930, %v3930
      %v3933 = vrot.slane %v2109, 1
      %v3934 = vrot.slane %v2112, 2
      %v3935 = vor.u32 %v3933, %v3934
      %v3936 = vsel %vm961, %v1184, %v3935
      %v3937 = vrot.slane %v2118, 1
      %v3938 = vrot.slane %v2121, 2
      %v3939 = vor.u32 %v3937, %v3938
      %v3940 = vsel %vm961, %v3935, %v3939
      %v3941 = vrot.slane %v2127, 1
      %v3942 = vrot.slane %v2130, 2
      %v3943 = vor.u32 %v3941, %v3942
      %v3944 = vsel %vm961, %v3939, %v3943
      %v3945 = vrot.slane %v2136, 1
      %v3946 = vrot.slane %v2139, 2
      %v3947 = vor.u32 %v3945, %v3946
      %v3948 = vsel %vm961, %v3943, %v3947
      %v3949 = vrot.slane %v2145, 1
      %v3950 = vrot.slane %v2148, 2
      %v3951 = vor.u32 %v3949, %v3950
      %v3952 = vsel %vm961, %v3947, %v3951
      %v3953 = vrot.slane %v2154, 1
      %v3954 = vrot.slane %v2157, 2
      %v3955 = vor.u32 %v3953, %v3954
      %v3956 = vsel %vm961, %v3951, %v3955
      %v3957 = vrot.slane %v3186, 1
      %v3958 = vrot.slane %v3182, 2
      %v3959 = vor.u32 %v3957, %v3958
      %v3960 = vsel %vm961, %v3955, %v3959
      %v3961 = vrot.slane %v3332, 1
      %v3962 = vrot.slane %v3335, 2
      %v3963 = vor.u32 %v3961, %v3962
      %v3964 = vsel %vm961, %v3959, %v3963
      %v3965 = vrot.slane %v3340, 1
      %v3966 = vrot.slane %v3343, 2
      %v3967 = vor.u32 %v3965, %v3966
      %v3968 = vsel %vm961, %v3963, %v3967
      %v3969 = vrot.slane %v3348, 1
      %v3970 = vrot.slane %v3351, 2
      %v3971 = vor.u32 %v3969, %v3970
      %v3972 = vsel %vm961, %v3967, %v3971
      %v3973 = vrot.slane %v3356, 1
      %v3974 = vrot.slane %v3359, 2
      %v3975 = vor.u32 %v3973, %v3974
      %v3976 = vsel %vm961, %v3971, %v3975
      %v3977 = vrot.slane %v3364, 1
      %v3978 = vrot.slane %v3367, 2
      %v3979 = vor.u32 %v3977, %v3978
      %v3980 = vsel %vm961, %v3975, %v3979
      %v3982 = vshrl.u32 %v3931, 16
      %v3984 = vrot.slane %v3982, 1
      %v3985 = vshll.u32 %v3931, 16
      %v3987 = vrot.slane %v3985, 2
      %v3988 = vor.u32 %v3984, %v3987
      %v3989 = vsel %vm961, %v3979, %v3988
      %v3991 = vshrl.u32 %v3932, 16
      %v3993 = vrot.slane %v3991, 1
      %v3994 = vshll.u32 %v3932, 16
      %v3996 = vrot.slane %v3994, 2
      %v3997 = vor.u32 %v3993, %v3996
      %v3998 = vsel %vm961, %v3988, %v3997
      %v3999 = vrot.slane %v1924, 2
      %v4000 = vsel %vm1245, %v1293, %v3999
      %v4001 = vrot.slane %v1925, 2
      %v4002 = vsel %vm1245, %v3999, %v4001
      %v4003 = vrot.slane %v1926, 2
      %v4004 = vsel %vm1245, %v4001, %v4003
      %v4005 = vrot.slane %v1927, 2
      %v4006 = vsel %vm1245, %v4003, %v4005
      %v4007 = vrot.slane %v1928, 2
      %v4008 = vsel %vm1245, %v4005, %v4007
      %v4009 = vrot.slane %v1929, 2
      %v4010 = vsel %vm1245, %v4007, %v4009
      %v4011 = vrot.slane %v2274, 2
      %v4012 = vsel %vm1245, %v4009, %v4011
      %v4013 = vrot.slane %v3266, 2
      %v4014 = vsel %vm1245, %v4011, %v4013
      %v4015 = vrot.slane %v3267, 2
      %v4016 = vsel %vm1245, %v4013, %v4015
      %v4017 = vrot.slane %v3268, 2
      %v4018 = vsel %vm1245, %v4015, %v4017
      %v4019 = vrot.slane %v3269, 2
      %v4020 = vsel %vm1245, %v4017, %v4019
      %v4021 = vrot.slane %v3270, 2
      %v4022 = vsel %vm1245, %v4019, %v4021
      %v4023 = vrot.slane %v3931, 2
      %v4024 = vsel %vm1245, %v4021, %v4023
      %v4025 = vrot.slane %v3932, 2
      %v4026 = vsel %vm1245, %v4023, %v4025
      %4027 = vrot.lane.b32.xlu0 %v1274, 16
      %v4028 = vpop.permute.xlu0 %4027
      %4029 = vrot.lane.b32.xlu0 %v1276, 16
      %v4030 = vpop.permute.xlu0 %4029
      %4031 = vrot.lane.b32.xlu0 %v1278, 16
      %v4032 = vpop.permute.xlu0 %4031
      %4033 = vrot.lane.b32.xlu0 %v1280, 16
      %v4034 = vpop.permute.xlu0 %4033
      %4035 = vrot.lane.b32.xlu0 %v1282, 16
      %v4036 = vpop.permute.xlu0 %4035
      %4037 = vrot.lane.b32.xlu0 %v1284, 16
      %v4038 = vpop.permute.xlu0 %4037
      %4039 = vrot.lane.b32.xlu0 %v1286, 16
      %v4040 = vpop.permute.xlu0 %4039
      %4041 = vrot.lane.b32.xlu0 %v1288, 16
      %v4042 = vpop.permute.xlu0 %4041
      %4043 = vrot.lane.b32.xlu0 %v1290, 16
      %v4044 = vpop.permute.xlu0 %4043
      %4045 = vrot.lane.b32.xlu0 %v1292, 16
      %v4046 = vpop.permute.xlu0 %4045
      %4047 = vrot.lane.b32.xlu0 %v1294, 16
      %v4048 = vpop.permute.xlu0 %4047
      %4049 = vrot.lane.b32.xlu0 %v4000, 16
      %v4050 = vpop.permute.xlu0 %4049
      %4051 = vrot.lane.b32.xlu0 %v4002, 16
      %v4052 = vpop.permute.xlu0 %4051
      %4053 = vrot.lane.b32.xlu0 %v4004, 16
      %v4054 = vpop.permute.xlu0 %4053
      %4055 = vrot.lane.b32.xlu0 %v4006, 16
      %v4056 = vpop.permute.xlu0 %4055
      %4057 = vrot.lane.b32.xlu0 %v4008, 16
      %v4058 = vpop.permute.xlu0 %4057
      %4059 = vrot.lane.b32.xlu0 %v4010, 16
      %v4060 = vpop.permute.xlu0 %4059
      %4061 = vrot.lane.b32.xlu0 %v4012, 16
      %v4062 = vpop.permute.xlu0 %4061
      %4063 = vrot.lane.b32.xlu0 %v4014, 16
      %v4064 = vpop.permute.xlu0 %4063
      %4065 = vrot.lane.b32.xlu0 %v4016, 16
      %v4066 = vpop.permute.xlu0 %4065
      %4067 = vrot.lane.b32.xlu0 %v4018, 16
      %v4068 = vpop.permute.xlu0 %4067
      %4069 = vrot.lane.b32.xlu0 %v4020, 16
      %v4070 = vpop.permute.xlu0 %4069
      %4071 = vrot.lane.b32.xlu0 %v4022, 16
      %v4072 = vpop.permute.xlu0 %4071
      %4073 = vrot.lane.b32.xlu0 %v4024, 16
      %v4074 = vpop.permute.xlu0 %4073
      %4075 = vrot.lane.b32.xlu0 %v4026, 16
      %v4076 = vpop.permute.xlu0 %4075
      %4077 = vrot.lane.b32.xlu0 %v4025, 16
      %v4078 = vpop.permute.xlu0 %4077
      %v4079 = vrot.slane %v1079, 2
      %v4080 = vrot.slane %v1082, 3
      %v4081 = vor.u32 %v4079, %v4080
      %v4082 = vrot.slane %v1088, 2
      %v4083 = vrot.slane %v1091, 3
      %v4084 = vor.u32 %v4082, %v4083
      %v4085 = vsel %vm1452, %v4081, %v4084
      %v4086 = vrot.slane %v1097, 2
      %v4087 = vrot.slane %v1100, 3
      %v4088 = vor.u32 %v4086, %v4087
      %v4089 = vsel %vm1452, %v4084, %v4088
      %v4090 = vrot.slane %v1106, 2
      %v4091 = vrot.slane %v1109, 3
      %v4092 = vor.u32 %v4090, %v4091
      %v4093 = vsel %vm1452, %v4088, %v4092
      %v4094 = vrot.slane %v1115, 2
      %v4095 = vrot.slane %v1118, 3
      %v4096 = vor.u32 %v4094, %v4095
      %v4097 = vsel %vm1452, %v4092, %v4096
      %v4098 = vrot.slane %v1124, 2
      %v4099 = vrot.slane %v1127, 3
      %v4100 = vor.u32 %v4098, %v4099
      %v4101 = vsel %vm1452, %v4096, %v4100
      %v4102 = vrot.slane %v1133, 2
      %v4103 = vrot.slane %v1136, 3
      %v4104 = vor.u32 %v4102, %v4103
      %v4105 = vsel %vm1452, %v4100, %v4104
      %v4106 = vrot.slane %v1142, 2
      %v4107 = vrot.slane %v1145, 3
      %v4108 = vor.u32 %v4106, %v4107
      %v4109 = vsel %vm1452, %v4104, %v4108
      %v4110 = vrot.slane %v1151, 2
      %v4111 = vrot.slane %v1154, 3
      %v4112 = vor.u32 %v4110, %v4111
      %v4113 = vsel %vm1452, %v4108, %v4112
      %v4114 = vrot.slane %v1160, 2
      %v4115 = vrot.slane %v1163, 3
      %v4116 = vor.u32 %v4114, %v4115
      %v4117 = vsel %vm1452, %v4112, %v4116
      %v4118 = vrot.slane %v1169, 2
      %v4119 = vrot.slane %v1172, 3
      %v4120 = vor.u32 %v4118, %v4119
      %v4121 = vsel %vm1452, %v4116, %v4120
      %v4122 = vrot.slane %v1178, 2
      %v4123 = vrot.slane %v1181, 3
      %v4124 = vor.u32 %v4122, %v4123
      %v4125 = vsel %vm1452, %v4120, %v4124
      %v4126 = vrot.slane %v2109, 2
      %v4127 = vrot.slane %v2112, 3
      %v4128 = vor.u32 %v4126, %v4127
      %v4129 = vsel %vm1452, %v4124, %v4128
      %v4130 = vrot.slane %v2118, 2
      %v4131 = vrot.slane %v2121, 3
      %v4132 = vor.u32 %v4130, %v4131
      %v4133 = vsel %vm1452, %v4128, %v4132
      %v4134 = vrot.slane %v2127, 2
      %v4135 = vrot.slane %v2130, 3
      %v4136 = vor.u32 %v4134, %v4135
      %v4137 = vsel %vm1452, %v4132, %v4136
      %v4138 = vrot.slane %v2136, 2
      %v4139 = vrot.slane %v2139, 3
      %v4140 = vor.u32 %v4138, %v4139
      %v4141 = vsel %vm1452, %v4136, %v4140
      %v4142 = vrot.slane %v2145, 2
      %v4143 = vrot.slane %v2148, 3
      %v4144 = vor.u32 %v4142, %v4143
      %v4145 = vsel %vm1452, %v4140, %v4144
      %v4146 = vrot.slane %v2154, 2
      %v4147 = vrot.slane %v2157, 3
      %v4148 = vor.u32 %v4146, %v4147
      %v4149 = vsel %vm1452, %v4144, %v4148
      %v4150 = vrot.slane %v3186, 2
      %v4151 = vrot.slane %v3182, 3
      %v4152 = vor.u32 %v4150, %v4151
      %v4153 = vsel %vm1452, %v4148, %v4152
      %v4154 = vrot.slane %v3332, 2
      %v4155 = vrot.slane %v3335, 3
      %v4156 = vor.u32 %v4154, %v4155
      %v4157 = vsel %vm1452, %v4152, %v4156
      %v4158 = vrot.slane %v3340, 2
      %v4159 = vrot.slane %v3343, 3
      %v4160 = vor.u32 %v4158, %v4159
      %v4161 = vsel %vm1452, %v4156, %v4160
      %v4162 = vrot.slane %v3348, 2
      %v4163 = vrot.slane %v3351, 3
      %v4164 = vor.u32 %v4162, %v4163
      %v4165 = vsel %vm1452, %v4160, %v4164
      %v4166 = vrot.slane %v3356, 2
      %v4167 = vrot.slane %v3359, 3
      %v4168 = vor.u32 %v4166, %v4167
      %v4169 = vsel %vm1452, %v4164, %v4168
      %v4170 = vrot.slane %v3364, 2
      %v4171 = vrot.slane %v3367, 3
      %v4172 = vor.u32 %v4170, %v4171
      %v4173 = vsel %vm1452, %v4168, %v4172
      %v4174 = vrot.slane %v3982, 2
      %v4175 = vrot.slane %v3985, 3
      %v4176 = vor.u32 %v4174, %v4175
      %v4177 = vsel %vm1452, %v4172, %v4176
      %v4178 = vrot.slane %v3991, 2
      %v4179 = vrot.slane %v3994, 3
      %v4180 = vor.u32 %v4178, %v4179
      %v4181 = vsel %vm1452, %v4176, %v4180
      %4182 = vrot.lane.b32.xlu0 %v4085, 32
      %v4183 = vpop.permute.xlu0 %4182
      %4184 = vrot.lane.b32.xlu0 %v4089, 32
      %v4185 = vpop.permute.xlu0 %4184
      %4186 = vrot.lane.b32.xlu0 %v4093, 32
      %v4187 = vpop.permute.xlu0 %4186
      %4188 = vrot.lane.b32.xlu0 %v4097, 32
      %v4189 = vpop.permute.xlu0 %4188
      %4190 = vrot.lane.b32.xlu0 %v4101, 32
      %v4191 = vpop.permute.xlu0 %4190
      %4192 = vrot.lane.b32.xlu0 %v4105, 32
      %v4193 = vpop.permute.xlu0 %4192
      %4194 = vrot.lane.b32.xlu0 %v4109, 32
      %v4195 = vpop.permute.xlu0 %4194
      %4196 = vrot.lane.b32.xlu0 %v4113, 32
      %v4197 = vpop.permute.xlu0 %4196
      %4198 = vrot.lane.b32.xlu0 %v4117, 32
      %v4199 = vpop.permute.xlu0 %4198
      %4200 = vrot.lane.b32.xlu0 %v4121, 32
      %v4201 = vpop.permute.xlu0 %4200
      %4202 = vrot.lane.b32.xlu0 %v4125, 32
      %v4203 = vpop.permute.xlu0 %4202
      %4204 = vrot.lane.b32.xlu0 %v4129, 32
      %v4205 = vpop.permute.xlu0 %4204
      %4206 = vrot.lane.b32.xlu0 %v4133, 32
      %v4207 = vpop.permute.xlu0 %4206
      %4208 = vrot.lane.b32.xlu0 %v4137, 32
      %v4209 = vpop.permute.xlu0 %4208
      %4210 = vrot.lane.b32.xlu0 %v4141, 32
      %v4211 = vpop.permute.xlu0 %4210
      %4212 = vrot.lane.b32.xlu0 %v4145, 32
      %v4213 = vpop.permute.xlu0 %4212
      %4214 = vrot.lane.b32.xlu0 %v4149, 32
      %v4215 = vpop.permute.xlu0 %4214
      %4216 = vrot.lane.b32.xlu0 %v4153, 32
      %v4217 = vpop.permute.xlu0 %4216
      %4218 = vrot.lane.b32.xlu0 %v4157, 32
      %v4219 = vpop.permute.xlu0 %4218
      %4220 = vrot.lane.b32.xlu0 %v4161, 32
      %v4221 = vpop.permute.xlu0 %4220
      %4222 = vrot.lane.b32.xlu0 %v4165, 32
      %v4223 = vpop.permute.xlu0 %4222
      %4224 = vrot.lane.b32.xlu0 %v4169, 32
      %v4225 = vpop.permute.xlu0 %4224
      %4226 = vrot.lane.b32.xlu0 %v4173, 32
      %v4227 = vpop.permute.xlu0 %4226
      %4228 = vrot.lane.b32.xlu0 %v4177, 32
      %v4229 = vpop.permute.xlu0 %4228
      %4230 = vrot.lane.b32.xlu0 %v4181, 32
      %v4231 = vpop.permute.xlu0 %4230
      %4232 = vrot.lane.b32.xlu0 %v4178, 32
      %v4233 = vpop.permute.xlu0 %4232
      %v4235 = vsel %vm2325, %v841, %v3197
      %v4237 = vsel %vm2325, %v842, %v3199
      %v4239 = vsel %vm2325, %v843, %v3201
      %v4241 = vsel %vm2325, %v844, %v3203
      %v4243 = vsel %vm2325, %v845, %v3205
      %v4245 = vsel %vm2325, %v846, %v3207
      %v4247 = vsel %vm2325, %v847, %v3209
      %v4249 = vsel %vm2325, %v848, %v3211
      %v4251 = vsel %vm2325, %v849, %v3213
      %v4253 = vsel %vm2325, %v850, %v3215
      %v4255 = vsel %vm2325, %v851, %v3217
      %v4257 = vsel %vm2325, %v852, %v3219
      %v4259 = vsel %vm2325, %v853, %v3221
      %v4261 = vsel %vm2325, %v854, %v3223
      %v4263 = vsel %vm2325, %v855, %v3225
      %v4265 = vsel %vm2325, %v856, %v3227
      %v4267 = vsel %vm2325, %v857, %v3229
      %v4269 = vsel %vm2325, %v858, %v3231
      %v4271 = vsel %vm2325, %v1924, %v3233
      %v4273 = vsel %vm2325, %v1925, %v3235
      %v4275 = vsel %vm2325, %v1926, %v3237
      %v4277 = vsel %vm2325, %v1927, %v3239
      %v4279 = vsel %vm2325, %v1928, %v3241
      %v4281 = vsel %vm2325, %v1929, %v3243
      %v4283 = vsel %vm2325, %v2274, %v3245
      %v4285 = vsel %vm2325, %v3109, %v3247
      %v4287 = vsel %vm2376, %v4235, %v3372
      %v4289 = vsel %vm2376, %v4237, %v3374
      %v4291 = vsel %vm2376, %v4239, %v3376
      %v4293 = vsel %vm2376, %v4241, %v3378
      %v4295 = vsel %vm2376, %v4243, %v3380
      %v4297 = vsel %vm2376, %v4245, %v3382
      %v4299 = vsel %vm2376, %v4247, %v3384
      %v4301 = vsel %vm2376, %v4249, %v3386
      %v4303 = vsel %vm2376, %v4251, %v3388
      %v4305 = vsel %vm2376, %v4253, %v3390
      %v4307 = vsel %vm2376, %v4255, %v3392
      %v4309 = vsel %vm2376, %v4257, %v3394
      %v4311 = vsel %vm2376, %v4259, %v3396
      %v4313 = vsel %vm2376, %v4261, %v3398
      %v4315 = vsel %vm2376, %v4263, %v3400
      %v4317 = vsel %vm2376, %v4265, %v3402
      %v4319 = vsel %vm2376, %v4267, %v3404
      %v4321 = vsel %vm2376, %v4269, %v3406
      %v4323 = vsel %vm2376, %v4271, %v3408
      %v4325 = vsel %vm2376, %v4273, %v3410
      %v4327 = vsel %vm2376, %v4275, %v3412
      %v4329 = vsel %vm2376, %v4277, %v3414
      %v4331 = vsel %vm2376, %v4279, %v3416
      %v4333 = vsel %vm2376, %v4281, %v3418
      %v4335 = vsel %vm2376, %v4283, %v3420
      %v4337 = vsel %vm2376, %v4285, %v3422
      %v4339 = vsel %vm2427, %v4287, %v3427
      %v4341 = vsel %vm2427, %v4289, %v3429
      %v4343 = vsel %vm2427, %v4291, %v3431
      %v4345 = vsel %vm2427, %v4293, %v3433
      %v4347 = vsel %vm2427, %v4295, %v3435
      %v4349 = vsel %vm2427, %v4297, %v3437
      %v4351 = vsel %vm2427, %v4299, %v3439
      %v4353 = vsel %vm2427, %v4301, %v3441
      %v4355 = vsel %vm2427, %v4303, %v3443
      %v4357 = vsel %vm2427, %v4305, %v3445
      %v4359 = vsel %vm2427, %v4307, %v3447
      %v4361 = vsel %vm2427, %v4309, %v3449
      %v4363 = vsel %vm2427, %v4311, %v3451
      %v4365 = vsel %vm2427, %v4313, %v3453
      %v4367 = vsel %vm2427, %v4315, %v3455
      %v4369 = vsel %vm2427, %v4317, %v3457
      %v4371 = vsel %vm2427, %v4319, %v3459
      %v4373 = vsel %vm2427, %v4321, %v3461
      %v4375 = vsel %vm2427, %v4323, %v3463
      %v4377 = vsel %vm2427, %v4325, %v3465
      %v4379 = vsel %vm2427, %v4327, %v3467
      %v4381 = vsel %vm2427, %v4329, %v3469
      %v4383 = vsel %vm2427, %v4331, %v3471
      %v4385 = vsel %vm2427, %v4333, %v3473
      %v4387 = vsel %vm2427, %v4335, %v3475
      %v4389 = vsel %vm2427, %v4337, %v3477
      %v4391 = vsel %vm2478, %v4339, %v3501
      %v4393 = vsel %vm2478, %v4341, %v3503
      %v4395 = vsel %vm2478, %v4343, %v3505
      %v4397 = vsel %vm2478, %v4345, %v3507
      %v4399 = vsel %vm2478, %v4347, %v3509
      %v4401 = vsel %vm2478, %v4349, %v3511
      %v4403 = vsel %vm2478, %v4351, %v3513
      %v4405 = vsel %vm2478, %v4353, %v3515
      %v4407 = vsel %vm2478, %v4355, %v3517
      %v4409 = vsel %vm2478, %v4357, %v3519
      %v4411 = vsel %vm2478, %v4359, %v3521
      %v4413 = vsel %vm2478, %v4361, %v3523
      %v4415 = vsel %vm2478, %v4363, %v3525
      %v4417 = vsel %vm2478, %v4365, %v3527
      %v4419 = vsel %vm2478, %v4367, %v3529
      %v4421 = vsel %vm2478, %v4369, %v3531
      %v4423 = vsel %vm2478, %v4371, %v3533
      %v4425 = vsel %vm2478, %v4373, %v3535
      %v4427 = vsel %vm2478, %v4375, %v3537
      %v4429 = vsel %vm2478, %v4377, %v3539
      %v4431 = vsel %vm2478, %v4379, %v3541
      %v4433 = vsel %vm2478, %v4381, %v3543
      %v4435 = vsel %vm2478, %v4383, %v3545
      %v4437 = vsel %vm2478, %v4385, %v3547
      %v4439 = vsel %vm2478, %v4387, %v3549
      %v4441 = vsel %vm2478, %v4389, %v3551
      %v4443 = vsel %vm2529, %v4391, %v3643
      %v4445 = vsel %vm2529, %v4393, %v3645
      %v4447 = vsel %vm2529, %v4395, %v3647
      %v4449 = vsel %vm2529, %v4397, %v3649
      %v4451 = vsel %vm2529, %v4399, %v3651
      %v4453 = vsel %vm2529, %v4401, %v3653
      %v4455 = vsel %vm2529, %v4403, %v3655
      %v4457 = vsel %vm2529, %v4405, %v3657
      %v4459 = vsel %vm2529, %v4407, %v3659
      %v4461 = vsel %vm2529, %v4409, %v3661
      %v4463 = vsel %vm2529, %v4411, %v3663
      %v4465 = vsel %vm2529, %v4413, %v3665
      %v4467 = vsel %vm2529, %v4415, %v3667
      %v4469 = vsel %vm2529, %v4417, %v3669
      %v4471 = vsel %vm2529, %v4419, %v3671
      %v4473 = vsel %vm2529, %v4421, %v3673
      %v4475 = vsel %vm2529, %v4423, %v3675
      %v4477 = vsel %vm2529, %v4425, %v3677
      %v4479 = vsel %vm2529, %v4427, %v3679
      %v4481 = vsel %vm2529, %v4429, %v3681
      %v4483 = vsel %vm2529, %v4431, %v3683
      %v4485 = vsel %vm2529, %v4433, %v3685
      %v4487 = vsel %vm2529, %v4435, %v3687
      %v4489 = vsel %vm2529, %v4437, %v3689
      %v4491 = vsel %vm2529, %v4439, %v3691
      %v4493 = vsel %vm2529, %v4441, %v3693
      %v4495 = vsel %vm2580, %v4443, %v3723
      %v4497 = vsel %vm2580, %v4445, %v3725
      %v4499 = vsel %vm2580, %v4447, %v3727
      %v4501 = vsel %vm2580, %v4449, %v3729
      %v4503 = vsel %vm2580, %v4451, %v3731
      %v4505 = vsel %vm2580, %v4453, %v3733
      %v4507 = vsel %vm2580, %v4455, %v3735
      %v4509 = vsel %vm2580, %v4457, %v3737
      %v4511 = vsel %vm2580, %v4459, %v3739
      %v4513 = vsel %vm2580, %v4461, %v3741
      %v4515 = vsel %vm2580, %v4463, %v3743
      %v4517 = vsel %vm2580, %v4465, %v3745
      %v4519 = vsel %vm2580, %v4467, %v3747
      %v4521 = vsel %vm2580, %v4469, %v3749
      %v4523 = vsel %vm2580, %v4471, %v3751
      %v4525 = vsel %vm2580, %v4473, %v3753
      %v4527 = vsel %vm2580, %v4475, %v3755
      %v4529 = vsel %vm2580, %v4477, %v3757
      %v4531 = vsel %vm2580, %v4479, %v3759
      %v4533 = vsel %vm2580, %v4481, %v3761
      %v4535 = vsel %vm2580, %v4483, %v3763
      %v4537 = vsel %vm2580, %v4485, %v3765
      %v4539 = vsel %vm2580, %v4487, %v3767
      %v4541 = vsel %vm2580, %v4489, %v3769
      %v4543 = vsel %vm2580, %v4491, %v3771
      %v4545 = vsel %vm2580, %v4493, %v3773
      %v4547 = vsel %vm2631, %v4495, %v3878
      %v4549 = vsel %vm2631, %v4497, %v3880
      %v4551 = vsel %vm2631, %v4499, %v3882
      %v4553 = vsel %vm2631, %v4501, %v3884
      %v4555 = vsel %vm2631, %v4503, %v3886
      %v4557 = vsel %vm2631, %v4505, %v3888
      %v4559 = vsel %vm2631, %v4507, %v3890
      %v4561 = vsel %vm2631, %v4509, %v3892
      %v4563 = vsel %vm2631, %v4511, %v3894
      %v4565 = vsel %vm2631, %v4513, %v3896
      %v4567 = vsel %vm2631, %v4515, %v3898
      %v4569 = vsel %vm2631, %v4517, %v3900
      %v4571 = vsel %vm2631, %v4519, %v3902
      %v4573 = vsel %vm2631, %v4521, %v3904
      %v4575 = vsel %vm2631, %v4523, %v3906
      %v4577 = vsel %vm2631, %v4525, %v3908
      %v4579 = vsel %vm2631, %v4527, %v3910
      %v4581 = vsel %vm2631, %v4529, %v3912
      %v4583 = vsel %vm2631, %v4531, %v3914
      %v4585 = vsel %vm2631, %v4533, %v3916
      %v4587 = vsel %vm2631, %v4535, %v3918
      %v4589 = vsel %vm2631, %v4537, %v3920
      %v4591 = vsel %vm2631, %v4539, %v3922
      %v4593 = vsel %vm2631, %v4541, %v3924
      %v4595 = vsel %vm2631, %v4543, %v3926
      %v4597 = vsel %vm2631, %v4545, %v3928
      %v4600 = vsel %vm2325, %v1095, %v4028
      %v4603 = vsel %vm2325, %v1104, %v4030
      %v4606 = vsel %vm2325, %v1113, %v4032
      %v4609 = vsel %vm2325, %v1122, %v4034
      %v4612 = vsel %vm2325, %v1131, %v4036
      %v4615 = vsel %vm2325, %v1140, %v4038
      %v4618 = vsel %vm2325, %v1149, %v4040
      %v4621 = vsel %vm2325, %v1158, %v4042
      %v4624 = vsel %vm2325, %v1167, %v4044
      %v4627 = vsel %vm2325, %v1176, %v4046
      %v4630 = vsel %vm2325, %v1185, %v4048
      %v4633 = vsel %vm2325, %v3936, %v4050
      %v4636 = vsel %vm2325, %v3940, %v4052
      %v4639 = vsel %vm2325, %v3944, %v4054
      %v4642 = vsel %vm2325, %v3948, %v4056
      %v4645 = vsel %vm2325, %v3952, %v4058
      %v4648 = vsel %vm2325, %v3956, %v4060
      %v4651 = vsel %vm2325, %v3960, %v4062
      %v4654 = vsel %vm2325, %v3964, %v4064
      %v4657 = vsel %vm2325, %v3968, %v4066
      %v4660 = vsel %vm2325, %v3972, %v4068
      %v4663 = vsel %vm2325, %v3976, %v4070
      %v4666 = vsel %vm2325, %v3980, %v4072
      %v4669 = vsel %vm2325, %v3989, %v4074
      %v4672 = vsel %vm2325, %v3998, %v4076
      %v4675 = vsel %vm2325, %v3993, %v4078
      %v4677 = vsel %vm2376, %v4600, %v4183
      %v4679 = vsel %vm2376, %v4603, %v4185
      %v4681 = vsel %vm2376, %v4606, %v4187
      %v4683 = vsel %vm2376, %v4609, %v4189
      %v4685 = vsel %vm2376, %v4612, %v4191
      %v4687 = vsel %vm2376, %v4615, %v4193
      %v4689 = vsel %vm2376, %v4618, %v4195
      %v4691 = vsel %vm2376, %v4621, %v4197
      %v4693 = vsel %vm2376, %v4624, %v4199
      %v4695 = vsel %vm2376, %v4627, %v4201
      %v4697 = vsel %vm2376, %v4630, %v4203
      %v4699 = vsel %vm2376, %v4633, %v4205
      %v4701 = vsel %vm2376, %v4636, %v4207
      %v4703 = vsel %vm2376, %v4639, %v4209
      %v4705 = vsel %vm2376, %v4642, %v4211
      %v4707 = vsel %vm2376, %v4645, %v4213
      %v4709 = vsel %vm2376, %v4648, %v4215
      %v4711 = vsel %vm2376, %v4651, %v4217
      %v4713 = vsel %vm2376, %v4654, %v4219
      %v4715 = vsel %vm2376, %v4657, %v4221
      %v4717 = vsel %vm2376, %v4660, %v4223
      %v4719 = vsel %vm2376, %v4663, %v4225
      %v4721 = vsel %vm2376, %v4666, %v4227
      %v4723 = vsel %vm2376, %v4669, %v4229
      %v4725 = vsel %vm2376, %v4672, %v4231
      %v4727 = vsel %vm2376, %v4675, %v4233
      %v4728 = vshrl.u32 %v4547, 16
      %v4730 = vshll.u32 %v4547, 16
      %v4732 = vrot.slane %v4730, 1
      %v4733 = vor.u32 %v4728, %v4732
      %v4734 = vshll.u32 %v4549, 16
      %v4736 = vrot.slane %v4734, 1
      %v4737 = vsel %vm475, %v4733, %v4736
      %v4738 = vshrl.u32 %v4677, 16
      %v4740 = vshll.u32 %v4677, 16
      %v4742 = vrot.slane %v4740, 1
      %v4743 = vor.u32 %v4738, %v4742
      %v4744 = vshll.u32 %v4679, 16
      %v4746 = vrot.slane %v4744, 1
      %v4747 = vsel %vm475, %v4743, %v4746
      %v4748 = vshrl.u32 %v4549, 16
      %v4750 = vor.u32 %v4748, %v4736
      %v4751 = vshll.u32 %v4551, 16
      %v4753 = vrot.slane %v4751, 1
      %v4754 = vsel %vm475, %v4750, %v4753
      %v4755 = vshrl.u32 %v4679, 16
      %v4757 = vor.u32 %v4755, %v4746
      %v4758 = vshll.u32 %v4681, 16
      %v4760 = vrot.slane %v4758, 1
      %v4761 = vsel %vm475, %v4757, %v4760
      %v4762 = vshrl.u32 %v4551, 16
      %v4764 = vor.u32 %v4762, %v4753
      %v4765 = vshll.u32 %v4553, 16
      %v4767 = vrot.slane %v4765, 1
      %v4768 = vsel %vm475, %v4764, %v4767
      %v4769 = vshrl.u32 %v4681, 16
      %v4771 = vor.u32 %v4769, %v4760
      %v4772 = vshll.u32 %v4683, 16
      %v4774 = vrot.slane %v4772, 1
      %v4775 = vsel %vm475, %v4771, %v4774
      %v4776 = vshrl.u32 %v4553, 16
      %v4778 = vor.u32 %v4776, %v4767
      %v4779 = vshll.u32 %v4555, 16
      %v4781 = vrot.slane %v4779, 1
      %v4782 = vsel %vm475, %v4778, %v4781
      %v4783 = vshrl.u32 %v4683, 16
      %v4785 = vor.u32 %v4783, %v4774
      %v4786 = vshll.u32 %v4685, 16
      %v4788 = vrot.slane %v4786, 1
      %v4789 = vsel %vm475, %v4785, %v4788
      %v4790 = vshrl.u32 %v4555, 16
      %v4792 = vor.u32 %v4790, %v4781
      %v4793 = vshll.u32 %v4557, 16
      %v4795 = vrot.slane %v4793, 1
      %v4796 = vsel %vm475, %v4792, %v4795
      %v4797 = vshrl.u32 %v4685, 16
      %v4799 = vor.u32 %v4797, %v4788
      %v4800 = vshll.u32 %v4687, 16
      %v4802 = vrot.slane %v4800, 1
      %v4803 = vsel %vm475, %v4799, %v4802
      %v4804 = vshrl.u32 %v4557, 16
      %v4806 = vor.u32 %v4804, %v4795
      %v4807 = vshll.u32 %v4559, 16
      %v4809 = vrot.slane %v4807, 1
      %v4810 = vsel %vm475, %v4806, %v4809
      %v4811 = vshrl.u32 %v4687, 16
      %v4813 = vor.u32 %v4811, %v4802
      %v4814 = vshll.u32 %v4689, 16
      %v4816 = vrot.slane %v4814, 1
      %v4817 = vsel %vm475, %v4813, %v4816
      %v4818 = vshrl.u32 %v4559, 16
      %v4820 = vor.u32 %v4818, %v4809
      %v4821 = vshll.u32 %v4561, 16
      %v4823 = vrot.slane %v4821, 1
      %v4824 = vsel %vm475, %v4820, %v4823
      %v4825 = vshrl.u32 %v4689, 16
      %v4827 = vor.u32 %v4825, %v4816
      %v4828 = vshll.u32 %v4691, 16
      %v4830 = vrot.slane %v4828, 1
      %v4831 = vsel %vm475, %v4827, %v4830
      %v4832 = vshrl.u32 %v4561, 16
      %v4834 = vor.u32 %v4832, %v4823
      %v4835 = vshll.u32 %v4563, 16
      %v4837 = vrot.slane %v4835, 1
      %v4838 = vsel %vm475, %v4834, %v4837
      %v4839 = vshrl.u32 %v4691, 16
      %v4841 = vor.u32 %v4839, %v4830
      %v4842 = vshll.u32 %v4693, 16
      %v4844 = vrot.slane %v4842, 1
      %v4845 = vsel %vm475, %v4841, %v4844
      %v4846 = vshrl.u32 %v4563, 16
      %v4848 = vor.u32 %v4846, %v4837
      %v4849 = vshll.u32 %v4565, 16
      %v4851 = vrot.slane %v4849, 1
      %v4852 = vsel %vm475, %v4848, %v4851
      %v4853 = vshrl.u32 %v4693, 16
      %v4855 = vor.u32 %v4853, %v4844
      %v4856 = vshll.u32 %v4695, 16
      %v4858 = vrot.slane %v4856, 1
      %v4859 = vsel %vm475, %v4855, %v4858
      %v4860 = vshrl.u32 %v4565, 16
      %v4862 = vor.u32 %v4860, %v4851
      %v4863 = vshll.u32 %v4567, 16
      %v4865 = vrot.slane %v4863, 1
      %v4866 = vsel %vm475, %v4862, %v4865
      %v4867 = vshrl.u32 %v4695, 16
      %v4869 = vor.u32 %v4867, %v4858
      %v4870 = vshll.u32 %v4697, 16
      %v4872 = vrot.slane %v4870, 1
      %v4873 = vsel %vm475, %v4869, %v4872
      %v4874 = vshrl.u32 %v4567, 16
      %v4876 = vor.u32 %v4874, %v4865
      %v4877 = vshll.u32 %v4569, 16
      %v4879 = vrot.slane %v4877, 1
      %v4880 = vsel %vm475, %v4876, %v4879
      %v4881 = vshrl.u32 %v4697, 16
      %v4883 = vor.u32 %v4881, %v4872
      %v4884 = vshll.u32 %v4699, 16
      %v4886 = vrot.slane %v4884, 1
      %v4887 = vsel %vm475, %v4883, %v4886
      %v4888 = vshrl.u32 %v4569, 16
      %v4890 = vor.u32 %v4888, %v4879
      %v4891 = vshll.u32 %v4571, 16
      %v4893 = vrot.slane %v4891, 1
      %v4894 = vsel %vm475, %v4890, %v4893
      %v4895 = vshrl.u32 %v4699, 16
      %v4897 = vor.u32 %v4895, %v4886
      %v4898 = vshll.u32 %v4701, 16
      %v4900 = vrot.slane %v4898, 1
      %v4901 = vsel %vm475, %v4897, %v4900
      %v4902 = vshrl.u32 %v4571, 16
      %v4904 = vor.u32 %v4902, %v4893
      %v4905 = vshll.u32 %v4573, 16
      %v4907 = vrot.slane %v4905, 1
      %v4908 = vsel %vm475, %v4904, %v4907
      %v4909 = vshrl.u32 %v4701, 16
      %v4911 = vor.u32 %v4909, %v4900
      %v4912 = vshll.u32 %v4703, 16
      %v4914 = vrot.slane %v4912, 1
      %v4915 = vsel %vm475, %v4911, %v4914
      %v4916 = vshrl.u32 %v4573, 16
      %v4918 = vor.u32 %v4916, %v4907
      %v4919 = vshll.u32 %v4575, 16
      %v4921 = vrot.slane %v4919, 1
      %v4922 = vsel %vm475, %v4918, %v4921
      %v4923 = vshrl.u32 %v4703, 16
      %v4925 = vor.u32 %v4923, %v4914
      %v4926 = vshll.u32 %v4705, 16
      %v4928 = vrot.slane %v4926, 1
      %v4929 = vsel %vm475, %v4925, %v4928
      %v4930 = vshrl.u32 %v4575, 16
      %v4932 = vor.u32 %v4930, %v4921
      %v4933 = vshll.u32 %v4577, 16
      %v4935 = vrot.slane %v4933, 1
      %v4936 = vsel %vm475, %v4932, %v4935
      %v4937 = vshrl.u32 %v4705, 16
      %v4939 = vor.u32 %v4937, %v4928
      %v4940 = vshll.u32 %v4707, 16
      %v4942 = vrot.slane %v4940, 1
      %v4943 = vsel %vm475, %v4939, %v4942
      %v4944 = vshrl.u32 %v4577, 16
      %v4946 = vor.u32 %v4944, %v4935
      %v4947 = vshll.u32 %v4579, 16
      %v4949 = vrot.slane %v4947, 1
      %v4950 = vsel %vm475, %v4946, %v4949
      %v4951 = vshrl.u32 %v4707, 16
      %v4953 = vor.u32 %v4951, %v4942
      %v4954 = vshll.u32 %v4709, 16
      %v4956 = vrot.slane %v4954, 1
      %v4957 = vsel %vm475, %v4953, %v4956
      %v4958 = vshrl.u32 %v4579, 16
      %v4960 = vor.u32 %v4958, %v4949
      %v4961 = vshll.u32 %v4581, 16
      %v4963 = vrot.slane %v4961, 1
      %v4964 = vsel %vm475, %v4960, %v4963
      %v4965 = vshrl.u32 %v4709, 16
      %v4967 = vor.u32 %v4965, %v4956
      %v4968 = vshll.u32 %v4711, 16
      %v4970 = vrot.slane %v4968, 1
      %v4971 = vsel %vm475, %v4967, %v4970
      %v4972 = vshrl.u32 %v4581, 16
      %v4974 = vor.u32 %v4972, %v4963
      %v4975 = vshll.u32 %v4583, 16
      %v4977 = vrot.slane %v4975, 1
      %v4978 = vsel %vm475, %v4974, %v4977
      %v4979 = vshrl.u32 %v4711, 16
      %v4981 = vor.u32 %v4979, %v4970
      %v4982 = vshll.u32 %v4713, 16
      %v4984 = vrot.slane %v4982, 1
      %v4985 = vsel %vm475, %v4981, %v4984
      %v4986 = vshrl.u32 %v4583, 16
      %v4988 = vor.u32 %v4986, %v4977
      %v4989 = vshll.u32 %v4585, 16
      %v4991 = vrot.slane %v4989, 1
      %v4992 = vsel %vm475, %v4988, %v4991
      %v4993 = vshrl.u32 %v4713, 16
      %v4995 = vor.u32 %v4993, %v4984
      %v4996 = vshll.u32 %v4715, 16
      %v4998 = vrot.slane %v4996, 1
      %v4999 = vsel %vm475, %v4995, %v4998
      %v5000 = vshrl.u32 %v4585, 16
      %v5002 = vor.u32 %v5000, %v4991
      %v5003 = vshll.u32 %v4587, 16
      %v5005 = vrot.slane %v5003, 1
      %v5006 = vsel %vm475, %v5002, %v5005
      %v5007 = vshrl.u32 %v4715, 16
      %v5009 = vor.u32 %v5007, %v4998
      %v5010 = vshll.u32 %v4717, 16
      %v5012 = vrot.slane %v5010, 1
      %v5013 = vsel %vm475, %v5009, %v5012
      %v5014 = vshrl.u32 %v4587, 16
      %v5016 = vor.u32 %v5014, %v5005
      %v5017 = vshll.u32 %v4589, 16
      %v5019 = vrot.slane %v5017, 1
      %v5020 = vsel %vm475, %v5016, %v5019
      %v5021 = vshrl.u32 %v4717, 16
      %v5023 = vor.u32 %v5021, %v5012
      %v5024 = vshll.u32 %v4719, 16
      %v5026 = vrot.slane %v5024, 1
      %v5027 = vsel %vm475, %v5023, %v5026
      %v5028 = vshrl.u32 %v4589, 16
      %v5030 = vor.u32 %v5028, %v5019
      %v5031 = vshll.u32 %v4591, 16
      %v5033 = vrot.slane %v5031, 1
      %v5034 = vsel %vm475, %v5030, %v5033
      %v5035 = vshrl.u32 %v4719, 16
      %v5037 = vor.u32 %v5035, %v5026
      %v5038 = vshll.u32 %v4721, 16
      %v5040 = vrot.slane %v5038, 1
      %v5041 = vsel %vm475, %v5037, %v5040
      %v5042 = vshrl.u32 %v4591, 16
      %v5044 = vor.u32 %v5042, %v5033
      %v5045 = vshll.u32 %v4593, 16
      %v5047 = vrot.slane %v5045, 1
      %v5048 = vsel %vm475, %v5044, %v5047
      %v5049 = vshrl.u32 %v4721, 16
      %v5051 = vor.u32 %v5049, %v5040
      %v5052 = vshll.u32 %v4723, 16
      %v5054 = vrot.slane %v5052, 1
      %v5055 = vsel %vm475, %v5051, %v5054
      %v5056 = vshrl.u32 %v4593, 16
      %v5058 = vor.u32 %v5056, %v5047
      %v5059 = vshll.u32 %v4595, 16
      %v5061 = vrot.slane %v5059, 1
      %v5062 = vsel %vm475, %v5058, %v5061
      %v5063 = vshrl.u32 %v4723, 16
      %v5065 = vor.u32 %v5063, %v5054
      %v5066 = vshll.u32 %v4725, 16
      %v5068 = vrot.slane %v5066, 1
      %v5069 = vsel %vm475, %v5065, %v5068
      %v5070 = vshrl.u32 %v4595, 16
      %v5072 = vor.u32 %v5070, %v5061
      %v5073 = vshll.u32 %v4597, 16
      %v5075 = vrot.slane %v5073, 1
      %v5076 = vsel %vm475, %v5072, %v5075
      %v5077 = vshrl.u32 %v4725, 16
      %v5079 = vor.u32 %v5077, %v5068
      %v5080 = vshll.u32 %v4727, 16
      %v5082 = vrot.slane %v5080, 1
      %v5083 = vsel %vm475, %v5079, %v5082
      %v5109 = vld [vmem:[%s1] sm:$0xf]
      %v5110 = vld [vmem:[%s1 + $0x4] sm:$0xf]
      %v5111 = vld [vmem:[%s1 + $0x8] sm:$0xf]
      %v5112 = vld [vmem:[%s1 + $0xc] sm:$0xf]
      %v5113 = vld [vmem:[%s1 + $0x10] sm:$0xf]
      %v5114 = vld [vmem:[%s1 + $0x14] sm:$0xf]
      %v5115 = vld [vmem:[%s1 + $0x18] sm:$0xf]
      %v5116 = vld [vmem:[%s1 + $0x1c] sm:$0xf]
      %v5117 = vld [vmem:[%s1 + $0x20] sm:$0xf]
      %v5118 = vld [vmem:[%s1 + $0x24] sm:$0xf]
      %v5119 = vld [vmem:[%s1 + $0x28] sm:$0xf]
      %v5120 = vld [vmem:[%s1 + $0x2c] sm:$0xf]
      %v5121 = vld [vmem:[%s1 + $0x30] sm:$0xf]
      %v5122 = vld [vmem:[%s1 + $0x34] sm:$0xf]
      %v5123 = vld [vmem:[%s1 + $0x38] sm:$0xf]
      %v5124 = vld [vmem:[%s1 + $0x3c] sm:$0xf]
      %v5125 = vld [vmem:[%s1 + $0x40] sm:$0xf]
      %v5126 = vld [vmem:[%s1 + $0x44] sm:$0xf]
      %v5127 = vld [vmem:[%s1 + $0x48] sm:$0xf]
      %v5128 = vld [vmem:[%s1 + $0x4c] sm:$0xf]
      %v5129 = vld [vmem:[%s1 + $0x50] sm:$0xf]
      %v5130 = vld [vmem:[%s1 + $0x54] sm:$0xf]
      %v5131 = vld [vmem:[%s1 + $0x58] sm:$0xf]
      %v5132 = vld [vmem:[%s1 + $0x5c] sm:$0xf]
      %v5133 = vld [vmem:[%s1 + $0x60] sm:$0xf]
      %v5134 = vld [vmem:[%s1 + $0x64] sm:$0xf]
      %v5135 = vld [vmem:[%s1 + $0x68] sm:$0xf]
      %v5136 = vld [vmem:[%s1 + $0x6c] sm:$0xf]
      %v5137 = vld [vmem:[%s1 + $0x70] sm:$0xf]
      %v5138 = vld [vmem:[%s1 + $0x74] sm:$0xf]
      %v5139 = vld [vmem:[%s1 + $0x78] sm:$0xf]
      %v5140 = vld [vmem:[%s1 + $0x7c] sm:$0xf]
      %v5141 = vld [vmem:[%s1 + $0x80] sm:$0xf]
      %v5142 = vld [vmem:[%s1 + $0x84] sm:$0xf]
      %v5143 = vld [vmem:[%s1 + $0x88] sm:$0xf]
      %v5144 = vld [vmem:[%s1 + $0x8c] sm:$0xf]
      %v5145 = vld [vmem:[%s1 + $0x90] sm:$0xf]
      %v5146 = vld [vmem:[%s1 + $0x94] sm:$0xf]
      %v5147 = vld [vmem:[%s1 + $0x98] sm:$0xf]
      %v5148 = vld [vmem:[%s1 + $0x9c] sm:$0xf]
      %v5149 = vld [vmem:[%s1 + $0xa0] sm:$0xf]
      %v5150 = vld [vmem:[%s1 + $0xa4] sm:$0xf]
      %v5151 = vld [vmem:[%s1 + $0xa8] sm:$0xf]
      %v5152 = vld [vmem:[%s1 + $0xac] sm:$0xf]
      %v5153 = vld [vmem:[%s1 + $0xb0] sm:$0xf]
      %v5154 = vld [vmem:[%s1 + $0xb4] sm:$0xf]
      %v5155 = vld [vmem:[%s1 + $0xb8] sm:$0xf]
      %v5156 = vld [vmem:[%s1 + $0xbc] sm:$0xf]
      %v5157 = vld [vmem:[%s1 + $0xc0] sm:$0xf]
      %v5158 = vld [vmem:[%s1 + $0xc4] sm:$0xf]
      %v5159 = vld [vmem:[%s1 + $0xc8] sm:$0xf]
      %v5160 = vld [vmem:[%s1 + $0xcc] sm:$0xf]
      %v5161 = vld [vmem:[%s1 + $0xd0] sm:$0xf]
      %v5162 = vld [vmem:[%s1 + $0xd4] sm:$0xf]
      %v5217 = vunpack.c.l.b16 %v5109
      %v5218 = vunpack.c.l.b16 %v5110
      %v5219 = vunpack.c.l.b16 %v5111
      %v5220 = vunpack.c.l.b16 %v5112
      %v5221 = vunpack.c.l.b16 %v5113
      %v5222 = vunpack.c.l.b16 %v5114
      %v5223 = vunpack.c.l.b16 %v5115
      %v5224 = vunpack.c.l.b16 %v5116
      %v5225 = vunpack.c.l.b16 %v5117
      %v5226 = vunpack.c.l.b16 %v5118
      %v5227 = vunpack.c.l.b16 %v5119
      %v5228 = vunpack.c.l.b16 %v5120
      %v5229 = vunpack.c.l.b16 %v5121
      %v5230 = vunpack.c.l.b16 %v5122
      %v5231 = vunpack.c.l.b16 %v5123
      %v5232 = vunpack.c.l.b16 %v5124
      %v5233 = vunpack.c.l.b16 %v5125
      %v5234 = vunpack.c.l.b16 %v5126
      %v5235 = vunpack.c.l.b16 %v5127
      %v5236 = vunpack.c.l.b16 %v5128
      %v5237 = vunpack.c.l.b16 %v5129
      %v5238 = vunpack.c.l.b16 %v5130
      %v5239 = vunpack.c.l.b16 %v5131
      %v5240 = vunpack.c.l.b16 %v5132
      %v5241 = vunpack.c.l.b16 %v5133
      %v5242 = vunpack.c.l.b16 %v5134
      %v5243 = vunpack.c.l.b16 %v5135
      %v5244 = vunpack.c.l.b16 %v5136
      %v5245 = vunpack.c.l.b16 %v5137
      %v5246 = vunpack.c.l.b16 %v5138
      %v5247 = vunpack.c.l.b16 %v5139
      %v5248 = vunpack.c.l.b16 %v5140
      %v5249 = vunpack.c.l.b16 %v5141
      %v5250 = vunpack.c.l.b16 %v5142
      %v5251 = vunpack.c.l.b16 %v5143
      %v5252 = vunpack.c.l.b16 %v5144
      %v5253 = vunpack.c.l.b16 %v5145
      %v5254 = vunpack.c.l.b16 %v5146
      %v5255 = vunpack.c.l.b16 %v5147
      %v5256 = vunpack.c.l.b16 %v5148
      %v5257 = vunpack.c.l.b16 %v5149
      %v5258 = vunpack.c.l.b16 %v5150
      %v5259 = vunpack.c.l.b16 %v5151
      %v5260 = vunpack.c.l.b16 %v5152
      %v5261 = vunpack.c.l.b16 %v5153
      %v5262 = vunpack.c.l.b16 %v5154
      %v5263 = vunpack.c.l.b16 %v5155
      %v5264 = vunpack.c.l.b16 %v5156
      %v5265 = vunpack.c.l.b16 %v5157
      %v5266 = vunpack.c.l.b16 %v5158
      %v5267 = vunpack.c.l.b16 %v5159
      %v5268 = vunpack.c.l.b16 %v5160
      %v5269 = vunpack.c.l.b16 %v5161
      %v5270 = vunpack.c.l.b16 %v5162
      %v5271 = vpack.c.b16 %v5218, %v5217
      %v5272 = vpack.c.b16 %v5220, %v5219
      %v5273 = vpack.c.b16 %v5222, %v5221
      %v5274 = vpack.c.b16 %v5224, %v5223
      %v5275 = vpack.c.b16 %v5226, %v5225
      %v5276 = vpack.c.b16 %v5228, %v5227
      %v5277 = vpack.c.b16 %v5230, %v5229
      %v5278 = vpack.c.b16 %v5232, %v5231
      %v5279 = vpack.c.b16 %v5234, %v5233
      %v5280 = vpack.c.b16 %v5236, %v5235
      %v5281 = vpack.c.b16 %v5238, %v5237
      %v5282 = vpack.c.b16 %v5240, %v5239
      %v5283 = vpack.c.b16 %v5242, %v5241
      %v5284 = vpack.c.b16 %v5244, %v5243
      %v5285 = vpack.c.b16 %v5246, %v5245
      %v5286 = vpack.c.b16 %v5248, %v5247
      %v5287 = vpack.c.b16 %v5250, %v5249
      %v5288 = vpack.c.b16 %v5252, %v5251
      %v5289 = vpack.c.b16 %v5254, %v5253
      %v5290 = vpack.c.b16 %v5256, %v5255
      %v5291 = vpack.c.b16 %v5258, %v5257
      %v5292 = vpack.c.b16 %v5260, %v5259
      %v5293 = vpack.c.b16 %v5262, %v5261
      %v5294 = vpack.c.b16 %v5264, %v5263
      %v5295 = vpack.c.b16 %v5266, %v5265
      %v5296 = vpack.c.b16 %v5268, %v5267
      %v5297 = vpack.c.b16 %v5270, %v5269
      %v5326 = vsel %vm2427, %v4747, 0
      %v5329 = vsel %vm2427, %v4761, 0
      %v5332 = vsel %vm2427, %v4775, 0
      %v5335 = vsel %vm2427, %v4789, 0
      %v5338 = vsel %vm2427, %v4803, 0
      %v5341 = vsel %vm2427, %v4817, 0
      %v5344 = vsel %vm2427, %v4831, 0
      %v5347 = vsel %vm2427, %v4845, 0
      %v5350 = vsel %vm2427, %v4859, 0
      %v5353 = vsel %vm2427, %v4873, 0
      %v5356 = vsel %vm2427, %v4887, 0
      %v5359 = vsel %vm2427, %v4901, 0
      %v5362 = vsel %vm2427, %v4915, 0
      %v5365 = vsel %vm2427, %v4929, 0
      %v5368 = vsel %vm2427, %v4943, 0
      %v5371 = vsel %vm2427, %v4957, 0
      %v5374 = vsel %vm2427, %v4971, 0
      %v5377 = vsel %vm2427, %v4985, 0
      %v5380 = vsel %vm2427, %v4999, 0
      %v5383 = vsel %vm2427, %v5013, 0
      %v5386 = vsel %vm2427, %v5027, 0
      %v5389 = vsel %vm2427, %v5041, 0
      %v5392 = vsel %vm2427, %v5055, 0
      %v5395 = vsel %vm2427, %v5069, 0
      %v5398 = vsel %vm2427, %v5083, 0
      %5400 = vmatprep.subr.bf16.mxu0 0
      %5401 = vmatpush1.bf16.msra.mxu0 %v5271
      %5402 = vmatprep.subr.bf16.mxu0 0
      %5403 = vmatpush1.bf16.msra.mxu0 %v5272
      %5404 = vmatprep.subr.bf16.mxu0 0
      %5405 = vmatpush1.bf16.msra.mxu0 %v5273
      %5406 = vmatprep.subr.bf16.mxu0 0
      %5407 = vmatpush1.bf16.msra.mxu0 %v5274
      %5408 = vmatprep.subr.bf16.mxu0 0
      %5409 = vmatpush1.bf16.msra.mxu0 %v5275
      %5410 = vmatprep.subr.bf16.mxu0 0
      %5411 = vmatpush1.bf16.msra.mxu0 %v5276
      %5412 = vmatprep.subr.bf16.mxu0 0
      %5413 = vmatpush1.bf16.msra.mxu0 %v5277
      %5414 = vmatprep.subr.bf16.mxu0 0
      %5415 = vmatpush1.bf16.msra.mxu0 %v5278
      %5416 = vmatprep.subr.bf16.mxu0 0
      %5417 = vmatpush1.bf16.msra.mxu0 %v5279
      %5418 = vmatprep.subr.bf16.mxu0 0
      %5419 = vmatpush1.bf16.msra.mxu0 %v5280
      %5420 = vmatprep.subr.bf16.mxu0 0
      %5421 = vmatpush1.bf16.msra.mxu0 %v5281
      %5422 = vmatprep.subr.bf16.mxu0 0
      %5423 = vmatpush1.bf16.msra.mxu0 %v5282
      %5424 = vmatprep.subr.bf16.mxu0 0
      %5425 = vmatpush1.bf16.msra.mxu0 %v5283
      %5426 = vmatprep.subr.bf16.mxu0 0
      %5427 = vmatpush1.bf16.msra.mxu0 %v5284
      %5428 = vmatprep.subr.bf16.mxu0 0
      %5429 = vmatpush1.bf16.msra.mxu0 %v5285
      %5430 = vmatprep.subr.bf16.mxu0 0
      %5431 = vmatpush1.bf16.msra.mxu0 %v5286
      %5432 = vmatprep.mubr.bf16.mxu0 %v3033
      %5433 = vmatmul.mubr.bf16.gmra.mrb[0].mxu0 %v2633
      %v5434 = vpop.f32.mrb[0].mxu0
      %v5435 = vadd.f32 0.0, %v5434
      %v5436 = vpop.f32.mrb[0].mxu0
      %v5437 = vpop.f32.mrb[0].mxu0
      %v5438 = vadd.f32 0.0, %v5437
      %v5439 = vpop.f32.mrb[0].mxu0
      %5440 = vmatprep.mubr.bf16.mxu0 %v3036
      %5441 = vmatmul.mubr.bf16.gmra.mrb[0].mxu0 %v2636
      %v5442 = vpop.f32.mrb[0].mxu0
      %v5443 = vadd.f32 0.0, %v5442
      %v5444 = vpop.f32.mrb[0].mxu0
      %v5445 = vpop.f32.mrb[0].mxu0
      %v5446 = vadd.f32 0.0, %v5445
      %v5447 = vpop.f32.mrb[0].mxu0
      %5448 = vmatprep.mubr.bf16.mxu0 %v3039
      %5449 = vmatmul.mubr.bf16.gmra.mrb[0].mxu0 %v2639
      %v5450 = vpop.f32.mrb[0].mxu0
      %v5451 = vadd.f32 0.0, %v5450
      %v5452 = vpop.f32.mrb[0].mxu0
      %v5453 = vpop.f32.mrb[0].mxu0
      %v5454 = vadd.f32 0.0, %v5453
      %v5455 = vpop.f32.mrb[0].mxu0
      %5456 = vmatprep.mubr.bf16.mxu0 %v3042
      %5457 = vmatmul.mubr.bf16.gmra.mrb[0].mxu0 %v2642
      %v5458 = vpop.f32.mrb[0].mxu0
      %v5459 = vadd.f32 0.0, %v5458
      %v5460 = vpop.f32.mrb[0].mxu0
      %v5461 = vpop.f32.mrb[0].mxu0
      %v5462 = vadd.f32 0.0, %v5461
      %v5463 = vpop.f32.mrb[0].mxu0
      %5464 = vmatprep.mubr.bf16.mxu0 %v3045
      %5465 = vmatmul.mubr.bf16.gmra.mrb[0].mxu0 %v2645
      %v5466 = vpop.f32.mrb[0].mxu0
      %v5467 = vadd.f32 0.0, %v5466
      %v5468 = vpop.f32.mrb[0].mxu0
      %v5469 = vpop.f32.mrb[0].mxu0
      %v5470 = vadd.f32 0.0, %v5469
      %v5471 = vpop.f32.mrb[0].mxu0
      %5472 = vmatprep.mubr.bf16.mxu0 %v3048
      %5473 = vmatmul.mubr.bf16.gmra.mrb[0].mxu0 %v2648
      %v5474 = vpop.f32.mrb[0].mxu0
      %v5475 = vadd.f32 0.0, %v5474
      %v5476 = vpop.f32.mrb[0].mxu0
      %v5477 = vpop.f32.mrb[0].mxu0
      %v5478 = vadd.f32 0.0, %v5477
      %v5479 = vpop.f32.mrb[0].mxu0
      %5480 = vmatprep.mubr.bf16.mxu0 %v3051
      %5481 = vmatmul.mubr.bf16.gmra.mrb[0].mxu0 %v2651
      %v5482 = vpop.f32.mrb[0].mxu0
      %v5483 = vadd.f32 0.0, %v5482
      %v5484 = vpop.f32.mrb[0].mxu0
      %v5485 = vpop.f32.mrb[0].mxu0
      %v5486 = vadd.f32 0.0, %v5485
      %v5487 = vpop.f32.mrb[0].mxu0
      %5488 = vmatprep.mubr.bf16.mxu0 %v3054
      %5489 = vmatmul.mubr.bf16.gmra.mrb[0].mxu0 %v2654
      %v5490 = vpop.f32.mrb[0].mxu0
      %v5491 = vadd.f32 0.0, %v5490
      %v5492 = vpop.f32.mrb[0].mxu0
      %v5493 = vpop.f32.mrb[0].mxu0
      %v5494 = vadd.f32 0.0, %v5493
      %v5495 = vpop.f32.mrb[0].mxu0
      %5496 = vmatprep.mubr.bf16.mxu0 %v3057
      %5497 = vmatmul.mubr.bf16.gmra.mrb[0].mxu0 %v2657
      %v5498 = vpop.f32.mrb[0].mxu0
      %v5499 = vadd.f32 0.0, %v5498
      %v5500 = vpop.f32.mrb[0].mxu0
      %v5501 = vpop.f32.mrb[0].mxu0
      %v5502 = vadd.f32 0.0, %v5501
      %v5503 = vpop.f32.mrb[0].mxu0
      %5504 = vmatprep.mubr.bf16.mxu0 %v3060
      %5505 = vmatmul.mubr.bf16.gmra.mrb[0].mxu0 %v2660
      %v5506 = vpop.f32.mrb[0].mxu0
      %v5507 = vadd.f32 0.0, %v5506
      %v5508 = vpop.f32.mrb[0].mxu0
      %v5509 = vpop.f32.mrb[0].mxu0
      %v5510 = vadd.f32 0.0, %v5509
      %v5511 = vpop.f32.mrb[0].mxu0
      %5512 = vmatprep.mubr.bf16.mxu0 %v3063
      %5513 = vmatmul.mubr.bf16.gmra.mrb[0].mxu0 %v2663
      %v5514 = vpop.f32.mrb[0].mxu0
      %v5515 = vadd.f32 0.0, %v5514
      %v5516 = vpop.f32.mrb[0].mxu0
      %v5517 = vpop.f32.mrb[0].mxu0
      %v5518 = vadd.f32 0.0, %v5517
      %v5519 = vpop.f32.mrb[0].mxu0
      %5520 = vmatprep.mubr.bf16.mxu0 %v3066
      %5521 = vmatmul.mubr.bf16.gmra.mrb[0].mxu0 %v2666
      %v5522 = vpop.f32.mrb[0].mxu0
      %v5523 = vadd.f32 0.0, %v5522
      %v5524 = vpop.f32.mrb[0].mxu0
      %v5525 = vpop.f32.mrb[0].mxu0
      %v5526 = vadd.f32 0.0, %v5525
      %v5527 = vpop.f32.mrb[0].mxu0
      %5528 = vmatprep.mubr.bf16.mxu0 %v3069
      %5529 = vmatmul.mubr.bf16.gmra.mrb[0].mxu0 %v2669
      %v5530 = vpop.f32.mrb[0].mxu0
      %v5531 = vadd.f32 0.0, %v5530
      %v5532 = vpop.f32.mrb[0].mxu0
      %v5533 = vpop.f32.mrb[0].mxu0
      %v5534 = vadd.f32 0.0, %v5533
      %v5535 = vpop.f32.mrb[0].mxu0
      %5536 = vmatprep.mubr.bf16.mxu0 %v3072
      %5537 = vmatmul.mubr.bf16.gmra.mrb[0].mxu0 %v2672
      %v5538 = vpop.f32.mrb[0].mxu0
      %v5539 = vadd.f32 0.0, %v5538
      %v5540 = vpop.f32.mrb[0].mxu0
      %v5541 = vpop.f32.mrb[0].mxu0
      %v5542 = vadd.f32 0.0, %v5541
      %v5543 = vpop.f32.mrb[0].mxu0
      %5544 = vmatprep.mubr.bf16.mxu0 %v3075
      %5545 = vmatmul.mubr.bf16.gmra.mrb[0].mxu0 %v2675
      %v5546 = vpop.f32.mrb[0].mxu0
      %v5547 = vadd.f32 0.0, %v5546
      %v5548 = vpop.f32.mrb[0].mxu0
      %v5549 = vpop.f32.mrb[0].mxu0
      %v5550 = vadd.f32 0.0, %v5549
      %v5551 = vpop.f32.mrb[0].mxu0
      %5552 = vmatprep.mubr.bf16.mxu0 %v3078
      %5553 = vmatmul.mubr.bf16.gmra.mrb[0].mxu0 %v2678
      %v5554 = vpop.f32.mrb[0].mxu0
      %v5555 = vadd.f32 0.0, %v5554
      %v5556 = vpop.f32.mrb[0].mxu0
      %v5557 = vpop.f32.mrb[0].mxu0
      %v5558 = vadd.f32 0.0, %v5557
      %v5559 = vpop.f32.mrb[0].mxu0
      %5560 = vmatprep.mubr.bf16.mxu0 %v3081
      %5561 = vmatmul.mubr.bf16.gmra.mrb[0].mxu0 %v2681
      %v5562 = vpop.f32.mrb[0].mxu0
      %v5563 = vadd.f32 0.0, %v5562
      %v5564 = vpop.f32.mrb[0].mxu0
      %v5565 = vpop.f32.mrb[0].mxu0
      %v5566 = vadd.f32 0.0, %v5565
      %v5567 = vpop.f32.mrb[0].mxu0
      %5568 = vmatprep.mubr.bf16.mxu0 %v3084
      %5569 = vmatmul.mubr.bf16.gmra.mrb[0].mxu0 %v2684
      %v5570 = vpop.f32.mrb[0].mxu0
      %v5571 = vadd.f32 0.0, %v5570
      %v5572 = vpop.f32.mrb[0].mxu0
      %v5573 = vpop.f32.mrb[0].mxu0
      %v5574 = vadd.f32 0.0, %v5573
      %v5575 = vpop.f32.mrb[0].mxu0
      %5576 = vmatprep.mubr.bf16.mxu0 %v3087
      %5577 = vmatmul.mubr.bf16.gmra.mrb[0].mxu0 %v2687
      %v5578 = vpop.f32.mrb[0].mxu0
      %v5579 = vadd.f32 0.0, %v5578
      %v5580 = vpop.f32.mrb[0].mxu0
      %v5581 = vpop.f32.mrb[0].mxu0
      %v5582 = vadd.f32 0.0, %v5581
      %v5583 = vpop.f32.mrb[0].mxu0
      %5584 = vmatprep.mubr.bf16.mxu0 %v3090
      %5585 = vmatmul.mubr.bf16.gmra.mrb[0].mxu0 %v2690
      %v5586 = vpop.f32.mrb[0].mxu0
      %v5587 = vadd.f32 0.0, %v5586
      %v5588 = vpop.f32.mrb[0].mxu0
      %v5589 = vpop.f32.mrb[0].mxu0
      %v5590 = vadd.f32 0.0, %v5589
      %v5591 = vpop.f32.mrb[0].mxu0
      %5592 = vmatprep.mubr.bf16.mxu0 %v3093
      %5593 = vmatmul.mubr.bf16.gmra.mrb[0].mxu0 %v2693
      %v5594 = vpop.f32.mrb[0].mxu0
      %v5595 = vadd.f32 0.0, %v5594
      %v5596 = vpop.f32.mrb[0].mxu0
      %v5597 = vpop.f32.mrb[0].mxu0
      %v5598 = vadd.f32 0.0, %v5597
      %v5599 = vpop.f32.mrb[0].mxu0
      %5600 = vmatprep.mubr.bf16.mxu0 %v3096
      %5601 = vmatmul.mubr.bf16.gmra.mrb[0].mxu0 %v2696
      %v5602 = vpop.f32.mrb[0].mxu0
      %v5603 = vadd.f32 0.0, %v5602
      %v5604 = vpop.f32.mrb[0].mxu0
      %v5605 = vpop.f32.mrb[0].mxu0
      %v5606 = vadd.f32 0.0, %v5605
      %v5607 = vpop.f32.mrb[0].mxu0
      %5608 = vmatprep.mubr.bf16.mxu0 %v3099
      %5609 = vmatmul.mubr.bf16.gmra.mrb[0].mxu0 %v2699
      %v5610 = vpop.f32.mrb[0].mxu0
      %v5611 = vadd.f32 0.0, %v5610
      %v5612 = vpop.f32.mrb[0].mxu0
      %v5613 = vpop.f32.mrb[0].mxu0
      %v5614 = vadd.f32 0.0, %v5613
      %v5615 = vpop.f32.mrb[0].mxu0
      %5616 = vmatprep.mubr.bf16.mxu0 %v3102
      %5617 = vmatmul.mubr.bf16.gmra.mrb[0].mxu0 %v2702
      %v5618 = vpop.f32.mrb[0].mxu0
      %v5619 = vadd.f32 0.0, %v5618
      %v5620 = vpop.f32.mrb[0].mxu0
      %v5621 = vpop.f32.mrb[0].mxu0
      %v5622 = vadd.f32 0.0, %v5621
      %v5623 = vpop.f32.mrb[0].mxu0
      %5624 = vmatprep.mubr.bf16.mxu0 %v3105
      %5625 = vmatmul.mubr.bf16.gmra.mrb[0].mxu0 %v2705
      %v5626 = vpop.f32.mrb[0].mxu0
      %v5627 = vadd.f32 0.0, %v5626
      %v5628 = vpop.f32.mrb[0].mxu0
      %v5629 = vpop.f32.mrb[0].mxu0
      %v5630 = vadd.f32 0.0, %v5629
      %v5631 = vpop.f32.mrb[0].mxu0
      %5632 = vdwg.mxu0
      %5633 = vmatprep.subr.bf16.mxu0 0
      %5634 = vmatpush1.bf16.msra.mxu0 %v5287
      %5635 = vmatprep.subr.bf16.mxu0 0
      %5636 = vmatpush1.bf16.msra.mxu0 %v5288
      %5637 = vmatprep.subr.bf16.mxu0 0
      %5638 = vmatpush1.bf16.msra.mxu0 %v5289
      %5639 = vmatprep.subr.bf16.mxu0 0
      %5640 = vmatpush1.bf16.msra.mxu0 %v5290
      %5641 = vmatprep.subr.bf16.mxu0 0
      %5642 = vmatpush1.bf16.msra.mxu0 %v5291
      %5643 = vmatprep.subr.bf16.mxu0 0
      %5644 = vmatpush1.bf16.msra.mxu0 %v5292
      %5645 = vmatprep.subr.bf16.mxu0 0
      %5646 = vmatpush1.bf16.msra.mxu0 %v5293
      %5647 = vmatprep.subr.bf16.mxu0 0
      %5648 = vmatpush1.bf16.msra.mxu0 %v5294
      %5649 = vmatprep.subr.bf16.mxu0 0
      %5650 = vmatpush1.bf16.msra.mxu0 %v5295
      %5651 = vmatprep.subr.bf16.mxu0 0
      %5652 = vmatpush1.bf16.msra.mxu0 %v5296
      %5653 = vmatprep.subr.bf16.mxu0 0
      %5654 = vmatpush1.bf16.msra.mxu0 %v5297
      %5655 = vmatprep.subr.bf16.mxu0 0
      %5656 = vmatpush1.bf16.msra.mxu0 0
      %5657 = vmatprep.subr.bf16.mxu0 0
      %5658 = vmatpush1.bf16.msra.mxu0 0
      %5659 = vmatprep.subr.bf16.mxu0 0
      %5660 = vmatpush1.bf16.msra.mxu0 0
      %5661 = vmatprep.subr.bf16.mxu0 0
      %5662 = vmatpush1.bf16.msra.mxu0 0
      %5663 = vmatprep.subr.bf16.mxu0 0
      %5664 = vmatpush1.bf16.msra.mxu0 0
      %5665 = vmatprep.mubr.bf16.mxu0 %v5326
      %5666 = vmatmul.mubr.bf16.gmra.mrb[0].mxu0 %v4737
      %v5667 = vpop.f32.mrb[0].mxu0
      %v5668 = vadd.f32 %v5435, %v5667
      %v5669 = vpop.f32.mrb[0].mxu0
      %v5670 = vpop.f32.mrb[0].mxu0
      %v5671 = vadd.f32 %v5438, %v5670
      %v5672 = vpop.f32.mrb[0].mxu0
      %5673 = vmatprep.mubr.bf16.mxu0 %v5329
      %5674 = vmatmul.mubr.bf16.gmra.mrb[0].mxu0 %v4754
      %v5675 = vpop.f32.mrb[0].mxu0
      %v5676 = vadd.f32 %v5443, %v5675
      %v5677 = vpop.f32.mrb[0].mxu0
      %v5678 = vpop.f32.mrb[0].mxu0
      %v5679 = vadd.f32 %v5446, %v5678
      %v5680 = vpop.f32.mrb[0].mxu0
      %5681 = vmatprep.mubr.bf16.mxu0 %v5332
      %5682 = vmatmul.mubr.bf16.gmra.mrb[0].mxu0 %v4768
      %v5683 = vpop.f32.mrb[0].mxu0
      %v5684 = vadd.f32 %v5451, %v5683
      %v5685 = vpop.f32.mrb[0].mxu0
      %v5686 = vpop.f32.mrb[0].mxu0
      %v5687 = vadd.f32 %v5454, %v5686
      %v5688 = vpop.f32.mrb[0].mxu0
      %5689 = vmatprep.mubr.bf16.mxu0 %v5335
      %5690 = vmatmul.mubr.bf16.gmra.mrb[0].mxu0 %v4782
      %v5691 = vpop.f32.mrb[0].mxu0
      %v5692 = vadd.f32 %v5459, %v5691
      %v5693 = vpop.f32.mrb[0].mxu0
      %v5694 = vpop.f32.mrb[0].mxu0
      %v5695 = vadd.f32 %v5462, %v5694
      %v5696 = vpop.f32.mrb[0].mxu0
      %5697 = vmatprep.mubr.bf16.mxu0 %v5338
      %5698 = vmatmul.mubr.bf16.gmra.mrb[0].mxu0 %v4796
      %v5699 = vpop.f32.mrb[0].mxu0
      %v5700 = vadd.f32 %v5467, %v5699
      %v5701 = vpop.f32.mrb[0].mxu0
      %v5702 = vpop.f32.mrb[0].mxu0
      %v5703 = vadd.f32 %v5470, %v5702
      %v5704 = vpop.f32.mrb[0].mxu0
      %5705 = vmatprep.mubr.bf16.mxu0 %v5341
      %5706 = vmatmul.mubr.bf16.gmra.mrb[0].mxu0 %v4810
      %v5707 = vpop.f32.mrb[0].mxu0
      %v5708 = vadd.f32 %v5475, %v5707
      %v5709 = vpop.f32.mrb[0].mxu0
      %v5710 = vpop.f32.mrb[0].mxu0
      %v5711 = vadd.f32 %v5478, %v5710
      %v5712 = vpop.f32.mrb[0].mxu0
      %5713 = vmatprep.mubr.bf16.mxu0 %v5344
      %5714 = vmatmul.mubr.bf16.gmra.mrb[0].mxu0 %v4824
      %v5715 = vpop.f32.mrb[0].mxu0
      %v5716 = vadd.f32 %v5483, %v5715
      %v5717 = vpop.f32.mrb[0].mxu0
      %v5718 = vpop.f32.mrb[0].mxu0
      %v5719 = vadd.f32 %v5486, %v5718
      %v5720 = vpop.f32.mrb[0].mxu0
      %5721 = vmatprep.mubr.bf16.mxu0 %v5347
      %5722 = vmatmul.mubr.bf16.gmra.mrb[0].mxu0 %v4838
      %v5723 = vpop.f32.mrb[0].mxu0
      %v5724 = vadd.f32 %v5491, %v5723
      %v5725 = vpop.f32.mrb[0].mxu0
      %v5726 = vpop.f32.mrb[0].mxu0
      %v5727 = vadd.f32 %v5494, %v5726
      %v5728 = vpop.f32.mrb[0].mxu0
      %5729 = vmatprep.mubr.bf16.mxu0 %v5350
      %5730 = vmatmul.mubr.bf16.gmra.mrb[0].mxu0 %v4852
      %v5731 = vpop.f32.mrb[0].mxu0
      %v5732 = vadd.f32 %v5499, %v5731
      %v5733 = vpop.f32.mrb[0].mxu0
      %v5734 = vpop.f32.mrb[0].mxu0
      %v5735 = vadd.f32 %v5502, %v5734
      %v5736 = vpop.f32.mrb[0].mxu0
      %5737 = vmatprep.mubr.bf16.mxu0 %v5353
      %5738 = vmatmul.mubr.bf16.gmra.mrb[0].mxu0 %v4866
      %v5739 = vpop.f32.mrb[0].mxu0
      %v5740 = vadd.f32 %v5507, %v5739
      %v5741 = vpop.f32.mrb[0].mxu0
      %v5742 = vpop.f32.mrb[0].mxu0
      %v5743 = vadd.f32 %v5510, %v5742
      %v5744 = vpop.f32.mrb[0].mxu0
      %5745 = vmatprep.mubr.bf16.mxu0 %v5356
      %5746 = vmatmul.mubr.bf16.gmra.mrb[0].mxu0 %v4880
      %v5747 = vpop.f32.mrb[0].mxu0
      %v5748 = vadd.f32 %v5515, %v5747
      %v5749 = vpop.f32.mrb[0].mxu0
      %v5750 = vpop.f32.mrb[0].mxu0
      %v5751 = vadd.f32 %v5518, %v5750
      %v5752 = vpop.f32.mrb[0].mxu0
      %5753 = vmatprep.mubr.bf16.mxu0 %v5359
      %5754 = vmatmul.mubr.bf16.gmra.mrb[0].mxu0 %v4894
      %v5755 = vpop.f32.mrb[0].mxu0
      %v5756 = vadd.f32 %v5523, %v5755
      %v5757 = vpop.f32.mrb[0].mxu0
      %v5758 = vpop.f32.mrb[0].mxu0
      %v5759 = vadd.f32 %v5526, %v5758
      %v5760 = vpop.f32.mrb[0].mxu0
      %5761 = vmatprep.mubr.bf16.mxu0 %v5362
      %5762 = vmatmul.mubr.bf16.gmra.mrb[0].mxu0 %v4908
      %v5763 = vpop.f32.mrb[0].mxu0
      %v5764 = vadd.f32 %v5531, %v5763
      %v5765 = vpop.f32.mrb[0].mxu0
      %v5766 = vpop.f32.mrb[0].mxu0
      %v5767 = vadd.f32 %v5534, %v5766
      %v5768 = vpop.f32.mrb[0].mxu0
      %5769 = vmatprep.mubr.bf16.mxu0 %v5365
      %5770 = vmatmul.mubr.bf16.gmra.mrb[0].mxu0 %v4922
      %v5771 = vpop.f32.mrb[0].mxu0
      %v5772 = vadd.f32 %v5539, %v5771
      %v5773 = vpop.f32.mrb[0].mxu0
      %v5774 = vpop.f32.mrb[0].mxu0
      %v5775 = vadd.f32 %v5542, %v5774
      %v5776 = vpop.f32.mrb[0].mxu0
      %5777 = vmatprep.mubr.bf16.mxu0 %v5368
      %5778 = vmatmul.mubr.bf16.gmra.mrb[0].mxu0 %v4936
      %v5779 = vpop.f32.mrb[0].mxu0
      %v5780 = vadd.f32 %v5547, %v5779
      %v5781 = vpop.f32.mrb[0].mxu0
      %v5782 = vpop.f32.mrb[0].mxu0
      %v5783 = vadd.f32 %v5550, %v5782
      %v5784 = vpop.f32.mrb[0].mxu0
      %5785 = vmatprep.mubr.bf16.mxu0 %v5371
      %5786 = vmatmul.mubr.bf16.gmra.mrb[0].mxu0 %v4950
      %v5787 = vpop.f32.mrb[0].mxu0
      %v5788 = vadd.f32 %v5555, %v5787
      %v5789 = vpop.f32.mrb[0].mxu0
      %v5790 = vpop.f32.mrb[0].mxu0
      %v5791 = vadd.f32 %v5558, %v5790
      %v5792 = vpop.f32.mrb[0].mxu0
      %5793 = vmatprep.mubr.bf16.mxu0 %v5374
      %5794 = vmatmul.mubr.bf16.gmra.mrb[0].mxu0 %v4964
      %v5795 = vpop.f32.mrb[0].mxu0
      %v5796 = vadd.f32 %v5563, %v5795
      %v5797 = vpop.f32.mrb[0].mxu0
      %v5798 = vpop.f32.mrb[0].mxu0
      %v5799 = vadd.f32 %v5566, %v5798
      %v5800 = vpop.f32.mrb[0].mxu0
      %5801 = vmatprep.mubr.bf16.mxu0 %v5377
      %5802 = vmatmul.mubr.bf16.gmra.mrb[0].mxu0 %v4978
      %v5803 = vpop.f32.mrb[0].mxu0
      %v5804 = vadd.f32 %v5571, %v5803
      %v5805 = vpop.f32.mrb[0].mxu0
      %v5806 = vpop.f32.mrb[0].mxu0
      %v5807 = vadd.f32 %v5574, %v5806
      %v5808 = vpop.f32.mrb[0].mxu0
      %5809 = vmatprep.mubr.bf16.mxu0 %v5380
      %5810 = vmatmul.mubr.bf16.gmra.mrb[0].mxu0 %v4992
      %v5811 = vpop.f32.mrb[0].mxu0
      %v5812 = vadd.f32 %v5579, %v5811
      %v5813 = vpop.f32.mrb[0].mxu0
      %v5814 = vpop.f32.mrb[0].mxu0
      %v5815 = vadd.f32 %v5582, %v5814
      %v5816 = vpop.f32.mrb[0].mxu0
      %5817 = vmatprep.mubr.bf16.mxu0 %v5383
      %5818 = vmatmul.mubr.bf16.gmra.mrb[0].mxu0 %v5006
      %v5819 = vpop.f32.mrb[0].mxu0
      %v5820 = vadd.f32 %v5587, %v5819
      %v5821 = vpop.f32.mrb[0].mxu0
      %v5822 = vpop.f32.mrb[0].mxu0
      %v5823 = vadd.f32 %v5590, %v5822
      %v5824 = vpop.f32.mrb[0].mxu0
      %5825 = vmatprep.mubr.bf16.mxu0 %v5386
      %5826 = vmatmul.mubr.bf16.gmra.mrb[0].mxu0 %v5020
      %v5827 = vpop.f32.mrb[0].mxu0
      %v5828 = vadd.f32 %v5595, %v5827
      %v5829 = vpop.f32.mrb[0].mxu0
      %v5830 = vpop.f32.mrb[0].mxu0
      %v5831 = vadd.f32 %v5598, %v5830
      %v5832 = vpop.f32.mrb[0].mxu0
      %5833 = vmatprep.mubr.bf16.mxu0 %v5389
      %5834 = vmatmul.mubr.bf16.gmra.mrb[0].mxu0 %v5034
      %v5835 = vpop.f32.mrb[0].mxu0
      %v5836 = vadd.f32 %v5603, %v5835
      %v5837 = vpop.f32.mrb[0].mxu0
      %v5838 = vpop.f32.mrb[0].mxu0
      %v5839 = vadd.f32 %v5606, %v5838
      %v5840 = vpop.f32.mrb[0].mxu0
      %5841 = vmatprep.mubr.bf16.mxu0 %v5392
      %5842 = vmatmul.mubr.bf16.gmra.mrb[0].mxu0 %v5048
      %v5843 = vpop.f32.mrb[0].mxu0
      %v5844 = vadd.f32 %v5611, %v5843
      %v5845 = vpop.f32.mrb[0].mxu0
      %v5846 = vpop.f32.mrb[0].mxu0
      %v5847 = vadd.f32 %v5614, %v5846
      %v5848 = vpop.f32.mrb[0].mxu0
      %5849 = vmatprep.mubr.bf16.mxu0 %v5395
      %5850 = vmatmul.mubr.bf16.gmra.mrb[0].mxu0 %v5062
      %v5851 = vpop.f32.mrb[0].mxu0
      %v5852 = vadd.f32 %v5619, %v5851
      %v5853 = vpop.f32.mrb[0].mxu0
      %v5854 = vpop.f32.mrb[0].mxu0
      %v5855 = vadd.f32 %v5622, %v5854
      %v5856 = vpop.f32.mrb[0].mxu0
      %5857 = vmatprep.mubr.bf16.mxu0 %v5398
      %5858 = vmatmul.mubr.bf16.gmra.mrb[0].mxu0 %v5076
      %v5859 = vpop.f32.mrb[0].mxu0
      %v5860 = vadd.f32 %v5627, %v5859
      %v5861 = vpop.f32.mrb[0].mxu0
      %v5862 = vpop.f32.mrb[0].mxu0
      %v5863 = vadd.f32 %v5630, %v5862
      %v5864 = vpop.f32.mrb[0].mxu0
      %5865 = vdwg.mxu0
      %vm5873 = vcmask 1045504
      %v5874 = vrot.slane %v5692, 2
      %v5875 = vrot.slane %v5695, 2
      %v5876 = vsel %vm5873, %v5874, %v5875
      %v5877 = vrot.slane %v5700, 2
      %v5878 = vsel %vm5873, %v5875, %v5877
      %v5879 = vrot.slane %v5703, 2
      %v5880 = vsel %vm5873, %v5877, %v5879
      %v5881 = vrot.slane %v5708, 2
      %v5882 = vsel %vm5873, %v5879, %v5881
      %v5883 = vrot.slane %v5711, 2
      %v5884 = vsel %vm5873, %v5881, %v5883
      %v5885 = vrot.slane %v5716, 2
      %v5886 = vsel %vm5873, %v5883, %v5885
      %5887 = vrot.lane.b32.xlu0 %v5876, 16
      %v5888 = vpop.permute.xlu0 %5887
      %5889 = vrot.lane.b32.xlu0 %v5878, 16
      %v5890 = vpop.permute.xlu0 %5889
      %5891 = vrot.lane.b32.xlu0 %v5880, 16
      %v5892 = vpop.permute.xlu0 %5891
      %5893 = vrot.lane.b32.xlu0 %v5882, 16
      %v5894 = vpop.permute.xlu0 %5893
      %5895 = vrot.lane.b32.xlu0 %v5884, 16
      %v5896 = vpop.permute.xlu0 %5895
      %5897 = vrot.lane.b32.xlu0 %v5886, 16
      %v5898 = vpop.permute.xlu0 %5897
      %5899 = vrot.lane.b32.xlu0 %v5885, 16
      %v5900 = vpop.permute.xlu0 %5899
      %vm5914 = vcmask 1043456
      %v5915 = vrot.slane %v5716, 4
      %v5916 = vrot.slane %v5719, 4
      %v5917 = vsel %vm5914, %v5915, %v5916
      %v5918 = vrot.slane %v5724, 4
      %v5919 = vsel %vm5914, %v5916, %v5918
      %v5920 = vrot.slane %v5727, 4
      %v5921 = vsel %vm5914, %v5918, %v5920
      %v5922 = vrot.slane %v5732, 4
      %v5923 = vsel %vm5914, %v5920, %v5922
      %v5924 = vrot.slane %v5735, 4
      %v5925 = vsel %vm5914, %v5922, %v5924
      %v5926 = vrot.slane %v5740, 4
      %v5927 = vsel %vm5914, %v5924, %v5926
      %5928 = vrot.lane.b32.xlu0 %v5917, 32
      %v5929 = vpop.permute.xlu0 %5928
      %5930 = vrot.lane.b32.xlu0 %v5919, 32
      %v5931 = vpop.permute.xlu0 %5930
      %5932 = vrot.lane.b32.xlu0 %v5921, 32
      %v5933 = vpop.permute.xlu0 %5932
      %5934 = vrot.lane.b32.xlu0 %v5923, 32
      %v5935 = vpop.permute.xlu0 %5934
      %5936 = vrot.lane.b32.xlu0 %v5925, 32
      %v5937 = vpop.permute.xlu0 %5936
      %5938 = vrot.lane.b32.xlu0 %v5927, 32
      %v5939 = vpop.permute.xlu0 %5938
      %5940 = vrot.lane.b32.xlu0 %v5926, 32
      %v5941 = vpop.permute.xlu0 %5940
      %vm5955 = vcmask 1041408
      %v5956 = vrot.slane %v5740, 6
      %v5957 = vrot.slane %v5743, 6
      %v5958 = vsel %vm5955, %v5956, %v5957
      %v5959 = vrot.slane %v5748, 6
      %v5960 = vsel %vm5955, %v5957, %v5959
      %v5961 = vrot.slane %v5751, 6
      %v5962 = vsel %vm5955, %v5959, %v5961
      %v5963 = vrot.slane %v5756, 6
      %v5964 = vsel %vm5955, %v5961, %v5963
      %v5965 = vrot.slane %v5759, 6
      %v5966 = vsel %vm5955, %v5963, %v5965
      %v5967 = vrot.slane %v5764, 6
      %v5968 = vsel %vm5955, %v5965, %v5967
      %5969 = vrot.lane.b32.xlu0 %v5958, 48
      %v5970 = vpop.permute.xlu0 %5969
      %5971 = vrot.lane.b32.xlu0 %v5960, 48
      %v5972 = vpop.permute.xlu0 %5971
      %5973 = vrot.lane.b32.xlu0 %v5962, 48
      %v5974 = vpop.permute.xlu0 %5973
      %5975 = vrot.lane.b32.xlu0 %v5964, 48
      %v5976 = vpop.permute.xlu0 %5975
      %5977 = vrot.lane.b32.xlu0 %v5966, 48
      %v5978 = vpop.permute.xlu0 %5977
      %5979 = vrot.lane.b32.xlu0 %v5968, 48
      %v5980 = vpop.permute.xlu0 %5979
      %5981 = vrot.lane.b32.xlu0 %v5967, 48
      %v5982 = vpop.permute.xlu0 %5981
      %5997 = vrot.lane.b32.xlu0 %v5767, 64
      %v5998 = vpop.permute.xlu0 %5997
      %5999 = vrot.lane.b32.xlu0 %v5772, 64
      %v6000 = vpop.permute.xlu0 %5999
      %6001 = vrot.lane.b32.xlu0 %v5775, 64
      %v6002 = vpop.permute.xlu0 %6001
      %6003 = vrot.lane.b32.xlu0 %v5780, 64
      %v6004 = vpop.permute.xlu0 %6003
      %6005 = vrot.lane.b32.xlu0 %v5783, 64
      %v6006 = vpop.permute.xlu0 %6005
      %6007 = vrot.lane.b32.xlu0 %v5788, 64
      %v6008 = vpop.permute.xlu0 %6007
      %6009 = vrot.lane.b32.xlu0 %v5791, 64
      %v6010 = vpop.permute.xlu0 %6009
      %v6024 = vrot.slane %v5791, 2
      %v6025 = vrot.slane %v5796, 2
      %v6026 = vsel %vm5873, %v6024, %v6025
      %v6027 = vrot.slane %v5799, 2
      %v6028 = vsel %vm5873, %v6025, %v6027
      %v6029 = vrot.slane %v5804, 2
      %v6030 = vsel %vm5873, %v6027, %v6029
      %v6031 = vrot.slane %v5807, 2
      %v6032 = vsel %vm5873, %v6029, %v6031
      %v6033 = vrot.slane %v5812, 2
      %v6034 = vsel %vm5873, %v6031, %v6033
      %v6035 = vrot.slane %v5815, 2
      %v6036 = vsel %vm5873, %v6033, %v6035
      %6037 = vrot.lane.b32.xlu0 %v6026, 80
      %v6038 = vpop.permute.xlu0 %6037
      %6039 = vrot.lane.b32.xlu0 %v6028, 80
      %v6040 = vpop.permute.xlu0 %6039
      %6041 = vrot.lane.b32.xlu0 %v6030, 80
      %v6042 = vpop.permute.xlu0 %6041
      %6043 = vrot.lane.b32.xlu0 %v6032, 80
      %v6044 = vpop.permute.xlu0 %6043
      %6045 = vrot.lane.b32.xlu0 %v6034, 80
      %v6046 = vpop.permute.xlu0 %6045
      %6047 = vrot.lane.b32.xlu0 %v6036, 80
      %v6048 = vpop.permute.xlu0 %6047
      %6049 = vrot.lane.b32.xlu0 %v6035, 80
      %v6050 = vpop.permute.xlu0 %6049
      %v6064 = vrot.slane %v5815, 4
      %v6065 = vrot.slane %v5820, 4
      %v6066 = vsel %vm5914, %v6064, %v6065
      %v6067 = vrot.slane %v5823, 4
      %v6068 = vsel %vm5914, %v6065, %v6067
      %v6069 = vrot.slane %v5828, 4
      %v6070 = vsel %vm5914, %v6067, %v6069
      %v6071 = vrot.slane %v5831, 4
      %v6072 = vsel %vm5914, %v6069, %v6071
      %v6073 = vrot.slane %v5836, 4
      %v6074 = vsel %vm5914, %v6071, %v6073
      %v6075 = vrot.slane %v5839, 4
      %v6076 = vsel %vm5914, %v6073, %v6075
      %6077 = vrot.lane.b32.xlu0 %v6066, 96
      %v6078 = vpop.permute.xlu0 %6077
      %6079 = vrot.lane.b32.xlu0 %v6068, 96
      %v6080 = vpop.permute.xlu0 %6079
      %6081 = vrot.lane.b32.xlu0 %v6070, 96
      %v6082 = vpop.permute.xlu0 %6081
      %6083 = vrot.lane.b32.xlu0 %v6072, 96
      %v6084 = vpop.permute.xlu0 %6083
      %6085 = vrot.lane.b32.xlu0 %v6074, 96
      %v6086 = vpop.permute.xlu0 %6085
      %6087 = vrot.lane.b32.xlu0 %v6076, 96
      %v6088 = vpop.permute.xlu0 %6087
      %6089 = vrot.lane.b32.xlu0 %v6075, 96
      %v6090 = vpop.permute.xlu0 %6089
      %v6104 = vrot.slane %v5839, 6
      %v6105 = vrot.slane %v5844, 6
      %v6106 = vsel %vm5955, %v6104, %v6105
      %v6107 = vrot.slane %v5847, 6
      %v6108 = vsel %vm5955, %v6105, %v6107
      %v6109 = vrot.slane %v5852, 6
      %v6110 = vsel %vm5955, %v6107, %v6109
      %v6111 = vrot.slane %v5855, 6
      %v6112 = vsel %vm5955, %v6109, %v6111
      %v6113 = vrot.slane %v5860, 6
      %v6114 = vsel %vm5955, %v6111, %v6113
      %v6115 = vrot.slane %v5863, 6
      %v6116 = vsel %vm5955, %v6113, %v6115
      %6117 = vrot.lane.b32.xlu0 %v6106, 112
      %v6118 = vpop.permute.xlu0 %6117
      %6119 = vrot.lane.b32.xlu0 %v6108, 112
      %v6120 = vpop.permute.xlu0 %6119
      %6121 = vrot.lane.b32.xlu0 %v6110, 112
      %v6122 = vpop.permute.xlu0 %6121
      %6123 = vrot.lane.b32.xlu0 %v6112, 112
      %v6124 = vpop.permute.xlu0 %6123
      %6125 = vrot.lane.b32.xlu0 %v6114, 112
      %v6126 = vpop.permute.xlu0 %6125
      %6127 = vrot.lane.b32.xlu0 %v6116, 112
      %v6128 = vpop.permute.xlu0 %6127
      %6129 = vrot.lane.b32.xlu0 %v6115, 112
      %v6130 = vpop.permute.xlu0 %6129
      %v6138 = vsel %vm2325, %v5668, %v5888
      %v6139 = vsel %vm2325, %v5671, %v5890
      %v6140 = vsel %vm2325, %v5676, %v5892
      %v6141 = vsel %vm2325, %v5679, %v5894
      %v6142 = vsel %vm2325, %v5684, %v5896
      %v6143 = vsel %vm2325, %v5687, %v5898
      %v6144 = vsel %vm2325, %v5692, %v5900
      %v6145 = vsel %vm2376, %v6138, %v5929
      %v6146 = vsel %vm2376, %v6139, %v5931
      %v6147 = vsel %vm2376, %v6140, %v5933
      %v6148 = vsel %vm2376, %v6141, %v5935
      %v6149 = vsel %vm2376, %v6142, %v5937
      %v6150 = vsel %vm2376, %v6143, %v5939
      %v6151 = vsel %vm2376, %v6144, %v5941
      %v6152 = vsel %vm2427, %v6145, %v5970
      %v6153 = vsel %vm2427, %v6146, %v5972
      %v6154 = vsel %vm2427, %v6147, %v5974
      %v6155 = vsel %vm2427, %v6148, %v5976
      %v6156 = vsel %vm2427, %v6149, %v5978
      %v6157 = vsel %vm2427, %v6150, %v5980
      %v6158 = vsel %vm2427, %v6151, %v5982
      %v6159 = vsel %vm2478, %v6152, %v5998
      %v6160 = vsel %vm2478, %v6153, %v6000
      %v6161 = vsel %vm2478, %v6154, %v6002
      %v6162 = vsel %vm2478, %v6155, %v6004
      %v6163 = vsel %vm2478, %v6156, %v6006
      %v6164 = vsel %vm2478, %v6157, %v6008
      %v6165 = vsel %vm2478, %v6158, %v6010
      %v6166 = vsel %vm2529, %v6159, %v6038
      %v6167 = vsel %vm2529, %v6160, %v6040
      %v6168 = vsel %vm2529, %v6161, %v6042
      %v6169 = vsel %vm2529, %v6162, %v6044
      %v6170 = vsel %vm2529, %v6163, %v6046
      %v6171 = vsel %vm2529, %v6164, %v6048
      %v6172 = vsel %vm2529, %v6165, %v6050
      %v6173 = vsel %vm2580, %v6166, %v6078
      %v6174 = vsel %vm2580, %v6167, %v6080
      %v6175 = vsel %vm2580, %v6168, %v6082
      %v6176 = vsel %vm2580, %v6169, %v6084
      %v6177 = vsel %vm2580, %v6170, %v6086
      %v6178 = vsel %vm2580, %v6171, %v6088
      %v6179 = vsel %vm2580, %v6172, %v6090
      %v6180 = vsel %vm2631, %v6173, %v6118
      %v6181 = vsel %vm2631, %v6174, %v6120
      %v6182 = vsel %vm2631, %v6175, %v6122
      %v6183 = vsel %vm2631, %v6176, %v6124
      %v6184 = vsel %vm2631, %v6177, %v6126
      %v6185 = vsel %vm2631, %v6178, %v6128
      %v6186 = vsel %vm2631, %v6179, %v6130
      %v6187 = vld [vmem:[%s2] sm:$0x1]
      %v6189 = vlaneseq
      %v6190 = vshrl.u32 %v6189, 7
      %v6191 = vsub.s32 0, %v6190
      %v6192 = vrot.slane %v6187, %v6191
      %v6194 = vadd.f32 %v6180, %v6192
      %v6195 = vadd.f32 %v6181, %v6192
      %v6196 = vadd.f32 %v6182, %v6192
      %v6197 = vadd.f32 %v6183, %v6192
      %v6198 = vadd.f32 %v6184, %v6192
      %v6199 = vadd.f32 %v6185, %v6192
      %v6200 = vadd.f32 %v6186, %v6192
      %v6201 = vld [vmem:[%s258] sm:$0xf]
      %v6202 = vld [vmem:[%s258 + $0x4] sm:$0xf]
      %v6203 = vld [vmem:[%s258 + $0x8] sm:$0xf]
      %v6204 = vld [vmem:[%s258 + $0xc] sm:$0xf]
      %v6205 = vld [vmem:[%s258 + $0x10] sm:$0xf]
      %v6206 = vld [vmem:[%s258 + $0x14] sm:$0xf]
      %v6207 = vld [vmem:[%s258 + $0x18] sm:$0x1]
      %v6208 = vunpack.c.l.bf16 %v6201
      %v6209 = vunpack.c.l.bf16 %v6202
      %v6210 = vunpack.c.l.bf16 %v6203
      %v6211 = vunpack.c.l.bf16 %v6204
      %v6212 = vunpack.c.l.bf16 %v6205
      %v6213 = vunpack.c.l.bf16 %v6206
      %v6214 = vunpack.c.l.bf16 %v6207
      %v6215 = vmul.f32 %v6194, %v6208
      %v6216 = vmul.f32 %v6195, %v6209
      %v6217 = vmul.f32 %v6196, %v6210
      %v6218 = vmul.f32 %v6197, %v6211
      %v6219 = vmul.f32 %v6198, %v6212
      %v6220 = vmul.f32 %v6199, %v6213
      %v6221 = vmul.f32 %v6200, %v6214
      %vm6222 = vcmp.gt.f32.partialorder %v6215, 0.0
      %vm6223 = vcmp.gt.f32.partialorder %v6216, 0.0
      %vm6224 = vcmp.gt.f32.partialorder %v6217, 0.0
      %vm6225 = vcmp.gt.f32.partialorder %v6218, 0.0
      %vm6226 = vcmp.gt.f32.partialorder %v6219, 0.0
      %vm6227 = vcmp.gt.f32.partialorder %v6220, 0.0
      %vm6228 = vcmp.gt.f32.partialorder %v6221, 0.0
      %v6229 = vmul.f32 %v6215, 0.333
      %v6230 = vmul.f32 %v6216, 0.333
      %v6231 = vmul.f32 %v6217, 0.333
      %v6232 = vmul.f32 %v6218, 0.333
      %v6233 = vmul.f32 %v6219, 0.333
      %v6234 = vmul.f32 %v6220, 0.333
      %v6235 = vmul.f32 %v6221, 0.333
      %v6236 = vsel %vm6222, %v6215, %v6229
      %v6237 = vsel %vm6223, %v6216, %v6230
      %v6238 = vsel %vm6224, %v6217, %v6231
      %v6239 = vsel %vm6225, %v6218, %v6232
      %v6240 = vsel %vm6226, %v6219, %v6233
      %v6241 = vsel %vm6227, %v6220, %v6234
      %v6242 = vsel %vm6228, %v6221, %v6235
      %v6243 = vpack.c.bf16 %v6237, %v6236
      %v6244 = vpack.c.bf16 %v6239, %v6238
      %v6245 = vpack.c.bf16 %v6241, %v6240
      %v6246 = vpack.c.bf16 %v6242, %v6242
      %v6251 = vunpack.c.l.b16 %v6243
      %v6252 = vunpack.c.h.b16 %v6243
      %v6253 = vunpack.c.l.b16 %v6244
      %v6254 = vunpack.c.h.b16 %v6244
      %v6255 = vunpack.c.l.b16 %v6245
      %v6256 = vunpack.c.h.b16 %v6245
      %v6257 = vunpack.c.l.b16 %v6246
      %v6258 = vpack.c.b16 %v6251, %v6251
      %v6259 = vpack.c.b16 %v6252, %v6252
      %v6260 = vpack.c.b16 %v6253, %v6253
      %v6261 = vpack.c.b16 %v6254, %v6254
      %v6262 = vpack.c.b16 %v6255, %v6255
      %v6263 = vpack.c.b16 %v6256, %v6256
      %v6264 = vpack.c.b16 %v6257, %v6257
      %6272 = vst [vmem:[%s267] sm:$0xf] %v6258
      %6273 = vst [vmem:[%s267 + $0x4] sm:$0xf] %v6259
      %6274 = vst [vmem:[%s267 + $0x8] sm:$0xf] %v6260
      %6275 = vst [vmem:[%s267 + $0xc] sm:$0xf] %v6261
      %6276 = vst [vmem:[%s267 + $0x10] sm:$0xf] %v6262
      %6277 = vst [vmem:[%s267 + $0x14] sm:$0xf] %v6263
      %6278 = vst [vmem:[%s267 + $0x18] sm:$0x1] %v6264
      %p6279 = scmp.lt.s32.totalorder %s19, 1
      %s6280 = scalar_select %p6279, %s19, 1
      %p6281 = scmp.lt.s32.totalorder %s20, 1
      %s6282 = scalar_select %p6281, %s20, 1
      %s6283 = smul.addr %s6282, 7
      %s6284 = smul.addr %s6280, 14
      %s6285 = sadd.s32 %s6283, %s6284
      %s6286 = smul.addr %s6285, 4
      %s6287 = scalar_lea.vmem %s4, %s6286
      // Predicated region
      $region37: #{sparse_block_series.4} parent=35 // pred_check
        %p6288 = pneg %p145
      $region38: #{sparse_block_series.4} parent=35 // pred_check_branch
        %6290 = sbr.rel (%p6288) target = $region40
      $region39: #{sparse_block_series.4} parent=35 // pred_region
        _
      $region40: #{sparse_block_series.4} parent=35 // pred_fallthru
        _
    $region36: #{sparse_block_series.4} parent=5 // pred_fallthru
      _
    %p6291 = scmp.le.s32.totalorder 2, %s10
    // Predicated region
    $region41: #{sparse_block_series.4} parent=5 // pred_check
      %p6292 = pneg %p6291
    $region42: #{sparse_block_series.4} parent=5 // pred_check_branch
      %6294 = sbr.rel (%p6292) target = $region44
    $region43: #{sparse_block_series.4} parent=5 // pred_region
      %s6295 = ssub.s32 %s10, 2
      // Predicated region
      $region45: #{sparse_block_series.4} parent=43 // pred_check
        %p6296 = pneg %p151
      $region46: #{sparse_block_series.4} parent=43 // pred_check_branch
        %6298 = sbr.rel (%p6296) target = $region48
      $region47: #{sparse_block_series.4} parent=43 // pred_region
        %p6299 = scmp.lt.s32.totalorder %s21, 1
        %s6300 = scalar_select %p6299, %s21, 1
        %p6301 = scmp.lt.s32.totalorder %s22, 1
        %s6302 = scalar_select %p6301, %s22, 1
        %s6303 = smul.addr %s6302, 7
        %s6304 = smul.addr %s6300, 14
        %s6305 = sadd.s32 %s6303, %s6304
        %s6306 = smul.addr %s6305, 4
        %s6307 = scalar_lea.vmem %s4, %s6306
      $region48: #{sparse_block_series.4} parent=43 // pred_fallthru
        _
    $region44: #{sparse_block_series.4} parent=5 // pred_fallthru
      _
  $region6: #{sparse_block_series.4} parent=0 // loop_footer
    %s14 = sadd.s32 1, %s10
  $region7: #{sparse_block_series.4} parent=0 // loop_footer_branch
    %9 = sbr.rel target = $region3
  $region8: #{sparse_block_series.4} parent=0 // loop_exit
    _

// kernel: sparse_block_series.5
$region0: #{sparse_block_series.5}
  #allocation0 [shape = 'u32[]', space=smem, size = 0x4, offset = 0x4, fixed_abs, tag = 'smem constant byte address 0x4 - core index']
  #allocation1 [shape = 'u32[144,128]{1,0:T(1,128)}', space=vmem, size = 0x12000, scoped, tag = 'internal scratch']
  %s0 = inlined_call_operand.vmem [shape: bf16[2,2,700,16], index: 0, kind: input, shape index: {}]
  %s1 = inlined_call_operand.vmem [shape: bf16[432,16], index: 1, kind: input, shape index: {}]
  %s2 = inlined_call_operand.vmem [shape: f32[1,128], index: 2, kind: input, shape index: {}]
  %s3 = inlined_call_operand.vmem [shape: bf16[2,2,50,128], index: 3, kind: input, shape index: {}]
  %s4 = inlined_call_operand.vmem [shape: bf16[2,2,50,128], index: 4, kind: input, shape index: {}]
  %s5 = inlined_call_operand.vmem [shape: bf16[2,2,50,128], index: 5, kind: output, shape index: {}]
  %s6 = sld [smem:[#allocation0]]
  $region53: #{sparse_block_series.5} parent=0
    _
  %s8 = ssub.s32 1, %s6
  %s9 = scalar_select 0, %s8, %s6
  loop: start=0, step=1, limit=6
  $region2: #{sparse_block_series.5} parent=0 // loop_pre_header
    _
  $region3: #{sparse_block_series.5} parent=0 // loop_header
    %s11 = sphi 0, %s15
    %p12 = scmp.ge.s32.totalorder %s11, 6
    %s18 = sphi 0, %s30
    %s19 = sphi 0, %s26
    %s20 = sphi 0, %s18
    %s21 = sphi 0, %s19
    %s22 = sphi 0, %s20
    %s23 = sphi 0, %s21
    %s35 = sphi 0, %s37
    %s38 = sphi 0, %s35
    %s39 = sphi 0, %s38
    %s55 = sphi 0, %s39
    %s59 = sphi 0, %s59
    %s61 = sphi 0, %s59
    %s62 = sphi 0, %s61
    %s76 = sphi 0, %s62
    %s80 = sphi 0, %s80
    %s82 = sphi 0, %s80
    %s83 = sphi 0, %s82
    %s97 = sphi 0, %s83
    %s105 = sphi 0, %s107
    %s108 = sphi 0, %s105
    %s109 = sphi 0, %s108
    %s125 = sphi 0, %s109
    %s133 = sphi 0, %s135
    %s136 = sphi 0, %s133
    %s137 = sphi 0, %s136
    %s153 = sphi 0, %s137
    %s161 = sphi 0, %s163
    %s164 = sphi 0, %s161
    %s165 = sphi 0, %s164
    %s181 = sphi 0, %s165
  $region4: #{sparse_block_series.5} parent=0 // loop_header_branch
    %14 = sbr.rel (%p12) target = $region8
  $region5: #{sparse_block_series.5} parent=0 // loop_body
    %s16 = ssub.s32 %s11, 1
    %s17 = ssub.s32 %s11, 2
    %s24 = sadd.s32 1, %s19
    %p25 = scmp.ge.s32.totalorder %s24, 2
    %s26 = scalar_select %p25, 0, %s24
    %s27 = sadd.s32 1, %s18
    %s28 = scalar_select %p25, %s27, %s18
    %p29 = scmp.ge.s32.totalorder %s28, 2
    %s30 = scalar_select %p29, 0, %s28
    %s31 = ssub.s32 %s18, %s30
    %s32 = ssub.s32 %s19, %s26
    %s33 = sor.u32 %s31, %s32
    %p34 = scmp.eq.s32.totalorder %s33, 0
    %s36 = sadd.s32 %s35, 1
    %s37 = scalar_select %p34, %s35, %s36
    %p40 = pneg %p34
    %p41 = scmp.eq.s32.totalorder %s11, 3
    %p42 = por %p40, %p41
    %p43 = scmp.ne.s32.totalorder %s35, %s38
    %p44 = scmp.eq.s32.totalorder %s11, 0
    %p45 = por %p43, %p44
    %p46 = scmp.ne.s32.totalorder %s35, %s38
    %p47 = scmp.eq.s32.totalorder %s16, 3
    %p48 = por %p46, %p47
    %p49 = scmp.ne.s32.totalorder %s38, %s39
    %p50 = scmp.eq.s32.totalorder %s16, 0
    %p51 = por %p49, %p50
    %p52 = scmp.ne.s32.totalorder %s38, %s39
    %p53 = scmp.eq.s32.totalorder %s17, 3
    %p54 = por %p52, %p53
    %p56 = scmp.ne.s32.totalorder %s39, %s55
    %p57 = scmp.eq.s32.totalorder %s17, 0
    %p58 = por %p56, %p57
    %s60 = sadd.s32 %s59, 1
    %p63 = scmp.eq.s32.totalorder %s11, 3
    %p64 = scmp.ne.s32.totalorder %s59, %s61
    %p65 = scmp.eq.s32.totalorder %s11, 0
    %p66 = por %p64, %p65
    %p67 = scmp.ne.s32.totalorder %s59, %s61
    %p68 = scmp.eq.s32.totalorder %s16, 3
    %p69 = por %p67, %p68
    %p70 = scmp.ne.s32.totalorder %s61, %s62
    %p71 = scmp.eq.s32.totalorder %s16, 0
    %p72 = por %p70, %p71
    %p73 = scmp.ne.s32.totalorder %s61, %s62
    %p74 = scmp.eq.s32.totalorder %s17, 3
    %p75 = por %p73, %p74
    %p77 = scmp.ne.s32.totalorder %s62, %s76
    %p78 = scmp.eq.s32.totalorder %s17, 0
    %p79 = por %p77, %p78
    %s81 = sadd.s32 %s80, 1
    %p84 = scmp.eq.s32.totalorder %s11, 3
    %p85 = scmp.ne.s32.totalorder %s80, %s82
    %p86 = scmp.eq.s32.totalorder %s11, 0
    %p87 = por %p85, %p86
    %p88 = scmp.ne.s32.totalorder %s80, %s82
    %p89 = scmp.eq.s32.totalorder %s16, 3
    %p90 = por %p88, %p89
    %p91 = scmp.ne.s32.totalorder %s82, %s83
    %p92 = scmp.eq.s32.totalorder %s16, 0
    %p93 = por %p91, %p92
    %p94 = scmp.ne.s32.totalorder %s82, %s83
    %p95 = scmp.eq.s32.totalorder %s17, 3
    %p96 = por %p94, %p95
    %p98 = scmp.ne.s32.totalorder %s83, %s97
    %p99 = scmp.eq.s32.totalorder %s17, 0
    %p100 = por %p98, %p99
    %s101 = ssub.s32 %s18, %s30
    %s102 = ssub.s32 %s19, %s26
    %s103 = sor.u32 %s101, %s102
    %p104 = scmp.eq.s32.totalorder %s103, 0
    %s106 = sadd.s32 %s105, 1
    %s107 = scalar_select %p104, %s105, %s106
    %p110 = pneg %p104
    %p111 = scmp.eq.s32.totalorder %s11, 3
    %p112 = por %p110, %p111
    %p113 = scmp.ne.s32.totalorder %s105, %s108
    %p114 = scmp.eq.s32.totalorder %s11, 0
    %p115 = por %p113, %p114
    %p116 = scmp.ne.s32.totalorder %s105, %s108
    %p117 = scmp.eq.s32.totalorder %s16, 3
    %p118 = por %p116, %p117
    %p119 = scmp.ne.s32.totalorder %s108, %s109
    %p120 = scmp.eq.s32.totalorder %s16, 0
    %p121 = por %p119, %p120
    %p122 = scmp.ne.s32.totalorder %s108, %s109
    %p123 = scmp.eq.s32.totalorder %s17, 3
    %p124 = por %p122, %p123
    %p126 = scmp.ne.s32.totalorder %s109, %s125
    %p127 = scmp.eq.s32.totalorder %s17, 0
    %p128 = por %p126, %p127
    %s129 = ssub.s32 %s18, %s30
    %s130 = ssub.s32 %s19, %s26
    %s131 = sor.u32 %s129, %s130
    %p132 = scmp.eq.s32.totalorder %s131, 0
    %s134 = sadd.s32 %s133, 1
    %s135 = scalar_select %p132, %s133, %s134
    %p138 = pneg %p132
    %p139 = scmp.eq.s32.totalorder %s11, 3
    %p140 = por %p138, %p139
    %p141 = scmp.ne.s32.totalorder %s133, %s136
    %p142 = scmp.eq.s32.totalorder %s11, 0
    %p143 = por %p141, %p142
    %p144 = scmp.ne.s32.totalorder %s133, %s136
    %p145 = scmp.eq.s32.totalorder %s16, 3
    %p146 = por %p144, %p145
    %p147 = scmp.ne.s32.totalorder %s136, %s137
    %p148 = scmp.eq.s32.totalorder %s16, 0
    %p149 = por %p147, %p148
    %p150 = scmp.ne.s32.totalorder %s136, %s137
    %p151 = scmp.eq.s32.totalorder %s17, 3
    %p152 = por %p150, %p151
    %p154 = scmp.ne.s32.totalorder %s137, %s153
    %p155 = scmp.eq.s32.totalorder %s17, 0
    %p156 = por %p154, %p155
    %s157 = ssub.s32 %s18, %s30
    %s158 = ssub.s32 %s19, %s26
    %s159 = sor.u32 %s157, %s158
    %p160 = scmp.eq.s32.totalorder %s159, 0
    %s162 = sadd.s32 %s161, 1
    %s163 = scalar_select %p160, %s161, %s162
    %p166 = pneg %p160
    %p167 = scmp.eq.s32.totalorder %s11, 3
    %p168 = por %p166, %p167
    %p169 = scmp.ne.s32.totalorder %s161, %s164
    %p170 = scmp.eq.s32.totalorder %s11, 0
    %p171 = por %p169, %p170
    %p172 = scmp.ne.s32.totalorder %s161, %s164
    %p173 = scmp.eq.s32.totalorder %s16, 3
    %p174 = por %p172, %p173
    %p175 = scmp.ne.s32.totalorder %s164, %s165
    %p176 = scmp.eq.s32.totalorder %s16, 0
    %p177 = por %p175, %p176
    %p178 = scmp.ne.s32.totalorder %s164, %s165
    %p179 = scmp.eq.s32.totalorder %s17, 3
    %p180 = por %p178, %p179
    %p182 = scmp.ne.s32.totalorder %s165, %s181
    %p183 = scmp.eq.s32.totalorder %s17, 0
    %p184 = por %p182, %p183
    %p185 = scmp.le.s32.totalorder 1, %s11
    %p186 = scmp.lt.s32.totalorder %s11, 5
    %p187 = pnand %p185, %p186
    %p188 = pneg %p187
    // Predicated region
    $region9: #{sparse_block_series.5} parent=5 // pred_check
      _
    $region10: #{sparse_block_series.5} parent=5 // pred_check_branch
      %190 = sbr.rel (%p187) target = $region12
    $region11: #{sparse_block_series.5} parent=5 // pred_region
      %s191 = ssub.s32 %s11, 1
      // Predicated region
      $region13: #{sparse_block_series.5} parent=11 // pred_check
        %p192 = pneg %p72
      $region14: #{sparse_block_series.5} parent=11 // pred_check_branch
        %194 = sbr.rel (%p192) target = $region16
      $region15: #{sparse_block_series.5} parent=11 // pred_region
        _
      $region16: #{sparse_block_series.5} parent=11 // pred_fallthru
        _
      // Predicated region
      $region17: #{sparse_block_series.5} parent=11 // pred_check
        %p195 = pneg %p93
      $region18: #{sparse_block_series.5} parent=11 // pred_check_branch
        %197 = sbr.rel (%p195) target = $region20
      $region19: #{sparse_block_series.5} parent=11 // pred_region
        _
      $region20: #{sparse_block_series.5} parent=11 // pred_fallthru
        _
    $region12: #{sparse_block_series.5} parent=5 // pred_fallthru
      _
    %p198 = scmp.lt.s32.totalorder %s11, 4
    // Predicated region
    $region21: #{sparse_block_series.5} parent=5 // pred_check
      %p199 = pneg %p198
    $region22: #{sparse_block_series.5} parent=5 // pred_check_branch
      %201 = sbr.rel (%p199) target = $region24
    $region23: #{sparse_block_series.5} parent=5 // pred_region
      // Predicated region
      $region25: #{sparse_block_series.5} parent=23 // pred_check
        %p202 = pneg %p45
      $region26: #{sparse_block_series.5} parent=23 // pred_check_branch
        %204 = sbr.rel (%p202) target = $region28
      $region27: #{sparse_block_series.5} parent=23 // pred_region
        %p205 = scmp.lt.s32.totalorder %s18, 1
        %s206 = scalar_select %p205, %s18, 1
        %p207 = scmp.lt.s32.totalorder %s19, 1
        %s208 = scalar_select %p207, %s19, 1
        %s209 = smul.addr %s208, 88
        %s210 = smul.addr %s206, 176
        %s211 = sadd.s32 %s209, %s210
        %s212 = smul.addr %s211, 4
        %s213 = scalar_lea.vmem %s0, %s212
      $region28: #{sparse_block_series.5} parent=23 // pred_fallthru
        _
      // Predicated region
      $region29: #{sparse_block_series.5} parent=23 // pred_check
        %p214 = pneg %p115
      $region30: #{sparse_block_series.5} parent=23 // pred_check_branch
        %216 = sbr.rel (%p214) target = $region32
      $region31: #{sparse_block_series.5} parent=23 // pred_region
        %p217 = scmp.lt.s32.totalorder %s18, 1
        %s218 = scalar_select %p217, %s18, 1
        %p219 = scmp.lt.s32.totalorder %s19, 1
        %s220 = scalar_select %p219, %s19, 1
        %s221 = smul.addr %s220, 7
        %s222 = smul.addr %s218, 14
        %s223 = sadd.s32 %s221, %s222
        %s224 = smul.addr %s223, 4
        %s225 = scalar_lea.vmem %s3, %s224
      $region32: #{sparse_block_series.5} parent=23 // pred_fallthru
        _
      // Predicated region
      $region33: #{sparse_block_series.5} parent=23 // pred_check
        %p226 = pneg %p143
      $region34: #{sparse_block_series.5} parent=23 // pred_check_branch
        %228 = sbr.rel (%p226) target = $region36
      $region35: #{sparse_block_series.5} parent=23 // pred_region
        %p229 = scmp.lt.s32.totalorder %s18, 1
        %s230 = scalar_select %p229, %s18, 1
        %p231 = scmp.lt.s32.totalorder %s19, 1
        %s232 = scalar_select %p231, %s19, 1
        %s233 = smul.addr %s232, 7
        %s234 = smul.addr %s230, 14
        %s235 = sadd.s32 %s233, %s234
        %s236 = smul.addr %s235, 4
        %s237 = scalar_lea.vmem %s4, %s236
      $region36: #{sparse_block_series.5} parent=23 // pred_fallthru
        _
    $region24: #{sparse_block_series.5} parent=5 // pred_fallthru
      _
    %p238 = scmp.le.s32.totalorder 1, %s11
    %p239 = scmp.lt.s32.totalorder %s11, 5
    %p240 = pnand %p238, %p239
    %p241 = pneg %p240
    // Predicated region
    $region37: #{sparse_block_series.5} parent=5 // pred_check
      _
    $region38: #{sparse_block_series.5} parent=5 // pred_check_branch
      %243 = sbr.rel (%p240) target = $region40
    $region39: #{sparse_block_series.5} parent=5 // pred_region
      %s244 = ssub.s32 %s11, 1
      %p245 = scmp.lt.s32.totalorder %s20, 1
      %s246 = scalar_select %p245, %s20, 1
      %p247 = scmp.lt.s32.totalorder %s21, 1
      %s248 = scalar_select %p247, %s21, 1
      %s249 = smul.addr %s248, 88
      %s250 = smul.addr %s246, 176
      %s251 = sadd.s32 %s249, %s250
      %s252 = smul.addr %s251, 4
      %s253 = scalar_lea.vmem %s0, %s252
      %p254 = pneg %p51
      %p255 = pneg %p48
      %p256 = pneg %p72
      %p257 = pneg %p69
      %p258 = pneg %p93
      %p259 = pneg %p90
      %p260 = scmp.lt.s32.totalorder %s20, 1
      %s261 = scalar_select %p260, %s20, 1
      %p262 = scmp.lt.s32.totalorder %s21, 1
      %s263 = scalar_select %p262, %s21, 1
      %s264 = smul.addr %s263, 7
      %s265 = smul.addr %s261, 14
      %s266 = sadd.s32 %s264, %s265
      %s267 = smul.addr %s266, 4
      %s268 = scalar_lea.vmem %s3, %s267
      %p269 = pneg %p121
      %p270 = pneg %p118
      %p271 = scmp.lt.s32.totalorder %s20, 1
      %s272 = scalar_select %p271, %s20, 1
      %p273 = scmp.lt.s32.totalorder %s21, 1
      %s274 = scalar_select %p273, %s21, 1
      %s275 = smul.addr %s274, 7
      %s276 = smul.addr %s272, 14
      %s277 = sadd.s32 %s275, %s276
      %s278 = smul.addr %s277, 4
      %s279 = scalar_lea.vmem %s4, %s278
      %p280 = pneg %p149
      %p281 = pneg %p146
      %p282 = pneg %p177
      %p283 = pneg %p174
      %p284 = scmp.lt.s32.totalorder %s20, 1
      %s285 = scalar_select %p284, %s20, 1
      %p286 = scmp.lt.s32.totalorder %s21, 1
      %s287 = scalar_select %p286, %s21, 1
      %s288 = smul.addr %s287, 7
      %s289 = smul.addr %s285, 14
      %s290 = sadd.s32 %s288, %s289
      %s291 = smul.addr %s290, 4
      %s292 = scalar_lea.vmem %s5, %s291
      %p293 = scmp.lt.s32.totalorder %s20, 1
      %s294 = scalar_select %p293, %s20, 1
      %p295 = scmp.lt.s32.totalorder %s21, 1
      %s296 = scalar_select %p295, %s21, 1
      %s297 = smul.addr %s296, 88
      %s298 = smul.addr %s294, 176
      %s299 = sadd.s32 %s297, %s298
      %s300 = smul.addr %s299, 4
      %s301 = scalar_lea.vmem %s0, %s300
      %p302 = scmp.lt.s32.totalorder %s20, 1
      %s303 = scalar_select %p302, %s20, 1
      %p304 = scmp.lt.s32.totalorder %s21, 1
      %s305 = scalar_select %p304, %s21, 1
      %s306 = smul.addr %s305, 7
      %s307 = smul.addr %s303, 14
      %s308 = sadd.s32 %s306, %s307
      %s309 = smul.addr %s308, 4
      %s310 = scalar_lea.vmem %s3, %s309
      %p311 = scmp.lt.s32.totalorder %s20, 1
      %s312 = scalar_select %p311, %s20, 1
      %p313 = scmp.lt.s32.totalorder %s21, 1
      %s314 = scalar_select %p313, %s21, 1
      %s315 = smul.addr %s314, 7
      %s316 = smul.addr %s312, 14
      %s317 = sadd.s32 %s315, %s316
      %s318 = smul.addr %s317, 4
      %s319 = scalar_lea.vmem %s4, %s318
      %p320 = scmp.lt.s32.totalorder %s20, 1
      %s321 = scalar_select %p320, %s20, 1
      %p322 = scmp.lt.s32.totalorder %s21, 1
      %s323 = scalar_select %p322, %s21, 1
      %s324 = smul.addr %s323, 7
      %s325 = smul.addr %s321, 14
      %s326 = sadd.s32 %s324, %s325
      %s327 = smul.addr %s326, 4
      %s328 = scalar_lea.vmem %s5, %s327
      %v330 = vld [vmem:[%s301] sm:$0xf]
      %v331 = vld [vmem:[%s301 + $0x4] sm:$0xf]
      %v332 = vld [vmem:[%s301 + $0x8] sm:$0xf]
      %v333 = vld [vmem:[%s301 + $0xc] sm:$0xf]
      %v334 = vld [vmem:[%s301 + $0x10] sm:$0xf]
      %v335 = vld [vmem:[%s301 + $0x14] sm:$0xf]
      %v336 = vld [vmem:[%s301 + $0x18] sm:$0xf]
      %v337 = vld [vmem:[%s301 + $0x1c] sm:$0xf]
      %v338 = vld [vmem:[%s301 + $0x20] sm:$0xf]
      %v339 = vld [vmem:[%s301 + $0x24] sm:$0xf]
      %v340 = vld [vmem:[%s301 + $0x28] sm:$0xf]
      %v341 = vld [vmem:[%s301 + $0x2c] sm:$0xf]
      %v342 = vld [vmem:[%s301 + $0x30] sm:$0xf]
      %v343 = vld [vmem:[%s301 + $0x34] sm:$0xf]
      %v344 = vld [vmem:[%s301 + $0x38] sm:$0xf]
      %v345 = vld [vmem:[%s301 + $0x3c] sm:$0xf]
      %v346 = vld [vmem:[%s301 + $0x40] sm:$0xf]
      %v347 = vld [vmem:[%s301 + $0x44] sm:$0xf]
      %v348 = vld [vmem:[%s301 + $0x48] sm:$0xf]
      %v349 = vld [vmem:[%s301 + $0x4c] sm:$0xf]
      %v350 = vld [vmem:[%s301 + $0x50] sm:$0xf]
      %v351 = vld [vmem:[%s301 + $0x54] sm:$0xf]
      %v352 = vld [vmem:[%s301 + $0x58] sm:$0xf]
      %v353 = vld [vmem:[%s301 + $0x5c] sm:$0xf]
      %v354 = vld [vmem:[%s301 + $0x60] sm:$0xf]
      %v355 = vld [vmem:[%s301 + $0x64] sm:$0xf]
      %v356 = vld [vmem:[%s301 + $0x68] sm:$0xf]
      %v357 = vld [vmem:[%s301 + $0x6c] sm:$0xf]
      %v358 = vld [vmem:[%s301 + $0x70] sm:$0xf]
      %v359 = vld [vmem:[%s301 + $0x74] sm:$0xf]
      %v360 = vld [vmem:[%s301 + $0x78] sm:$0xf]
      %v361 = vld [vmem:[%s301 + $0x7c] sm:$0xf]
      %v362 = vld [vmem:[%s301 + $0x80] sm:$0xf]
      %v363 = vld [vmem:[%s301 + $0x84] sm:$0xf]
      %v364 = vld [vmem:[%s301 + $0x88] sm:$0xf]
      %v365 = vld [vmem:[%s301 + $0x8c] sm:$0xf]
      %v366 = vld [vmem:[%s301 + $0x90] sm:$0xf]
      %v367 = vld [vmem:[%s301 + $0x94] sm:$0xf]
      %v368 = vld [vmem:[%s301 + $0x98] sm:$0xf]
      %v369 = vld [vmem:[%s301 + $0x9c] sm:$0xf]
      %v370 = vld [vmem:[%s301 + $0xa0] sm:$0xf]
      %v371 = vld [vmem:[%s301 + $0xa4] sm:$0xf]
      %v372 = vld [vmem:[%s301 + $0xa8] sm:$0xf]
      %v373 = vld [vmem:[%s301 + $0xac] sm:$0xf]
      %v374 = vld [vmem:[%s301 + $0xb0] sm:$0xf]
      %v375 = vld [vmem:[%s301 + $0xb4] sm:$0xf]
      %v376 = vld [vmem:[%s301 + $0xb8] sm:$0xf]
      %v377 = vld [vmem:[%s301 + $0xbc] sm:$0xf]
      %v378 = vld [vmem:[%s301 + $0xc0] sm:$0xf]
      %v379 = vld [vmem:[%s301 + $0xc4] sm:$0xf]
      %v380 = vld [vmem:[%s301 + $0xc8] sm:$0xf]
      %v381 = vld [vmem:[%s301 + $0xcc] sm:$0xf]
      %v382 = vld [vmem:[%s301 + $0xd0] sm:$0xf]
      %v383 = vld [vmem:[%s301 + $0xd4] sm:$0xf]
      %v384 = vld [vmem:[%s301 + $0xd8] sm:$0xf]
      %v385 = vld [vmem:[%s301 + $0xdc] sm:$0xf]
      %v386 = vld [vmem:[%s301 + $0xe0] sm:$0xf]
      %v387 = vld [vmem:[%s301 + $0xe4] sm:$0xf]
      %v388 = vld [vmem:[%s301 + $0xe8] sm:$0xf]
      %v389 = vld [vmem:[%s301 + $0xec] sm:$0xf]
      %v390 = vld [vmem:[%s301 + $0xf0] sm:$0xf]
      %v391 = vld [vmem:[%s301 + $0xf4] sm:$0xf]
      %v392 = vld [vmem:[%s301 + $0xf8] sm:$0xf]
      %v393 = vld [vmem:[%s301 + $0xfc] sm:$0xf]
      %v394 = vld [vmem:[%s301 + $0x100] sm:$0xf]
      %v395 = vld [vmem:[%s301 + $0x104] sm:$0xf]
      %v396 = vld [vmem:[%s301 + $0x108] sm:$0xf]
      %v397 = vld [vmem:[%s301 + $0x10c] sm:$0xf]
      %v398 = vld [vmem:[%s301 + $0x110] sm:$0xf]
      %v399 = vld [vmem:[%s301 + $0x114] sm:$0xf]
      %v400 = vld [vmem:[%s301 + $0x118] sm:$0xf]
      %v401 = vld [vmem:[%s301 + $0x11c] sm:$0xf]
      %v402 = vld [vmem:[%s301 + $0x120] sm:$0xf]
      %v403 = vld [vmem:[%s301 + $0x124] sm:$0xf]
      %v404 = vld [vmem:[%s301 + $0x128] sm:$0xf]
      %v405 = vld [vmem:[%s301 + $0x12c] sm:$0xf]
      %v406 = vld [vmem:[%s301 + $0x130] sm:$0xf]
      %v407 = vld [vmem:[%s301 + $0x134] sm:$0xf]
      %v458 = vunpack.c.l.b16 %v330
      %v459 = vunpack.c.l.b16 %v331
      %v460 = vunpack.c.l.b16 %v332
      %v461 = vunpack.c.l.b16 %v333
      %v462 = vunpack.c.l.b16 %v334
      %v463 = vunpack.c.l.b16 %v335
      %v464 = vunpack.c.l.b16 %v336
      %v465 = vunpack.c.l.b16 %v337
      %v466 = vunpack.c.l.b16 %v338
      %v467 = vunpack.c.l.b16 %v339
      %v468 = vunpack.c.l.b16 %v340
      %v469 = vunpack.c.l.b16 %v341
      %v470 = vunpack.c.l.b16 %v342
      %v471 = vunpack.c.l.b16 %v343
      %v472 = vunpack.c.l.b16 %v344
      %v473 = vunpack.c.l.b16 %v345
      %v474 = vunpack.c.l.b16 %v346
      %v475 = vunpack.c.l.b16 %v347
      %v476 = vunpack.c.l.b16 %v348
      %v477 = vunpack.c.l.b16 %v349
      %v478 = vunpack.c.l.b16 %v350
      %v479 = vunpack.c.l.b16 %v351
      %v480 = vunpack.c.l.b16 %v352
      %v481 = vunpack.c.l.b16 %v353
      %v482 = vunpack.c.l.b16 %v354
      %v483 = vunpack.c.l.b16 %v355
      %v484 = vunpack.c.l.b16 %v356
      %v485 = vunpack.c.l.b16 %v357
      %v486 = vunpack.c.l.b16 %v358
      %v487 = vunpack.c.l.b16 %v359
      %v488 = vunpack.c.l.b16 %v360
      %v489 = vunpack.c.l.b16 %v361
      %v490 = vunpack.c.l.b16 %v362
      %v491 = vunpack.c.l.b16 %v363
      %v492 = vunpack.c.l.b16 %v364
      %v493 = vunpack.c.l.b16 %v365
      %v494 = vunpack.c.l.b16 %v366
      %v495 = vunpack.c.l.b16 %v367
      %v496 = vunpack.c.l.b16 %v368
      %v497 = vunpack.c.l.b16 %v369
      %v498 = vunpack.c.l.b16 %v370
      %v499 = vunpack.c.l.b16 %v371
      %v500 = vunpack.c.l.b16 %v372
      %v501 = vunpack.c.l.b16 %v373
      %v502 = vunpack.c.l.b16 %v374
      %v503 = vunpack.c.l.b16 %v375
      %v504 = vunpack.c.l.b16 %v376
      %v505 = vunpack.c.l.b16 %v377
      %v506 = vunpack.c.l.b16 %v378
      %v507 = vunpack.c.l.b16 %v379
      %v508 = vpack.c.b16 %v459, %v458
      %v509 = vpack.c.b16 %v461, %v460
      %v510 = vpack.c.b16 %v463, %v462
      %v511 = vpack.c.b16 %v465, %v464
      %v512 = vpack.c.b16 %v467, %v466
      %v513 = vpack.c.b16 %v469, %v468
      %v514 = vpack.c.b16 %v471, %v470
      %v515 = vpack.c.b16 %v473, %v472
      %v516 = vpack.c.b16 %v475, %v474
      %v517 = vpack.c.b16 %v477, %v476
      %v518 = vpack.c.b16 %v479, %v478
      %v519 = vpack.c.b16 %v481, %v480
      %v520 = vpack.c.b16 %v483, %v482
      %v521 = vpack.c.b16 %v485, %v484
      %v522 = vpack.c.b16 %v487, %v486
      %v523 = vpack.c.b16 %v489, %v488
      %v524 = vpack.c.b16 %v491, %v490
      %v525 = vpack.c.b16 %v493, %v492
      %v526 = vpack.c.b16 %v495, %v494
      %v527 = vpack.c.b16 %v497, %v496
      %v528 = vpack.c.b16 %v499, %v498
      %v529 = vpack.c.b16 %v501, %v500
      %v530 = vpack.c.b16 %v503, %v502
      %v531 = vpack.c.b16 %v505, %v504
      %v532 = vpack.c.b16 %v507, %v506
      %v534 = vunpack.c.l.b16 %v380
      %v535 = vpack.c.b16 %v534, %v534
      %vm536 = vsmask.f32 7424
      %v538 = vshrl.u32 %v508, 16
      %v540 = vshll.u32 %v508, 16
      %v542 = vrot.slane %v540, 1
      %v543 = vor.u32 %v538, %v542
      %v545 = vshll.u32 %v509, 16
      %v547 = vrot.slane %v545, 1
      %v548 = vsel %vm536, %v543, %v547
      %v549 = vshrl.u32 %v509, 16
      %v551 = vor.u32 %v549, %v547
      %v553 = vshll.u32 %v510, 16
      %v555 = vrot.slane %v553, 1
      %v556 = vsel %vm536, %v551, %v555
      %v557 = vshrl.u32 %v510, 16
      %v559 = vor.u32 %v557, %v555
      %v561 = vshll.u32 %v511, 16
      %v563 = vrot.slane %v561, 1
      %v564 = vsel %vm536, %v559, %v563
      %v565 = vshrl.u32 %v511, 16
      %v567 = vor.u32 %v565, %v563
      %v569 = vshll.u32 %v512, 16
      %v571 = vrot.slane %v569, 1
      %v572 = vsel %vm536, %v567, %v571
      %v573 = vshrl.u32 %v512, 16
      %v575 = vor.u32 %v573, %v571
      %v577 = vshll.u32 %v513, 16
      %v579 = vrot.slane %v577, 1
      %v580 = vsel %vm536, %v575, %v579
      %v581 = vshrl.u32 %v513, 16
      %v583 = vor.u32 %v581, %v579
      %v585 = vshll.u32 %v514, 16
      %v587 = vrot.slane %v585, 1
      %v588 = vsel %vm536, %v583, %v587
      %v589 = vshrl.u32 %v514, 16
      %v591 = vor.u32 %v589, %v587
      %v593 = vshll.u32 %v515, 16
      %v595 = vrot.slane %v593, 1
      %v596 = vsel %vm536, %v591, %v595
      %v597 = vshrl.u32 %v515, 16
      %v599 = vor.u32 %v597, %v595
      %v601 = vshll.u32 %v516, 16
      %v603 = vrot.slane %v601, 1
      %v604 = vsel %vm536, %v599, %v603
      %v605 = vshrl.u32 %v516, 16
      %v607 = vor.u32 %v605, %v603
      %v609 = vshll.u32 %v517, 16
      %v611 = vrot.slane %v609, 1
      %v612 = vsel %vm536, %v607, %v611
      %v613 = vshrl.u32 %v517, 16
      %v615 = vor.u32 %v613, %v611
      %v617 = vshll.u32 %v518, 16
      %v619 = vrot.slane %v617, 1
      %v620 = vsel %vm536, %v615, %v619
      %v621 = vshrl.u32 %v518, 16
      %v623 = vor.u32 %v621, %v619
      %v625 = vshll.u32 %v519, 16
      %v627 = vrot.slane %v625, 1
      %v628 = vsel %vm536, %v623, %v627
      %v629 = vshrl.u32 %v519, 16
      %v631 = vor.u32 %v629, %v627
      %v633 = vshll.u32 %v520, 16
      %v635 = vrot.slane %v633, 1
      %v636 = vsel %vm536, %v631, %v635
      %v637 = vshrl.u32 %v520, 16
      %v639 = vor.u32 %v637, %v635
      %v641 = vshll.u32 %v521, 16
      %v643 = vrot.slane %v641, 1
      %v644 = vsel %vm536, %v639, %v643
      %v645 = vshrl.u32 %v521, 16
      %v647 = vor.u32 %v645, %v643
      %v649 = vshll.u32 %v522, 16
      %v651 = vrot.slane %v649, 1
      %v652 = vsel %vm536, %v647, %v651
      %v653 = vshrl.u32 %v522, 16
      %v655 = vor.u32 %v653, %v651
      %v657 = vshll.u32 %v523, 16
      %v659 = vrot.slane %v657, 1
      %v660 = vsel %vm536, %v655, %v659
      %v661 = vshrl.u32 %v523, 16
      %v663 = vor.u32 %v661, %v659
      %v665 = vshll.u32 %v524, 16
      %v667 = vrot.slane %v665, 1
      %v668 = vsel %vm536, %v663, %v667
      %v669 = vshrl.u32 %v524, 16
      %v671 = vor.u32 %v669, %v667
      %v673 = vshll.u32 %v525, 16
      %v675 = vrot.slane %v673, 1
      %v676 = vsel %vm536, %v671, %v675
      %v677 = vshrl.u32 %v525, 16
      %v679 = vor.u32 %v677, %v675
      %v681 = vshll.u32 %v526, 16
      %v683 = vrot.slane %v681, 1
      %v684 = vsel %vm536, %v679, %v683
      %v685 = vshrl.u32 %v526, 16
      %v687 = vor.u32 %v685, %v683
      %v689 = vshll.u32 %v527, 16
      %v691 = vrot.slane %v689, 1
      %v692 = vsel %vm536, %v687, %v691
      %v693 = vshrl.u32 %v527, 16
      %v695 = vor.u32 %v693, %v691
      %v697 = vshll.u32 %v528, 16
      %v699 = vrot.slane %v697, 1
      %v700 = vsel %vm536, %v695, %v699
      %v701 = vshrl.u32 %v528, 16
      %v703 = vor.u32 %v701, %v699
      %v705 = vshll.u32 %v529, 16
      %v707 = vrot.slane %v705, 1
      %v708 = vsel %vm536, %v703, %v707
      %v709 = vshrl.u32 %v529, 16
      %v711 = vor.u32 %v709, %v707
      %v713 = vshll.u32 %v530, 16
      %v715 = vrot.slane %v713, 1
      %v716 = vsel %vm536, %v711, %v715
      %v717 = vshrl.u32 %v530, 16
      %v719 = vor.u32 %v717, %v715
      %v721 = vshll.u32 %v531, 16
      %v723 = vrot.slane %v721, 1
      %v724 = vsel %vm536, %v719, %v723
      %v725 = vshrl.u32 %v531, 16
      %v727 = vor.u32 %v725, %v723
      %v729 = vshll.u32 %v532, 16
      %v731 = vrot.slane %v729, 1
      %v732 = vsel %vm536, %v727, %v731
      %v733 = vshrl.u32 %v532, 16
      %v735 = vor.u32 %v733, %v731
      %v737 = vshll.u32 %v535, 16
      %v739 = vrot.slane %v737, 1
      %v740 = vsel %vm536, %v735, %v739
      %741 = vrot.lane.b32.xlu0 %v548, 16
      %v742 = vpop.permute.xlu0 %741
      %743 = vrot.lane.b32.xlu0 %v556, 16
      %v744 = vpop.permute.xlu0 %743
      %745 = vrot.lane.b32.xlu0 %v564, 16
      %v746 = vpop.permute.xlu0 %745
      %747 = vrot.lane.b32.xlu0 %v572, 16
      %v748 = vpop.permute.xlu0 %747
      %749 = vrot.lane.b32.xlu0 %v580, 16
      %v750 = vpop.permute.xlu0 %749
      %751 = vrot.lane.b32.xlu0 %v588, 16
      %v752 = vpop.permute.xlu0 %751
      %753 = vrot.lane.b32.xlu0 %v596, 16
      %v754 = vpop.permute.xlu0 %753
      %755 = vrot.lane.b32.xlu0 %v604, 16
      %v756 = vpop.permute.xlu0 %755
      %757 = vrot.lane.b32.xlu0 %v612, 16
      %v758 = vpop.permute.xlu0 %757
      %759 = vrot.lane.b32.xlu0 %v620, 16
      %v760 = vpop.permute.xlu0 %759
      %761 = vrot.lane.b32.xlu0 %v628, 16
      %v762 = vpop.permute.xlu0 %761
      %763 = vrot.lane.b32.xlu0 %v636, 16
      %v764 = vpop.permute.xlu0 %763
      %765 = vrot.lane.b32.xlu0 %v644, 16
      %v766 = vpop.permute.xlu0 %765
      %767 = vrot.lane.b32.xlu0 %v652, 16
      %v768 = vpop.permute.xlu0 %767
      %769 = vrot.lane.b32.xlu0 %v660, 16
      %v770 = vpop.permute.xlu0 %769
      %771 = vrot.lane.b32.xlu0 %v668, 16
      %v772 = vpop.permute.xlu0 %771
      %773 = vrot.lane.b32.xlu0 %v676, 16
      %v774 = vpop.permute.xlu0 %773
      %775 = vrot.lane.b32.xlu0 %v684, 16
      %v776 = vpop.permute.xlu0 %775
      %777 = vrot.lane.b32.xlu0 %v692, 16
      %v778 = vpop.permute.xlu0 %777
      %779 = vrot.lane.b32.xlu0 %v700, 16
      %v780 = vpop.permute.xlu0 %779
      %781 = vrot.lane.b32.xlu0 %v708, 16
      %v782 = vpop.permute.xlu0 %781
      %783 = vrot.lane.b32.xlu0 %v716, 16
      %v784 = vpop.permute.xlu0 %783
      %785 = vrot.lane.b32.xlu0 %v724, 16
      %v786 = vpop.permute.xlu0 %785
      %787 = vrot.lane.b32.xlu0 %v732, 16
      %v788 = vpop.permute.xlu0 %787
      %789 = vrot.lane.b32.xlu0 %v740, 16
      %v790 = vpop.permute.xlu0 %789
      %vm791 = vcmask 1046528
      %v792 = vrot.slane %v508, 1
      %v793 = vrot.slane %v509, 1
      %v794 = vsel %vm791, %v792, %v793
      %v795 = vrot.slane %v510, 1
      %v796 = vsel %vm791, %v793, %v795
      %v797 = vrot.slane %v511, 1
      %v798 = vsel %vm791, %v795, %v797
      %v799 = vrot.slane %v512, 1
      %v800 = vsel %vm791, %v797, %v799
      %v801 = vrot.slane %v513, 1
      %v802 = vsel %vm791, %v799, %v801
      %v803 = vrot.slane %v514, 1
      %v804 = vsel %vm791, %v801, %v803
      %v805 = vrot.slane %v515, 1
      %v806 = vsel %vm791, %v803, %v805
      %v807 = vrot.slane %v516, 1
      %v808 = vsel %vm791, %v805, %v807
      %v809 = vrot.slane %v517, 1
      %v810 = vsel %vm791, %v807, %v809
      %v811 = vrot.slane %v518, 1
      %v812 = vsel %vm791, %v809, %v811
      %v813 = vrot.slane %v519, 1
      %v814 = vsel %vm791, %v811, %v813
      %v815 = vrot.slane %v520, 1
      %v816 = vsel %vm791, %v813, %v815
      %v817 = vrot.slane %v521, 1
      %v818 = vsel %vm791, %v815, %v817
      %v819 = vrot.slane %v522, 1
      %v820 = vsel %vm791, %v817, %v819
      %v821 = vrot.slane %v523, 1
      %v822 = vsel %vm791, %v819, %v821
      %v823 = vrot.slane %v524, 1
      %v824 = vsel %vm791, %v821, %v823
      %v825 = vrot.slane %v525, 1
      %v826 = vsel %vm791, %v823, %v825
      %v827 = vrot.slane %v526, 1
      %v828 = vsel %vm791, %v825, %v827
      %v829 = vrot.slane %v527, 1
      %v830 = vsel %vm791, %v827, %v829
      %v831 = vrot.slane %v528, 1
      %v832 = vsel %vm791, %v829, %v831
      %v833 = vrot.slane %v529, 1
      %v834 = vsel %vm791, %v831, %v833
      %v835 = vrot.slane %v530, 1
      %v836 = vsel %vm791, %v833, %v835
      %v837 = vrot.slane %v531, 1
      %v838 = vsel %vm791, %v835, %v837
      %v839 = vrot.slane %v532, 1
      %v840 = vsel %vm791, %v837, %v839
      %v841 = vrot.slane %v535, 1
      %v842 = vsel %vm791, %v839, %v841
      %843 = vrot.lane.b32.xlu0 %v794, 32
      %v844 = vpop.permute.xlu0 %843
      %845 = vrot.lane.b32.xlu0 %v796, 32
      %v846 = vpop.permute.xlu0 %845
      %847 = vrot.lane.b32.xlu0 %v798, 32
      %v848 = vpop.permute.xlu0 %847
      %849 = vrot.lane.b32.xlu0 %v800, 32
      %v850 = vpop.permute.xlu0 %849
      %851 = vrot.lane.b32.xlu0 %v802, 32
      %v852 = vpop.permute.xlu0 %851
      %853 = vrot.lane.b32.xlu0 %v804, 32
      %v854 = vpop.permute.xlu0 %853
      %855 = vrot.lane.b32.xlu0 %v806, 32
      %v856 = vpop.permute.xlu0 %855
      %857 = vrot.lane.b32.xlu0 %v808, 32
      %v858 = vpop.permute.xlu0 %857
      %859 = vrot.lane.b32.xlu0 %v810, 32
      %v860 = vpop.permute.xlu0 %859
      %861 = vrot.lane.b32.xlu0 %v812, 32
      %v862 = vpop.permute.xlu0 %861
      %863 = vrot.lane.b32.xlu0 %v814, 32
      %v864 = vpop.permute.xlu0 %863
      %865 = vrot.lane.b32.xlu0 %v816, 32
      %v866 = vpop.permute.xlu0 %865
      %867 = vrot.lane.b32.xlu0 %v818, 32
      %v868 = vpop.permute.xlu0 %867
      %869 = vrot.lane.b32.xlu0 %v820, 32
      %v870 = vpop.permute.xlu0 %869
      %871 = vrot.lane.b32.xlu0 %v822, 32
      %v872 = vpop.permute.xlu0 %871
      %873 = vrot.lane.b32.xlu0 %v824, 32
      %v874 = vpop.permute.xlu0 %873
      %875 = vrot.lane.b32.xlu0 %v826, 32
      %v876 = vpop.permute.xlu0 %875
      %877 = vrot.lane.b32.xlu0 %v828, 32
      %v878 = vpop.permute.xlu0 %877
      %879 = vrot.lane.b32.xlu0 %v830, 32
      %v880 = vpop.permute.xlu0 %879
      %881 = vrot.lane.b32.xlu0 %v832, 32
      %v882 = vpop.permute.xlu0 %881
      %883 = vrot.lane.b32.xlu0 %v834, 32
      %v884 = vpop.permute.xlu0 %883
      %885 = vrot.lane.b32.xlu0 %v836, 32
      %v886 = vpop.permute.xlu0 %885
      %887 = vrot.lane.b32.xlu0 %v838, 32
      %v888 = vpop.permute.xlu0 %887
      %889 = vrot.lane.b32.xlu0 %v840, 32
      %v890 = vpop.permute.xlu0 %889
      %891 = vrot.lane.b32.xlu0 %v842, 32
      %v892 = vpop.permute.xlu0 %891
      %v894 = vunpack.c.l.b16 %v381
      %v895 = vpack.c.b16 %v460, %v459
      %v896 = vpack.c.b16 %v462, %v461
      %v897 = vpack.c.b16 %v464, %v463
      %v898 = vpack.c.b16 %v466, %v465
      %v899 = vpack.c.b16 %v468, %v467
      %v900 = vpack.c.b16 %v470, %v469
      %v901 = vpack.c.b16 %v472, %v471
      %v902 = vpack.c.b16 %v474, %v473
      %v903 = vpack.c.b16 %v476, %v475
      %v904 = vpack.c.b16 %v478, %v477
      %v905 = vpack.c.b16 %v480, %v479
      %v906 = vpack.c.b16 %v482, %v481
      %v907 = vpack.c.b16 %v484, %v483
      %v908 = vpack.c.b16 %v486, %v485
      %v909 = vpack.c.b16 %v488, %v487
      %v910 = vpack.c.b16 %v490, %v489
      %v911 = vpack.c.b16 %v492, %v491
      %v912 = vpack.c.b16 %v494, %v493
      %v913 = vpack.c.b16 %v496, %v495
      %v914 = vpack.c.b16 %v498, %v497
      %v915 = vpack.c.b16 %v500, %v499
      %v916 = vpack.c.b16 %v502, %v501
      %v917 = vpack.c.b16 %v504, %v503
      %v918 = vpack.c.b16 %v506, %v505
      %v919 = vpack.c.b16 %v534, %v507
      %v920 = vpack.c.b16 %v894, %v894
      %v921 = vrot.slane %v895, 1
      %v922 = vrot.slane %v896, 1
      %v923 = vsel %vm791, %v921, %v922
      %v924 = vrot.slane %v897, 1
      %v925 = vsel %vm791, %v922, %v924
      %v926 = vrot.slane %v898, 1
      %v927 = vsel %vm791, %v924, %v926
      %v928 = vrot.slane %v899, 1
      %v929 = vsel %vm791, %v926, %v928
      %v930 = vrot.slane %v900, 1
      %v931 = vsel %vm791, %v928, %v930
      %v932 = vrot.slane %v901, 1
      %v933 = vsel %vm791, %v930, %v932
      %v934 = vrot.slane %v902, 1
      %v935 = vsel %vm791, %v932, %v934
      %v936 = vrot.slane %v903, 1
      %v937 = vsel %vm791, %v934, %v936
      %v938 = vrot.slane %v904, 1
      %v939 = vsel %vm791, %v936, %v938
      %v940 = vrot.slane %v905, 1
      %v941 = vsel %vm791, %v938, %v940
      %v942 = vrot.slane %v906, 1
      %v943 = vsel %vm791, %v940, %v942
      %v944 = vrot.slane %v907, 1
      %v945 = vsel %vm791, %v942, %v944
      %v946 = vrot.slane %v908, 1
      %v947 = vsel %vm791, %v944, %v946
      %v948 = vrot.slane %v909, 1
      %v949 = vsel %vm791, %v946, %v948
      %v950 = vrot.slane %v910, 1
      %v951 = vsel %vm791, %v948, %v950
      %v952 = vrot.slane %v911, 1
      %v953 = vsel %vm791, %v950, %v952
      %v954 = vrot.slane %v912, 1
      %v955 = vsel %vm791, %v952, %v954
      %v956 = vrot.slane %v913, 1
      %v957 = vsel %vm791, %v954, %v956
      %v958 = vrot.slane %v914, 1
      %v959 = vsel %vm791, %v956, %v958
      %v960 = vrot.slane %v915, 1
      %v961 = vsel %vm791, %v958, %v960
      %v962 = vrot.slane %v916, 1
      %v963 = vsel %vm791, %v960, %v962
      %v964 = vrot.slane %v917, 1
      %v965 = vsel %vm791, %v962, %v964
      %v966 = vrot.slane %v918, 1
      %v967 = vsel %vm791, %v964, %v966
      %v968 = vrot.slane %v919, 1
      %v969 = vsel %vm791, %v966, %v968
      %v970 = vrot.slane %v920, 1
      %v971 = vsel %vm791, %v968, %v970
      %972 = vrot.lane.b32.xlu0 %v923, 48
      %v973 = vpop.permute.xlu0 %972
      %974 = vrot.lane.b32.xlu0 %v925, 48
      %v975 = vpop.permute.xlu0 %974
      %976 = vrot.lane.b32.xlu0 %v927, 48
      %v977 = vpop.permute.xlu0 %976
      %978 = vrot.lane.b32.xlu0 %v929, 48
      %v979 = vpop.permute.xlu0 %978
      %980 = vrot.lane.b32.xlu0 %v931, 48
      %v981 = vpop.permute.xlu0 %980
      %982 = vrot.lane.b32.xlu0 %v933, 48
      %v983 = vpop.permute.xlu0 %982
      %984 = vrot.lane.b32.xlu0 %v935, 48
      %v985 = vpop.permute.xlu0 %984
      %986 = vrot.lane.b32.xlu0 %v937, 48
      %v987 = vpop.permute.xlu0 %986
      %988 = vrot.lane.b32.xlu0 %v939, 48
      %v989 = vpop.permute.xlu0 %988
      %990 = vrot.lane.b32.xlu0 %v941, 48
      %v991 = vpop.permute.xlu0 %990
      %992 = vrot.lane.b32.xlu0 %v943, 48
      %v993 = vpop.permute.xlu0 %992
      %994 = vrot.lane.b32.xlu0 %v945, 48
      %v995 = vpop.permute.xlu0 %994
      %996 = vrot.lane.b32.xlu0 %v947, 48
      %v997 = vpop.permute.xlu0 %996
      %998 = vrot.lane.b32.xlu0 %v949, 48
      %v999 = vpop.permute.xlu0 %998
      %1000 = vrot.lane.b32.xlu0 %v951, 48
      %v1001 = vpop.permute.xlu0 %1000
      %1002 = vrot.lane.b32.xlu0 %v953, 48
      %v1003 = vpop.permute.xlu0 %1002
      %1004 = vrot.lane.b32.xlu0 %v955, 48
      %v1005 = vpop.permute.xlu0 %1004
      %1006 = vrot.lane.b32.xlu0 %v957, 48
      %v1007 = vpop.permute.xlu0 %1006
      %1008 = vrot.lane.b32.xlu0 %v959, 48
      %v1009 = vpop.permute.xlu0 %1008
      %1010 = vrot.lane.b32.xlu0 %v961, 48
      %v1011 = vpop.permute.xlu0 %1010
      %1012 = vrot.lane.b32.xlu0 %v963, 48
      %v1013 = vpop.permute.xlu0 %1012
      %1014 = vrot.lane.b32.xlu0 %v965, 48
      %v1015 = vpop.permute.xlu0 %1014
      %1016 = vrot.lane.b32.xlu0 %v967, 48
      %v1017 = vpop.permute.xlu0 %1016
      %1018 = vrot.lane.b32.xlu0 %v969, 48
      %v1019 = vpop.permute.xlu0 %1018
      %1020 = vrot.lane.b32.xlu0 %v971, 48
      %v1021 = vpop.permute.xlu0 %1020
      %vm1022 = vsmask.f32 6400
      %v1024 = vshrl.u32 %v895, 16
      %v1026 = vrot.slane %v1024, 1
      %v1027 = vshll.u32 %v895, 16
      %v1029 = vrot.slane %v1027, 2
      %v1030 = vor.u32 %v1026, %v1029
      %v1032 = vshrl.u32 %v896, 16
      %v1034 = vrot.slane %v1032, 1
      %v1035 = vshll.u32 %v896, 16
      %v1037 = vrot.slane %v1035, 2
      %v1038 = vor.u32 %v1034, %v1037
      %v1039 = vsel %vm1022, %v1030, %v1038
      %v1041 = vshrl.u32 %v897, 16
      %v1043 = vrot.slane %v1041, 1
      %v1044 = vshll.u32 %v897, 16
      %v1046 = vrot.slane %v1044, 2
      %v1047 = vor.u32 %v1043, %v1046
      %v1048 = vsel %vm1022, %v1038, %v1047
      %v1050 = vshrl.u32 %v898, 16
      %v1052 = vrot.slane %v1050, 1
      %v1053 = vshll.u32 %v898, 16
      %v1055 = vrot.slane %v1053, 2
      %v1056 = vor.u32 %v1052, %v1055
      %v1057 = vsel %vm1022, %v1047, %v1056
      %v1059 = vshrl.u32 %v899, 16
      %v1061 = vrot.slane %v1059, 1
      %v1062 = vshll.u32 %v899, 16
      %v1064 = vrot.slane %v1062, 2
      %v1065 = vor.u32 %v1061, %v1064
      %v1066 = vsel %vm1022, %v1056, %v1065
      %v1068 = vshrl.u32 %v900, 16
      %v1070 = vrot.slane %v1068, 1
      %v1071 = vshll.u32 %v900, 16
      %v1073 = vrot.slane %v1071, 2
      %v1074 = vor.u32 %v1070, %v1073
      %v1075 = vsel %vm1022, %v1065, %v1074
      %v1077 = vshrl.u32 %v901, 16
      %v1079 = vrot.slane %v1077, 1
      %v1080 = vshll.u32 %v901, 16
      %v1082 = vrot.slane %v1080, 2
      %v1083 = vor.u32 %v1079, %v1082
      %v1084 = vsel %vm1022, %v1074, %v1083
      %v1086 = vshrl.u32 %v902, 16
      %v1088 = vrot.slane %v1086, 1
      %v1089 = vshll.u32 %v902, 16
      %v1091 = vrot.slane %v1089, 2
      %v1092 = vor.u32 %v1088, %v1091
      %v1093 = vsel %vm1022, %v1083, %v1092
      %v1095 = vshrl.u32 %v903, 16
      %v1097 = vrot.slane %v1095, 1
      %v1098 = vshll.u32 %v903, 16
      %v1100 = vrot.slane %v1098, 2
      %v1101 = vor.u32 %v1097, %v1100
      %v1102 = vsel %vm1022, %v1092, %v1101
      %v1104 = vshrl.u32 %v904, 16
      %v1106 = vrot.slane %v1104, 1
      %v1107 = vshll.u32 %v904, 16
      %v1109 = vrot.slane %v1107, 2
      %v1110 = vor.u32 %v1106, %v1109
      %v1111 = vsel %vm1022, %v1101, %v1110
      %v1113 = vshrl.u32 %v905, 16
      %v1115 = vrot.slane %v1113, 1
      %v1116 = vshll.u32 %v905, 16
      %v1118 = vrot.slane %v1116, 2
      %v1119 = vor.u32 %v1115, %v1118
      %v1120 = vsel %vm1022, %v1110, %v1119
      %v1122 = vshrl.u32 %v906, 16
      %v1124 = vrot.slane %v1122, 1
      %v1125 = vshll.u32 %v906, 16
      %v1127 = vrot.slane %v1125, 2
      %v1128 = vor.u32 %v1124, %v1127
      %v1129 = vsel %vm1022, %v1119, %v1128
      %v1131 = vshrl.u32 %v907, 16
      %v1133 = vrot.slane %v1131, 1
      %v1134 = vshll.u32 %v907, 16
      %v1136 = vrot.slane %v1134, 2
      %v1137 = vor.u32 %v1133, %v1136
      %v1138 = vsel %vm1022, %v1128, %v1137
      %v1140 = vshrl.u32 %v908, 16
      %v1142 = vrot.slane %v1140, 1
      %v1143 = vshll.u32 %v908, 16
      %v1145 = vrot.slane %v1143, 2
      %v1146 = vor.u32 %v1142, %v1145
      %v1147 = vsel %vm1022, %v1137, %v1146
      %v1149 = vshrl.u32 %v909, 16
      %v1151 = vrot.slane %v1149, 1
      %v1152 = vshll.u32 %v909, 16
      %v1154 = vrot.slane %v1152, 2
      %v1155 = vor.u32 %v1151, %v1154
      %v1156 = vsel %vm1022, %v1146, %v1155
      %v1158 = vshrl.u32 %v910, 16
      %v1160 = vrot.slane %v1158, 1
      %v1161 = vshll.u32 %v910, 16
      %v1163 = vrot.slane %v1161, 2
      %v1164 = vor.u32 %v1160, %v1163
      %v1165 = vsel %vm1022, %v1155, %v1164
      %v1167 = vshrl.u32 %v911, 16
      %v1169 = vrot.slane %v1167, 1
      %v1170 = vshll.u32 %v911, 16
      %v1172 = vrot.slane %v1170, 2
      %v1173 = vor.u32 %v1169, %v1172
      %v1174 = vsel %vm1022, %v1164, %v1173
      %v1176 = vshrl.u32 %v912, 16
      %v1178 = vrot.slane %v1176, 1
      %v1179 = vshll.u32 %v912, 16
      %v1181 = vrot.slane %v1179, 2
      %v1182 = vor.u32 %v1178, %v1181
      %v1183 = vsel %vm1022, %v1173, %v1182
      %v1185 = vshrl.u32 %v913, 16
      %v1187 = vrot.slane %v1185, 1
      %v1188 = vshll.u32 %v913, 16
      %v1190 = vrot.slane %v1188, 2
      %v1191 = vor.u32 %v1187, %v1190
      %v1192 = vsel %vm1022, %v1182, %v1191
      %v1194 = vshrl.u32 %v914, 16
      %v1196 = vrot.slane %v1194, 1
      %v1197 = vshll.u32 %v914, 16
      %v1199 = vrot.slane %v1197, 2
      %v1200 = vor.u32 %v1196, %v1199
      %v1201 = vsel %vm1022, %v1191, %v1200
      %v1203 = vshrl.u32 %v915, 16
      %v1205 = vrot.slane %v1203, 1
      %v1206 = vshll.u32 %v915, 16
      %v1208 = vrot.slane %v1206, 2
      %v1209 = vor.u32 %v1205, %v1208
      %v1210 = vsel %vm1022, %v1200, %v1209
      %v1212 = vshrl.u32 %v916, 16
      %v1214 = vrot.slane %v1212, 1
      %v1215 = vshll.u32 %v916, 16
      %v1217 = vrot.slane %v1215, 2
      %v1218 = vor.u32 %v1214, %v1217
      %v1219 = vsel %vm1022, %v1209, %v1218
      %v1221 = vshrl.u32 %v917, 16
      %v1223 = vrot.slane %v1221, 1
      %v1224 = vshll.u32 %v917, 16
      %v1226 = vrot.slane %v1224, 2
      %v1227 = vor.u32 %v1223, %v1226
      %v1228 = vsel %vm1022, %v1218, %v1227
      %v1230 = vshrl.u32 %v918, 16
      %v1232 = vrot.slane %v1230, 1
      %v1233 = vshll.u32 %v918, 16
      %v1235 = vrot.slane %v1233, 2
      %v1236 = vor.u32 %v1232, %v1235
      %v1237 = vsel %vm1022, %v1227, %v1236
      %v1239 = vshrl.u32 %v919, 16
      %v1241 = vrot.slane %v1239, 1
      %v1242 = vshll.u32 %v919, 16
      %v1244 = vrot.slane %v1242, 2
      %v1245 = vor.u32 %v1241, %v1244
      %v1246 = vsel %vm1022, %v1236, %v1245
      %v1248 = vshrl.u32 %v920, 16
      %v1250 = vrot.slane %v1248, 1
      %v1251 = vshll.u32 %v920, 16
      %v1253 = vrot.slane %v1251, 2
      %v1254 = vor.u32 %v1250, %v1253
      %v1255 = vsel %vm1022, %v1245, %v1254
      %1256 = vrot.lane.b32.xlu0 %v1039, 64
      %v1257 = vpop.permute.xlu0 %1256
      %1258 = vrot.lane.b32.xlu0 %v1048, 64
      %v1259 = vpop.permute.xlu0 %1258
      %1260 = vrot.lane.b32.xlu0 %v1057, 64
      %v1261 = vpop.permute.xlu0 %1260
      %1262 = vrot.lane.b32.xlu0 %v1066, 64
      %v1263 = vpop.permute.xlu0 %1262
      %1264 = vrot.lane.b32.xlu0 %v1075, 64
      %v1265 = vpop.permute.xlu0 %1264
      %1266 = vrot.lane.b32.xlu0 %v1084, 64
      %v1267 = vpop.permute.xlu0 %1266
      %1268 = vrot.lane.b32.xlu0 %v1093, 64
      %v1269 = vpop.permute.xlu0 %1268
      %1270 = vrot.lane.b32.xlu0 %v1102, 64
      %v1271 = vpop.permute.xlu0 %1270
      %1272 = vrot.lane.b32.xlu0 %v1111, 64
      %v1273 = vpop.permute.xlu0 %1272
      %1274 = vrot.lane.b32.xlu0 %v1120, 64
      %v1275 = vpop.permute.xlu0 %1274
      %1276 = vrot.lane.b32.xlu0 %v1129, 64
      %v1277 = vpop.permute.xlu0 %1276
      %1278 = vrot.lane.b32.xlu0 %v1138, 64
      %v1279 = vpop.permute.xlu0 %1278
      %1280 = vrot.lane.b32.xlu0 %v1147, 64
      %v1281 = vpop.permute.xlu0 %1280
      %1282 = vrot.lane.b32.xlu0 %v1156, 64
      %v1283 = vpop.permute.xlu0 %1282
      %1284 = vrot.lane.b32.xlu0 %v1165, 64
      %v1285 = vpop.permute.xlu0 %1284
      %1286 = vrot.lane.b32.xlu0 %v1174, 64
      %v1287 = vpop.permute.xlu0 %1286
      %1288 = vrot.lane.b32.xlu0 %v1183, 64
      %v1289 = vpop.permute.xlu0 %1288
      %1290 = vrot.lane.b32.xlu0 %v1192, 64
      %v1291 = vpop.permute.xlu0 %1290
      %1292 = vrot.lane.b32.xlu0 %v1201, 64
      %v1293 = vpop.permute.xlu0 %1292
      %1294 = vrot.lane.b32.xlu0 %v1210, 64
      %v1295 = vpop.permute.xlu0 %1294
      %1296 = vrot.lane.b32.xlu0 %v1219, 64
      %v1297 = vpop.permute.xlu0 %1296
      %1298 = vrot.lane.b32.xlu0 %v1228, 64
      %v1299 = vpop.permute.xlu0 %1298
      %1300 = vrot.lane.b32.xlu0 %v1237, 64
      %v1301 = vpop.permute.xlu0 %1300
      %1302 = vrot.lane.b32.xlu0 %v1246, 64
      %v1303 = vpop.permute.xlu0 %1302
      %1304 = vrot.lane.b32.xlu0 %v1255, 64
      %v1305 = vpop.permute.xlu0 %1304
      %vm1306 = vcmask 1045504
      %v1307 = vrot.slane %v895, 2
      %v1308 = vrot.slane %v896, 2
      %v1309 = vsel %vm1306, %v1307, %v1308
      %v1310 = vrot.slane %v897, 2
      %v1311 = vsel %vm1306, %v1308, %v1310
      %v1312 = vrot.slane %v898, 2
      %v1313 = vsel %vm1306, %v1310, %v1312
      %v1314 = vrot.slane %v899, 2
      %v1315 = vsel %vm1306, %v1312, %v1314
      %v1316 = vrot.slane %v900, 2
      %v1317 = vsel %vm1306, %v1314, %v1316
      %v1318 = vrot.slane %v901, 2
      %v1319 = vsel %vm1306, %v1316, %v1318
      %v1320 = vrot.slane %v902, 2
      %v1321 = vsel %vm1306, %v1318, %v1320
      %v1322 = vrot.slane %v903, 2
      %v1323 = vsel %vm1306, %v1320, %v1322
      %v1324 = vrot.slane %v904, 2
      %v1325 = vsel %vm1306, %v1322, %v1324
      %v1326 = vrot.slane %v905, 2
      %v1327 = vsel %vm1306, %v1324, %v1326
      %v1328 = vrot.slane %v906, 2
      %v1329 = vsel %vm1306, %v1326, %v1328
      %v1330 = vrot.slane %v907, 2
      %v1331 = vsel %vm1306, %v1328, %v1330
      %v1332 = vrot.slane %v908, 2
      %v1333 = vsel %vm1306, %v1330, %v1332
      %v1334 = vrot.slane %v909, 2
      %v1335 = vsel %vm1306, %v1332, %v1334
      %v1336 = vrot.slane %v910, 2
      %v1337 = vsel %vm1306, %v1334, %v1336
      %v1338 = vrot.slane %v911, 2
      %v1339 = vsel %vm1306, %v1336, %v1338
      %v1340 = vrot.slane %v912, 2
      %v1341 = vsel %vm1306, %v1338, %v1340
      %v1342 = vrot.slane %v913, 2
      %v1343 = vsel %vm1306, %v1340, %v1342
      %v1344 = vrot.slane %v914, 2
      %v1345 = vsel %vm1306, %v1342, %v1344
      %v1346 = vrot.slane %v915, 2
      %v1347 = vsel %vm1306, %v1344, %v1346
      %v1348 = vrot.slane %v916, 2
      %v1349 = vsel %vm1306, %v1346, %v1348
      %v1350 = vrot.slane %v917, 2
      %v1351 = vsel %vm1306, %v1348, %v1350
      %v1352 = vrot.slane %v918, 2
      %v1353 = vsel %vm1306, %v1350, %v1352
      %v1354 = vrot.slane %v919, 2
      %v1355 = vsel %vm1306, %v1352, %v1354
      %v1356 = vrot.slane %v920, 2
      %v1357 = vsel %vm1306, %v1354, %v1356
      %1358 = vrot.lane.b32.xlu0 %v1309, 80
      %v1359 = vpop.permute.xlu0 %1358
      %1360 = vrot.lane.b32.xlu0 %v1311, 80
      %v1361 = vpop.permute.xlu0 %1360
      %1362 = vrot.lane.b32.xlu0 %v1313, 80
      %v1363 = vpop.permute.xlu0 %1362
      %1364 = vrot.lane.b32.xlu0 %v1315, 80
      %v1365 = vpop.permute.xlu0 %1364
      %1366 = vrot.lane.b32.xlu0 %v1317, 80
      %v1367 = vpop.permute.xlu0 %1366
      %1368 = vrot.lane.b32.xlu0 %v1319, 80
      %v1369 = vpop.permute.xlu0 %1368
      %1370 = vrot.lane.b32.xlu0 %v1321, 80
      %v1371 = vpop.permute.xlu0 %1370
      %1372 = vrot.lane.b32.xlu0 %v1323, 80
      %v1373 = vpop.permute.xlu0 %1372
      %1374 = vrot.lane.b32.xlu0 %v1325, 80
      %v1375 = vpop.permute.xlu0 %1374
      %1376 = vrot.lane.b32.xlu0 %v1327, 80
      %v1377 = vpop.permute.xlu0 %1376
      %1378 = vrot.lane.b32.xlu0 %v1329, 80
      %v1379 = vpop.permute.xlu0 %1378
      %1380 = vrot.lane.b32.xlu0 %v1331, 80
      %v1381 = vpop.permute.xlu0 %1380
      %1382 = vrot.lane.b32.xlu0 %v1333, 80
      %v1383 = vpop.permute.xlu0 %1382
      %1384 = vrot.lane.b32.xlu0 %v1335, 80
      %v1385 = vpop.permute.xlu0 %1384
      %1386 = vrot.lane.b32.xlu0 %v1337, 80
      %v1387 = vpop.permute.xlu0 %1386
      %1388 = vrot.lane.b32.xlu0 %v1339, 80
      %v1389 = vpop.permute.xlu0 %1388
      %1390 = vrot.lane.b32.xlu0 %v1341, 80
      %v1391 = vpop.permute.xlu0 %1390
      %1392 = vrot.lane.b32.xlu0 %v1343, 80
      %v1393 = vpop.permute.xlu0 %1392
      %1394 = vrot.lane.b32.xlu0 %v1345, 80
      %v1395 = vpop.permute.xlu0 %1394
      %1396 = vrot.lane.b32.xlu0 %v1347, 80
      %v1397 = vpop.permute.xlu0 %1396
      %1398 = vrot.lane.b32.xlu0 %v1349, 80
      %v1399 = vpop.permute.xlu0 %1398
      %1400 = vrot.lane.b32.xlu0 %v1351, 80
      %v1401 = vpop.permute.xlu0 %1400
      %1402 = vrot.lane.b32.xlu0 %v1353, 80
      %v1403 = vpop.permute.xlu0 %1402
      %1404 = vrot.lane.b32.xlu0 %v1355, 80
      %v1405 = vpop.permute.xlu0 %1404
      %1406 = vrot.lane.b32.xlu0 %v1357, 80
      %v1407 = vpop.permute.xlu0 %1406
      %v1409 = vunpack.c.l.b16 %v382
      %v1410 = vpack.c.b16 %v894, %v534
      %v1411 = vpack.c.b16 %v1409, %v1409
      %v1412 = vrot.slane %v509, 2
      %v1413 = vrot.slane %v510, 2
      %v1414 = vsel %vm1306, %v1412, %v1413
      %v1415 = vrot.slane %v511, 2
      %v1416 = vsel %vm1306, %v1413, %v1415
      %v1417 = vrot.slane %v512, 2
      %v1418 = vsel %vm1306, %v1415, %v1417
      %v1419 = vrot.slane %v513, 2
      %v1420 = vsel %vm1306, %v1417, %v1419
      %v1421 = vrot.slane %v514, 2
      %v1422 = vsel %vm1306, %v1419, %v1421
      %v1423 = vrot.slane %v515, 2
      %v1424 = vsel %vm1306, %v1421, %v1423
      %v1425 = vrot.slane %v516, 2
      %v1426 = vsel %vm1306, %v1423, %v1425
      %v1427 = vrot.slane %v517, 2
      %v1428 = vsel %vm1306, %v1425, %v1427
      %v1429 = vrot.slane %v518, 2
      %v1430 = vsel %vm1306, %v1427, %v1429
      %v1431 = vrot.slane %v519, 2
      %v1432 = vsel %vm1306, %v1429, %v1431
      %v1433 = vrot.slane %v520, 2
      %v1434 = vsel %vm1306, %v1431, %v1433
      %v1435 = vrot.slane %v521, 2
      %v1436 = vsel %vm1306, %v1433, %v1435
      %v1437 = vrot.slane %v522, 2
      %v1438 = vsel %vm1306, %v1435, %v1437
      %v1439 = vrot.slane %v523, 2
      %v1440 = vsel %vm1306, %v1437, %v1439
      %v1441 = vrot.slane %v524, 2
      %v1442 = vsel %vm1306, %v1439, %v1441
      %v1443 = vrot.slane %v525, 2
      %v1444 = vsel %vm1306, %v1441, %v1443
      %v1445 = vrot.slane %v526, 2
      %v1446 = vsel %vm1306, %v1443, %v1445
      %v1447 = vrot.slane %v527, 2
      %v1448 = vsel %vm1306, %v1445, %v1447
      %v1449 = vrot.slane %v528, 2
      %v1450 = vsel %vm1306, %v1447, %v1449
      %v1451 = vrot.slane %v529, 2
      %v1452 = vsel %vm1306, %v1449, %v1451
      %v1453 = vrot.slane %v530, 2
      %v1454 = vsel %vm1306, %v1451, %v1453
      %v1455 = vrot.slane %v531, 2
      %v1456 = vsel %vm1306, %v1453, %v1455
      %v1457 = vrot.slane %v532, 2
      %v1458 = vsel %vm1306, %v1455, %v1457
      %v1459 = vrot.slane %v1410, 2
      %v1460 = vsel %vm1306, %v1457, %v1459
      %v1461 = vrot.slane %v1411, 2
      %v1462 = vsel %vm1306, %v1459, %v1461
      %1463 = vrot.lane.b32.xlu0 %v1414, 96
      %v1464 = vpop.permute.xlu0 %1463
      %1465 = vrot.lane.b32.xlu0 %v1416, 96
      %v1466 = vpop.permute.xlu0 %1465
      %1467 = vrot.lane.b32.xlu0 %v1418, 96
      %v1468 = vpop.permute.xlu0 %1467
      %1469 = vrot.lane.b32.xlu0 %v1420, 96
      %v1470 = vpop.permute.xlu0 %1469
      %1471 = vrot.lane.b32.xlu0 %v1422, 96
      %v1472 = vpop.permute.xlu0 %1471
      %1473 = vrot.lane.b32.xlu0 %v1424, 96
      %v1474 = vpop.permute.xlu0 %1473
      %1475 = vrot.lane.b32.xlu0 %v1426, 96
      %v1476 = vpop.permute.xlu0 %1475
      %1477 = vrot.lane.b32.xlu0 %v1428, 96
      %v1478 = vpop.permute.xlu0 %1477
      %1479 = vrot.lane.b32.xlu0 %v1430, 96
      %v1480 = vpop.permute.xlu0 %1479
      %1481 = vrot.lane.b32.xlu0 %v1432, 96
      %v1482 = vpop.permute.xlu0 %1481
      %1483 = vrot.lane.b32.xlu0 %v1434, 96
      %v1484 = vpop.permute.xlu0 %1483
      %1485 = vrot.lane.b32.xlu0 %v1436, 96
      %v1486 = vpop.permute.xlu0 %1485
      %1487 = vrot.lane.b32.xlu0 %v1438, 96
      %v1488 = vpop.permute.xlu0 %1487
      %1489 = vrot.lane.b32.xlu0 %v1440, 96
      %v1490 = vpop.permute.xlu0 %1489
      %1491 = vrot.lane.b32.xlu0 %v1442, 96
      %v1492 = vpop.permute.xlu0 %1491
      %1493 = vrot.lane.b32.xlu0 %v1444, 96
      %v1494 = vpop.permute.xlu0 %1493
      %1495 = vrot.lane.b32.xlu0 %v1446, 96
      %v1496 = vpop.permute.xlu0 %1495
      %1497 = vrot.lane.b32.xlu0 %v1448, 96
      %v1498 = vpop.permute.xlu0 %1497
      %1499 = vrot.lane.b32.xlu0 %v1450, 96
      %v1500 = vpop.permute.xlu0 %1499
      %1501 = vrot.lane.b32.xlu0 %v1452, 96
      %v1502 = vpop.permute.xlu0 %1501
      %1503 = vrot.lane.b32.xlu0 %v1454, 96
      %v1504 = vpop.permute.xlu0 %1503
      %1505 = vrot.lane.b32.xlu0 %v1456, 96
      %v1506 = vpop.permute.xlu0 %1505
      %1507 = vrot.lane.b32.xlu0 %v1458, 96
      %v1508 = vpop.permute.xlu0 %1507
      %1509 = vrot.lane.b32.xlu0 %v1460, 96
      %v1510 = vpop.permute.xlu0 %1509
      %1511 = vrot.lane.b32.xlu0 %v1462, 96
      %v1512 = vpop.permute.xlu0 %1511
      %vm1513 = vsmask.f32 5376
      %v1514 = vrot.slane %v549, 2
      %v1515 = vrot.slane %v545, 3
      %v1516 = vor.u32 %v1514, %v1515
      %v1517 = vrot.slane %v557, 2
      %v1518 = vrot.slane %v553, 3
      %v1519 = vor.u32 %v1517, %v1518
      %v1520 = vsel %vm1513, %v1516, %v1519
      %v1521 = vrot.slane %v565, 2
      %v1522 = vrot.slane %v561, 3
      %v1523 = vor.u32 %v1521, %v1522
      %v1524 = vsel %vm1513, %v1519, %v1523
      %v1525 = vrot.slane %v573, 2
      %v1526 = vrot.slane %v569, 3
      %v1527 = vor.u32 %v1525, %v1526
      %v1528 = vsel %vm1513, %v1523, %v1527
      %v1529 = vrot.slane %v581, 2
      %v1530 = vrot.slane %v577, 3
      %v1531 = vor.u32 %v1529, %v1530
      %v1532 = vsel %vm1513, %v1527, %v1531
      %v1533 = vrot.slane %v589, 2
      %v1534 = vrot.slane %v585, 3
      %v1535 = vor.u32 %v1533, %v1534
      %v1536 = vsel %vm1513, %v1531, %v1535
      %v1537 = vrot.slane %v597, 2
      %v1538 = vrot.slane %v593, 3
      %v1539 = vor.u32 %v1537, %v1538
      %v1540 = vsel %vm1513, %v1535, %v1539
      %v1541 = vrot.slane %v605, 2
      %v1542 = vrot.slane %v601, 3
      %v1543 = vor.u32 %v1541, %v1542
      %v1544 = vsel %vm1513, %v1539, %v1543
      %v1545 = vrot.slane %v613, 2
      %v1546 = vrot.slane %v609, 3
      %v1547 = vor.u32 %v1545, %v1546
      %v1548 = vsel %vm1513, %v1543, %v1547
      %v1549 = vrot.slane %v621, 2
      %v1550 = vrot.slane %v617, 3
      %v1551 = vor.u32 %v1549, %v1550
      %v1552 = vsel %vm1513, %v1547, %v1551
      %v1553 = vrot.slane %v629, 2
      %v1554 = vrot.slane %v625, 3
      %v1555 = vor.u32 %v1553, %v1554
      %v1556 = vsel %vm1513, %v1551, %v1555
      %v1557 = vrot.slane %v637, 2
      %v1558 = vrot.slane %v633, 3
      %v1559 = vor.u32 %v1557, %v1558
      %v1560 = vsel %vm1513, %v1555, %v1559
      %v1561 = vrot.slane %v645, 2
      %v1562 = vrot.slane %v641, 3
      %v1563 = vor.u32 %v1561, %v1562
      %v1564 = vsel %vm1513, %v1559, %v1563
      %v1565 = vrot.slane %v653, 2
      %v1566 = vrot.slane %v649, 3
      %v1567 = vor.u32 %v1565, %v1566
      %v1568 = vsel %vm1513, %v1563, %v1567
      %v1569 = vrot.slane %v661, 2
      %v1570 = vrot.slane %v657, 3
      %v1571 = vor.u32 %v1569, %v1570
      %v1572 = vsel %vm1513, %v1567, %v1571
      %v1573 = vrot.slane %v669, 2
      %v1574 = vrot.slane %v665, 3
      %v1575 = vor.u32 %v1573, %v1574
      %v1576 = vsel %vm1513, %v1571, %v1575
      %v1577 = vrot.slane %v677, 2
      %v1578 = vrot.slane %v673, 3
      %v1579 = vor.u32 %v1577, %v1578
      %v1580 = vsel %vm1513, %v1575, %v1579
      %v1581 = vrot.slane %v685, 2
      %v1582 = vrot.slane %v681, 3
      %v1583 = vor.u32 %v1581, %v1582
      %v1584 = vsel %vm1513, %v1579, %v1583
      %v1585 = vrot.slane %v693, 2
      %v1586 = vrot.slane %v689, 3
      %v1587 = vor.u32 %v1585, %v1586
      %v1588 = vsel %vm1513, %v1583, %v1587
      %v1589 = vrot.slane %v701, 2
      %v1590 = vrot.slane %v697, 3
      %v1591 = vor.u32 %v1589, %v1590
      %v1592 = vsel %vm1513, %v1587, %v1591
      %v1593 = vrot.slane %v709, 2
      %v1594 = vrot.slane %v705, 3
      %v1595 = vor.u32 %v1593, %v1594
      %v1596 = vsel %vm1513, %v1591, %v1595
      %v1597 = vrot.slane %v717, 2
      %v1598 = vrot.slane %v713, 3
      %v1599 = vor.u32 %v1597, %v1598
      %v1600 = vsel %vm1513, %v1595, %v1599
      %v1601 = vrot.slane %v725, 2
      %v1602 = vrot.slane %v721, 3
      %v1603 = vor.u32 %v1601, %v1602
      %v1604 = vsel %vm1513, %v1599, %v1603
      %v1605 = vrot.slane %v733, 2
      %v1606 = vrot.slane %v729, 3
      %v1607 = vor.u32 %v1605, %v1606
      %v1608 = vsel %vm1513, %v1603, %v1607
      %v1610 = vshrl.u32 %v1410, 16
      %v1612 = vrot.slane %v1610, 2
      %v1613 = vshll.u32 %v1410, 16
      %v1615 = vrot.slane %v1613, 3
      %v1616 = vor.u32 %v1612, %v1615
      %v1617 = vsel %vm1513, %v1607, %v1616
      %v1619 = vshrl.u32 %v1411, 16
      %v1621 = vrot.slane %v1619, 2
      %v1622 = vshll.u32 %v1411, 16
      %v1624 = vrot.slane %v1622, 3
      %v1625 = vor.u32 %v1621, %v1624
      %v1626 = vsel %vm1513, %v1616, %v1625
      %1627 = vrot.lane.b32.xlu0 %v1520, 112
      %v1628 = vpop.permute.xlu0 %1627
      %1629 = vrot.lane.b32.xlu0 %v1524, 112
      %v1630 = vpop.permute.xlu0 %1629
      %1631 = vrot.lane.b32.xlu0 %v1528, 112
      %v1632 = vpop.permute.xlu0 %1631
      %1633 = vrot.lane.b32.xlu0 %v1532, 112
      %v1634 = vpop.permute.xlu0 %1633
      %1635 = vrot.lane.b32.xlu0 %v1536, 112
      %v1636 = vpop.permute.xlu0 %1635
      %1637 = vrot.lane.b32.xlu0 %v1540, 112
      %v1638 = vpop.permute.xlu0 %1637
      %1639 = vrot.lane.b32.xlu0 %v1544, 112
      %v1640 = vpop.permute.xlu0 %1639
      %1641 = vrot.lane.b32.xlu0 %v1548, 112
      %v1642 = vpop.permute.xlu0 %1641
      %1643 = vrot.lane.b32.xlu0 %v1552, 112
      %v1644 = vpop.permute.xlu0 %1643
      %1645 = vrot.lane.b32.xlu0 %v1556, 112
      %v1646 = vpop.permute.xlu0 %1645
      %1647 = vrot.lane.b32.xlu0 %v1560, 112
      %v1648 = vpop.permute.xlu0 %1647
      %1649 = vrot.lane.b32.xlu0 %v1564, 112
      %v1650 = vpop.permute.xlu0 %1649
      %1651 = vrot.lane.b32.xlu0 %v1568, 112
      %v1652 = vpop.permute.xlu0 %1651
      %1653 = vrot.lane.b32.xlu0 %v1572, 112
      %v1654 = vpop.permute.xlu0 %1653
      %1655 = vrot.lane.b32.xlu0 %v1576, 112
      %v1656 = vpop.permute.xlu0 %1655
      %1657 = vrot.lane.b32.xlu0 %v1580, 112
      %v1658 = vpop.permute.xlu0 %1657
      %1659 = vrot.lane.b32.xlu0 %v1584, 112
      %v1660 = vpop.permute.xlu0 %1659
      %1661 = vrot.lane.b32.xlu0 %v1588, 112
      %v1662 = vpop.permute.xlu0 %1661
      %1663 = vrot.lane.b32.xlu0 %v1592, 112
      %v1664 = vpop.permute.xlu0 %1663
      %1665 = vrot.lane.b32.xlu0 %v1596, 112
      %v1666 = vpop.permute.xlu0 %1665
      %1667 = vrot.lane.b32.xlu0 %v1600, 112
      %v1668 = vpop.permute.xlu0 %1667
      %1669 = vrot.lane.b32.xlu0 %v1604, 112
      %v1670 = vpop.permute.xlu0 %1669
      %1671 = vrot.lane.b32.xlu0 %v1608, 112
      %v1672 = vpop.permute.xlu0 %1671
      %1673 = vrot.lane.b32.xlu0 %v1617, 112
      %v1674 = vpop.permute.xlu0 %1673
      %1675 = vrot.lane.b32.xlu0 %v1626, 112
      %v1676 = vpop.permute.xlu0 %1675
      %vm1677 = vcmask 1044480
      %v1678 = vrot.slane %v509, 3
      %v1679 = vrot.slane %v510, 3
      %v1680 = vsel %vm1677, %v1678, %v1679
      %v1681 = vrot.slane %v511, 3
      %v1682 = vsel %vm1677, %v1679, %v1681
      %v1683 = vrot.slane %v512, 3
      %v1684 = vsel %vm1677, %v1681, %v1683
      %v1685 = vrot.slane %v513, 3
      %v1686 = vsel %vm1677, %v1683, %v1685
      %v1687 = vrot.slane %v514, 3
      %v1688 = vsel %vm1677, %v1685, %v1687
      %v1689 = vrot.slane %v515, 3
      %v1690 = vsel %vm1677, %v1687, %v1689
      %v1691 = vrot.slane %v516, 3
      %v1692 = vsel %vm1677, %v1689, %v1691
      %v1693 = vrot.slane %v517, 3
      %v1694 = vsel %vm1677, %v1691, %v1693
      %v1695 = vrot.slane %v518, 3
      %v1696 = vsel %vm1677, %v1693, %v1695
      %v1697 = vrot.slane %v519, 3
      %v1698 = vsel %vm1677, %v1695, %v1697
      %v1699 = vrot.slane %v520, 3
      %v1700 = vsel %vm1677, %v1697, %v1699
      %v1701 = vrot.slane %v521, 3
      %v1702 = vsel %vm1677, %v1699, %v1701
      %v1703 = vrot.slane %v522, 3
      %v1704 = vsel %vm1677, %v1701, %v1703
      %v1705 = vrot.slane %v523, 3
      %v1706 = vsel %vm1677, %v1703, %v1705
      %v1707 = vrot.slane %v524, 3
      %v1708 = vsel %vm1677, %v1705, %v1707
      %v1709 = vrot.slane %v525, 3
      %v1710 = vsel %vm1677, %v1707, %v1709
      %v1711 = vrot.slane %v526, 3
      %v1712 = vsel %vm1677, %v1709, %v1711
      %v1713 = vrot.slane %v527, 3
      %v1714 = vsel %vm1677, %v1711, %v1713
      %v1715 = vrot.slane %v528, 3
      %v1716 = vsel %vm1677, %v1713, %v1715
      %v1717 = vrot.slane %v529, 3
      %v1718 = vsel %vm1677, %v1715, %v1717
      %v1719 = vrot.slane %v530, 3
      %v1720 = vsel %vm1677, %v1717, %v1719
      %v1721 = vrot.slane %v531, 3
      %v1722 = vsel %vm1677, %v1719, %v1721
      %v1723 = vrot.slane %v532, 3
      %v1724 = vsel %vm1677, %v1721, %v1723
      %v1725 = vrot.slane %v1410, 3
      %v1726 = vsel %vm1677, %v1723, %v1725
      %v1727 = vrot.slane %v1411, 3
      %v1728 = vsel %vm1677, %v1725, %v1727
      %v1739 = vunpack.c.l.b16 %v383
      %v1740 = vunpack.c.l.b16 %v384
      %v1741 = vunpack.c.l.b16 %v385
      %v1742 = vunpack.c.l.b16 %v386
      %v1743 = vunpack.c.l.b16 %v387
      %v1744 = vunpack.c.l.b16 %v388
      %v1745 = vunpack.c.l.b16 %v389
      %v1746 = vunpack.c.l.b16 %v390
      %v1747 = vunpack.c.l.b16 %v391
      %v1748 = vunpack.c.l.b16 %v392
      %v1749 = vpack.c.b16 %v1739, %v1409
      %v1750 = vpack.c.b16 %v1741, %v1740
      %v1751 = vpack.c.b16 %v1743, %v1742
      %v1752 = vpack.c.b16 %v1745, %v1744
      %v1753 = vpack.c.b16 %v1747, %v1746
      %v1754 = vpack.c.b16 %v1748, %v1748
      %v1755 = vrot.slane %v1749, 2
      %v1756 = vsel %vm1306, %v1459, %v1755
      %v1757 = vrot.slane %v1750, 2
      %v1758 = vsel %vm1306, %v1755, %v1757
      %v1759 = vrot.slane %v1751, 2
      %v1760 = vsel %vm1306, %v1757, %v1759
      %v1761 = vrot.slane %v1752, 2
      %v1762 = vsel %vm1306, %v1759, %v1761
      %v1763 = vrot.slane %v1753, 2
      %v1764 = vsel %vm1306, %v1761, %v1763
      %v1765 = vrot.slane %v1754, 2
      %v1766 = vsel %vm1306, %v1763, %v1765
      %1767 = vrot.lane.b32.xlu0 %v1424, 16
      %v1768 = vpop.permute.xlu0 %1767
      %1769 = vrot.lane.b32.xlu0 %v1426, 16
      %v1770 = vpop.permute.xlu0 %1769
      %1771 = vrot.lane.b32.xlu0 %v1428, 16
      %v1772 = vpop.permute.xlu0 %1771
      %1773 = vrot.lane.b32.xlu0 %v1430, 16
      %v1774 = vpop.permute.xlu0 %1773
      %1775 = vrot.lane.b32.xlu0 %v1432, 16
      %v1776 = vpop.permute.xlu0 %1775
      %1777 = vrot.lane.b32.xlu0 %v1434, 16
      %v1778 = vpop.permute.xlu0 %1777
      %1779 = vrot.lane.b32.xlu0 %v1436, 16
      %v1780 = vpop.permute.xlu0 %1779
      %1781 = vrot.lane.b32.xlu0 %v1438, 16
      %v1782 = vpop.permute.xlu0 %1781
      %1783 = vrot.lane.b32.xlu0 %v1440, 16
      %v1784 = vpop.permute.xlu0 %1783
      %1785 = vrot.lane.b32.xlu0 %v1442, 16
      %v1786 = vpop.permute.xlu0 %1785
      %1787 = vrot.lane.b32.xlu0 %v1444, 16
      %v1788 = vpop.permute.xlu0 %1787
      %1789 = vrot.lane.b32.xlu0 %v1446, 16
      %v1790 = vpop.permute.xlu0 %1789
      %1791 = vrot.lane.b32.xlu0 %v1448, 16
      %v1792 = vpop.permute.xlu0 %1791
      %1793 = vrot.lane.b32.xlu0 %v1450, 16
      %v1794 = vpop.permute.xlu0 %1793
      %1795 = vrot.lane.b32.xlu0 %v1452, 16
      %v1796 = vpop.permute.xlu0 %1795
      %1797 = vrot.lane.b32.xlu0 %v1454, 16
      %v1798 = vpop.permute.xlu0 %1797
      %1799 = vrot.lane.b32.xlu0 %v1456, 16
      %v1800 = vpop.permute.xlu0 %1799
      %1801 = vrot.lane.b32.xlu0 %v1458, 16
      %v1802 = vpop.permute.xlu0 %1801
      %1803 = vrot.lane.b32.xlu0 %v1460, 16
      %v1804 = vpop.permute.xlu0 %1803
      %1805 = vrot.lane.b32.xlu0 %v1756, 16
      %v1806 = vpop.permute.xlu0 %1805
      %1807 = vrot.lane.b32.xlu0 %v1758, 16
      %v1808 = vpop.permute.xlu0 %1807
      %1809 = vrot.lane.b32.xlu0 %v1760, 16
      %v1810 = vpop.permute.xlu0 %1809
      %1811 = vrot.lane.b32.xlu0 %v1762, 16
      %v1812 = vpop.permute.xlu0 %1811
      %1813 = vrot.lane.b32.xlu0 %v1764, 16
      %v1814 = vpop.permute.xlu0 %1813
      %1815 = vrot.lane.b32.xlu0 %v1766, 16
      %v1816 = vpop.permute.xlu0 %1815
      %v1818 = vshrl.u32 %v1749, 16
      %v1820 = vrot.slane %v1818, 2
      %v1821 = vshll.u32 %v1749, 16
      %v1823 = vrot.slane %v1821, 3
      %v1824 = vor.u32 %v1820, %v1823
      %v1825 = vsel %vm1513, %v1616, %v1824
      %v1827 = vshrl.u32 %v1750, 16
      %v1829 = vrot.slane %v1827, 2
      %v1830 = vshll.u32 %v1750, 16
      %v1832 = vrot.slane %v1830, 3
      %v1833 = vor.u32 %v1829, %v1832
      %v1834 = vsel %vm1513, %v1824, %v1833
      %v1836 = vshrl.u32 %v1751, 16
      %v1838 = vrot.slane %v1836, 2
      %v1839 = vshll.u32 %v1751, 16
      %v1841 = vrot.slane %v1839, 3
      %v1842 = vor.u32 %v1838, %v1841
      %v1843 = vsel %vm1513, %v1833, %v1842
      %v1845 = vshrl.u32 %v1752, 16
      %v1847 = vrot.slane %v1845, 2
      %v1848 = vshll.u32 %v1752, 16
      %v1850 = vrot.slane %v1848, 3
      %v1851 = vor.u32 %v1847, %v1850
      %v1852 = vsel %vm1513, %v1842, %v1851
      %v1854 = vshrl.u32 %v1753, 16
      %v1856 = vrot.slane %v1854, 2
      %v1857 = vshll.u32 %v1753, 16
      %v1859 = vrot.slane %v1857, 3
      %v1860 = vor.u32 %v1856, %v1859
      %v1861 = vsel %vm1513, %v1851, %v1860
      %v1863 = vshrl.u32 %v1754, 16
      %v1865 = vrot.slane %v1863, 2
      %v1866 = vshll.u32 %v1754, 16
      %v1868 = vrot.slane %v1866, 3
      %v1869 = vor.u32 %v1865, %v1868
      %v1870 = vsel %vm1513, %v1860, %v1869
      %1871 = vrot.lane.b32.xlu0 %v1540, 32
      %v1872 = vpop.permute.xlu0 %1871
      %1873 = vrot.lane.b32.xlu0 %v1544, 32
      %v1874 = vpop.permute.xlu0 %1873
      %1875 = vrot.lane.b32.xlu0 %v1548, 32
      %v1876 = vpop.permute.xlu0 %1875
      %1877 = vrot.lane.b32.xlu0 %v1552, 32
      %v1878 = vpop.permute.xlu0 %1877
      %1879 = vrot.lane.b32.xlu0 %v1556, 32
      %v1880 = vpop.permute.xlu0 %1879
      %1881 = vrot.lane.b32.xlu0 %v1560, 32
      %v1882 = vpop.permute.xlu0 %1881
      %1883 = vrot.lane.b32.xlu0 %v1564, 32
      %v1884 = vpop.permute.xlu0 %1883
      %1885 = vrot.lane.b32.xlu0 %v1568, 32
      %v1886 = vpop.permute.xlu0 %1885
      %1887 = vrot.lane.b32.xlu0 %v1572, 32
      %v1888 = vpop.permute.xlu0 %1887
      %1889 = vrot.lane.b32.xlu0 %v1576, 32
      %v1890 = vpop.permute.xlu0 %1889
      %1891 = vrot.lane.b32.xlu0 %v1580, 32
      %v1892 = vpop.permute.xlu0 %1891
      %1893 = vrot.lane.b32.xlu0 %v1584, 32
      %v1894 = vpop.permute.xlu0 %1893
      %1895 = vrot.lane.b32.xlu0 %v1588, 32
      %v1896 = vpop.permute.xlu0 %1895
      %1897 = vrot.lane.b32.xlu0 %v1592, 32
      %v1898 = vpop.permute.xlu0 %1897
      %1899 = vrot.lane.b32.xlu0 %v1596, 32
      %v1900 = vpop.permute.xlu0 %1899
      %1901 = vrot.lane.b32.xlu0 %v1600, 32
      %v1902 = vpop.permute.xlu0 %1901
      %1903 = vrot.lane.b32.xlu0 %v1604, 32
      %v1904 = vpop.permute.xlu0 %1903
      %1905 = vrot.lane.b32.xlu0 %v1608, 32
      %v1906 = vpop.permute.xlu0 %1905
      %1907 = vrot.lane.b32.xlu0 %v1617, 32
      %v1908 = vpop.permute.xlu0 %1907
      %1909 = vrot.lane.b32.xlu0 %v1825, 32
      %v1910 = vpop.permute.xlu0 %1909
      %1911 = vrot.lane.b32.xlu0 %v1834, 32
      %v1912 = vpop.permute.xlu0 %1911
      %1913 = vrot.lane.b32.xlu0 %v1843, 32
      %v1914 = vpop.permute.xlu0 %1913
      %1915 = vrot.lane.b32.xlu0 %v1852, 32
      %v1916 = vpop.permute.xlu0 %1915
      %1917 = vrot.lane.b32.xlu0 %v1861, 32
      %v1918 = vpop.permute.xlu0 %1917
      %1919 = vrot.lane.b32.xlu0 %v1870, 32
      %v1920 = vpop.permute.xlu0 %1919
      %v1921 = vrot.slane %v1749, 3
      %v1922 = vsel %vm1677, %v1725, %v1921
      %v1923 = vrot.slane %v1750, 3
      %v1924 = vsel %vm1677, %v1921, %v1923
      %v1925 = vrot.slane %v1751, 3
      %v1926 = vsel %vm1677, %v1923, %v1925
      %v1927 = vrot.slane %v1752, 3
      %v1928 = vsel %vm1677, %v1925, %v1927
      %v1929 = vrot.slane %v1753, 3
      %v1930 = vsel %vm1677, %v1927, %v1929
      %v1931 = vrot.slane %v1754, 3
      %v1932 = vsel %vm1677, %v1929, %v1931
      %1933 = vrot.lane.b32.xlu0 %v1690, 48
      %v1934 = vpop.permute.xlu0 %1933
      %1935 = vrot.lane.b32.xlu0 %v1692, 48
      %v1936 = vpop.permute.xlu0 %1935
      %1937 = vrot.lane.b32.xlu0 %v1694, 48
      %v1938 = vpop.permute.xlu0 %1937
      %1939 = vrot.lane.b32.xlu0 %v1696, 48
      %v1940 = vpop.permute.xlu0 %1939
      %1941 = vrot.lane.b32.xlu0 %v1698, 48
      %v1942 = vpop.permute.xlu0 %1941
      %1943 = vrot.lane.b32.xlu0 %v1700, 48
      %v1944 = vpop.permute.xlu0 %1943
      %1945 = vrot.lane.b32.xlu0 %v1702, 48
      %v1946 = vpop.permute.xlu0 %1945
      %1947 = vrot.lane.b32.xlu0 %v1704, 48
      %v1948 = vpop.permute.xlu0 %1947
      %1949 = vrot.lane.b32.xlu0 %v1706, 48
      %v1950 = vpop.permute.xlu0 %1949
      %1951 = vrot.lane.b32.xlu0 %v1708, 48
      %v1952 = vpop.permute.xlu0 %1951
      %1953 = vrot.lane.b32.xlu0 %v1710, 48
      %v1954 = vpop.permute.xlu0 %1953
      %1955 = vrot.lane.b32.xlu0 %v1712, 48
      %v1956 = vpop.permute.xlu0 %1955
      %1957 = vrot.lane.b32.xlu0 %v1714, 48
      %v1958 = vpop.permute.xlu0 %1957
      %1959 = vrot.lane.b32.xlu0 %v1716, 48
      %v1960 = vpop.permute.xlu0 %1959
      %1961 = vrot.lane.b32.xlu0 %v1718, 48
      %v1962 = vpop.permute.xlu0 %1961
      %1963 = vrot.lane.b32.xlu0 %v1720, 48
      %v1964 = vpop.permute.xlu0 %1963
      %1965 = vrot.lane.b32.xlu0 %v1722, 48
      %v1966 = vpop.permute.xlu0 %1965
      %1967 = vrot.lane.b32.xlu0 %v1724, 48
      %v1968 = vpop.permute.xlu0 %1967
      %1969 = vrot.lane.b32.xlu0 %v1726, 48
      %v1970 = vpop.permute.xlu0 %1969
      %1971 = vrot.lane.b32.xlu0 %v1922, 48
      %v1972 = vpop.permute.xlu0 %1971
      %1973 = vrot.lane.b32.xlu0 %v1924, 48
      %v1974 = vpop.permute.xlu0 %1973
      %1975 = vrot.lane.b32.xlu0 %v1926, 48
      %v1976 = vpop.permute.xlu0 %1975
      %1977 = vrot.lane.b32.xlu0 %v1928, 48
      %v1978 = vpop.permute.xlu0 %1977
      %1979 = vrot.lane.b32.xlu0 %v1930, 48
      %v1980 = vpop.permute.xlu0 %1979
      %1981 = vrot.lane.b32.xlu0 %v1932, 48
      %v1982 = vpop.permute.xlu0 %1981
      %v1984 = vunpack.c.l.b16 %v393
      %v1985 = vpack.c.b16 %v1409, %v894
      %v1986 = vpack.c.b16 %v1740, %v1739
      %v1987 = vpack.c.b16 %v1742, %v1741
      %v1988 = vpack.c.b16 %v1744, %v1743
      %v1989 = vpack.c.b16 %v1746, %v1745
      %v1990 = vpack.c.b16 %v1748, %v1747
      %v1991 = vpack.c.b16 %v1984, %v1984
      %v1992 = vrot.slane %v901, 3
      %v1993 = vrot.slane %v902, 3
      %v1994 = vsel %vm1677, %v1992, %v1993
      %v1995 = vrot.slane %v903, 3
      %v1996 = vsel %vm1677, %v1993, %v1995
      %v1997 = vrot.slane %v904, 3
      %v1998 = vsel %vm1677, %v1995, %v1997
      %v1999 = vrot.slane %v905, 3
      %v2000 = vsel %vm1677, %v1997, %v1999
      %v2001 = vrot.slane %v906, 3
      %v2002 = vsel %vm1677, %v1999, %v2001
      %v2003 = vrot.slane %v907, 3
      %v2004 = vsel %vm1677, %v2001, %v2003
      %v2005 = vrot.slane %v908, 3
      %v2006 = vsel %vm1677, %v2003, %v2005
      %v2007 = vrot.slane %v909, 3
      %v2008 = vsel %vm1677, %v2005, %v2007
      %v2009 = vrot.slane %v910, 3
      %v2010 = vsel %vm1677, %v2007, %v2009
      %v2011 = vrot.slane %v911, 3
      %v2012 = vsel %vm1677, %v2009, %v2011
      %v2013 = vrot.slane %v912, 3
      %v2014 = vsel %vm1677, %v2011, %v2013
      %v2015 = vrot.slane %v913, 3
      %v2016 = vsel %vm1677, %v2013, %v2015
      %v2017 = vrot.slane %v914, 3
      %v2018 = vsel %vm1677, %v2015, %v2017
      %v2019 = vrot.slane %v915, 3
      %v2020 = vsel %vm1677, %v2017, %v2019
      %v2021 = vrot.slane %v916, 3
      %v2022 = vsel %vm1677, %v2019, %v2021
      %v2023 = vrot.slane %v917, 3
      %v2024 = vsel %vm1677, %v2021, %v2023
      %v2025 = vrot.slane %v918, 3
      %v2026 = vsel %vm1677, %v2023, %v2025
      %v2027 = vrot.slane %v919, 3
      %v2028 = vsel %vm1677, %v2025, %v2027
      %v2029 = vrot.slane %v1985, 3
      %v2030 = vsel %vm1677, %v2027, %v2029
      %v2031 = vrot.slane %v1986, 3
      %v2032 = vsel %vm1677, %v2029, %v2031
      %v2033 = vrot.slane %v1987, 3
      %v2034 = vsel %vm1677, %v2031, %v2033
      %v2035 = vrot.slane %v1988, 3
      %v2036 = vsel %vm1677, %v2033, %v2035
      %v2037 = vrot.slane %v1989, 3
      %v2038 = vsel %vm1677, %v2035, %v2037
      %v2039 = vrot.slane %v1990, 3
      %v2040 = vsel %vm1677, %v2037, %v2039
      %v2041 = vrot.slane %v1991, 3
      %v2042 = vsel %vm1677, %v2039, %v2041
      %2043 = vrot.lane.b32.xlu0 %v1994, 64
      %v2044 = vpop.permute.xlu0 %2043
      %2045 = vrot.lane.b32.xlu0 %v1996, 64
      %v2046 = vpop.permute.xlu0 %2045
      %2047 = vrot.lane.b32.xlu0 %v1998, 64
      %v2048 = vpop.permute.xlu0 %2047
      %2049 = vrot.lane.b32.xlu0 %v2000, 64
      %v2050 = vpop.permute.xlu0 %2049
      %2051 = vrot.lane.b32.xlu0 %v2002, 64
      %v2052 = vpop.permute.xlu0 %2051
      %2053 = vrot.lane.b32.xlu0 %v2004, 64
      %v2054 = vpop.permute.xlu0 %2053
      %2055 = vrot.lane.b32.xlu0 %v2006, 64
      %v2056 = vpop.permute.xlu0 %2055
      %2057 = vrot.lane.b32.xlu0 %v2008, 64
      %v2058 = vpop.permute.xlu0 %2057
      %2059 = vrot.lane.b32.xlu0 %v2010, 64
      %v2060 = vpop.permute.xlu0 %2059
      %2061 = vrot.lane.b32.xlu0 %v2012, 64
      %v2062 = vpop.permute.xlu0 %2061
      %2063 = vrot.lane.b32.xlu0 %v2014, 64
      %v2064 = vpop.permute.xlu0 %2063
      %2065 = vrot.lane.b32.xlu0 %v2016, 64
      %v2066 = vpop.permute.xlu0 %2065
      %2067 = vrot.lane.b32.xlu0 %v2018, 64
      %v2068 = vpop.permute.xlu0 %2067
      %2069 = vrot.lane.b32.xlu0 %v2020, 64
      %v2070 = vpop.permute.xlu0 %2069
      %2071 = vrot.lane.b32.xlu0 %v2022, 64
      %v2072 = vpop.permute.xlu0 %2071
      %2073 = vrot.lane.b32.xlu0 %v2024, 64
      %v2074 = vpop.permute.xlu0 %2073
      %2075 = vrot.lane.b32.xlu0 %v2026, 64
      %v2076 = vpop.permute.xlu0 %2075
      %2077 = vrot.lane.b32.xlu0 %v2028, 64
      %v2078 = vpop.permute.xlu0 %2077
      %2079 = vrot.lane.b32.xlu0 %v2030, 64
      %v2080 = vpop.permute.xlu0 %2079
      %2081 = vrot.lane.b32.xlu0 %v2032, 64
      %v2082 = vpop.permute.xlu0 %2081
      %2083 = vrot.lane.b32.xlu0 %v2034, 64
      %v2084 = vpop.permute.xlu0 %2083
      %2085 = vrot.lane.b32.xlu0 %v2036, 64
      %v2086 = vpop.permute.xlu0 %2085
      %2087 = vrot.lane.b32.xlu0 %v2038, 64
      %v2088 = vpop.permute.xlu0 %2087
      %2089 = vrot.lane.b32.xlu0 %v2040, 64
      %v2090 = vpop.permute.xlu0 %2089
      %2091 = vrot.lane.b32.xlu0 %v2042, 64
      %v2092 = vpop.permute.xlu0 %2091
      %vm2093 = vsmask.f32 4352
      %v2094 = vrot.slane %v1077, 3
      %v2095 = vrot.slane %v1080, 4
      %v2096 = vor.u32 %v2094, %v2095
      %v2097 = vrot.slane %v1086, 3
      %v2098 = vrot.slane %v1089, 4
      %v2099 = vor.u32 %v2097, %v2098
      %v2100 = vsel %vm2093, %v2096, %v2099
      %v2101 = vrot.slane %v1095, 3
      %v2102 = vrot.slane %v1098, 4
      %v2103 = vor.u32 %v2101, %v2102
      %v2104 = vsel %vm2093, %v2099, %v2103
      %v2105 = vrot.slane %v1104, 3
      %v2106 = vrot.slane %v1107, 4
      %v2107 = vor.u32 %v2105, %v2106
      %v2108 = vsel %vm2093, %v2103, %v2107
      %v2109 = vrot.slane %v1113, 3
      %v2110 = vrot.slane %v1116, 4
      %v2111 = vor.u32 %v2109, %v2110
      %v2112 = vsel %vm2093, %v2107, %v2111
      %v2113 = vrot.slane %v1122, 3
      %v2114 = vrot.slane %v1125, 4
      %v2115 = vor.u32 %v2113, %v2114
      %v2116 = vsel %vm2093, %v2111, %v2115
      %v2117 = vrot.slane %v1131, 3
      %v2118 = vrot.slane %v1134, 4
      %v2119 = vor.u32 %v2117, %v2118
      %v2120 = vsel %vm2093, %v2115, %v2119
      %v2121 = vrot.slane %v1140, 3
      %v2122 = vrot.slane %v1143, 4
      %v2123 = vor.u32 %v2121, %v2122
      %v2124 = vsel %vm2093, %v2119, %v2123
      %v2125 = vrot.slane %v1149, 3
      %v2126 = vrot.slane %v1152, 4
      %v2127 = vor.u32 %v2125, %v2126
      %v2128 = vsel %vm2093, %v2123, %v2127
      %v2129 = vrot.slane %v1158, 3
      %v2130 = vrot.slane %v1161, 4
      %v2131 = vor.u32 %v2129, %v2130
      %v2132 = vsel %vm2093, %v2127, %v2131
      %v2133 = vrot.slane %v1167, 3
      %v2134 = vrot.slane %v1170, 4
      %v2135 = vor.u32 %v2133, %v2134
      %v2136 = vsel %vm2093, %v2131, %v2135
      %v2137 = vrot.slane %v1176, 3
      %v2138 = vrot.slane %v1179, 4
      %v2139 = vor.u32 %v2137, %v2138
      %v2140 = vsel %vm2093, %v2135, %v2139
      %v2141 = vrot.slane %v1185, 3
      %v2142 = vrot.slane %v1188, 4
      %v2143 = vor.u32 %v2141, %v2142
      %v2144 = vsel %vm2093, %v2139, %v2143
      %v2145 = vrot.slane %v1194, 3
      %v2146 = vrot.slane %v1197, 4
      %v2147 = vor.u32 %v2145, %v2146
      %v2148 = vsel %vm2093, %v2143, %v2147
      %v2149 = vrot.slane %v1203, 3
      %v2150 = vrot.slane %v1206, 4
      %v2151 = vor.u32 %v2149, %v2150
      %v2152 = vsel %vm2093, %v2147, %v2151
      %v2153 = vrot.slane %v1212, 3
      %v2154 = vrot.slane %v1215, 4
      %v2155 = vor.u32 %v2153, %v2154
      %v2156 = vsel %vm2093, %v2151, %v2155
      %v2157 = vrot.slane %v1221, 3
      %v2158 = vrot.slane %v1224, 4
      %v2159 = vor.u32 %v2157, %v2158
      %v2160 = vsel %vm2093, %v2155, %v2159
      %v2161 = vrot.slane %v1230, 3
      %v2162 = vrot.slane %v1233, 4
      %v2163 = vor.u32 %v2161, %v2162
      %v2164 = vsel %vm2093, %v2159, %v2163
      %v2165 = vrot.slane %v1239, 3
      %v2166 = vrot.slane %v1242, 4
      %v2167 = vor.u32 %v2165, %v2166
      %v2168 = vsel %vm2093, %v2163, %v2167
      %v2170 = vshrl.u32 %v1985, 16
      %v2172 = vrot.slane %v2170, 3
      %v2173 = vshll.u32 %v1985, 16
      %v2175 = vrot.slane %v2173, 4
      %v2176 = vor.u32 %v2172, %v2175
      %v2177 = vsel %vm2093, %v2167, %v2176
      %v2179 = vshrl.u32 %v1986, 16
      %v2181 = vrot.slane %v2179, 3
      %v2182 = vshll.u32 %v1986, 16
      %v2184 = vrot.slane %v2182, 4
      %v2185 = vor.u32 %v2181, %v2184
      %v2186 = vsel %vm2093, %v2176, %v2185
      %v2188 = vshrl.u32 %v1987, 16
      %v2190 = vrot.slane %v2188, 3
      %v2191 = vshll.u32 %v1987, 16
      %v2193 = vrot.slane %v2191, 4
      %v2194 = vor.u32 %v2190, %v2193
      %v2195 = vsel %vm2093, %v2185, %v2194
      %v2197 = vshrl.u32 %v1988, 16
      %v2199 = vrot.slane %v2197, 3
      %v2200 = vshll.u32 %v1988, 16
      %v2202 = vrot.slane %v2200, 4
      %v2203 = vor.u32 %v2199, %v2202
      %v2204 = vsel %vm2093, %v2194, %v2203
      %v2206 = vshrl.u32 %v1989, 16
      %v2208 = vrot.slane %v2206, 3
      %v2209 = vshll.u32 %v1989, 16
      %v2211 = vrot.slane %v2209, 4
      %v2212 = vor.u32 %v2208, %v2211
      %v2213 = vsel %vm2093, %v2203, %v2212
      %v2215 = vshrl.u32 %v1990, 16
      %v2217 = vrot.slane %v2215, 3
      %v2218 = vshll.u32 %v1990, 16
      %v2220 = vrot.slane %v2218, 4
      %v2221 = vor.u32 %v2217, %v2220
      %v2222 = vsel %vm2093, %v2212, %v2221
      %v2224 = vshrl.u32 %v1991, 16
      %v2226 = vrot.slane %v2224, 3
      %v2227 = vshll.u32 %v1991, 16
      %v2229 = vrot.slane %v2227, 4
      %v2230 = vor.u32 %v2226, %v2229
      %v2231 = vsel %vm2093, %v2221, %v2230
      %2232 = vrot.lane.b32.xlu0 %v2100, 80
      %v2233 = vpop.permute.xlu0 %2232
      %2234 = vrot.lane.b32.xlu0 %v2104, 80
      %v2235 = vpop.permute.xlu0 %2234
      %2236 = vrot.lane.b32.xlu0 %v2108, 80
      %v2237 = vpop.permute.xlu0 %2236
      %2238 = vrot.lane.b32.xlu0 %v2112, 80
      %v2239 = vpop.permute.xlu0 %2238
      %2240 = vrot.lane.b32.xlu0 %v2116, 80
      %v2241 = vpop.permute.xlu0 %2240
      %2242 = vrot.lane.b32.xlu0 %v2120, 80
      %v2243 = vpop.permute.xlu0 %2242
      %2244 = vrot.lane.b32.xlu0 %v2124, 80
      %v2245 = vpop.permute.xlu0 %2244
      %2246 = vrot.lane.b32.xlu0 %v2128, 80
      %v2247 = vpop.permute.xlu0 %2246
      %2248 = vrot.lane.b32.xlu0 %v2132, 80
      %v2249 = vpop.permute.xlu0 %2248
      %2250 = vrot.lane.b32.xlu0 %v2136, 80
      %v2251 = vpop.permute.xlu0 %2250
      %2252 = vrot.lane.b32.xlu0 %v2140, 80
      %v2253 = vpop.permute.xlu0 %2252
      %2254 = vrot.lane.b32.xlu0 %v2144, 80
      %v2255 = vpop.permute.xlu0 %2254
      %2256 = vrot.lane.b32.xlu0 %v2148, 80
      %v2257 = vpop.permute.xlu0 %2256
      %2258 = vrot.lane.b32.xlu0 %v2152, 80
      %v2259 = vpop.permute.xlu0 %2258
      %2260 = vrot.lane.b32.xlu0 %v2156, 80
      %v2261 = vpop.permute.xlu0 %2260
      %2262 = vrot.lane.b32.xlu0 %v2160, 80
      %v2263 = vpop.permute.xlu0 %2262
      %2264 = vrot.lane.b32.xlu0 %v2164, 80
      %v2265 = vpop.permute.xlu0 %2264
      %2266 = vrot.lane.b32.xlu0 %v2168, 80
      %v2267 = vpop.permute.xlu0 %2266
      %2268 = vrot.lane.b32.xlu0 %v2177, 80
      %v2269 = vpop.permute.xlu0 %2268
      %2270 = vrot.lane.b32.xlu0 %v2186, 80
      %v2271 = vpop.permute.xlu0 %2270
      %2272 = vrot.lane.b32.xlu0 %v2195, 80
      %v2273 = vpop.permute.xlu0 %2272
      %2274 = vrot.lane.b32.xlu0 %v2204, 80
      %v2275 = vpop.permute.xlu0 %2274
      %2276 = vrot.lane.b32.xlu0 %v2213, 80
      %v2277 = vpop.permute.xlu0 %2276
      %2278 = vrot.lane.b32.xlu0 %v2222, 80
      %v2279 = vpop.permute.xlu0 %2278
      %2280 = vrot.lane.b32.xlu0 %v2231, 80
      %v2281 = vpop.permute.xlu0 %2280
      %v2282 = vpack.c.b16 %v1984, %v1748
      %2283 = vrot.lane.b32.xlu0 %v515, 96
      %v2284 = vpop.permute.xlu0 %2283
      %2285 = vrot.lane.b32.xlu0 %v516, 96
      %v2286 = vpop.permute.xlu0 %2285
      %2287 = vrot.lane.b32.xlu0 %v517, 96
      %v2288 = vpop.permute.xlu0 %2287
      %2289 = vrot.lane.b32.xlu0 %v518, 96
      %v2290 = vpop.permute.xlu0 %2289
      %2291 = vrot.lane.b32.xlu0 %v519, 96
      %v2292 = vpop.permute.xlu0 %2291
      %2293 = vrot.lane.b32.xlu0 %v520, 96
      %v2294 = vpop.permute.xlu0 %2293
      %2295 = vrot.lane.b32.xlu0 %v521, 96
      %v2296 = vpop.permute.xlu0 %2295
      %2297 = vrot.lane.b32.xlu0 %v522, 96
      %v2298 = vpop.permute.xlu0 %2297
      %2299 = vrot.lane.b32.xlu0 %v523, 96
      %v2300 = vpop.permute.xlu0 %2299
      %2301 = vrot.lane.b32.xlu0 %v524, 96
      %v2302 = vpop.permute.xlu0 %2301
      %2303 = vrot.lane.b32.xlu0 %v525, 96
      %v2304 = vpop.permute.xlu0 %2303
      %2305 = vrot.lane.b32.xlu0 %v526, 96
      %v2306 = vpop.permute.xlu0 %2305
      %2307 = vrot.lane.b32.xlu0 %v527, 96
      %v2308 = vpop.permute.xlu0 %2307
      %2309 = vrot.lane.b32.xlu0 %v528, 96
      %v2310 = vpop.permute.xlu0 %2309
      %2311 = vrot.lane.b32.xlu0 %v529, 96
      %v2312 = vpop.permute.xlu0 %2311
      %2313 = vrot.lane.b32.xlu0 %v530, 96
      %v2314 = vpop.permute.xlu0 %2313
      %2315 = vrot.lane.b32.xlu0 %v531, 96
      %v2316 = vpop.permute.xlu0 %2315
      %2317 = vrot.lane.b32.xlu0 %v532, 96
      %v2318 = vpop.permute.xlu0 %2317
      %2319 = vrot.lane.b32.xlu0 %v1410, 96
      %v2320 = vpop.permute.xlu0 %2319
      %2321 = vrot.lane.b32.xlu0 %v1749, 96
      %v2322 = vpop.permute.xlu0 %2321
      %2323 = vrot.lane.b32.xlu0 %v1750, 96
      %v2324 = vpop.permute.xlu0 %2323
      %2325 = vrot.lane.b32.xlu0 %v1751, 96
      %v2326 = vpop.permute.xlu0 %2325
      %2327 = vrot.lane.b32.xlu0 %v1752, 96
      %v2328 = vpop.permute.xlu0 %2327
      %2329 = vrot.lane.b32.xlu0 %v1753, 96
      %v2330 = vpop.permute.xlu0 %2329
      %2331 = vrot.lane.b32.xlu0 %v2282, 96
      %v2332 = vpop.permute.xlu0 %2331
      %v2334 = vunpack.c.l.b16 %v394
      %v2335 = vpack.c.b16 %v2334, %v1984
      %2336 = vrot.lane.b32.xlu0 %v902, 112
      %v2337 = vpop.permute.xlu0 %2336
      %2338 = vrot.lane.b32.xlu0 %v903, 112
      %v2339 = vpop.permute.xlu0 %2338
      %2340 = vrot.lane.b32.xlu0 %v904, 112
      %v2341 = vpop.permute.xlu0 %2340
      %2342 = vrot.lane.b32.xlu0 %v905, 112
      %v2343 = vpop.permute.xlu0 %2342
      %2344 = vrot.lane.b32.xlu0 %v906, 112
      %v2345 = vpop.permute.xlu0 %2344
      %2346 = vrot.lane.b32.xlu0 %v907, 112
      %v2347 = vpop.permute.xlu0 %2346
      %2348 = vrot.lane.b32.xlu0 %v908, 112
      %v2349 = vpop.permute.xlu0 %2348
      %2350 = vrot.lane.b32.xlu0 %v909, 112
      %v2351 = vpop.permute.xlu0 %2350
      %2352 = vrot.lane.b32.xlu0 %v910, 112
      %v2353 = vpop.permute.xlu0 %2352
      %2354 = vrot.lane.b32.xlu0 %v911, 112
      %v2355 = vpop.permute.xlu0 %2354
      %2356 = vrot.lane.b32.xlu0 %v912, 112
      %v2357 = vpop.permute.xlu0 %2356
      %2358 = vrot.lane.b32.xlu0 %v913, 112
      %v2359 = vpop.permute.xlu0 %2358
      %2360 = vrot.lane.b32.xlu0 %v914, 112
      %v2361 = vpop.permute.xlu0 %2360
      %2362 = vrot.lane.b32.xlu0 %v915, 112
      %v2363 = vpop.permute.xlu0 %2362
      %2364 = vrot.lane.b32.xlu0 %v916, 112
      %v2365 = vpop.permute.xlu0 %2364
      %2366 = vrot.lane.b32.xlu0 %v917, 112
      %v2367 = vpop.permute.xlu0 %2366
      %2368 = vrot.lane.b32.xlu0 %v918, 112
      %v2369 = vpop.permute.xlu0 %2368
      %2370 = vrot.lane.b32.xlu0 %v919, 112
      %v2371 = vpop.permute.xlu0 %2370
      %2372 = vrot.lane.b32.xlu0 %v1985, 112
      %v2373 = vpop.permute.xlu0 %2372
      %2374 = vrot.lane.b32.xlu0 %v1986, 112
      %v2375 = vpop.permute.xlu0 %2374
      %2376 = vrot.lane.b32.xlu0 %v1987, 112
      %v2377 = vpop.permute.xlu0 %2376
      %2378 = vrot.lane.b32.xlu0 %v1988, 112
      %v2379 = vpop.permute.xlu0 %2378
      %2380 = vrot.lane.b32.xlu0 %v1989, 112
      %v2381 = vpop.permute.xlu0 %2380
      %2382 = vrot.lane.b32.xlu0 %v1990, 112
      %v2383 = vpop.permute.xlu0 %2382
      %2384 = vrot.lane.b32.xlu0 %v2335, 112
      %v2385 = vpop.permute.xlu0 %2384
      %vm2386 = vcmask 130048
      %v2388 = vsel %vm2386, %v508, %v742
      %v2390 = vsel %vm2386, %v509, %v744
      %v2392 = vsel %vm2386, %v510, %v746
      %v2394 = vsel %vm2386, %v511, %v748
      %v2396 = vsel %vm2386, %v512, %v750
      %v2398 = vsel %vm2386, %v513, %v752
      %v2400 = vsel %vm2386, %v514, %v754
      %v2402 = vsel %vm2386, %v515, %v756
      %v2404 = vsel %vm2386, %v516, %v758
      %v2406 = vsel %vm2386, %v517, %v760
      %v2408 = vsel %vm2386, %v518, %v762
      %v2410 = vsel %vm2386, %v519, %v764
      %v2412 = vsel %vm2386, %v520, %v766
      %v2414 = vsel %vm2386, %v521, %v768
      %v2416 = vsel %vm2386, %v522, %v770
      %v2418 = vsel %vm2386, %v523, %v772
      %v2420 = vsel %vm2386, %v524, %v774
      %v2422 = vsel %vm2386, %v525, %v776
      %v2424 = vsel %vm2386, %v526, %v778
      %v2426 = vsel %vm2386, %v527, %v780
      %v2428 = vsel %vm2386, %v528, %v782
      %v2430 = vsel %vm2386, %v529, %v784
      %v2432 = vsel %vm2386, %v530, %v786
      %v2434 = vsel %vm2386, %v531, %v788
      %v2436 = vsel %vm2386, %v532, %v790
      %vm2437 = vcmask 261120
      %v2439 = vsel %vm2437, %v2388, %v844
      %v2441 = vsel %vm2437, %v2390, %v846
      %v2443 = vsel %vm2437, %v2392, %v848
      %v2445 = vsel %vm2437, %v2394, %v850
      %v2447 = vsel %vm2437, %v2396, %v852
      %v2449 = vsel %vm2437, %v2398, %v854
      %v2451 = vsel %vm2437, %v2400, %v856
      %v2453 = vsel %vm2437, %v2402, %v858
      %v2455 = vsel %vm2437, %v2404, %v860
      %v2457 = vsel %vm2437, %v2406, %v862
      %v2459 = vsel %vm2437, %v2408, %v864
      %v2461 = vsel %vm2437, %v2410, %v866
      %v2463 = vsel %vm2437, %v2412, %v868
      %v2465 = vsel %vm2437, %v2414, %v870
      %v2467 = vsel %vm2437, %v2416, %v872
      %v2469 = vsel %vm2437, %v2418, %v874
      %v2471 = vsel %vm2437, %v2420, %v876
      %v2473 = vsel %vm2437, %v2422, %v878
      %v2475 = vsel %vm2437, %v2424, %v880
      %v2477 = vsel %vm2437, %v2426, %v882
      %v2479 = vsel %vm2437, %v2428, %v884
      %v2481 = vsel %vm2437, %v2430, %v886
      %v2483 = vsel %vm2437, %v2432, %v888
      %v2485 = vsel %vm2437, %v2434, %v890
      %v2487 = vsel %vm2437, %v2436, %v892
      %vm2488 = vcmask 392192
      %v2490 = vsel %vm2488, %v2439, %v973
      %v2492 = vsel %vm2488, %v2441, %v975
      %v2494 = vsel %vm2488, %v2443, %v977
      %v2496 = vsel %vm2488, %v2445, %v979
      %v2498 = vsel %vm2488, %v2447, %v981
      %v2500 = vsel %vm2488, %v2449, %v983
      %v2502 = vsel %vm2488, %v2451, %v985
      %v2504 = vsel %vm2488, %v2453, %v987
      %v2506 = vsel %vm2488, %v2455, %v989
      %v2508 = vsel %vm2488, %v2457, %v991
      %v2510 = vsel %vm2488, %v2459, %v993
      %v2512 = vsel %vm2488, %v2461, %v995
      %v2514 = vsel %vm2488, %v2463, %v997
      %v2516 = vsel %vm2488, %v2465, %v999
      %v2518 = vsel %vm2488, %v2467, %v1001
      %v2520 = vsel %vm2488, %v2469, %v1003
      %v2522 = vsel %vm2488, %v2471, %v1005
      %v2524 = vsel %vm2488, %v2473, %v1007
      %v2526 = vsel %vm2488, %v2475, %v1009
      %v2528 = vsel %vm2488, %v2477, %v1011
      %v2530 = vsel %vm2488, %v2479, %v1013
      %v2532 = vsel %vm2488, %v2481, %v1015
      %v2534 = vsel %vm2488, %v2483, %v1017
      %v2536 = vsel %vm2488, %v2485, %v1019
      %v2538 = vsel %vm2488, %v2487, %v1021
      %vm2539 = vcmask 523264
      %v2541 = vsel %vm2539, %v2490, %v1257
      %v2543 = vsel %vm2539, %v2492, %v1259
      %v2545 = vsel %vm2539, %v2494, %v1261
      %v2547 = vsel %vm2539, %v2496, %v1263
      %v2549 = vsel %vm2539, %v2498, %v1265
      %v2551 = vsel %vm2539, %v2500, %v1267
      %v2553 = vsel %vm2539, %v2502, %v1269
      %v2555 = vsel %vm2539, %v2504, %v1271
      %v2557 = vsel %vm2539, %v2506, %v1273
      %v2559 = vsel %vm2539, %v2508, %v1275
      %v2561 = vsel %vm2539, %v2510, %v1277
      %v2563 = vsel %vm2539, %v2512, %v1279
      %v2565 = vsel %vm2539, %v2514, %v1281
      %v2567 = vsel %vm2539, %v2516, %v1283
      %v2569 = vsel %vm2539, %v2518, %v1285
      %v2571 = vsel %vm2539, %v2520, %v1287
      %v2573 = vsel %vm2539, %v2522, %v1289
      %v2575 = vsel %vm2539, %v2524, %v1291
      %v2577 = vsel %vm2539, %v2526, %v1293
      %v2579 = vsel %vm2539, %v2528, %v1295
      %v2581 = vsel %vm2539, %v2530, %v1297
      %v2583 = vsel %vm2539, %v2532, %v1299
      %v2585 = vsel %vm2539, %v2534, %v1301
      %v2587 = vsel %vm2539, %v2536, %v1303
      %v2589 = vsel %vm2539, %v2538, %v1305
      %vm2590 = vcmask 654336
      %v2592 = vsel %vm2590, %v2541, %v1359
      %v2594 = vsel %vm2590, %v2543, %v1361
      %v2596 = vsel %vm2590, %v2545, %v1363
      %v2598 = vsel %vm2590, %v2547, %v1365
      %v2600 = vsel %vm2590, %v2549, %v1367
      %v2602 = vsel %vm2590, %v2551, %v1369
      %v2604 = vsel %vm2590, %v2553, %v1371
      %v2606 = vsel %vm2590, %v2555, %v1373
      %v2608 = vsel %vm2590, %v2557, %v1375
      %v2610 = vsel %vm2590, %v2559, %v1377
      %v2612 = vsel %vm2590, %v2561, %v1379
      %v2614 = vsel %vm2590, %v2563, %v1381
      %v2616 = vsel %vm2590, %v2565, %v1383
      %v2618 = vsel %vm2590, %v2567, %v1385
      %v2620 = vsel %vm2590, %v2569, %v1387
      %v2622 = vsel %vm2590, %v2571, %v1389
      %v2624 = vsel %vm2590, %v2573, %v1391
      %v2626 = vsel %vm2590, %v2575, %v1393
      %v2628 = vsel %vm2590, %v2577, %v1395
      %v2630 = vsel %vm2590, %v2579, %v1397
      %v2632 = vsel %vm2590, %v2581, %v1399
      %v2634 = vsel %vm2590, %v2583, %v1401
      %v2636 = vsel %vm2590, %v2585, %v1403
      %v2638 = vsel %vm2590, %v2587, %v1405
      %v2640 = vsel %vm2590, %v2589, %v1407
      %vm2641 = vcmask 785408
      %v2643 = vsel %vm2641, %v2592, %v1464
      %v2645 = vsel %vm2641, %v2594, %v1466
      %v2647 = vsel %vm2641, %v2596, %v1468
      %v2649 = vsel %vm2641, %v2598, %v1470
      %v2651 = vsel %vm2641, %v2600, %v1472
      %v2653 = vsel %vm2641, %v2602, %v1474
      %v2655 = vsel %vm2641, %v2604, %v1476
      %v2657 = vsel %vm2641, %v2606, %v1478
      %v2659 = vsel %vm2641, %v2608, %v1480
      %v2661 = vsel %vm2641, %v2610, %v1482
      %v2663 = vsel %vm2641, %v2612, %v1484
      %v2665 = vsel %vm2641, %v2614, %v1486
      %v2667 = vsel %vm2641, %v2616, %v1488
      %v2669 = vsel %vm2641, %v2618, %v1490
      %v2671 = vsel %vm2641, %v2620, %v1492
      %v2673 = vsel %vm2641, %v2622, %v1494
      %v2675 = vsel %vm2641, %v2624, %v1496
      %v2677 = vsel %vm2641, %v2626, %v1498
      %v2679 = vsel %vm2641, %v2628, %v1500
      %v2681 = vsel %vm2641, %v2630, %v1502
      %v2683 = vsel %vm2641, %v2632, %v1504
      %v2685 = vsel %vm2641, %v2634, %v1506
      %v2687 = vsel %vm2641, %v2636, %v1508
      %v2689 = vsel %vm2641, %v2638, %v1510
      %v2691 = vsel %vm2641, %v2640, %v1512
      %vm2692 = vcmask 916480
      %v2694 = vsel %vm2692, %v2643, %v1628
      %v2697 = vsel %vm2692, %v2645, %v1630
      %v2700 = vsel %vm2692, %v2647, %v1632
      %v2703 = vsel %vm2692, %v2649, %v1634
      %v2706 = vsel %vm2692, %v2651, %v1636
      %v2709 = vsel %vm2692, %v2653, %v1638
      %v2712 = vsel %vm2692, %v2655, %v1640
      %v2715 = vsel %vm2692, %v2657, %v1642
      %v2718 = vsel %vm2692, %v2659, %v1644
      %v2721 = vsel %vm2692, %v2661, %v1646
      %v2724 = vsel %vm2692, %v2663, %v1648
      %v2727 = vsel %vm2692, %v2665, %v1650
      %v2730 = vsel %vm2692, %v2667, %v1652
      %v2733 = vsel %vm2692, %v2669, %v1654
      %v2736 = vsel %vm2692, %v2671, %v1656
      %v2739 = vsel %vm2692, %v2673, %v1658
      %v2742 = vsel %vm2692, %v2675, %v1660
      %v2745 = vsel %vm2692, %v2677, %v1662
      %v2748 = vsel %vm2692, %v2679, %v1664
      %v2751 = vsel %vm2692, %v2681, %v1666
      %v2754 = vsel %vm2692, %v2683, %v1668
      %v2757 = vsel %vm2692, %v2685, %v1670
      %v2760 = vsel %vm2692, %v2687, %v1672
      %v2763 = vsel %vm2692, %v2689, %v1674
      %v2766 = vsel %vm2692, %v2691, %v1676
      %v2770 = vsel %vm2386, %v1680, %v1768
      %v2773 = vsel %vm2386, %v1682, %v1770
      %v2776 = vsel %vm2386, %v1684, %v1772
      %v2779 = vsel %vm2386, %v1686, %v1774
      %v2782 = vsel %vm2386, %v1688, %v1776
      %v2785 = vsel %vm2386, %v1690, %v1778
      %v2788 = vsel %vm2386, %v1692, %v1780
      %v2791 = vsel %vm2386, %v1694, %v1782
      %v2794 = vsel %vm2386, %v1696, %v1784
      %v2797 = vsel %vm2386, %v1698, %v1786
      %v2800 = vsel %vm2386, %v1700, %v1788
      %v2803 = vsel %vm2386, %v1702, %v1790
      %v2806 = vsel %vm2386, %v1704, %v1792
      %v2809 = vsel %vm2386, %v1706, %v1794
      %v2812 = vsel %vm2386, %v1708, %v1796
      %v2815 = vsel %vm2386, %v1710, %v1798
      %v2818 = vsel %vm2386, %v1712, %v1800
      %v2821 = vsel %vm2386, %v1714, %v1802
      %v2824 = vsel %vm2386, %v1716, %v1804
      %v2827 = vsel %vm2386, %v1718, %v1806
      %v2830 = vsel %vm2386, %v1720, %v1808
      %v2833 = vsel %vm2386, %v1722, %v1810
      %v2836 = vsel %vm2386, %v1724, %v1812
      %v2839 = vsel %vm2386, %v1726, %v1814
      %v2842 = vsel %vm2386, %v1728, %v1816
      %v2844 = vsel %vm2437, %v2770, %v1872
      %v2846 = vsel %vm2437, %v2773, %v1874
      %v2848 = vsel %vm2437, %v2776, %v1876
      %v2850 = vsel %vm2437, %v2779, %v1878
      %v2852 = vsel %vm2437, %v2782, %v1880
      %v2854 = vsel %vm2437, %v2785, %v1882
      %v2856 = vsel %vm2437, %v2788, %v1884
      %v2858 = vsel %vm2437, %v2791, %v1886
      %v2860 = vsel %vm2437, %v2794, %v1888
      %v2862 = vsel %vm2437, %v2797, %v1890
      %v2864 = vsel %vm2437, %v2800, %v1892
      %v2866 = vsel %vm2437, %v2803, %v1894
      %v2868 = vsel %vm2437, %v2806, %v1896
      %v2870 = vsel %vm2437, %v2809, %v1898
      %v2872 = vsel %vm2437, %v2812, %v1900
      %v2874 = vsel %vm2437, %v2815, %v1902
      %v2876 = vsel %vm2437, %v2818, %v1904
      %v2878 = vsel %vm2437, %v2821, %v1906
      %v2880 = vsel %vm2437, %v2824, %v1908
      %v2882 = vsel %vm2437, %v2827, %v1910
      %v2884 = vsel %vm2437, %v2830, %v1912
      %v2886 = vsel %vm2437, %v2833, %v1914
      %v2888 = vsel %vm2437, %v2836, %v1916
      %v2890 = vsel %vm2437, %v2839, %v1918
      %v2892 = vsel %vm2437, %v2842, %v1920
      %v2894 = vsel %vm2488, %v2844, %v1934
      %v2896 = vsel %vm2488, %v2846, %v1936
      %v2898 = vsel %vm2488, %v2848, %v1938
      %v2900 = vsel %vm2488, %v2850, %v1940
      %v2902 = vsel %vm2488, %v2852, %v1942
      %v2904 = vsel %vm2488, %v2854, %v1944
      %v2906 = vsel %vm2488, %v2856, %v1946
      %v2908 = vsel %vm2488, %v2858, %v1948
      %v2910 = vsel %vm2488, %v2860, %v1950
      %v2912 = vsel %vm2488, %v2862, %v1952
      %v2914 = vsel %vm2488, %v2864, %v1954
      %v2916 = vsel %vm2488, %v2866, %v1956
      %v2918 = vsel %vm2488, %v2868, %v1958
      %v2920 = vsel %vm2488, %v2870, %v1960
      %v2922 = vsel %vm2488, %v2872, %v1962
      %v2924 = vsel %vm2488, %v2874, %v1964
      %v2926 = vsel %vm2488, %v2876, %v1966
      %v2928 = vsel %vm2488, %v2878, %v1968
      %v2930 = vsel %vm2488, %v2880, %v1970
      %v2932 = vsel %vm2488, %v2882, %v1972
      %v2934 = vsel %vm2488, %v2884, %v1974
      %v2936 = vsel %vm2488, %v2886, %v1976
      %v2938 = vsel %vm2488, %v2888, %v1978
      %v2940 = vsel %vm2488, %v2890, %v1980
      %v2942 = vsel %vm2488, %v2892, %v1982
      %v2944 = vsel %vm2539, %v2894, %v2044
      %v2946 = vsel %vm2539, %v2896, %v2046
      %v2948 = vsel %vm2539, %v2898, %v2048
      %v2950 = vsel %vm2539, %v2900, %v2050
      %v2952 = vsel %vm2539, %v2902, %v2052
      %v2954 = vsel %vm2539, %v2904, %v2054
      %v2956 = vsel %vm2539, %v2906, %v2056
      %v2958 = vsel %vm2539, %v2908, %v2058
      %v2960 = vsel %vm2539, %v2910, %v2060
      %v2962 = vsel %vm2539, %v2912, %v2062
      %v2964 = vsel %vm2539, %v2914, %v2064
      %v2966 = vsel %vm2539, %v2916, %v2066
      %v2968 = vsel %vm2539, %v2918, %v2068
      %v2970 = vsel %vm2539, %v2920, %v2070
      %v2972 = vsel %vm2539, %v2922, %v2072
      %v2974 = vsel %vm2539, %v2924, %v2074
      %v2976 = vsel %vm2539, %v2926, %v2076
      %v2978 = vsel %vm2539, %v2928, %v2078
      %v2980 = vsel %vm2539, %v2930, %v2080
      %v2982 = vsel %vm2539, %v2932, %v2082
      %v2984 = vsel %vm2539, %v2934, %v2084
      %v2986 = vsel %vm2539, %v2936, %v2086
      %v2988 = vsel %vm2539, %v2938, %v2088
      %v2990 = vsel %vm2539, %v2940, %v2090
      %v2992 = vsel %vm2539, %v2942, %v2092
      %v2994 = vsel %vm2590, %v2944, %v2233
      %v2996 = vsel %vm2590, %v2946, %v2235
      %v2998 = vsel %vm2590, %v2948, %v2237
      %v3000 = vsel %vm2590, %v2950, %v2239
      %v3002 = vsel %vm2590, %v2952, %v2241
      %v3004 = vsel %vm2590, %v2954, %v2243
      %v3006 = vsel %vm2590, %v2956, %v2245
      %v3008 = vsel %vm2590, %v2958, %v2247
      %v3010 = vsel %vm2590, %v2960, %v2249
      %v3012 = vsel %vm2590, %v2962, %v2251
      %v3014 = vsel %vm2590, %v2964, %v2253
      %v3016 = vsel %vm2590, %v2966, %v2255
      %v3018 = vsel %vm2590, %v2968, %v2257
      %v3020 = vsel %vm2590, %v2970, %v2259
      %v3022 = vsel %vm2590, %v2972, %v2261
      %v3024 = vsel %vm2590, %v2974, %v2263
      %v3026 = vsel %vm2590, %v2976, %v2265
      %v3028 = vsel %vm2590, %v2978, %v2267
      %v3030 = vsel %vm2590, %v2980, %v2269
      %v3032 = vsel %vm2590, %v2982, %v2271
      %v3034 = vsel %vm2590, %v2984, %v2273
      %v3036 = vsel %vm2590, %v2986, %v2275
      %v3038 = vsel %vm2590, %v2988, %v2277
      %v3040 = vsel %vm2590, %v2990, %v2279
      %v3042 = vsel %vm2590, %v2992, %v2281
      %v3044 = vsel %vm2641, %v2994, %v2284
      %v3046 = vsel %vm2641, %v2996, %v2286
      %v3048 = vsel %vm2641, %v2998, %v2288
      %v3050 = vsel %vm2641, %v3000, %v2290
      %v3052 = vsel %vm2641, %v3002, %v2292
      %v3054 = vsel %vm2641, %v3004, %v2294
      %v3056 = vsel %vm2641, %v3006, %v2296
      %v3058 = vsel %vm2641, %v3008, %v2298
      %v3060 = vsel %vm2641, %v3010, %v2300
      %v3062 = vsel %vm2641, %v3012, %v2302
      %v3064 = vsel %vm2641, %v3014, %v2304
      %v3066 = vsel %vm2641, %v3016, %v2306
      %v3068 = vsel %vm2641, %v3018, %v2308
      %v3070 = vsel %vm2641, %v3020, %v2310
      %v3072 = vsel %vm2641, %v3022, %v2312
      %v3074 = vsel %vm2641, %v3024, %v2314
      %v3076 = vsel %vm2641, %v3026, %v2316
      %v3078 = vsel %vm2641, %v3028, %v2318
      %v3080 = vsel %vm2641, %v3030, %v2320
      %v3082 = vsel %vm2641, %v3032, %v2322
      %v3084 = vsel %vm2641, %v3034, %v2324
      %v3086 = vsel %vm2641, %v3036, %v2326
      %v3088 = vsel %vm2641, %v3038, %v2328
      %v3090 = vsel %vm2641, %v3040, %v2330
      %v3092 = vsel %vm2641, %v3042, %v2332
      %v3094 = vsel %vm2692, %v3044, %v2337
      %v3097 = vsel %vm2692, %v3046, %v2339
      %v3100 = vsel %vm2692, %v3048, %v2341
      %v3103 = vsel %vm2692, %v3050, %v2343
      %v3106 = vsel %vm2692, %v3052, %v2345
      %v3109 = vsel %vm2692, %v3054, %v2347
      %v3112 = vsel %vm2692, %v3056, %v2349
      %v3115 = vsel %vm2692, %v3058, %v2351
      %v3118 = vsel %vm2692, %v3060, %v2353
      %v3121 = vsel %vm2692, %v3062, %v2355
      %v3124 = vsel %vm2692, %v3064, %v2357
      %v3127 = vsel %vm2692, %v3066, %v2359
      %v3130 = vsel %vm2692, %v3068, %v2361
      %v3133 = vsel %vm2692, %v3070, %v2363
      %v3136 = vsel %vm2692, %v3072, %v2365
      %v3139 = vsel %vm2692, %v3074, %v2367
      %v3142 = vsel %vm2692, %v3076, %v2369
      %v3145 = vsel %vm2692, %v3078, %v2371
      %v3148 = vsel %vm2692, %v3080, %v2373
      %v3151 = vsel %vm2692, %v3082, %v2375
      %v3154 = vsel %vm2692, %v3084, %v2377
      %v3157 = vsel %vm2692, %v3086, %v2379
      %v3160 = vsel %vm2692, %v3088, %v2381
      %v3163 = vsel %vm2692, %v3090, %v2383
      %v3166 = vsel %vm2692, %v3092, %v2385
      %v3169 = vunpack.c.l.b16 %v395
      %v3170 = vpack.c.b16 %v3169, %v3169
      %v3171 = vrot.slane %v1089, 1
      %v3172 = vor.u32 %v1086, %v3171
      %v3173 = vrot.slane %v1098, 1
      %v3174 = vsel %vm536, %v3172, %v3173
      %v3175 = vor.u32 %v1095, %v3173
      %v3176 = vrot.slane %v1107, 1
      %v3177 = vsel %vm536, %v3175, %v3176
      %v3178 = vor.u32 %v1104, %v3176
      %v3179 = vrot.slane %v1116, 1
      %v3180 = vsel %vm536, %v3178, %v3179
      %v3181 = vor.u32 %v1113, %v3179
      %v3182 = vrot.slane %v1125, 1
      %v3183 = vsel %vm536, %v3181, %v3182
      %v3184 = vor.u32 %v1122, %v3182
      %v3185 = vrot.slane %v1134, 1
      %v3186 = vsel %vm536, %v3184, %v3185
      %v3187 = vor.u32 %v1131, %v3185
      %v3188 = vrot.slane %v1143, 1
      %v3189 = vsel %vm536, %v3187, %v3188
      %v3190 = vor.u32 %v1140, %v3188
      %v3191 = vrot.slane %v1152, 1
      %v3192 = vsel %vm536, %v3190, %v3191
      %v3193 = vor.u32 %v1149, %v3191
      %v3194 = vrot.slane %v1161, 1
      %v3195 = vsel %vm536, %v3193, %v3194
      %v3196 = vor.u32 %v1158, %v3194
      %v3197 = vrot.slane %v1170, 1
      %v3198 = vsel %vm536, %v3196, %v3197
      %v3199 = vor.u32 %v1167, %v3197
      %v3200 = vrot.slane %v1179, 1
      %v3201 = vsel %vm536, %v3199, %v3200
      %v3202 = vor.u32 %v1176, %v3200
      %v3203 = vrot.slane %v1188, 1
      %v3204 = vsel %vm536, %v3202, %v3203
      %v3205 = vor.u32 %v1185, %v3203
      %v3206 = vrot.slane %v1197, 1
      %v3207 = vsel %vm536, %v3205, %v3206
      %v3208 = vor.u32 %v1194, %v3206
      %v3209 = vrot.slane %v1206, 1
      %v3210 = vsel %vm536, %v3208, %v3209
      %v3211 = vor.u32 %v1203, %v3209
      %v3212 = vrot.slane %v1215, 1
      %v3213 = vsel %vm536, %v3211, %v3212
      %v3214 = vor.u32 %v1212, %v3212
      %v3215 = vrot.slane %v1224, 1
      %v3216 = vsel %vm536, %v3214, %v3215
      %v3217 = vor.u32 %v1221, %v3215
      %v3218 = vrot.slane %v1233, 1
      %v3219 = vsel %vm536, %v3217, %v3218
      %v3220 = vor.u32 %v1230, %v3218
      %v3221 = vrot.slane %v1242, 1
      %v3222 = vsel %vm536, %v3220, %v3221
      %v3223 = vor.u32 %v1239, %v3221
      %v3224 = vrot.slane %v2173, 1
      %v3225 = vsel %vm536, %v3223, %v3224
      %v3226 = vor.u32 %v2170, %v3224
      %v3227 = vrot.slane %v2182, 1
      %v3228 = vsel %vm536, %v3226, %v3227
      %v3229 = vor.u32 %v2179, %v3227
      %v3230 = vrot.slane %v2191, 1
      %v3231 = vsel %vm536, %v3229, %v3230
      %v3232 = vor.u32 %v2188, %v3230
      %v3233 = vrot.slane %v2200, 1
      %v3234 = vsel %vm536, %v3232, %v3233
      %v3235 = vor.u32 %v2197, %v3233
      %v3236 = vrot.slane %v2209, 1
      %v3237 = vsel %vm536, %v3235, %v3236
      %v3238 = vor.u32 %v2206, %v3236
      %v3239 = vrot.slane %v2218, 1
      %v3240 = vsel %vm536, %v3238, %v3239
      %v3241 = vor.u32 %v2215, %v3239
      %v3243 = vshll.u32 %v2335, 16
      %v3245 = vrot.slane %v3243, 1
      %v3246 = vsel %vm536, %v3241, %v3245
      %v3247 = vshrl.u32 %v2335, 16
      %v3249 = vor.u32 %v3247, %v3245
      %v3251 = vshll.u32 %v3170, 16
      %v3253 = vrot.slane %v3251, 1
      %v3254 = vsel %vm536, %v3249, %v3253
      %v3255 = vshrl.u32 %v3170, 16
      %3257 = vrot.lane.b32.xlu0 %v3174, 16
      %v3258 = vpop.permute.xlu0 %3257
      %3259 = vrot.lane.b32.xlu0 %v3177, 16
      %v3260 = vpop.permute.xlu0 %3259
      %3261 = vrot.lane.b32.xlu0 %v3180, 16
      %v3262 = vpop.permute.xlu0 %3261
      %3263 = vrot.lane.b32.xlu0 %v3183, 16
      %v3264 = vpop.permute.xlu0 %3263
      %3265 = vrot.lane.b32.xlu0 %v3186, 16
      %v3266 = vpop.permute.xlu0 %3265
      %3267 = vrot.lane.b32.xlu0 %v3189, 16
      %v3268 = vpop.permute.xlu0 %3267
      %3269 = vrot.lane.b32.xlu0 %v3192, 16
      %v3270 = vpop.permute.xlu0 %3269
      %3271 = vrot.lane.b32.xlu0 %v3195, 16
      %v3272 = vpop.permute.xlu0 %3271
      %3273 = vrot.lane.b32.xlu0 %v3198, 16
      %v3274 = vpop.permute.xlu0 %3273
      %3275 = vrot.lane.b32.xlu0 %v3201, 16
      %v3276 = vpop.permute.xlu0 %3275
      %3277 = vrot.lane.b32.xlu0 %v3204, 16
      %v3278 = vpop.permute.xlu0 %3277
      %3279 = vrot.lane.b32.xlu0 %v3207, 16
      %v3280 = vpop.permute.xlu0 %3279
      %3281 = vrot.lane.b32.xlu0 %v3210, 16
      %v3282 = vpop.permute.xlu0 %3281
      %3283 = vrot.lane.b32.xlu0 %v3213, 16
      %v3284 = vpop.permute.xlu0 %3283
      %3285 = vrot.lane.b32.xlu0 %v3216, 16
      %v3286 = vpop.permute.xlu0 %3285
      %3287 = vrot.lane.b32.xlu0 %v3219, 16
      %v3288 = vpop.permute.xlu0 %3287
      %3289 = vrot.lane.b32.xlu0 %v3222, 16
      %v3290 = vpop.permute.xlu0 %3289
      %3291 = vrot.lane.b32.xlu0 %v3225, 16
      %v3292 = vpop.permute.xlu0 %3291
      %3293 = vrot.lane.b32.xlu0 %v3228, 16
      %v3294 = vpop.permute.xlu0 %3293
      %3295 = vrot.lane.b32.xlu0 %v3231, 16
      %v3296 = vpop.permute.xlu0 %3295
      %3297 = vrot.lane.b32.xlu0 %v3234, 16
      %v3298 = vpop.permute.xlu0 %3297
      %3299 = vrot.lane.b32.xlu0 %v3237, 16
      %v3300 = vpop.permute.xlu0 %3299
      %3301 = vrot.lane.b32.xlu0 %v3240, 16
      %v3302 = vpop.permute.xlu0 %3301
      %3303 = vrot.lane.b32.xlu0 %v3246, 16
      %v3304 = vpop.permute.xlu0 %3303
      %3305 = vrot.lane.b32.xlu0 %v3254, 16
      %v3306 = vpop.permute.xlu0 %3305
      %3307 = vrot.lane.b32.xlu0 %v3255, 16
      %v3308 = vpop.permute.xlu0 %3307
      %v3318 = vunpack.c.l.b16 %v396
      %v3319 = vunpack.c.l.b16 %v397
      %v3320 = vunpack.c.l.b16 %v398
      %v3321 = vunpack.c.l.b16 %v399
      %v3322 = vunpack.c.l.b16 %v400
      %v3323 = vunpack.c.l.b16 %v401
      %v3324 = vunpack.c.l.b16 %v402
      %v3325 = vunpack.c.l.b16 %v403
      %v3326 = vunpack.c.l.b16 %v404
      %v3327 = vpack.c.b16 %v3318, %v3169
      %v3328 = vpack.c.b16 %v3320, %v3319
      %v3329 = vpack.c.b16 %v3322, %v3321
      %v3330 = vpack.c.b16 %v3324, %v3323
      %v3331 = vpack.c.b16 %v3326, %v3325
      %vm3332 = vsmask.f32 256
      %v3333 = vrot.slane %v1131, 7
      %v3334 = vor.u32 %v3333, %v1134
      %v3335 = vrot.slane %v1140, 7
      %v3336 = vor.u32 %v3335, %v1143
      %v3337 = vsel %vm3332, %v3333, %v3336
      %v3338 = vrot.slane %v1149, 7
      %v3339 = vor.u32 %v3338, %v1152
      %v3340 = vsel %vm3332, %v3335, %v3339
      %v3341 = vrot.slane %v1158, 7
      %v3342 = vor.u32 %v3341, %v1161
      %v3343 = vsel %vm3332, %v3338, %v3342
      %v3344 = vrot.slane %v1167, 7
      %v3345 = vor.u32 %v3344, %v1170
      %v3346 = vsel %vm3332, %v3341, %v3345
      %v3347 = vrot.slane %v1176, 7
      %v3348 = vor.u32 %v3347, %v1179
      %v3349 = vsel %vm3332, %v3344, %v3348
      %v3350 = vrot.slane %v1185, 7
      %v3351 = vor.u32 %v3350, %v1188
      %v3352 = vsel %vm3332, %v3347, %v3351
      %v3353 = vrot.slane %v1194, 7
      %v3354 = vor.u32 %v3353, %v1197
      %v3355 = vsel %vm3332, %v3350, %v3354
      %v3356 = vrot.slane %v1203, 7
      %v3357 = vor.u32 %v3356, %v1206
      %v3358 = vsel %vm3332, %v3353, %v3357
      %v3359 = vrot.slane %v1212, 7
      %v3360 = vor.u32 %v3359, %v1215
      %v3361 = vsel %vm3332, %v3356, %v3360
      %v3362 = vrot.slane %v1221, 7
      %v3363 = vor.u32 %v3362, %v1224
      %v3364 = vsel %vm3332, %v3359, %v3363
      %v3365 = vrot.slane %v1230, 7
      %v3366 = vor.u32 %v3365, %v1233
      %v3367 = vsel %vm3332, %v3362, %v3366
      %v3368 = vrot.slane %v1239, 7
      %v3369 = vor.u32 %v3368, %v1242
      %v3370 = vsel %vm3332, %v3365, %v3369
      %v3371 = vrot.slane %v2170, 7
      %v3372 = vor.u32 %v3371, %v2173
      %v3373 = vsel %vm3332, %v3368, %v3372
      %v3374 = vrot.slane %v2179, 7
      %v3375 = vor.u32 %v3374, %v2182
      %v3376 = vsel %vm3332, %v3371, %v3375
      %v3377 = vrot.slane %v2188, 7
      %v3378 = vor.u32 %v3377, %v2191
      %v3379 = vsel %vm3332, %v3374, %v3378
      %v3380 = vrot.slane %v2197, 7
      %v3381 = vor.u32 %v3380, %v2200
      %v3382 = vsel %vm3332, %v3377, %v3381
      %v3383 = vrot.slane %v2206, 7
      %v3384 = vor.u32 %v3383, %v2209
      %v3385 = vsel %vm3332, %v3380, %v3384
      %v3386 = vrot.slane %v2215, 7
      %v3387 = vor.u32 %v3386, %v2218
      %v3388 = vsel %vm3332, %v3383, %v3387
      %v3389 = vrot.slane %v3247, 7
      %v3390 = vor.u32 %v3389, %v3243
      %v3391 = vsel %vm3332, %v3386, %v3390
      %v3393 = vshrl.u32 %v3327, 16
      %v3395 = vrot.slane %v3393, 7
      %v3396 = vshll.u32 %v3327, 16
      %v3398 = vor.u32 %v3395, %v3396
      %v3399 = vsel %vm3332, %v3389, %v3398
      %v3401 = vshrl.u32 %v3328, 16
      %v3403 = vrot.slane %v3401, 7
      %v3404 = vshll.u32 %v3328, 16
      %v3406 = vor.u32 %v3403, %v3404
      %v3407 = vsel %vm3332, %v3395, %v3406
      %v3409 = vshrl.u32 %v3329, 16
      %v3411 = vrot.slane %v3409, 7
      %v3412 = vshll.u32 %v3329, 16
      %v3414 = vor.u32 %v3411, %v3412
      %v3415 = vsel %vm3332, %v3403, %v3414
      %v3417 = vshrl.u32 %v3330, 16
      %v3419 = vrot.slane %v3417, 7
      %v3420 = vshll.u32 %v3330, 16
      %v3422 = vor.u32 %v3419, %v3420
      %v3423 = vsel %vm3332, %v3411, %v3422
      %v3425 = vshrl.u32 %v3331, 16
      %v3427 = vrot.slane %v3425, 7
      %v3428 = vshll.u32 %v3331, 16
      %v3430 = vor.u32 %v3427, %v3428
      %v3431 = vsel %vm3332, %v3419, %v3430
      %3432 = vrot.lane.b32.xlu0 %v3334, 32
      %v3433 = vpop.permute.xlu0 %3432
      %3434 = vrot.lane.b32.xlu0 %v3337, 32
      %v3435 = vpop.permute.xlu0 %3434
      %3436 = vrot.lane.b32.xlu0 %v3340, 32
      %v3437 = vpop.permute.xlu0 %3436
      %3438 = vrot.lane.b32.xlu0 %v3343, 32
      %v3439 = vpop.permute.xlu0 %3438
      %3440 = vrot.lane.b32.xlu0 %v3346, 32
      %v3441 = vpop.permute.xlu0 %3440
      %3442 = vrot.lane.b32.xlu0 %v3349, 32
      %v3443 = vpop.permute.xlu0 %3442
      %3444 = vrot.lane.b32.xlu0 %v3352, 32
      %v3445 = vpop.permute.xlu0 %3444
      %3446 = vrot.lane.b32.xlu0 %v3355, 32
      %v3447 = vpop.permute.xlu0 %3446
      %3448 = vrot.lane.b32.xlu0 %v3358, 32
      %v3449 = vpop.permute.xlu0 %3448
      %3450 = vrot.lane.b32.xlu0 %v3361, 32
      %v3451 = vpop.permute.xlu0 %3450
      %3452 = vrot.lane.b32.xlu0 %v3364, 32
      %v3453 = vpop.permute.xlu0 %3452
      %3454 = vrot.lane.b32.xlu0 %v3367, 32
      %v3455 = vpop.permute.xlu0 %3454
      %3456 = vrot.lane.b32.xlu0 %v3370, 32
      %v3457 = vpop.permute.xlu0 %3456
      %3458 = vrot.lane.b32.xlu0 %v3373, 32
      %v3459 = vpop.permute.xlu0 %3458
      %3460 = vrot.lane.b32.xlu0 %v3376, 32
      %v3461 = vpop.permute.xlu0 %3460
      %3462 = vrot.lane.b32.xlu0 %v3379, 32
      %v3463 = vpop.permute.xlu0 %3462
      %3464 = vrot.lane.b32.xlu0 %v3382, 32
      %v3465 = vpop.permute.xlu0 %3464
      %3466 = vrot.lane.b32.xlu0 %v3385, 32
      %v3467 = vpop.permute.xlu0 %3466
      %3468 = vrot.lane.b32.xlu0 %v3388, 32
      %v3469 = vpop.permute.xlu0 %3468
      %3470 = vrot.lane.b32.xlu0 %v3391, 32
      %v3471 = vpop.permute.xlu0 %3470
      %3472 = vrot.lane.b32.xlu0 %v3399, 32
      %v3473 = vpop.permute.xlu0 %3472
      %3474 = vrot.lane.b32.xlu0 %v3407, 32
      %v3475 = vpop.permute.xlu0 %3474
      %3476 = vrot.lane.b32.xlu0 %v3415, 32
      %v3477 = vpop.permute.xlu0 %3476
      %3478 = vrot.lane.b32.xlu0 %v3423, 32
      %v3479 = vpop.permute.xlu0 %3478
      %3480 = vrot.lane.b32.xlu0 %v3431, 32
      %v3481 = vpop.permute.xlu0 %3480
      %3482 = vrot.lane.b32.xlu0 %v3427, 32
      %v3483 = vpop.permute.xlu0 %3482
      %v3485 = vunpack.c.l.b16 %v405
      %v3486 = vpack.c.b16 %v3485, %v3485
      %3487 = vrot.lane.b32.xlu0 %v907, 48
      %v3488 = vpop.permute.xlu0 %3487
      %3489 = vrot.lane.b32.xlu0 %v908, 48
      %v3490 = vpop.permute.xlu0 %3489
      %3491 = vrot.lane.b32.xlu0 %v909, 48
      %v3492 = vpop.permute.xlu0 %3491
      %3493 = vrot.lane.b32.xlu0 %v910, 48
      %v3494 = vpop.permute.xlu0 %3493
      %3495 = vrot.lane.b32.xlu0 %v911, 48
      %v3496 = vpop.permute.xlu0 %3495
      %3497 = vrot.lane.b32.xlu0 %v912, 48
      %v3498 = vpop.permute.xlu0 %3497
      %3499 = vrot.lane.b32.xlu0 %v913, 48
      %v3500 = vpop.permute.xlu0 %3499
      %3501 = vrot.lane.b32.xlu0 %v914, 48
      %v3502 = vpop.permute.xlu0 %3501
      %3503 = vrot.lane.b32.xlu0 %v915, 48
      %v3504 = vpop.permute.xlu0 %3503
      %3505 = vrot.lane.b32.xlu0 %v916, 48
      %v3506 = vpop.permute.xlu0 %3505
      %3507 = vrot.lane.b32.xlu0 %v917, 48
      %v3508 = vpop.permute.xlu0 %3507
      %3509 = vrot.lane.b32.xlu0 %v918, 48
      %v3510 = vpop.permute.xlu0 %3509
      %3511 = vrot.lane.b32.xlu0 %v919, 48
      %v3512 = vpop.permute.xlu0 %3511
      %3513 = vrot.lane.b32.xlu0 %v1985, 48
      %v3514 = vpop.permute.xlu0 %3513
      %3515 = vrot.lane.b32.xlu0 %v1986, 48
      %v3516 = vpop.permute.xlu0 %3515
      %3517 = vrot.lane.b32.xlu0 %v1987, 48
      %v3518 = vpop.permute.xlu0 %3517
      %3519 = vrot.lane.b32.xlu0 %v1988, 48
      %v3520 = vpop.permute.xlu0 %3519
      %3521 = vrot.lane.b32.xlu0 %v1989, 48
      %v3522 = vpop.permute.xlu0 %3521
      %3523 = vrot.lane.b32.xlu0 %v1990, 48
      %v3524 = vpop.permute.xlu0 %3523
      %3525 = vrot.lane.b32.xlu0 %v2335, 48
      %v3526 = vpop.permute.xlu0 %3525
      %3527 = vrot.lane.b32.xlu0 %v3327, 48
      %v3528 = vpop.permute.xlu0 %3527
      %3529 = vrot.lane.b32.xlu0 %v3328, 48
      %v3530 = vpop.permute.xlu0 %3529
      %3531 = vrot.lane.b32.xlu0 %v3329, 48
      %v3532 = vpop.permute.xlu0 %3531
      %3533 = vrot.lane.b32.xlu0 %v3330, 48
      %v3534 = vpop.permute.xlu0 %3533
      %3535 = vrot.lane.b32.xlu0 %v3331, 48
      %v3536 = vpop.permute.xlu0 %3535
      %3537 = vrot.lane.b32.xlu0 %v3486, 48
      %v3538 = vpop.permute.xlu0 %3537
      %v3539 = vrot.slane %v3396, 1
      %v3540 = vsel %vm536, %v3249, %v3539
      %v3541 = vor.u32 %v3393, %v3539
      %v3542 = vrot.slane %v3404, 1
      %v3543 = vsel %vm536, %v3541, %v3542
      %v3544 = vor.u32 %v3401, %v3542
      %v3545 = vrot.slane %v3412, 1
      %v3546 = vsel %vm536, %v3544, %v3545
      %v3547 = vor.u32 %v3409, %v3545
      %v3548 = vrot.slane %v3420, 1
      %v3549 = vsel %vm536, %v3547, %v3548
      %v3550 = vor.u32 %v3417, %v3548
      %v3551 = vrot.slane %v3428, 1
      %v3552 = vsel %vm536, %v3550, %v3551
      %v3553 = vor.u32 %v3425, %v3551
      %v3555 = vshll.u32 %v3486, 16
      %v3557 = vrot.slane %v3555, 1
      %v3558 = vsel %vm536, %v3553, %v3557
      %v3559 = vshrl.u32 %v3486, 16
      %3561 = vrot.lane.b32.xlu0 %v3189, 64
      %v3562 = vpop.permute.xlu0 %3561
      %3563 = vrot.lane.b32.xlu0 %v3192, 64
      %v3564 = vpop.permute.xlu0 %3563
      %3565 = vrot.lane.b32.xlu0 %v3195, 64
      %v3566 = vpop.permute.xlu0 %3565
      %3567 = vrot.lane.b32.xlu0 %v3198, 64
      %v3568 = vpop.permute.xlu0 %3567
      %3569 = vrot.lane.b32.xlu0 %v3201, 64
      %v3570 = vpop.permute.xlu0 %3569
      %3571 = vrot.lane.b32.xlu0 %v3204, 64
      %v3572 = vpop.permute.xlu0 %3571
      %3573 = vrot.lane.b32.xlu0 %v3207, 64
      %v3574 = vpop.permute.xlu0 %3573
      %3575 = vrot.lane.b32.xlu0 %v3210, 64
      %v3576 = vpop.permute.xlu0 %3575
      %3577 = vrot.lane.b32.xlu0 %v3213, 64
      %v3578 = vpop.permute.xlu0 %3577
      %3579 = vrot.lane.b32.xlu0 %v3216, 64
      %v3580 = vpop.permute.xlu0 %3579
      %3581 = vrot.lane.b32.xlu0 %v3219, 64
      %v3582 = vpop.permute.xlu0 %3581
      %3583 = vrot.lane.b32.xlu0 %v3222, 64
      %v3584 = vpop.permute.xlu0 %3583
      %3585 = vrot.lane.b32.xlu0 %v3225, 64
      %v3586 = vpop.permute.xlu0 %3585
      %3587 = vrot.lane.b32.xlu0 %v3228, 64
      %v3588 = vpop.permute.xlu0 %3587
      %3589 = vrot.lane.b32.xlu0 %v3231, 64
      %v3590 = vpop.permute.xlu0 %3589
      %3591 = vrot.lane.b32.xlu0 %v3234, 64
      %v3592 = vpop.permute.xlu0 %3591
      %3593 = vrot.lane.b32.xlu0 %v3237, 64
      %v3594 = vpop.permute.xlu0 %3593
      %3595 = vrot.lane.b32.xlu0 %v3240, 64
      %v3596 = vpop.permute.xlu0 %3595
      %3597 = vrot.lane.b32.xlu0 %v3246, 64
      %v3598 = vpop.permute.xlu0 %3597
      %3599 = vrot.lane.b32.xlu0 %v3540, 64
      %v3600 = vpop.permute.xlu0 %3599
      %3601 = vrot.lane.b32.xlu0 %v3543, 64
      %v3602 = vpop.permute.xlu0 %3601
      %3603 = vrot.lane.b32.xlu0 %v3546, 64
      %v3604 = vpop.permute.xlu0 %3603
      %3605 = vrot.lane.b32.xlu0 %v3549, 64
      %v3606 = vpop.permute.xlu0 %3605
      %3607 = vrot.lane.b32.xlu0 %v3552, 64
      %v3608 = vpop.permute.xlu0 %3607
      %3609 = vrot.lane.b32.xlu0 %v3558, 64
      %v3610 = vpop.permute.xlu0 %3609
      %3611 = vrot.lane.b32.xlu0 %v3559, 64
      %v3612 = vpop.permute.xlu0 %3611
      %v3614 = vunpack.c.l.b16 %v406
      %v3615 = vpack.c.b16 %v3169, %v2334
      %v3616 = vpack.c.b16 %v3319, %v3318
      %v3617 = vpack.c.b16 %v3321, %v3320
      %v3618 = vpack.c.b16 %v3323, %v3322
      %v3619 = vpack.c.b16 %v3325, %v3324
      %v3620 = vpack.c.b16 %v3485, %v3326
      %v3621 = vpack.c.b16 %v3614, %v3614
      %v3622 = vrot.slane %v1613, 1
      %v3623 = vsel %vm536, %v735, %v3622
      %v3624 = vor.u32 %v1610, %v3622
      %v3625 = vrot.slane %v1821, 1
      %v3626 = vsel %vm536, %v3624, %v3625
      %v3627 = vor.u32 %v1818, %v3625
      %v3628 = vrot.slane %v1830, 1
      %v3629 = vsel %vm536, %v3627, %v3628
      %v3630 = vor.u32 %v1827, %v3628
      %v3631 = vrot.slane %v1839, 1
      %v3632 = vsel %vm536, %v3630, %v3631
      %v3633 = vor.u32 %v1836, %v3631
      %v3634 = vrot.slane %v1848, 1
      %v3635 = vsel %vm536, %v3633, %v3634
      %v3636 = vor.u32 %v1845, %v3634
      %v3637 = vrot.slane %v1857, 1
      %v3638 = vsel %vm536, %v3636, %v3637
      %v3639 = vor.u32 %v1854, %v3637
      %v3641 = vshll.u32 %v2282, 16
      %v3643 = vrot.slane %v3641, 1
      %v3644 = vsel %vm536, %v3639, %v3643
      %v3645 = vshrl.u32 %v2282, 16
      %v3647 = vor.u32 %v3645, %v3643
      %v3649 = vshll.u32 %v3615, 16
      %v3651 = vrot.slane %v3649, 1
      %v3652 = vsel %vm536, %v3647, %v3651
      %v3653 = vshrl.u32 %v3615, 16
      %v3655 = vor.u32 %v3653, %v3651
      %v3657 = vshll.u32 %v3616, 16
      %v3659 = vrot.slane %v3657, 1
      %v3660 = vsel %vm536, %v3655, %v3659
      %v3661 = vshrl.u32 %v3616, 16
      %v3663 = vor.u32 %v3661, %v3659
      %v3665 = vshll.u32 %v3617, 16
      %v3667 = vrot.slane %v3665, 1
      %v3668 = vsel %vm536, %v3663, %v3667
      %v3669 = vshrl.u32 %v3617, 16
      %v3671 = vor.u32 %v3669, %v3667
      %v3673 = vshll.u32 %v3618, 16
      %v3675 = vrot.slane %v3673, 1
      %v3676 = vsel %vm536, %v3671, %v3675
      %v3677 = vshrl.u32 %v3618, 16
      %v3679 = vor.u32 %v3677, %v3675
      %v3681 = vshll.u32 %v3619, 16
      %v3683 = vrot.slane %v3681, 1
      %v3684 = vsel %vm536, %v3679, %v3683
      %v3685 = vshrl.u32 %v3619, 16
      %v3687 = vor.u32 %v3685, %v3683
      %v3689 = vshll.u32 %v3620, 16
      %v3691 = vrot.slane %v3689, 1
      %v3692 = vsel %vm536, %v3687, %v3691
      %v3693 = vshrl.u32 %v3620, 16
      %v3695 = vor.u32 %v3693, %v3691
      %v3697 = vshll.u32 %v3621, 16
      %v3699 = vrot.slane %v3697, 1
      %v3700 = vsel %vm536, %v3695, %v3699
      %v3701 = vshrl.u32 %v3621, 16
      %3703 = vrot.lane.b32.xlu0 %v652, 80
      %v3704 = vpop.permute.xlu0 %3703
      %3705 = vrot.lane.b32.xlu0 %v660, 80
      %v3706 = vpop.permute.xlu0 %3705
      %3707 = vrot.lane.b32.xlu0 %v668, 80
      %v3708 = vpop.permute.xlu0 %3707
      %3709 = vrot.lane.b32.xlu0 %v676, 80
      %v3710 = vpop.permute.xlu0 %3709
      %3711 = vrot.lane.b32.xlu0 %v684, 80
      %v3712 = vpop.permute.xlu0 %3711
      %3713 = vrot.lane.b32.xlu0 %v692, 80
      %v3714 = vpop.permute.xlu0 %3713
      %3715 = vrot.lane.b32.xlu0 %v700, 80
      %v3716 = vpop.permute.xlu0 %3715
      %3717 = vrot.lane.b32.xlu0 %v708, 80
      %v3718 = vpop.permute.xlu0 %3717
      %3719 = vrot.lane.b32.xlu0 %v716, 80
      %v3720 = vpop.permute.xlu0 %3719
      %3721 = vrot.lane.b32.xlu0 %v724, 80
      %v3722 = vpop.permute.xlu0 %3721
      %3723 = vrot.lane.b32.xlu0 %v732, 80
      %v3724 = vpop.permute.xlu0 %3723
      %3725 = vrot.lane.b32.xlu0 %v3623, 80
      %v3726 = vpop.permute.xlu0 %3725
      %3727 = vrot.lane.b32.xlu0 %v3626, 80
      %v3728 = vpop.permute.xlu0 %3727
      %3729 = vrot.lane.b32.xlu0 %v3629, 80
      %v3730 = vpop.permute.xlu0 %3729
      %3731 = vrot.lane.b32.xlu0 %v3632, 80
      %v3732 = vpop.permute.xlu0 %3731
      %3733 = vrot.lane.b32.xlu0 %v3635, 80
      %v3734 = vpop.permute.xlu0 %3733
      %3735 = vrot.lane.b32.xlu0 %v3638, 80
      %v3736 = vpop.permute.xlu0 %3735
      %3737 = vrot.lane.b32.xlu0 %v3644, 80
      %v3738 = vpop.permute.xlu0 %3737
      %3739 = vrot.lane.b32.xlu0 %v3652, 80
      %v3740 = vpop.permute.xlu0 %3739
      %3741 = vrot.lane.b32.xlu0 %v3660, 80
      %v3742 = vpop.permute.xlu0 %3741
      %3743 = vrot.lane.b32.xlu0 %v3668, 80
      %v3744 = vpop.permute.xlu0 %3743
      %3745 = vrot.lane.b32.xlu0 %v3676, 80
      %v3746 = vpop.permute.xlu0 %3745
      %3747 = vrot.lane.b32.xlu0 %v3684, 80
      %v3748 = vpop.permute.xlu0 %3747
      %3749 = vrot.lane.b32.xlu0 %v3692, 80
      %v3750 = vpop.permute.xlu0 %3749
      %3751 = vrot.lane.b32.xlu0 %v3700, 80
      %v3752 = vpop.permute.xlu0 %3751
      %3753 = vrot.lane.b32.xlu0 %v3701, 80
      %v3754 = vpop.permute.xlu0 %3753
      %v3755 = vrot.slane %v1410, 1
      %v3756 = vsel %vm791, %v839, %v3755
      %v3757 = vrot.slane %v1749, 1
      %v3758 = vsel %vm791, %v3755, %v3757
      %v3759 = vrot.slane %v1750, 1
      %v3760 = vsel %vm791, %v3757, %v3759
      %v3761 = vrot.slane %v1751, 1
      %v3762 = vsel %vm791, %v3759, %v3761
      %v3763 = vrot.slane %v1752, 1
      %v3764 = vsel %vm791, %v3761, %v3763
      %v3765 = vrot.slane %v1753, 1
      %v3766 = vsel %vm791, %v3763, %v3765
      %v3767 = vrot.slane %v2282, 1
      %v3768 = vsel %vm791, %v3765, %v3767
      %v3769 = vrot.slane %v3615, 1
      %v3770 = vsel %vm791, %v3767, %v3769
      %v3771 = vrot.slane %v3616, 1
      %v3772 = vsel %vm791, %v3769, %v3771
      %v3773 = vrot.slane %v3617, 1
      %v3774 = vsel %vm791, %v3771, %v3773
      %v3775 = vrot.slane %v3618, 1
      %v3776 = vsel %vm791, %v3773, %v3775
      %v3777 = vrot.slane %v3619, 1
      %v3778 = vsel %vm791, %v3775, %v3777
      %v3779 = vrot.slane %v3620, 1
      %v3780 = vsel %vm791, %v3777, %v3779
      %v3781 = vrot.slane %v3621, 1
      %v3782 = vsel %vm791, %v3779, %v3781
      %3783 = vrot.lane.b32.xlu0 %v820, 96
      %v3784 = vpop.permute.xlu0 %3783
      %3785 = vrot.lane.b32.xlu0 %v822, 96
      %v3786 = vpop.permute.xlu0 %3785
      %3787 = vrot.lane.b32.xlu0 %v824, 96
      %v3788 = vpop.permute.xlu0 %3787
      %3789 = vrot.lane.b32.xlu0 %v826, 96
      %v3790 = vpop.permute.xlu0 %3789
      %3791 = vrot.lane.b32.xlu0 %v828, 96
      %v3792 = vpop.permute.xlu0 %3791
      %3793 = vrot.lane.b32.xlu0 %v830, 96
      %v3794 = vpop.permute.xlu0 %3793
      %3795 = vrot.lane.b32.xlu0 %v832, 96
      %v3796 = vpop.permute.xlu0 %3795
      %3797 = vrot.lane.b32.xlu0 %v834, 96
      %v3798 = vpop.permute.xlu0 %3797
      %3799 = vrot.lane.b32.xlu0 %v836, 96
      %v3800 = vpop.permute.xlu0 %3799
      %3801 = vrot.lane.b32.xlu0 %v838, 96
      %v3802 = vpop.permute.xlu0 %3801
      %3803 = vrot.lane.b32.xlu0 %v840, 96
      %v3804 = vpop.permute.xlu0 %3803
      %3805 = vrot.lane.b32.xlu0 %v3756, 96
      %v3806 = vpop.permute.xlu0 %3805
      %3807 = vrot.lane.b32.xlu0 %v3758, 96
      %v3808 = vpop.permute.xlu0 %3807
      %3809 = vrot.lane.b32.xlu0 %v3760, 96
      %v3810 = vpop.permute.xlu0 %3809
      %3811 = vrot.lane.b32.xlu0 %v3762, 96
      %v3812 = vpop.permute.xlu0 %3811
      %3813 = vrot.lane.b32.xlu0 %v3764, 96
      %v3814 = vpop.permute.xlu0 %3813
      %3815 = vrot.lane.b32.xlu0 %v3766, 96
      %v3816 = vpop.permute.xlu0 %3815
      %3817 = vrot.lane.b32.xlu0 %v3768, 96
      %v3818 = vpop.permute.xlu0 %3817
      %3819 = vrot.lane.b32.xlu0 %v3770, 96
      %v3820 = vpop.permute.xlu0 %3819
      %3821 = vrot.lane.b32.xlu0 %v3772, 96
      %v3822 = vpop.permute.xlu0 %3821
      %3823 = vrot.lane.b32.xlu0 %v3774, 96
      %v3824 = vpop.permute.xlu0 %3823
      %3825 = vrot.lane.b32.xlu0 %v3776, 96
      %v3826 = vpop.permute.xlu0 %3825
      %3827 = vrot.lane.b32.xlu0 %v3778, 96
      %v3828 = vpop.permute.xlu0 %3827
      %3829 = vrot.lane.b32.xlu0 %v3780, 96
      %v3830 = vpop.permute.xlu0 %3829
      %3831 = vrot.lane.b32.xlu0 %v3782, 96
      %v3832 = vpop.permute.xlu0 %3831
      %3833 = vrot.lane.b32.xlu0 %v3781, 96
      %v3834 = vpop.permute.xlu0 %3833
      %v3835 = vrot.slane %v645, 1
      %v3836 = vrot.slane %v641, 2
      %v3837 = vor.u32 %v3835, %v3836
      %v3838 = vrot.slane %v653, 1
      %v3839 = vrot.slane %v649, 2
      %v3840 = vor.u32 %v3838, %v3839
      %v3841 = vsel %vm1022, %v3837, %v3840
      %v3842 = vrot.slane %v661, 1
      %v3843 = vrot.slane %v657, 2
      %v3844 = vor.u32 %v3842, %v3843
      %v3845 = vsel %vm1022, %v3840, %v3844
      %v3846 = vrot.slane %v669, 1
      %v3847 = vrot.slane %v665, 2
      %v3848 = vor.u32 %v3846, %v3847
      %v3849 = vsel %vm1022, %v3844, %v3848
      %v3850 = vrot.slane %v677, 1
      %v3851 = vrot.slane %v673, 2
      %v3852 = vor.u32 %v3850, %v3851
      %v3853 = vsel %vm1022, %v3848, %v3852
      %v3854 = vrot.slane %v685, 1
      %v3855 = vrot.slane %v681, 2
      %v3856 = vor.u32 %v3854, %v3855
      %v3857 = vsel %vm1022, %v3852, %v3856
      %v3858 = vrot.slane %v693, 1
      %v3859 = vrot.slane %v689, 2
      %v3860 = vor.u32 %v3858, %v3859
      %v3861 = vsel %vm1022, %v3856, %v3860
      %v3862 = vrot.slane %v701, 1
      %v3863 = vrot.slane %v697, 2
      %v3864 = vor.u32 %v3862, %v3863
      %v3865 = vsel %vm1022, %v3860, %v3864
      %v3866 = vrot.slane %v709, 1
      %v3867 = vrot.slane %v705, 2
      %v3868 = vor.u32 %v3866, %v3867
      %v3869 = vsel %vm1022, %v3864, %v3868
      %v3870 = vrot.slane %v717, 1
      %v3871 = vrot.slane %v713, 2
      %v3872 = vor.u32 %v3870, %v3871
      %v3873 = vsel %vm1022, %v3868, %v3872
      %v3874 = vrot.slane %v725, 1
      %v3875 = vrot.slane %v721, 2
      %v3876 = vor.u32 %v3874, %v3875
      %v3877 = vsel %vm1022, %v3872, %v3876
      %v3878 = vrot.slane %v733, 1
      %v3879 = vrot.slane %v729, 2
      %v3880 = vor.u32 %v3878, %v3879
      %v3881 = vsel %vm1022, %v3876, %v3880
      %v3882 = vrot.slane %v1610, 1
      %v3883 = vrot.slane %v1613, 2
      %v3884 = vor.u32 %v3882, %v3883
      %v3885 = vsel %vm1022, %v3880, %v3884
      %v3886 = vrot.slane %v1818, 1
      %v3887 = vrot.slane %v1821, 2
      %v3888 = vor.u32 %v3886, %v3887
      %v3889 = vsel %vm1022, %v3884, %v3888
      %v3890 = vrot.slane %v1827, 1
      %v3891 = vrot.slane %v1830, 2
      %v3892 = vor.u32 %v3890, %v3891
      %v3893 = vsel %vm1022, %v3888, %v3892
      %v3894 = vrot.slane %v1836, 1
      %v3895 = vrot.slane %v1839, 2
      %v3896 = vor.u32 %v3894, %v3895
      %v3897 = vsel %vm1022, %v3892, %v3896
      %v3898 = vrot.slane %v1845, 1
      %v3899 = vrot.slane %v1848, 2
      %v3900 = vor.u32 %v3898, %v3899
      %v3901 = vsel %vm1022, %v3896, %v3900
      %v3902 = vrot.slane %v1854, 1
      %v3903 = vrot.slane %v1857, 2
      %v3904 = vor.u32 %v3902, %v3903
      %v3905 = vsel %vm1022, %v3900, %v3904
      %v3906 = vrot.slane %v3645, 1
      %v3907 = vrot.slane %v3641, 2
      %v3908 = vor.u32 %v3906, %v3907
      %v3909 = vsel %vm1022, %v3904, %v3908
      %v3910 = vrot.slane %v3653, 1
      %v3911 = vrot.slane %v3649, 2
      %v3912 = vor.u32 %v3910, %v3911
      %v3913 = vsel %vm1022, %v3908, %v3912
      %v3914 = vrot.slane %v3661, 1
      %v3915 = vrot.slane %v3657, 2
      %v3916 = vor.u32 %v3914, %v3915
      %v3917 = vsel %vm1022, %v3912, %v3916
      %v3918 = vrot.slane %v3669, 1
      %v3919 = vrot.slane %v3665, 2
      %v3920 = vor.u32 %v3918, %v3919
      %v3921 = vsel %vm1022, %v3916, %v3920
      %v3922 = vrot.slane %v3677, 1
      %v3923 = vrot.slane %v3673, 2
      %v3924 = vor.u32 %v3922, %v3923
      %v3925 = vsel %vm1022, %v3920, %v3924
      %v3926 = vrot.slane %v3685, 1
      %v3927 = vrot.slane %v3681, 2
      %v3928 = vor.u32 %v3926, %v3927
      %v3929 = vsel %vm1022, %v3924, %v3928
      %v3930 = vrot.slane %v3693, 1
      %v3931 = vrot.slane %v3689, 2
      %v3932 = vor.u32 %v3930, %v3931
      %v3933 = vsel %vm1022, %v3928, %v3932
      %v3934 = vrot.slane %v3701, 1
      %v3935 = vrot.slane %v3697, 2
      %v3936 = vor.u32 %v3934, %v3935
      %v3937 = vsel %vm1022, %v3932, %v3936
      %3938 = vrot.lane.b32.xlu0 %v3841, 112
      %v3939 = vpop.permute.xlu0 %3938
      %3940 = vrot.lane.b32.xlu0 %v3845, 112
      %v3941 = vpop.permute.xlu0 %3940
      %3942 = vrot.lane.b32.xlu0 %v3849, 112
      %v3943 = vpop.permute.xlu0 %3942
      %3944 = vrot.lane.b32.xlu0 %v3853, 112
      %v3945 = vpop.permute.xlu0 %3944
      %3946 = vrot.lane.b32.xlu0 %v3857, 112
      %v3947 = vpop.permute.xlu0 %3946
      %3948 = vrot.lane.b32.xlu0 %v3861, 112
      %v3949 = vpop.permute.xlu0 %3948
      %3950 = vrot.lane.b32.xlu0 %v3865, 112
      %v3951 = vpop.permute.xlu0 %3950
      %3952 = vrot.lane.b32.xlu0 %v3869, 112
      %v3953 = vpop.permute.xlu0 %3952
      %3954 = vrot.lane.b32.xlu0 %v3873, 112
      %v3955 = vpop.permute.xlu0 %3954
      %3956 = vrot.lane.b32.xlu0 %v3877, 112
      %v3957 = vpop.permute.xlu0 %3956
      %3958 = vrot.lane.b32.xlu0 %v3881, 112
      %v3959 = vpop.permute.xlu0 %3958
      %3960 = vrot.lane.b32.xlu0 %v3885, 112
      %v3961 = vpop.permute.xlu0 %3960
      %3962 = vrot.lane.b32.xlu0 %v3889, 112
      %v3963 = vpop.permute.xlu0 %3962
      %3964 = vrot.lane.b32.xlu0 %v3893, 112
      %v3965 = vpop.permute.xlu0 %3964
      %3966 = vrot.lane.b32.xlu0 %v3897, 112
      %v3967 = vpop.permute.xlu0 %3966
      %3968 = vrot.lane.b32.xlu0 %v3901, 112
      %v3969 = vpop.permute.xlu0 %3968
      %3970 = vrot.lane.b32.xlu0 %v3905, 112
      %v3971 = vpop.permute.xlu0 %3970
      %3972 = vrot.lane.b32.xlu0 %v3909, 112
      %v3973 = vpop.permute.xlu0 %3972
      %3974 = vrot.lane.b32.xlu0 %v3913, 112
      %v3975 = vpop.permute.xlu0 %3974
      %3976 = vrot.lane.b32.xlu0 %v3917, 112
      %v3977 = vpop.permute.xlu0 %3976
      %3978 = vrot.lane.b32.xlu0 %v3921, 112
      %v3979 = vpop.permute.xlu0 %3978
      %3980 = vrot.lane.b32.xlu0 %v3925, 112
      %v3981 = vpop.permute.xlu0 %3980
      %3982 = vrot.lane.b32.xlu0 %v3929, 112
      %v3983 = vpop.permute.xlu0 %3982
      %3984 = vrot.lane.b32.xlu0 %v3933, 112
      %v3985 = vpop.permute.xlu0 %3984
      %3986 = vrot.lane.b32.xlu0 %v3937, 112
      %v3987 = vpop.permute.xlu0 %3986
      %3988 = vrot.lane.b32.xlu0 %v3934, 112
      %v3989 = vpop.permute.xlu0 %3988
      %v3991 = vunpack.c.l.b16 %v407
      %v3992 = vpack.c.b16 %v3614, %v3485
      %v3993 = vpack.c.b16 %v3991, %v3991
      %v3994 = vrot.slane %v2170, 1
      %v3995 = vrot.slane %v2173, 2
      %v3996 = vor.u32 %v3994, %v3995
      %v3997 = vsel %vm1022, %v1245, %v3996
      %v3998 = vrot.slane %v2179, 1
      %v3999 = vrot.slane %v2182, 2
      %v4000 = vor.u32 %v3998, %v3999
      %v4001 = vsel %vm1022, %v3996, %v4000
      %v4002 = vrot.slane %v2188, 1
      %v4003 = vrot.slane %v2191, 2
      %v4004 = vor.u32 %v4002, %v4003
      %v4005 = vsel %vm1022, %v4000, %v4004
      %v4006 = vrot.slane %v2197, 1
      %v4007 = vrot.slane %v2200, 2
      %v4008 = vor.u32 %v4006, %v4007
      %v4009 = vsel %vm1022, %v4004, %v4008
      %v4010 = vrot.slane %v2206, 1
      %v4011 = vrot.slane %v2209, 2
      %v4012 = vor.u32 %v4010, %v4011
      %v4013 = vsel %vm1022, %v4008, %v4012
      %v4014 = vrot.slane %v2215, 1
      %v4015 = vrot.slane %v2218, 2
      %v4016 = vor.u32 %v4014, %v4015
      %v4017 = vsel %vm1022, %v4012, %v4016
      %v4018 = vrot.slane %v3247, 1
      %v4019 = vrot.slane %v3243, 2
      %v4020 = vor.u32 %v4018, %v4019
      %v4021 = vsel %vm1022, %v4016, %v4020
      %v4022 = vrot.slane %v3393, 1
      %v4023 = vrot.slane %v3396, 2
      %v4024 = vor.u32 %v4022, %v4023
      %v4025 = vsel %vm1022, %v4020, %v4024
      %v4026 = vrot.slane %v3401, 1
      %v4027 = vrot.slane %v3404, 2
      %v4028 = vor.u32 %v4026, %v4027
      %v4029 = vsel %vm1022, %v4024, %v4028
      %v4030 = vrot.slane %v3409, 1
      %v4031 = vrot.slane %v3412, 2
      %v4032 = vor.u32 %v4030, %v4031
      %v4033 = vsel %vm1022, %v4028, %v4032
      %v4034 = vrot.slane %v3417, 1
      %v4035 = vrot.slane %v3420, 2
      %v4036 = vor.u32 %v4034, %v4035
      %v4037 = vsel %vm1022, %v4032, %v4036
      %v4038 = vrot.slane %v3425, 1
      %v4039 = vrot.slane %v3428, 2
      %v4040 = vor.u32 %v4038, %v4039
      %v4041 = vsel %vm1022, %v4036, %v4040
      %v4043 = vshrl.u32 %v3992, 16
      %v4045 = vrot.slane %v4043, 1
      %v4046 = vshll.u32 %v3992, 16
      %v4048 = vrot.slane %v4046, 2
      %v4049 = vor.u32 %v4045, %v4048
      %v4050 = vsel %vm1022, %v4040, %v4049
      %v4052 = vshrl.u32 %v3993, 16
      %v4054 = vrot.slane %v4052, 1
      %v4055 = vshll.u32 %v3993, 16
      %v4057 = vrot.slane %v4055, 2
      %v4058 = vor.u32 %v4054, %v4057
      %v4059 = vsel %vm1022, %v4049, %v4058
      %v4060 = vrot.slane %v1985, 2
      %v4061 = vsel %vm1306, %v1354, %v4060
      %v4062 = vrot.slane %v1986, 2
      %v4063 = vsel %vm1306, %v4060, %v4062
      %v4064 = vrot.slane %v1987, 2
      %v4065 = vsel %vm1306, %v4062, %v4064
      %v4066 = vrot.slane %v1988, 2
      %v4067 = vsel %vm1306, %v4064, %v4066
      %v4068 = vrot.slane %v1989, 2
      %v4069 = vsel %vm1306, %v4066, %v4068
      %v4070 = vrot.slane %v1990, 2
      %v4071 = vsel %vm1306, %v4068, %v4070
      %v4072 = vrot.slane %v2335, 2
      %v4073 = vsel %vm1306, %v4070, %v4072
      %v4074 = vrot.slane %v3327, 2
      %v4075 = vsel %vm1306, %v4072, %v4074
      %v4076 = vrot.slane %v3328, 2
      %v4077 = vsel %vm1306, %v4074, %v4076
      %v4078 = vrot.slane %v3329, 2
      %v4079 = vsel %vm1306, %v4076, %v4078
      %v4080 = vrot.slane %v3330, 2
      %v4081 = vsel %vm1306, %v4078, %v4080
      %v4082 = vrot.slane %v3331, 2
      %v4083 = vsel %vm1306, %v4080, %v4082
      %v4084 = vrot.slane %v3992, 2
      %v4085 = vsel %vm1306, %v4082, %v4084
      %v4086 = vrot.slane %v3993, 2
      %v4087 = vsel %vm1306, %v4084, %v4086
      %4088 = vrot.lane.b32.xlu0 %v1335, 16
      %v4089 = vpop.permute.xlu0 %4088
      %4090 = vrot.lane.b32.xlu0 %v1337, 16
      %v4091 = vpop.permute.xlu0 %4090
      %4092 = vrot.lane.b32.xlu0 %v1339, 16
      %v4093 = vpop.permute.xlu0 %4092
      %4094 = vrot.lane.b32.xlu0 %v1341, 16
      %v4095 = vpop.permute.xlu0 %4094
      %4096 = vrot.lane.b32.xlu0 %v1343, 16
      %v4097 = vpop.permute.xlu0 %4096
      %4098 = vrot.lane.b32.xlu0 %v1345, 16
      %v4099 = vpop.permute.xlu0 %4098
      %4100 = vrot.lane.b32.xlu0 %v1347, 16
      %v4101 = vpop.permute.xlu0 %4100
      %4102 = vrot.lane.b32.xlu0 %v1349, 16
      %v4103 = vpop.permute.xlu0 %4102
      %4104 = vrot.lane.b32.xlu0 %v1351, 16
      %v4105 = vpop.permute.xlu0 %4104
      %4106 = vrot.lane.b32.xlu0 %v1353, 16
      %v4107 = vpop.permute.xlu0 %4106
      %4108 = vrot.lane.b32.xlu0 %v1355, 16
      %v4109 = vpop.permute.xlu0 %4108
      %4110 = vrot.lane.b32.xlu0 %v4061, 16
      %v4111 = vpop.permute.xlu0 %4110
      %4112 = vrot.lane.b32.xlu0 %v4063, 16
      %v4113 = vpop.permute.xlu0 %4112
      %4114 = vrot.lane.b32.xlu0 %v4065, 16
      %v4115 = vpop.permute.xlu0 %4114
      %4116 = vrot.lane.b32.xlu0 %v4067, 16
      %v4117 = vpop.permute.xlu0 %4116
      %4118 = vrot.lane.b32.xlu0 %v4069, 16
      %v4119 = vpop.permute.xlu0 %4118
      %4120 = vrot.lane.b32.xlu0 %v4071, 16
      %v4121 = vpop.permute.xlu0 %4120
      %4122 = vrot.lane.b32.xlu0 %v4073, 16
      %v4123 = vpop.permute.xlu0 %4122
      %4124 = vrot.lane.b32.xlu0 %v4075, 16
      %v4125 = vpop.permute.xlu0 %4124
      %4126 = vrot.lane.b32.xlu0 %v4077, 16
      %v4127 = vpop.permute.xlu0 %4126
      %4128 = vrot.lane.b32.xlu0 %v4079, 16
      %v4129 = vpop.permute.xlu0 %4128
      %4130 = vrot.lane.b32.xlu0 %v4081, 16
      %v4131 = vpop.permute.xlu0 %4130
      %4132 = vrot.lane.b32.xlu0 %v4083, 16
      %v4133 = vpop.permute.xlu0 %4132
      %4134 = vrot.lane.b32.xlu0 %v4085, 16
      %v4135 = vpop.permute.xlu0 %4134
      %4136 = vrot.lane.b32.xlu0 %v4087, 16
      %v4137 = vpop.permute.xlu0 %4136
      %4138 = vrot.lane.b32.xlu0 %v4086, 16
      %v4139 = vpop.permute.xlu0 %4138
      %v4140 = vrot.slane %v1140, 2
      %v4141 = vrot.slane %v1143, 3
      %v4142 = vor.u32 %v4140, %v4141
      %v4143 = vrot.slane %v1149, 2
      %v4144 = vrot.slane %v1152, 3
      %v4145 = vor.u32 %v4143, %v4144
      %v4146 = vsel %vm1513, %v4142, %v4145
      %v4147 = vrot.slane %v1158, 2
      %v4148 = vrot.slane %v1161, 3
      %v4149 = vor.u32 %v4147, %v4148
      %v4150 = vsel %vm1513, %v4145, %v4149
      %v4151 = vrot.slane %v1167, 2
      %v4152 = vrot.slane %v1170, 3
      %v4153 = vor.u32 %v4151, %v4152
      %v4154 = vsel %vm1513, %v4149, %v4153
      %v4155 = vrot.slane %v1176, 2
      %v4156 = vrot.slane %v1179, 3
      %v4157 = vor.u32 %v4155, %v4156
      %v4158 = vsel %vm1513, %v4153, %v4157
      %v4159 = vrot.slane %v1185, 2
      %v4160 = vrot.slane %v1188, 3
      %v4161 = vor.u32 %v4159, %v4160
      %v4162 = vsel %vm1513, %v4157, %v4161
      %v4163 = vrot.slane %v1194, 2
      %v4164 = vrot.slane %v1197, 3
      %v4165 = vor.u32 %v4163, %v4164
      %v4166 = vsel %vm1513, %v4161, %v4165
      %v4167 = vrot.slane %v1203, 2
      %v4168 = vrot.slane %v1206, 3
      %v4169 = vor.u32 %v4167, %v4168
      %v4170 = vsel %vm1513, %v4165, %v4169
      %v4171 = vrot.slane %v1212, 2
      %v4172 = vrot.slane %v1215, 3
      %v4173 = vor.u32 %v4171, %v4172
      %v4174 = vsel %vm1513, %v4169, %v4173
      %v4175 = vrot.slane %v1221, 2
      %v4176 = vrot.slane %v1224, 3
      %v4177 = vor.u32 %v4175, %v4176
      %v4178 = vsel %vm1513, %v4173, %v4177
      %v4179 = vrot.slane %v1230, 2
      %v4180 = vrot.slane %v1233, 3
      %v4181 = vor.u32 %v4179, %v4180
      %v4182 = vsel %vm1513, %v4177, %v4181
      %v4183 = vrot.slane %v1239, 2
      %v4184 = vrot.slane %v1242, 3
      %v4185 = vor.u32 %v4183, %v4184
      %v4186 = vsel %vm1513, %v4181, %v4185
      %v4187 = vrot.slane %v2170, 2
      %v4188 = vrot.slane %v2173, 3
      %v4189 = vor.u32 %v4187, %v4188
      %v4190 = vsel %vm1513, %v4185, %v4189
      %v4191 = vrot.slane %v2179, 2
      %v4192 = vrot.slane %v2182, 3
      %v4193 = vor.u32 %v4191, %v4192
      %v4194 = vsel %vm1513, %v4189, %v4193
      %v4195 = vrot.slane %v2188, 2
      %v4196 = vrot.slane %v2191, 3
      %v4197 = vor.u32 %v4195, %v4196
      %v4198 = vsel %vm1513, %v4193, %v4197
      %v4199 = vrot.slane %v2197, 2
      %v4200 = vrot.slane %v2200, 3
      %v4201 = vor.u32 %v4199, %v4200
      %v4202 = vsel %vm1513, %v4197, %v4201
      %v4203 = vrot.slane %v2206, 2
      %v4204 = vrot.slane %v2209, 3
      %v4205 = vor.u32 %v4203, %v4204
      %v4206 = vsel %vm1513, %v4201, %v4205
      %v4207 = vrot.slane %v2215, 2
      %v4208 = vrot.slane %v2218, 3
      %v4209 = vor.u32 %v4207, %v4208
      %v4210 = vsel %vm1513, %v4205, %v4209
      %v4211 = vrot.slane %v3247, 2
      %v4212 = vrot.slane %v3243, 3
      %v4213 = vor.u32 %v4211, %v4212
      %v4214 = vsel %vm1513, %v4209, %v4213
      %v4215 = vrot.slane %v3393, 2
      %v4216 = vrot.slane %v3396, 3
      %v4217 = vor.u32 %v4215, %v4216
      %v4218 = vsel %vm1513, %v4213, %v4217
      %v4219 = vrot.slane %v3401, 2
      %v4220 = vrot.slane %v3404, 3
      %v4221 = vor.u32 %v4219, %v4220
      %v4222 = vsel %vm1513, %v4217, %v4221
      %v4223 = vrot.slane %v3409, 2
      %v4224 = vrot.slane %v3412, 3
      %v4225 = vor.u32 %v4223, %v4224
      %v4226 = vsel %vm1513, %v4221, %v4225
      %v4227 = vrot.slane %v3417, 2
      %v4228 = vrot.slane %v3420, 3
      %v4229 = vor.u32 %v4227, %v4228
      %v4230 = vsel %vm1513, %v4225, %v4229
      %v4231 = vrot.slane %v3425, 2
      %v4232 = vrot.slane %v3428, 3
      %v4233 = vor.u32 %v4231, %v4232
      %v4234 = vsel %vm1513, %v4229, %v4233
      %v4235 = vrot.slane %v4043, 2
      %v4236 = vrot.slane %v4046, 3
      %v4237 = vor.u32 %v4235, %v4236
      %v4238 = vsel %vm1513, %v4233, %v4237
      %v4239 = vrot.slane %v4052, 2
      %v4240 = vrot.slane %v4055, 3
      %v4241 = vor.u32 %v4239, %v4240
      %v4242 = vsel %vm1513, %v4237, %v4241
      %4243 = vrot.lane.b32.xlu0 %v4146, 32
      %v4244 = vpop.permute.xlu0 %4243
      %4245 = vrot.lane.b32.xlu0 %v4150, 32
      %v4246 = vpop.permute.xlu0 %4245
      %4247 = vrot.lane.b32.xlu0 %v4154, 32
      %v4248 = vpop.permute.xlu0 %4247
      %4249 = vrot.lane.b32.xlu0 %v4158, 32
      %v4250 = vpop.permute.xlu0 %4249
      %4251 = vrot.lane.b32.xlu0 %v4162, 32
      %v4252 = vpop.permute.xlu0 %4251
      %4253 = vrot.lane.b32.xlu0 %v4166, 32
      %v4254 = vpop.permute.xlu0 %4253
      %4255 = vrot.lane.b32.xlu0 %v4170, 32
      %v4256 = vpop.permute.xlu0 %4255
      %4257 = vrot.lane.b32.xlu0 %v4174, 32
      %v4258 = vpop.permute.xlu0 %4257
      %4259 = vrot.lane.b32.xlu0 %v4178, 32
      %v4260 = vpop.permute.xlu0 %4259
      %4261 = vrot.lane.b32.xlu0 %v4182, 32
      %v4262 = vpop.permute.xlu0 %4261
      %4263 = vrot.lane.b32.xlu0 %v4186, 32
      %v4264 = vpop.permute.xlu0 %4263
      %4265 = vrot.lane.b32.xlu0 %v4190, 32
      %v4266 = vpop.permute.xlu0 %4265
      %4267 = vrot.lane.b32.xlu0 %v4194, 32
      %v4268 = vpop.permute.xlu0 %4267
      %4269 = vrot.lane.b32.xlu0 %v4198, 32
      %v4270 = vpop.permute.xlu0 %4269
      %4271 = vrot.lane.b32.xlu0 %v4202, 32
      %v4272 = vpop.permute.xlu0 %4271
      %4273 = vrot.lane.b32.xlu0 %v4206, 32
      %v4274 = vpop.permute.xlu0 %4273
      %4275 = vrot.lane.b32.xlu0 %v4210, 32
      %v4276 = vpop.permute.xlu0 %4275
      %4277 = vrot.lane.b32.xlu0 %v4214, 32
      %v4278 = vpop.permute.xlu0 %4277
      %4279 = vrot.lane.b32.xlu0 %v4218, 32
      %v4280 = vpop.permute.xlu0 %4279
      %4281 = vrot.lane.b32.xlu0 %v4222, 32
      %v4282 = vpop.permute.xlu0 %4281
      %4283 = vrot.lane.b32.xlu0 %v4226, 32
      %v4284 = vpop.permute.xlu0 %4283
      %4285 = vrot.lane.b32.xlu0 %v4230, 32
      %v4286 = vpop.permute.xlu0 %4285
      %4287 = vrot.lane.b32.xlu0 %v4234, 32
      %v4288 = vpop.permute.xlu0 %4287
      %4289 = vrot.lane.b32.xlu0 %v4238, 32
      %v4290 = vpop.permute.xlu0 %4289
      %4291 = vrot.lane.b32.xlu0 %v4242, 32
      %v4292 = vpop.permute.xlu0 %4291
      %4293 = vrot.lane.b32.xlu0 %v4239, 32
      %v4294 = vpop.permute.xlu0 %4293
      %v4296 = vsel %vm2386, %v902, %v3258
      %v4298 = vsel %vm2386, %v903, %v3260
      %v4300 = vsel %vm2386, %v904, %v3262
      %v4302 = vsel %vm2386, %v905, %v3264
      %v4304 = vsel %vm2386, %v906, %v3266
      %v4306 = vsel %vm2386, %v907, %v3268
      %v4308 = vsel %vm2386, %v908, %v3270
      %v4310 = vsel %vm2386, %v909, %v3272
      %v4312 = vsel %vm2386, %v910, %v3274
      %v4314 = vsel %vm2386, %v911, %v3276
      %v4316 = vsel %vm2386, %v912, %v3278
      %v4318 = vsel %vm2386, %v913, %v3280
      %v4320 = vsel %vm2386, %v914, %v3282
      %v4322 = vsel %vm2386, %v915, %v3284
      %v4324 = vsel %vm2386, %v916, %v3286
      %v4326 = vsel %vm2386, %v917, %v3288
      %v4328 = vsel %vm2386, %v918, %v3290
      %v4330 = vsel %vm2386, %v919, %v3292
      %v4332 = vsel %vm2386, %v1985, %v3294
      %v4334 = vsel %vm2386, %v1986, %v3296
      %v4336 = vsel %vm2386, %v1987, %v3298
      %v4338 = vsel %vm2386, %v1988, %v3300
      %v4340 = vsel %vm2386, %v1989, %v3302
      %v4342 = vsel %vm2386, %v1990, %v3304
      %v4344 = vsel %vm2386, %v2335, %v3306
      %v4346 = vsel %vm2386, %v3170, %v3308
      %v4348 = vsel %vm2437, %v4296, %v3433
      %v4350 = vsel %vm2437, %v4298, %v3435
      %v4352 = vsel %vm2437, %v4300, %v3437
      %v4354 = vsel %vm2437, %v4302, %v3439
      %v4356 = vsel %vm2437, %v4304, %v3441
      %v4358 = vsel %vm2437, %v4306, %v3443
      %v4360 = vsel %vm2437, %v4308, %v3445
      %v4362 = vsel %vm2437, %v4310, %v3447
      %v4364 = vsel %vm2437, %v4312, %v3449
      %v4366 = vsel %vm2437, %v4314, %v3451
      %v4368 = vsel %vm2437, %v4316, %v3453
      %v4370 = vsel %vm2437, %v4318, %v3455
      %v4372 = vsel %vm2437, %v4320, %v3457
      %v4374 = vsel %vm2437, %v4322, %v3459
      %v4376 = vsel %vm2437, %v4324, %v3461
      %v4378 = vsel %vm2437, %v4326, %v3463
      %v4380 = vsel %vm2437, %v4328, %v3465
      %v4382 = vsel %vm2437, %v4330, %v3467
      %v4384 = vsel %vm2437, %v4332, %v3469
      %v4386 = vsel %vm2437, %v4334, %v3471
      %v4388 = vsel %vm2437, %v4336, %v3473
      %v4390 = vsel %vm2437, %v4338, %v3475
      %v4392 = vsel %vm2437, %v4340, %v3477
      %v4394 = vsel %vm2437, %v4342, %v3479
      %v4396 = vsel %vm2437, %v4344, %v3481
      %v4398 = vsel %vm2437, %v4346, %v3483
      %v4400 = vsel %vm2488, %v4348, %v3488
      %v4402 = vsel %vm2488, %v4350, %v3490
      %v4404 = vsel %vm2488, %v4352, %v3492
      %v4406 = vsel %vm2488, %v4354, %v3494
      %v4408 = vsel %vm2488, %v4356, %v3496
      %v4410 = vsel %vm2488, %v4358, %v3498
      %v4412 = vsel %vm2488, %v4360, %v3500
      %v4414 = vsel %vm2488, %v4362, %v3502
      %v4416 = vsel %vm2488, %v4364, %v3504
      %v4418 = vsel %vm2488, %v4366, %v3506
      %v4420 = vsel %vm2488, %v4368, %v3508
      %v4422 = vsel %vm2488, %v4370, %v3510
      %v4424 = vsel %vm2488, %v4372, %v3512
      %v4426 = vsel %vm2488, %v4374, %v3514
      %v4428 = vsel %vm2488, %v4376, %v3516
      %v4430 = vsel %vm2488, %v4378, %v3518
      %v4432 = vsel %vm2488, %v4380, %v3520
      %v4434 = vsel %vm2488, %v4382, %v3522
      %v4436 = vsel %vm2488, %v4384, %v3524
      %v4438 = vsel %vm2488, %v4386, %v3526
      %v4440 = vsel %vm2488, %v4388, %v3528
      %v4442 = vsel %vm2488, %v4390, %v3530
      %v4444 = vsel %vm2488, %v4392, %v3532
      %v4446 = vsel %vm2488, %v4394, %v3534
      %v4448 = vsel %vm2488, %v4396, %v3536
      %v4450 = vsel %vm2488, %v4398, %v3538
      %v4452 = vsel %vm2539, %v4400, %v3562
      %v4454 = vsel %vm2539, %v4402, %v3564
      %v4456 = vsel %vm2539, %v4404, %v3566
      %v4458 = vsel %vm2539, %v4406, %v3568
      %v4460 = vsel %vm2539, %v4408, %v3570
      %v4462 = vsel %vm2539, %v4410, %v3572
      %v4464 = vsel %vm2539, %v4412, %v3574
      %v4466 = vsel %vm2539, %v4414, %v3576
      %v4468 = vsel %vm2539, %v4416, %v3578
      %v4470 = vsel %vm2539, %v4418, %v3580
      %v4472 = vsel %vm2539, %v4420, %v3582
      %v4474 = vsel %vm2539, %v4422, %v3584
      %v4476 = vsel %vm2539, %v4424, %v3586
      %v4478 = vsel %vm2539, %v4426, %v3588
      %v4480 = vsel %vm2539, %v4428, %v3590
      %v4482 = vsel %vm2539, %v4430, %v3592
      %v4484 = vsel %vm2539, %v4432, %v3594
      %v4486 = vsel %vm2539, %v4434, %v3596
      %v4488 = vsel %vm2539, %v4436, %v3598
      %v4490 = vsel %vm2539, %v4438, %v3600
      %v4492 = vsel %vm2539, %v4440, %v3602
      %v4494 = vsel %vm2539, %v4442, %v3604
      %v4496 = vsel %vm2539, %v4444, %v3606
      %v4498 = vsel %vm2539, %v4446, %v3608
      %v4500 = vsel %vm2539, %v4448, %v3610
      %v4502 = vsel %vm2539, %v4450, %v3612
      %v4504 = vsel %vm2590, %v4452, %v3704
      %v4506 = vsel %vm2590, %v4454, %v3706
      %v4508 = vsel %vm2590, %v4456, %v3708
      %v4510 = vsel %vm2590, %v4458, %v3710
      %v4512 = vsel %vm2590, %v4460, %v3712
      %v4514 = vsel %vm2590, %v4462, %v3714
      %v4516 = vsel %vm2590, %v4464, %v3716
      %v4518 = vsel %vm2590, %v4466, %v3718
      %v4520 = vsel %vm2590, %v4468, %v3720
      %v4522 = vsel %vm2590, %v4470, %v3722
      %v4524 = vsel %vm2590, %v4472, %v3724
      %v4526 = vsel %vm2590, %v4474, %v3726
      %v4528 = vsel %vm2590, %v4476, %v3728
      %v4530 = vsel %vm2590, %v4478, %v3730
      %v4532 = vsel %vm2590, %v4480, %v3732
      %v4534 = vsel %vm2590, %v4482, %v3734
      %v4536 = vsel %vm2590, %v4484, %v3736
      %v4538 = vsel %vm2590, %v4486, %v3738
      %v4540 = vsel %vm2590, %v4488, %v3740
      %v4542 = vsel %vm2590, %v4490, %v3742
      %v4544 = vsel %vm2590, %v4492, %v3744
      %v4546 = vsel %vm2590, %v4494, %v3746
      %v4548 = vsel %vm2590, %v4496, %v3748
      %v4550 = vsel %vm2590, %v4498, %v3750
      %v4552 = vsel %vm2590, %v4500, %v3752
      %v4554 = vsel %vm2590, %v4502, %v3754
      %v4556 = vsel %vm2641, %v4504, %v3784
      %v4558 = vsel %vm2641, %v4506, %v3786
      %v4560 = vsel %vm2641, %v4508, %v3788
      %v4562 = vsel %vm2641, %v4510, %v3790
      %v4564 = vsel %vm2641, %v4512, %v3792
      %v4566 = vsel %vm2641, %v4514, %v3794
      %v4568 = vsel %vm2641, %v4516, %v3796
      %v4570 = vsel %vm2641, %v4518, %v3798
      %v4572 = vsel %vm2641, %v4520, %v3800
      %v4574 = vsel %vm2641, %v4522, %v3802
      %v4576 = vsel %vm2641, %v4524, %v3804
      %v4578 = vsel %vm2641, %v4526, %v3806
      %v4580 = vsel %vm2641, %v4528, %v3808
      %v4582 = vsel %vm2641, %v4530, %v3810
      %v4584 = vsel %vm2641, %v4532, %v3812
      %v4586 = vsel %vm2641, %v4534, %v3814
      %v4588 = vsel %vm2641, %v4536, %v3816
      %v4590 = vsel %vm2641, %v4538, %v3818
      %v4592 = vsel %vm2641, %v4540, %v3820
      %v4594 = vsel %vm2641, %v4542, %v3822
      %v4596 = vsel %vm2641, %v4544, %v3824
      %v4598 = vsel %vm2641, %v4546, %v3826
      %v4600 = vsel %vm2641, %v4548, %v3828
      %v4602 = vsel %vm2641, %v4550, %v3830
      %v4604 = vsel %vm2641, %v4552, %v3832
      %v4606 = vsel %vm2641, %v4554, %v3834
      %v4608 = vsel %vm2692, %v4556, %v3939
      %v4610 = vsel %vm2692, %v4558, %v3941
      %v4612 = vsel %vm2692, %v4560, %v3943
      %v4614 = vsel %vm2692, %v4562, %v3945
      %v4616 = vsel %vm2692, %v4564, %v3947
      %v4618 = vsel %vm2692, %v4566, %v3949
      %v4620 = vsel %vm2692, %v4568, %v3951
      %v4622 = vsel %vm2692, %v4570, %v3953
      %v4624 = vsel %vm2692, %v4572, %v3955
      %v4626 = vsel %vm2692, %v4574, %v3957
      %v4628 = vsel %vm2692, %v4576, %v3959
      %v4630 = vsel %vm2692, %v4578, %v3961
      %v4632 = vsel %vm2692, %v4580, %v3963
      %v4634 = vsel %vm2692, %v4582, %v3965
      %v4636 = vsel %vm2692, %v4584, %v3967
      %v4638 = vsel %vm2692, %v4586, %v3969
      %v4640 = vsel %vm2692, %v4588, %v3971
      %v4642 = vsel %vm2692, %v4590, %v3973
      %v4644 = vsel %vm2692, %v4592, %v3975
      %v4646 = vsel %vm2692, %v4594, %v3977
      %v4648 = vsel %vm2692, %v4596, %v3979
      %v4650 = vsel %vm2692, %v4598, %v3981
      %v4652 = vsel %vm2692, %v4600, %v3983
      %v4654 = vsel %vm2692, %v4602, %v3985
      %v4656 = vsel %vm2692, %v4604, %v3987
      %v4658 = vsel %vm2692, %v4606, %v3989
      %v4661 = vsel %vm2386, %v1156, %v4089
      %v4664 = vsel %vm2386, %v1165, %v4091
      %v4667 = vsel %vm2386, %v1174, %v4093
      %v4670 = vsel %vm2386, %v1183, %v4095
      %v4673 = vsel %vm2386, %v1192, %v4097
      %v4676 = vsel %vm2386, %v1201, %v4099
      %v4679 = vsel %vm2386, %v1210, %v4101
      %v4682 = vsel %vm2386, %v1219, %v4103
      %v4685 = vsel %vm2386, %v1228, %v4105
      %v4688 = vsel %vm2386, %v1237, %v4107
      %v4691 = vsel %vm2386, %v1246, %v4109
      %v4694 = vsel %vm2386, %v3997, %v4111
      %v4697 = vsel %vm2386, %v4001, %v4113
      %v4700 = vsel %vm2386, %v4005, %v4115
      %v4703 = vsel %vm2386, %v4009, %v4117
      %v4706 = vsel %vm2386, %v4013, %v4119
      %v4709 = vsel %vm2386, %v4017, %v4121
      %v4712 = vsel %vm2386, %v4021, %v4123
      %v4715 = vsel %vm2386, %v4025, %v4125
      %v4718 = vsel %vm2386, %v4029, %v4127
      %v4721 = vsel %vm2386, %v4033, %v4129
      %v4724 = vsel %vm2386, %v4037, %v4131
      %v4727 = vsel %vm2386, %v4041, %v4133
      %v4730 = vsel %vm2386, %v4050, %v4135
      %v4733 = vsel %vm2386, %v4059, %v4137
      %v4736 = vsel %vm2386, %v4054, %v4139
      %v4738 = vsel %vm2437, %v4661, %v4244
      %v4740 = vsel %vm2437, %v4664, %v4246
      %v4742 = vsel %vm2437, %v4667, %v4248
      %v4744 = vsel %vm2437, %v4670, %v4250
      %v4746 = vsel %vm2437, %v4673, %v4252
      %v4748 = vsel %vm2437, %v4676, %v4254
      %v4750 = vsel %vm2437, %v4679, %v4256
      %v4752 = vsel %vm2437, %v4682, %v4258
      %v4754 = vsel %vm2437, %v4685, %v4260
      %v4756 = vsel %vm2437, %v4688, %v4262
      %v4758 = vsel %vm2437, %v4691, %v4264
      %v4760 = vsel %vm2437, %v4694, %v4266
      %v4762 = vsel %vm2437, %v4697, %v4268
      %v4764 = vsel %vm2437, %v4700, %v4270
      %v4766 = vsel %vm2437, %v4703, %v4272
      %v4768 = vsel %vm2437, %v4706, %v4274
      %v4770 = vsel %vm2437, %v4709, %v4276
      %v4772 = vsel %vm2437, %v4712, %v4278
      %v4774 = vsel %vm2437, %v4715, %v4280
      %v4776 = vsel %vm2437, %v4718, %v4282
      %v4778 = vsel %vm2437, %v4721, %v4284
      %v4780 = vsel %vm2437, %v4724, %v4286
      %v4782 = vsel %vm2437, %v4727, %v4288
      %v4784 = vsel %vm2437, %v4730, %v4290
      %v4786 = vsel %vm2437, %v4733, %v4292
      %v4788 = vsel %vm2437, %v4736, %v4294
      %v4789 = vshrl.u32 %v4608, 16
      %v4791 = vshll.u32 %v4608, 16
      %v4793 = vrot.slane %v4791, 1
      %v4794 = vor.u32 %v4789, %v4793
      %v4795 = vshll.u32 %v4610, 16
      %v4797 = vrot.slane %v4795, 1
      %v4798 = vsel %vm536, %v4794, %v4797
      %v4799 = vshrl.u32 %v4738, 16
      %v4801 = vshll.u32 %v4738, 16
      %v4803 = vrot.slane %v4801, 1
      %v4804 = vor.u32 %v4799, %v4803
      %v4805 = vshll.u32 %v4740, 16
      %v4807 = vrot.slane %v4805, 1
      %v4808 = vsel %vm536, %v4804, %v4807
      %v4809 = vshrl.u32 %v4610, 16
      %v4811 = vor.u32 %v4809, %v4797
      %v4812 = vshll.u32 %v4612, 16
      %v4814 = vrot.slane %v4812, 1
      %v4815 = vsel %vm536, %v4811, %v4814
      %v4816 = vshrl.u32 %v4740, 16
      %v4818 = vor.u32 %v4816, %v4807
      %v4819 = vshll.u32 %v4742, 16
      %v4821 = vrot.slane %v4819, 1
      %v4822 = vsel %vm536, %v4818, %v4821
      %v4823 = vshrl.u32 %v4612, 16
      %v4825 = vor.u32 %v4823, %v4814
      %v4826 = vshll.u32 %v4614, 16
      %v4828 = vrot.slane %v4826, 1
      %v4829 = vsel %vm536, %v4825, %v4828
      %v4830 = vshrl.u32 %v4742, 16
      %v4832 = vor.u32 %v4830, %v4821
      %v4833 = vshll.u32 %v4744, 16
      %v4835 = vrot.slane %v4833, 1
      %v4836 = vsel %vm536, %v4832, %v4835
      %v4837 = vshrl.u32 %v4614, 16
      %v4839 = vor.u32 %v4837, %v4828
      %v4840 = vshll.u32 %v4616, 16
      %v4842 = vrot.slane %v4840, 1
      %v4843 = vsel %vm536, %v4839, %v4842
      %v4844 = vshrl.u32 %v4744, 16
      %v4846 = vor.u32 %v4844, %v4835
      %v4847 = vshll.u32 %v4746, 16
      %v4849 = vrot.slane %v4847, 1
      %v4850 = vsel %vm536, %v4846, %v4849
      %v4851 = vshrl.u32 %v4616, 16
      %v4853 = vor.u32 %v4851, %v4842
      %v4854 = vshll.u32 %v4618, 16
      %v4856 = vrot.slane %v4854, 1
      %v4857 = vsel %vm536, %v4853, %v4856
      %v4858 = vshrl.u32 %v4746, 16
      %v4860 = vor.u32 %v4858, %v4849
      %v4861 = vshll.u32 %v4748, 16
      %v4863 = vrot.slane %v4861, 1
      %v4864 = vsel %vm536, %v4860, %v4863
      %v4865 = vshrl.u32 %v4618, 16
      %v4867 = vor.u32 %v4865, %v4856
      %v4868 = vshll.u32 %v4620, 16
      %v4870 = vrot.slane %v4868, 1
      %v4871 = vsel %vm536, %v4867, %v4870
      %v4872 = vshrl.u32 %v4748, 16
      %v4874 = vor.u32 %v4872, %v4863
      %v4875 = vshll.u32 %v4750, 16
      %v4877 = vrot.slane %v4875, 1
      %v4878 = vsel %vm536, %v4874, %v4877
      %v4879 = vshrl.u32 %v4620, 16
      %v4881 = vor.u32 %v4879, %v4870
      %v4882 = vshll.u32 %v4622, 16
      %v4884 = vrot.slane %v4882, 1
      %v4885 = vsel %vm536, %v4881, %v4884
      %v4886 = vshrl.u32 %v4750, 16
      %v4888 = vor.u32 %v4886, %v4877
      %v4889 = vshll.u32 %v4752, 16
      %v4891 = vrot.slane %v4889, 1
      %v4892 = vsel %vm536, %v4888, %v4891
      %v4893 = vshrl.u32 %v4622, 16
      %v4895 = vor.u32 %v4893, %v4884
      %v4896 = vshll.u32 %v4624, 16
      %v4898 = vrot.slane %v4896, 1
      %v4899 = vsel %vm536, %v4895, %v4898
      %v4900 = vshrl.u32 %v4752, 16
      %v4902 = vor.u32 %v4900, %v4891
      %v4903 = vshll.u32 %v4754, 16
      %v4905 = vrot.slane %v4903, 1
      %v4906 = vsel %vm536, %v4902, %v4905
      %v4907 = vshrl.u32 %v4624, 16
      %v4909 = vor.u32 %v4907, %v4898
      %v4910 = vshll.u32 %v4626, 16
      %v4912 = vrot.slane %v4910, 1
      %v4913 = vsel %vm536, %v4909, %v4912
      %v4914 = vshrl.u32 %v4754, 16
      %v4916 = vor.u32 %v4914, %v4905
      %v4917 = vshll.u32 %v4756, 16
      %v4919 = vrot.slane %v4917, 1
      %v4920 = vsel %vm536, %v4916, %v4919
      %v4921 = vshrl.u32 %v4626, 16
      %v4923 = vor.u32 %v4921, %v4912
      %v4924 = vshll.u32 %v4628, 16
      %v4926 = vrot.slane %v4924, 1
      %v4927 = vsel %vm536, %v4923, %v4926
      %v4928 = vshrl.u32 %v4756, 16
      %v4930 = vor.u32 %v4928, %v4919
      %v4931 = vshll.u32 %v4758, 16
      %v4933 = vrot.slane %v4931, 1
      %v4934 = vsel %vm536, %v4930, %v4933
      %v4935 = vshrl.u32 %v4628, 16
      %v4937 = vor.u32 %v4935, %v4926
      %v4938 = vshll.u32 %v4630, 16
      %v4940 = vrot.slane %v4938, 1
      %v4941 = vsel %vm536, %v4937, %v4940
      %v4942 = vshrl.u32 %v4758, 16
      %v4944 = vor.u32 %v4942, %v4933
      %v4945 = vshll.u32 %v4760, 16
      %v4947 = vrot.slane %v4945, 1
      %v4948 = vsel %vm536, %v4944, %v4947
      %v4949 = vshrl.u32 %v4630, 16
      %v4951 = vor.u32 %v4949, %v4940
      %v4952 = vshll.u32 %v4632, 16
      %v4954 = vrot.slane %v4952, 1
      %v4955 = vsel %vm536, %v4951, %v4954
      %v4956 = vshrl.u32 %v4760, 16
      %v4958 = vor.u32 %v4956, %v4947
      %v4959 = vshll.u32 %v4762, 16
      %v4961 = vrot.slane %v4959, 1
      %v4962 = vsel %vm536, %v4958, %v4961
      %v4963 = vshrl.u32 %v4632, 16
      %v4965 = vor.u32 %v4963, %v4954
      %v4966 = vshll.u32 %v4634, 16
      %v4968 = vrot.slane %v4966, 1
      %v4969 = vsel %vm536, %v4965, %v4968
      %v4970 = vshrl.u32 %v4762, 16
      %v4972 = vor.u32 %v4970, %v4961
      %v4973 = vshll.u32 %v4764, 16
      %v4975 = vrot.slane %v4973, 1
      %v4976 = vsel %vm536, %v4972, %v4975
      %v4977 = vshrl.u32 %v4634, 16
      %v4979 = vor.u32 %v4977, %v4968
      %v4980 = vshll.u32 %v4636, 16
      %v4982 = vrot.slane %v4980, 1
      %v4983 = vsel %vm536, %v4979, %v4982
      %v4984 = vshrl.u32 %v4764, 16
      %v4986 = vor.u32 %v4984, %v4975
      %v4987 = vshll.u32 %v4766, 16
      %v4989 = vrot.slane %v4987, 1
      %v4990 = vsel %vm536, %v4986, %v4989
      %v4991 = vshrl.u32 %v4636, 16
      %v4993 = vor.u32 %v4991, %v4982
      %v4994 = vshll.u32 %v4638, 16
      %v4996 = vrot.slane %v4994, 1
      %v4997 = vsel %vm536, %v4993, %v4996
      %v4998 = vshrl.u32 %v4766, 16
      %v5000 = vor.u32 %v4998, %v4989
      %v5001 = vshll.u32 %v4768, 16
      %v5003 = vrot.slane %v5001, 1
      %v5004 = vsel %vm536, %v5000, %v5003
      %v5005 = vshrl.u32 %v4638, 16
      %v5007 = vor.u32 %v5005, %v4996
      %v5008 = vshll.u32 %v4640, 16
      %v5010 = vrot.slane %v5008, 1
      %v5011 = vsel %vm536, %v5007, %v5010
      %v5012 = vshrl.u32 %v4768, 16
      %v5014 = vor.u32 %v5012, %v5003
      %v5015 = vshll.u32 %v4770, 16
      %v5017 = vrot.slane %v5015, 1
      %v5018 = vsel %vm536, %v5014, %v5017
      %v5019 = vshrl.u32 %v4640, 16
      %v5021 = vor.u32 %v5019, %v5010
      %v5022 = vshll.u32 %v4642, 16
      %v5024 = vrot.slane %v5022, 1
      %v5025 = vsel %vm536, %v5021, %v5024
      %v5026 = vshrl.u32 %v4770, 16
      %v5028 = vor.u32 %v5026, %v5017
      %v5029 = vshll.u32 %v4772, 16
      %v5031 = vrot.slane %v5029, 1
      %v5032 = vsel %vm536, %v5028, %v5031
      %v5033 = vshrl.u32 %v4642, 16
      %v5035 = vor.u32 %v5033, %v5024
      %v5036 = vshll.u32 %v4644, 16
      %v5038 = vrot.slane %v5036, 1
      %v5039 = vsel %vm536, %v5035, %v5038
      %v5040 = vshrl.u32 %v4772, 16
      %v5042 = vor.u32 %v5040, %v5031
      %v5043 = vshll.u32 %v4774, 16
      %v5045 = vrot.slane %v5043, 1
      %v5046 = vsel %vm536, %v5042, %v5045
      %v5047 = vshrl.u32 %v4644, 16
      %v5049 = vor.u32 %v5047, %v5038
      %v5050 = vshll.u32 %v4646, 16
      %v5052 = vrot.slane %v5050, 1
      %v5053 = vsel %vm536, %v5049, %v5052
      %v5054 = vshrl.u32 %v4774, 16
      %v5056 = vor.u32 %v5054, %v5045
      %v5057 = vshll.u32 %v4776, 16
      %v5059 = vrot.slane %v5057, 1
      %v5060 = vsel %vm536, %v5056, %v5059
      %v5061 = vshrl.u32 %v4646, 16
      %v5063 = vor.u32 %v5061, %v5052
      %v5064 = vshll.u32 %v4648, 16
      %v5066 = vrot.slane %v5064, 1
      %v5067 = vsel %vm536, %v5063, %v5066
      %v5068 = vshrl.u32 %v4776, 16
      %v5070 = vor.u32 %v5068, %v5059
      %v5071 = vshll.u32 %v4778, 16
      %v5073 = vrot.slane %v5071, 1
      %v5074 = vsel %vm536, %v5070, %v5073
      %v5075 = vshrl.u32 %v4648, 16
      %v5077 = vor.u32 %v5075, %v5066
      %v5078 = vshll.u32 %v4650, 16
      %v5080 = vrot.slane %v5078, 1
      %v5081 = vsel %vm536, %v5077, %v5080
      %v5082 = vshrl.u32 %v4778, 16
      %v5084 = vor.u32 %v5082, %v5073
      %v5085 = vshll.u32 %v4780, 16
      %v5087 = vrot.slane %v5085, 1
      %v5088 = vsel %vm536, %v5084, %v5087
      %v5089 = vshrl.u32 %v4650, 16
      %v5091 = vor.u32 %v5089, %v5080
      %v5092 = vshll.u32 %v4652, 16
      %v5094 = vrot.slane %v5092, 1
      %v5095 = vsel %vm536, %v5091, %v5094
      %v5096 = vshrl.u32 %v4780, 16
      %v5098 = vor.u32 %v5096, %v5087
      %v5099 = vshll.u32 %v4782, 16
      %v5101 = vrot.slane %v5099, 1
      %v5102 = vsel %vm536, %v5098, %v5101
      %v5103 = vshrl.u32 %v4652, 16
      %v5105 = vor.u32 %v5103, %v5094
      %v5106 = vshll.u32 %v4654, 16
      %v5108 = vrot.slane %v5106, 1
      %v5109 = vsel %vm536, %v5105, %v5108
      %v5110 = vshrl.u32 %v4782, 16
      %v5112 = vor.u32 %v5110, %v5101
      %v5113 = vshll.u32 %v4784, 16
      %v5115 = vrot.slane %v5113, 1
      %v5116 = vsel %vm536, %v5112, %v5115
      %v5117 = vshrl.u32 %v4654, 16
      %v5119 = vor.u32 %v5117, %v5108
      %v5120 = vshll.u32 %v4656, 16
      %v5122 = vrot.slane %v5120, 1
      %v5123 = vsel %vm536, %v5119, %v5122
      %v5124 = vshrl.u32 %v4784, 16
      %v5126 = vor.u32 %v5124, %v5115
      %v5127 = vshll.u32 %v4786, 16
      %v5129 = vrot.slane %v5127, 1
      %v5130 = vsel %vm536, %v5126, %v5129
      %v5131 = vshrl.u32 %v4656, 16
      %v5133 = vor.u32 %v5131, %v5122
      %v5134 = vshll.u32 %v4658, 16
      %v5136 = vrot.slane %v5134, 1
      %v5137 = vsel %vm536, %v5133, %v5136
      %v5138 = vshrl.u32 %v4786, 16
      %v5140 = vor.u32 %v5138, %v5129
      %v5141 = vshll.u32 %v4788, 16
      %v5143 = vrot.slane %v5141, 1
      %v5144 = vsel %vm536, %v5140, %v5143
      %v5170 = vld [vmem:[%s1] sm:$0xf]
      %v5171 = vld [vmem:[%s1 + $0x4] sm:$0xf]
      %v5172 = vld [vmem:[%s1 + $0x8] sm:$0xf]
      %v5173 = vld [vmem:[%s1 + $0xc] sm:$0xf]
      %v5174 = vld [vmem:[%s1 + $0x10] sm:$0xf]
      %v5175 = vld [vmem:[%s1 + $0x14] sm:$0xf]
      %v5176 = vld [vmem:[%s1 + $0x18] sm:$0xf]
      %v5177 = vld [vmem:[%s1 + $0x1c] sm:$0xf]
      %v5178 = vld [vmem:[%s1 + $0x20] sm:$0xf]
      %v5179 = vld [vmem:[%s1 + $0x24] sm:$0xf]
      %v5180 = vld [vmem:[%s1 + $0x28] sm:$0xf]
      %v5181 = vld [vmem:[%s1 + $0x2c] sm:$0xf]
      %v5182 = vld [vmem:[%s1 + $0x30] sm:$0xf]
      %v5183 = vld [vmem:[%s1 + $0x34] sm:$0xf]
      %v5184 = vld [vmem:[%s1 + $0x38] sm:$0xf]
      %v5185 = vld [vmem:[%s1 + $0x3c] sm:$0xf]
      %v5186 = vld [vmem:[%s1 + $0x40] sm:$0xf]
      %v5187 = vld [vmem:[%s1 + $0x44] sm:$0xf]
      %v5188 = vld [vmem:[%s1 + $0x48] sm:$0xf]
      %v5189 = vld [vmem:[%s1 + $0x4c] sm:$0xf]
      %v5190 = vld [vmem:[%s1 + $0x50] sm:$0xf]
      %v5191 = vld [vmem:[%s1 + $0x54] sm:$0xf]
      %v5192 = vld [vmem:[%s1 + $0x58] sm:$0xf]
      %v5193 = vld [vmem:[%s1 + $0x5c] sm:$0xf]
      %v5194 = vld [vmem:[%s1 + $0x60] sm:$0xf]
      %v5195 = vld [vmem:[%s1 + $0x64] sm:$0xf]
      %v5196 = vld [vmem:[%s1 + $0x68] sm:$0xf]
      %v5197 = vld [vmem:[%s1 + $0x6c] sm:$0xf]
      %v5198 = vld [vmem:[%s1 + $0x70] sm:$0xf]
      %v5199 = vld [vmem:[%s1 + $0x74] sm:$0xf]
      %v5200 = vld [vmem:[%s1 + $0x78] sm:$0xf]
      %v5201 = vld [vmem:[%s1 + $0x7c] sm:$0xf]
      %v5202 = vld [vmem:[%s1 + $0x80] sm:$0xf]
      %v5203 = vld [vmem:[%s1 + $0x84] sm:$0xf]
      %v5204 = vld [vmem:[%s1 + $0x88] sm:$0xf]
      %v5205 = vld [vmem:[%s1 + $0x8c] sm:$0xf]
      %v5206 = vld [vmem:[%s1 + $0x90] sm:$0xf]
      %v5207 = vld [vmem:[%s1 + $0x94] sm:$0xf]
      %v5208 = vld [vmem:[%s1 + $0x98] sm:$0xf]
      %v5209 = vld [vmem:[%s1 + $0x9c] sm:$0xf]
      %v5210 = vld [vmem:[%s1 + $0xa0] sm:$0xf]
      %v5211 = vld [vmem:[%s1 + $0xa4] sm:$0xf]
      %v5212 = vld [vmem:[%s1 + $0xa8] sm:$0xf]
      %v5213 = vld [vmem:[%s1 + $0xac] sm:$0xf]
      %v5214 = vld [vmem:[%s1 + $0xb0] sm:$0xf]
      %v5215 = vld [vmem:[%s1 + $0xb4] sm:$0xf]
      %v5216 = vld [vmem:[%s1 + $0xb8] sm:$0xf]
      %v5217 = vld [vmem:[%s1 + $0xbc] sm:$0xf]
      %v5218 = vld [vmem:[%s1 + $0xc0] sm:$0xf]
      %v5219 = vld [vmem:[%s1 + $0xc4] sm:$0xf]
      %v5220 = vld [vmem:[%s1 + $0xc8] sm:$0xf]
      %v5221 = vld [vmem:[%s1 + $0xcc] sm:$0xf]
      %v5222 = vld [vmem:[%s1 + $0xd0] sm:$0xf]
      %v5223 = vld [vmem:[%s1 + $0xd4] sm:$0xf]
      %v5278 = vunpack.c.l.b16 %v5170
      %v5279 = vunpack.c.l.b16 %v5171
      %v5280 = vunpack.c.l.b16 %v5172
      %v5281 = vunpack.c.l.b16 %v5173
      %v5282 = vunpack.c.l.b16 %v5174
      %v5283 = vunpack.c.l.b16 %v5175
      %v5284 = vunpack.c.l.b16 %v5176
      %v5285 = vunpack.c.l.b16 %v5177
      %v5286 = vunpack.c.l.b16 %v5178
      %v5287 = vunpack.c.l.b16 %v5179
      %v5288 = vunpack.c.l.b16 %v5180
      %v5289 = vunpack.c.l.b16 %v5181
      %v5290 = vunpack.c.l.b16 %v5182
      %v5291 = vunpack.c.l.b16 %v5183
      %v5292 = vunpack.c.l.b16 %v5184
      %v5293 = vunpack.c.l.b16 %v5185
      %v5294 = vunpack.c.l.b16 %v5186
      %v5295 = vunpack.c.l.b16 %v5187
      %v5296 = vunpack.c.l.b16 %v5188
      %v5297 = vunpack.c.l.b16 %v5189
      %v5298 = vunpack.c.l.b16 %v5190
      %v5299 = vunpack.c.l.b16 %v5191
      %v5300 = vunpack.c.l.b16 %v5192
      %v5301 = vunpack.c.l.b16 %v5193
      %v5302 = vunpack.c.l.b16 %v5194
      %v5303 = vunpack.c.l.b16 %v5195
      %v5304 = vunpack.c.l.b16 %v5196
      %v5305 = vunpack.c.l.b16 %v5197
      %v5306 = vunpack.c.l.b16 %v5198
      %v5307 = vunpack.c.l.b16 %v5199
      %v5308 = vunpack.c.l.b16 %v5200
      %v5309 = vunpack.c.l.b16 %v5201
      %v5310 = vunpack.c.l.b16 %v5202
      %v5311 = vunpack.c.l.b16 %v5203
      %v5312 = vunpack.c.l.b16 %v5204
      %v5313 = vunpack.c.l.b16 %v5205
      %v5314 = vunpack.c.l.b16 %v5206
      %v5315 = vunpack.c.l.b16 %v5207
      %v5316 = vunpack.c.l.b16 %v5208
      %v5317 = vunpack.c.l.b16 %v5209
      %v5318 = vunpack.c.l.b16 %v5210
      %v5319 = vunpack.c.l.b16 %v5211
      %v5320 = vunpack.c.l.b16 %v5212
      %v5321 = vunpack.c.l.b16 %v5213
      %v5322 = vunpack.c.l.b16 %v5214
      %v5323 = vunpack.c.l.b16 %v5215
      %v5324 = vunpack.c.l.b16 %v5216
      %v5325 = vunpack.c.l.b16 %v5217
      %v5326 = vunpack.c.l.b16 %v5218
      %v5327 = vunpack.c.l.b16 %v5219
      %v5328 = vunpack.c.l.b16 %v5220
      %v5329 = vunpack.c.l.b16 %v5221
      %v5330 = vunpack.c.l.b16 %v5222
      %v5331 = vunpack.c.l.b16 %v5223
      %v5332 = vpack.c.b16 %v5279, %v5278
      %v5333 = vpack.c.b16 %v5281, %v5280
      %v5334 = vpack.c.b16 %v5283, %v5282
      %v5335 = vpack.c.b16 %v5285, %v5284
      %v5336 = vpack.c.b16 %v5287, %v5286
      %v5337 = vpack.c.b16 %v5289, %v5288
      %v5338 = vpack.c.b16 %v5291, %v5290
      %v5339 = vpack.c.b16 %v5293, %v5292
      %v5340 = vpack.c.b16 %v5295, %v5294
      %v5341 = vpack.c.b16 %v5297, %v5296
      %v5342 = vpack.c.b16 %v5299, %v5298
      %v5343 = vpack.c.b16 %v5301, %v5300
      %v5344 = vpack.c.b16 %v5303, %v5302
      %v5345 = vpack.c.b16 %v5305, %v5304
      %v5346 = vpack.c.b16 %v5307, %v5306
      %v5347 = vpack.c.b16 %v5309, %v5308
      %v5348 = vpack.c.b16 %v5311, %v5310
      %v5349 = vpack.c.b16 %v5313, %v5312
      %v5350 = vpack.c.b16 %v5315, %v5314
      %v5351 = vpack.c.b16 %v5317, %v5316
      %v5352 = vpack.c.b16 %v5319, %v5318
      %v5353 = vpack.c.b16 %v5321, %v5320
      %v5354 = vpack.c.b16 %v5323, %v5322
      %v5355 = vpack.c.b16 %v5325, %v5324
      %v5356 = vpack.c.b16 %v5327, %v5326
      %v5357 = vpack.c.b16 %v5329, %v5328
      %v5358 = vpack.c.b16 %v5331, %v5330
      %v5387 = vsel %vm2488, %v4808, 0
      %v5390 = vsel %vm2488, %v4822, 0
      %v5393 = vsel %vm2488, %v4836, 0
      %v5396 = vsel %vm2488, %v4850, 0
      %v5399 = vsel %vm2488, %v4864, 0
      %v5402 = vsel %vm2488, %v4878, 0
      %v5405 = vsel %vm2488, %v4892, 0
      %v5408 = vsel %vm2488, %v4906, 0
      %v5411 = vsel %vm2488, %v4920, 0
      %v5414 = vsel %vm2488, %v4934, 0
      %v5417 = vsel %vm2488, %v4948, 0
      %v5420 = vsel %vm2488, %v4962, 0
      %v5423 = vsel %vm2488, %v4976, 0
      %v5426 = vsel %vm2488, %v4990, 0
      %v5429 = vsel %vm2488, %v5004, 0
      %v5432 = vsel %vm2488, %v5018, 0
      %v5435 = vsel %vm2488, %v5032, 0
      %v5438 = vsel %vm2488, %v5046, 0
      %v5441 = vsel %vm2488, %v5060, 0
      %v5444 = vsel %vm2488, %v5074, 0
      %v5447 = vsel %vm2488, %v5088, 0
      %v5450 = vsel %vm2488, %v5102, 0
      %v5453 = vsel %vm2488, %v5116, 0
      %v5456 = vsel %vm2488, %v5130, 0
      %v5459 = vsel %vm2488, %v5144, 0
      %5461 = vmatprep.subr.bf16.mxu0 0
      %5462 = vmatpush1.bf16.msra.mxu0 %v5332
      %5463 = vmatprep.subr.bf16.mxu0 0
      %5464 = vmatpush1.bf16.msra.mxu0 %v5333
      %5465 = vmatprep.subr.bf16.mxu0 0
      %5466 = vmatpush1.bf16.msra.mxu0 %v5334
      %5467 = vmatprep.subr.bf16.mxu0 0
      %5468 = vmatpush1.bf16.msra.mxu0 %v5335
      %5469 = vmatprep.subr.bf16.mxu0 0
      %5470 = vmatpush1.bf16.msra.mxu0 %v5336
      %5471 = vmatprep.subr.bf16.mxu0 0
      %5472 = vmatpush1.bf16.msra.mxu0 %v5337
      %5473 = vmatprep.subr.bf16.mxu0 0
      %5474 = vmatpush1.bf16.msra.mxu0 %v5338
      %5475 = vmatprep.subr.bf16.mxu0 0
      %5476 = vmatpush1.bf16.msra.mxu0 %v5339
      %5477 = vmatprep.subr.bf16.mxu0 0
      %5478 = vmatpush1.bf16.msra.mxu0 %v5340
      %5479 = vmatprep.subr.bf16.mxu0 0
      %5480 = vmatpush1.bf16.msra.mxu0 %v5341
      %5481 = vmatprep.subr.bf16.mxu0 0
      %5482 = vmatpush1.bf16.msra.mxu0 %v5342
      %5483 = vmatprep.subr.bf16.mxu0 0
      %5484 = vmatpush1.bf16.msra.mxu0 %v5343
      %5485 = vmatprep.subr.bf16.mxu0 0
      %5486 = vmatpush1.bf16.msra.mxu0 %v5344
      %5487 = vmatprep.subr.bf16.mxu0 0
      %5488 = vmatpush1.bf16.msra.mxu0 %v5345
      %5489 = vmatprep.subr.bf16.mxu0 0
      %5490 = vmatpush1.bf16.msra.mxu0 %v5346
      %5491 = vmatprep.subr.bf16.mxu0 0
      %5492 = vmatpush1.bf16.msra.mxu0 %v5347
      %5493 = vmatprep.mubr.bf16.mxu0 %v3094
      %5494 = vmatmul.mubr.bf16.gmra.mrb[0].mxu0 %v2694
      %v5495 = vpop.f32.mrb[0].mxu0
      %v5496 = vadd.f32 0.0, %v5495
      %v5497 = vpop.f32.mrb[0].mxu0
      %v5498 = vpop.f32.mrb[0].mxu0
      %v5499 = vadd.f32 0.0, %v5498
      %v5500 = vpop.f32.mrb[0].mxu0
      %5501 = vmatprep.mubr.bf16.mxu0 %v3097
      %5502 = vmatmul.mubr.bf16.gmra.mrb[0].mxu0 %v2697
      %v5503 = vpop.f32.mrb[0].mxu0
      %v5504 = vadd.f32 0.0, %v5503
      %v5505 = vpop.f32.mrb[0].mxu0
      %v5506 = vpop.f32.mrb[0].mxu0
      %v5507 = vadd.f32 0.0, %v5506
      %v5508 = vpop.f32.mrb[0].mxu0
      %5509 = vmatprep.mubr.bf16.mxu0 %v3100
      %5510 = vmatmul.mubr.bf16.gmra.mrb[0].mxu0 %v2700
      %v5511 = vpop.f32.mrb[0].mxu0
      %v5512 = vadd.f32 0.0, %v5511
      %v5513 = vpop.f32.mrb[0].mxu0
      %v5514 = vpop.f32.mrb[0].mxu0
      %v5515 = vadd.f32 0.0, %v5514
      %v5516 = vpop.f32.mrb[0].mxu0
      %5517 = vmatprep.mubr.bf16.mxu0 %v3103
      %5518 = vmatmul.mubr.bf16.gmra.mrb[0].mxu0 %v2703
      %v5519 = vpop.f32.mrb[0].mxu0
      %v5520 = vadd.f32 0.0, %v5519
      %v5521 = vpop.f32.mrb[0].mxu0
      %v5522 = vpop.f32.mrb[0].mxu0
      %v5523 = vadd.f32 0.0, %v5522
      %v5524 = vpop.f32.mrb[0].mxu0
      %5525 = vmatprep.mubr.bf16.mxu0 %v3106
      %5526 = vmatmul.mubr.bf16.gmra.mrb[0].mxu0 %v2706
      %v5527 = vpop.f32.mrb[0].mxu0
      %v5528 = vadd.f32 0.0, %v5527
      %v5529 = vpop.f32.mrb[0].mxu0
      %v5530 = vpop.f32.mrb[0].mxu0
      %v5531 = vadd.f32 0.0, %v5530
      %v5532 = vpop.f32.mrb[0].mxu0
      %5533 = vmatprep.mubr.bf16.mxu0 %v3109
      %5534 = vmatmul.mubr.bf16.gmra.mrb[0].mxu0 %v2709
      %v5535 = vpop.f32.mrb[0].mxu0
      %v5536 = vadd.f32 0.0, %v5535
      %v5537 = vpop.f32.mrb[0].mxu0
      %v5538 = vpop.f32.mrb[0].mxu0
      %v5539 = vadd.f32 0.0, %v5538
      %v5540 = vpop.f32.mrb[0].mxu0
      %5541 = vmatprep.mubr.bf16.mxu0 %v3112
      %5542 = vmatmul.mubr.bf16.gmra.mrb[0].mxu0 %v2712
      %v5543 = vpop.f32.mrb[0].mxu0
      %v5544 = vadd.f32 0.0, %v5543
      %v5545 = vpop.f32.mrb[0].mxu0
      %v5546 = vpop.f32.mrb[0].mxu0
      %v5547 = vadd.f32 0.0, %v5546
      %v5548 = vpop.f32.mrb[0].mxu0
      %5549 = vmatprep.mubr.bf16.mxu0 %v3115
      %5550 = vmatmul.mubr.bf16.gmra.mrb[0].mxu0 %v2715
      %v5551 = vpop.f32.mrb[0].mxu0
      %v5552 = vadd.f32 0.0, %v5551
      %v5553 = vpop.f32.mrb[0].mxu0
      %v5554 = vpop.f32.mrb[0].mxu0
      %v5555 = vadd.f32 0.0, %v5554
      %v5556 = vpop.f32.mrb[0].mxu0
      %5557 = vmatprep.mubr.bf16.mxu0 %v3118
      %5558 = vmatmul.mubr.bf16.gmra.mrb[0].mxu0 %v2718
      %v5559 = vpop.f32.mrb[0].mxu0
      %v5560 = vadd.f32 0.0, %v5559
      %v5561 = vpop.f32.mrb[0].mxu0
      %v5562 = vpop.f32.mrb[0].mxu0
      %v5563 = vadd.f32 0.0, %v5562
      %v5564 = vpop.f32.mrb[0].mxu0
      %5565 = vmatprep.mubr.bf16.mxu0 %v3121
      %5566 = vmatmul.mubr.bf16.gmra.mrb[0].mxu0 %v2721
      %v5567 = vpop.f32.mrb[0].mxu0
      %v5568 = vadd.f32 0.0, %v5567
      %v5569 = vpop.f32.mrb[0].mxu0
      %v5570 = vpop.f32.mrb[0].mxu0
      %v5571 = vadd.f32 0.0, %v5570
      %v5572 = vpop.f32.mrb[0].mxu0
      %5573 = vmatprep.mubr.bf16.mxu0 %v3124
      %5574 = vmatmul.mubr.bf16.gmra.mrb[0].mxu0 %v2724
      %v5575 = vpop.f32.mrb[0].mxu0
      %v5576 = vadd.f32 0.0, %v5575
      %v5577 = vpop.f32.mrb[0].mxu0
      %v5578 = vpop.f32.mrb[0].mxu0
      %v5579 = vadd.f32 0.0, %v5578
      %v5580 = vpop.f32.mrb[0].mxu0
      %5581 = vmatprep.mubr.bf16.mxu0 %v3127
      %5582 = vmatmul.mubr.bf16.gmra.mrb[0].mxu0 %v2727
      %v5583 = vpop.f32.mrb[0].mxu0
      %v5584 = vadd.f32 0.0, %v5583
      %v5585 = vpop.f32.mrb[0].mxu0
      %v5586 = vpop.f32.mrb[0].mxu0
      %v5587 = vadd.f32 0.0, %v5586
      %v5588 = vpop.f32.mrb[0].mxu0
      %5589 = vmatprep.mubr.bf16.mxu0 %v3130
      %5590 = vmatmul.mubr.bf16.gmra.mrb[0].mxu0 %v2730
      %v5591 = vpop.f32.mrb[0].mxu0
      %v5592 = vadd.f32 0.0, %v5591
      %v5593 = vpop.f32.mrb[0].mxu0
      %v5594 = vpop.f32.mrb[0].mxu0
      %v5595 = vadd.f32 0.0, %v5594
      %v5596 = vpop.f32.mrb[0].mxu0
      %5597 = vmatprep.mubr.bf16.mxu0 %v3133
      %5598 = vmatmul.mubr.bf16.gmra.mrb[0].mxu0 %v2733
      %v5599 = vpop.f32.mrb[0].mxu0
      %v5600 = vadd.f32 0.0, %v5599
      %v5601 = vpop.f32.mrb[0].mxu0
      %v5602 = vpop.f32.mrb[0].mxu0
      %v5603 = vadd.f32 0.0, %v5602
      %v5604 = vpop.f32.mrb[0].mxu0
      %5605 = vmatprep.mubr.bf16.mxu0 %v3136
      %5606 = vmatmul.mubr.bf16.gmra.mrb[0].mxu0 %v2736
      %v5607 = vpop.f32.mrb[0].mxu0
      %v5608 = vadd.f32 0.0, %v5607
      %v5609 = vpop.f32.mrb[0].mxu0
      %v5610 = vpop.f32.mrb[0].mxu0
      %v5611 = vadd.f32 0.0, %v5610
      %v5612 = vpop.f32.mrb[0].mxu0
      %5613 = vmatprep.mubr.bf16.mxu0 %v3139
      %5614 = vmatmul.mubr.bf16.gmra.mrb[0].mxu0 %v2739
      %v5615 = vpop.f32.mrb[0].mxu0
      %v5616 = vadd.f32 0.0, %v5615
      %v5617 = vpop.f32.mrb[0].mxu0
      %v5618 = vpop.f32.mrb[0].mxu0
      %v5619 = vadd.f32 0.0, %v5618
      %v5620 = vpop.f32.mrb[0].mxu0
      %5621 = vmatprep.mubr.bf16.mxu0 %v3142
      %5622 = vmatmul.mubr.bf16.gmra.mrb[0].mxu0 %v2742
      %v5623 = vpop.f32.mrb[0].mxu0
      %v5624 = vadd.f32 0.0, %v5623
      %v5625 = vpop.f32.mrb[0].mxu0
      %v5626 = vpop.f32.mrb[0].mxu0
      %v5627 = vadd.f32 0.0, %v5626
      %v5628 = vpop.f32.mrb[0].mxu0
      %5629 = vmatprep.mubr.bf16.mxu0 %v3145
      %5630 = vmatmul.mubr.bf16.gmra.mrb[0].mxu0 %v2745
      %v5631 = vpop.f32.mrb[0].mxu0
      %v5632 = vadd.f32 0.0, %v5631
      %v5633 = vpop.f32.mrb[0].mxu0
      %v5634 = vpop.f32.mrb[0].mxu0
      %v5635 = vadd.f32 0.0, %v5634
      %v5636 = vpop.f32.mrb[0].mxu0
      %5637 = vmatprep.mubr.bf16.mxu0 %v3148
      %5638 = vmatmul.mubr.bf16.gmra.mrb[0].mxu0 %v2748
      %v5639 = vpop.f32.mrb[0].mxu0
      %v5640 = vadd.f32 0.0, %v5639
      %v5641 = vpop.f32.mrb[0].mxu0
      %v5642 = vpop.f32.mrb[0].mxu0
      %v5643 = vadd.f32 0.0, %v5642
      %v5644 = vpop.f32.mrb[0].mxu0
      %5645 = vmatprep.mubr.bf16.mxu0 %v3151
      %5646 = vmatmul.mubr.bf16.gmra.mrb[0].mxu0 %v2751
      %v5647 = vpop.f32.mrb[0].mxu0
      %v5648 = vadd.f32 0.0, %v5647
      %v5649 = vpop.f32.mrb[0].mxu0
      %v5650 = vpop.f32.mrb[0].mxu0
      %v5651 = vadd.f32 0.0, %v5650
      %v5652 = vpop.f32.mrb[0].mxu0
      %5653 = vmatprep.mubr.bf16.mxu0 %v3154
      %5654 = vmatmul.mubr.bf16.gmra.mrb[0].mxu0 %v2754
      %v5655 = vpop.f32.mrb[0].mxu0
      %v5656 = vadd.f32 0.0, %v5655
      %v5657 = vpop.f32.mrb[0].mxu0
      %v5658 = vpop.f32.mrb[0].mxu0
      %v5659 = vadd.f32 0.0, %v5658
      %v5660 = vpop.f32.mrb[0].mxu0
      %5661 = vmatprep.mubr.bf16.mxu0 %v3157
      %5662 = vmatmul.mubr.bf16.gmra.mrb[0].mxu0 %v2757
      %v5663 = vpop.f32.mrb[0].mxu0
      %v5664 = vadd.f32 0.0, %v5663
      %v5665 = vpop.f32.mrb[0].mxu0
      %v5666 = vpop.f32.mrb[0].mxu0
      %v5667 = vadd.f32 0.0, %v5666
      %v5668 = vpop.f32.mrb[0].mxu0
      %5669 = vmatprep.mubr.bf16.mxu0 %v3160
      %5670 = vmatmul.mubr.bf16.gmra.mrb[0].mxu0 %v2760
      %v5671 = vpop.f32.mrb[0].mxu0
      %v5672 = vadd.f32 0.0, %v5671
      %v5673 = vpop.f32.mrb[0].mxu0
      %v5674 = vpop.f32.mrb[0].mxu0
      %v5675 = vadd.f32 0.0, %v5674
      %v5676 = vpop.f32.mrb[0].mxu0
      %5677 = vmatprep.mubr.bf16.mxu0 %v3163
      %5678 = vmatmul.mubr.bf16.gmra.mrb[0].mxu0 %v2763
      %v5679 = vpop.f32.mrb[0].mxu0
      %v5680 = vadd.f32 0.0, %v5679
      %v5681 = vpop.f32.mrb[0].mxu0
      %v5682 = vpop.f32.mrb[0].mxu0
      %v5683 = vadd.f32 0.0, %v5682
      %v5684 = vpop.f32.mrb[0].mxu0
      %5685 = vmatprep.mubr.bf16.mxu0 %v3166
      %5686 = vmatmul.mubr.bf16.gmra.mrb[0].mxu0 %v2766
      %v5687 = vpop.f32.mrb[0].mxu0
      %v5688 = vadd.f32 0.0, %v5687
      %v5689 = vpop.f32.mrb[0].mxu0
      %v5690 = vpop.f32.mrb[0].mxu0
      %v5691 = vadd.f32 0.0, %v5690
      %v5692 = vpop.f32.mrb[0].mxu0
      %5693 = vdwg.mxu0
      %5694 = vmatprep.subr.bf16.mxu0 0
      %5695 = vmatpush1.bf16.msra.mxu0 %v5348
      %5696 = vmatprep.subr.bf16.mxu0 0
      %5697 = vmatpush1.bf16.msra.mxu0 %v5349
      %5698 = vmatprep.subr.bf16.mxu0 0
      %5699 = vmatpush1.bf16.msra.mxu0 %v5350
      %5700 = vmatprep.subr.bf16.mxu0 0
      %5701 = vmatpush1.bf16.msra.mxu0 %v5351
      %5702 = vmatprep.subr.bf16.mxu0 0
      %5703 = vmatpush1.bf16.msra.mxu0 %v5352
      %5704 = vmatprep.subr.bf16.mxu0 0
      %5705 = vmatpush1.bf16.msra.mxu0 %v5353
      %5706 = vmatprep.subr.bf16.mxu0 0
      %5707 = vmatpush1.bf16.msra.mxu0 %v5354
      %5708 = vmatprep.subr.bf16.mxu0 0
      %5709 = vmatpush1.bf16.msra.mxu0 %v5355
      %5710 = vmatprep.subr.bf16.mxu0 0
      %5711 = vmatpush1.bf16.msra.mxu0 %v5356
      %5712 = vmatprep.subr.bf16.mxu0 0
      %5713 = vmatpush1.bf16.msra.mxu0 %v5357
      %5714 = vmatprep.subr.bf16.mxu0 0
      %5715 = vmatpush1.bf16.msra.mxu0 %v5358
      %5716 = vmatprep.subr.bf16.mxu0 0
      %5717 = vmatpush1.bf16.msra.mxu0 0
      %5718 = vmatprep.subr.bf16.mxu0 0
      %5719 = vmatpush1.bf16.msra.mxu0 0
      %5720 = vmatprep.subr.bf16.mxu0 0
      %5721 = vmatpush1.bf16.msra.mxu0 0
      %5722 = vmatprep.subr.bf16.mxu0 0
      %5723 = vmatpush1.bf16.msra.mxu0 0
      %5724 = vmatprep.subr.bf16.mxu0 0
      %5725 = vmatpush1.bf16.msra.mxu0 0
      %5726 = vmatprep.mubr.bf16.mxu0 %v5387
      %5727 = vmatmul.mubr.bf16.gmra.mrb[0].mxu0 %v4798
      %v5728 = vpop.f32.mrb[0].mxu0
      %v5729 = vadd.f32 %v5496, %v5728
      %v5730 = vpop.f32.mrb[0].mxu0
      %v5731 = vpop.f32.mrb[0].mxu0
      %v5732 = vadd.f32 %v5499, %v5731
      %v5733 = vpop.f32.mrb[0].mxu0
      %5734 = vmatprep.mubr.bf16.mxu0 %v5390
      %5735 = vmatmul.mubr.bf16.gmra.mrb[0].mxu0 %v4815
      %v5736 = vpop.f32.mrb[0].mxu0
      %v5737 = vadd.f32 %v5504, %v5736
      %v5738 = vpop.f32.mrb[0].mxu0
      %v5739 = vpop.f32.mrb[0].mxu0
      %v5740 = vadd.f32 %v5507, %v5739
      %v5741 = vpop.f32.mrb[0].mxu0
      %5742 = vmatprep.mubr.bf16.mxu0 %v5393
      %5743 = vmatmul.mubr.bf16.gmra.mrb[0].mxu0 %v4829
      %v5744 = vpop.f32.mrb[0].mxu0
      %v5745 = vadd.f32 %v5512, %v5744
      %v5746 = vpop.f32.mrb[0].mxu0
      %v5747 = vpop.f32.mrb[0].mxu0
      %v5748 = vadd.f32 %v5515, %v5747
      %v5749 = vpop.f32.mrb[0].mxu0
      %5750 = vmatprep.mubr.bf16.mxu0 %v5396
      %5751 = vmatmul.mubr.bf16.gmra.mrb[0].mxu0 %v4843
      %v5752 = vpop.f32.mrb[0].mxu0
      %v5753 = vadd.f32 %v5520, %v5752
      %v5754 = vpop.f32.mrb[0].mxu0
      %v5755 = vpop.f32.mrb[0].mxu0
      %v5756 = vadd.f32 %v5523, %v5755
      %v5757 = vpop.f32.mrb[0].mxu0
      %5758 = vmatprep.mubr.bf16.mxu0 %v5399
      %5759 = vmatmul.mubr.bf16.gmra.mrb[0].mxu0 %v4857
      %v5760 = vpop.f32.mrb[0].mxu0
      %v5761 = vadd.f32 %v5528, %v5760
      %v5762 = vpop.f32.mrb[0].mxu0
      %v5763 = vpop.f32.mrb[0].mxu0
      %v5764 = vadd.f32 %v5531, %v5763
      %v5765 = vpop.f32.mrb[0].mxu0
      %5766 = vmatprep.mubr.bf16.mxu0 %v5402
      %5767 = vmatmul.mubr.bf16.gmra.mrb[0].mxu0 %v4871
      %v5768 = vpop.f32.mrb[0].mxu0
      %v5769 = vadd.f32 %v5536, %v5768
      %v5770 = vpop.f32.mrb[0].mxu0
      %v5771 = vpop.f32.mrb[0].mxu0
      %v5772 = vadd.f32 %v5539, %v5771
      %v5773 = vpop.f32.mrb[0].mxu0
      %5774 = vmatprep.mubr.bf16.mxu0 %v5405
      %5775 = vmatmul.mubr.bf16.gmra.mrb[0].mxu0 %v4885
      %v5776 = vpop.f32.mrb[0].mxu0
      %v5777 = vadd.f32 %v5544, %v5776
      %v5778 = vpop.f32.mrb[0].mxu0
      %v5779 = vpop.f32.mrb[0].mxu0
      %v5780 = vadd.f32 %v5547, %v5779
      %v5781 = vpop.f32.mrb[0].mxu0
      %5782 = vmatprep.mubr.bf16.mxu0 %v5408
      %5783 = vmatmul.mubr.bf16.gmra.mrb[0].mxu0 %v4899
      %v5784 = vpop.f32.mrb[0].mxu0
      %v5785 = vadd.f32 %v5552, %v5784
      %v5786 = vpop.f32.mrb[0].mxu0
      %v5787 = vpop.f32.mrb[0].mxu0
      %v5788 = vadd.f32 %v5555, %v5787
      %v5789 = vpop.f32.mrb[0].mxu0
      %5790 = vmatprep.mubr.bf16.mxu0 %v5411
      %5791 = vmatmul.mubr.bf16.gmra.mrb[0].mxu0 %v4913
      %v5792 = vpop.f32.mrb[0].mxu0
      %v5793 = vadd.f32 %v5560, %v5792
      %v5794 = vpop.f32.mrb[0].mxu0
      %v5795 = vpop.f32.mrb[0].mxu0
      %v5796 = vadd.f32 %v5563, %v5795
      %v5797 = vpop.f32.mrb[0].mxu0
      %5798 = vmatprep.mubr.bf16.mxu0 %v5414
      %5799 = vmatmul.mubr.bf16.gmra.mrb[0].mxu0 %v4927
      %v5800 = vpop.f32.mrb[0].mxu0
      %v5801 = vadd.f32 %v5568, %v5800
      %v5802 = vpop.f32.mrb[0].mxu0
      %v5803 = vpop.f32.mrb[0].mxu0
      %v5804 = vadd.f32 %v5571, %v5803
      %v5805 = vpop.f32.mrb[0].mxu0
      %5806 = vmatprep.mubr.bf16.mxu0 %v5417
      %5807 = vmatmul.mubr.bf16.gmra.mrb[0].mxu0 %v4941
      %v5808 = vpop.f32.mrb[0].mxu0
      %v5809 = vadd.f32 %v5576, %v5808
      %v5810 = vpop.f32.mrb[0].mxu0
      %v5811 = vpop.f32.mrb[0].mxu0
      %v5812 = vadd.f32 %v5579, %v5811
      %v5813 = vpop.f32.mrb[0].mxu0
      %5814 = vmatprep.mubr.bf16.mxu0 %v5420
      %5815 = vmatmul.mubr.bf16.gmra.mrb[0].mxu0 %v4955
      %v5816 = vpop.f32.mrb[0].mxu0
      %v5817 = vadd.f32 %v5584, %v5816
      %v5818 = vpop.f32.mrb[0].mxu0
      %v5819 = vpop.f32.mrb[0].mxu0
      %v5820 = vadd.f32 %v5587, %v5819
      %v5821 = vpop.f32.mrb[0].mxu0
      %5822 = vmatprep.mubr.bf16.mxu0 %v5423
      %5823 = vmatmul.mubr.bf16.gmra.mrb[0].mxu0 %v4969
      %v5824 = vpop.f32.mrb[0].mxu0
      %v5825 = vadd.f32 %v5592, %v5824
      %v5826 = vpop.f32.mrb[0].mxu0
      %v5827 = vpop.f32.mrb[0].mxu0
      %v5828 = vadd.f32 %v5595, %v5827
      %v5829 = vpop.f32.mrb[0].mxu0
      %5830 = vmatprep.mubr.bf16.mxu0 %v5426
      %5831 = vmatmul.mubr.bf16.gmra.mrb[0].mxu0 %v4983
      %v5832 = vpop.f32.mrb[0].mxu0
      %v5833 = vadd.f32 %v5600, %v5832
      %v5834 = vpop.f32.mrb[0].mxu0
      %v5835 = vpop.f32.mrb[0].mxu0
      %v5836 = vadd.f32 %v5603, %v5835
      %v5837 = vpop.f32.mrb[0].mxu0
      %5838 = vmatprep.mubr.bf16.mxu0 %v5429
      %5839 = vmatmul.mubr.bf16.gmra.mrb[0].mxu0 %v4997
      %v5840 = vpop.f32.mrb[0].mxu0
      %v5841 = vadd.f32 %v5608, %v5840
      %v5842 = vpop.f32.mrb[0].mxu0
      %v5843 = vpop.f32.mrb[0].mxu0
      %v5844 = vadd.f32 %v5611, %v5843
      %v5845 = vpop.f32.mrb[0].mxu0
      %5846 = vmatprep.mubr.bf16.mxu0 %v5432
      %5847 = vmatmul.mubr.bf16.gmra.mrb[0].mxu0 %v5011
      %v5848 = vpop.f32.mrb[0].mxu0
      %v5849 = vadd.f32 %v5616, %v5848
      %v5850 = vpop.f32.mrb[0].mxu0
      %v5851 = vpop.f32.mrb[0].mxu0
      %v5852 = vadd.f32 %v5619, %v5851
      %v5853 = vpop.f32.mrb[0].mxu0
      %5854 = vmatprep.mubr.bf16.mxu0 %v5435
      %5855 = vmatmul.mubr.bf16.gmra.mrb[0].mxu0 %v5025
      %v5856 = vpop.f32.mrb[0].mxu0
      %v5857 = vadd.f32 %v5624, %v5856
      %v5858 = vpop.f32.mrb[0].mxu0
      %v5859 = vpop.f32.mrb[0].mxu0
      %v5860 = vadd.f32 %v5627, %v5859
      %v5861 = vpop.f32.mrb[0].mxu0
      %5862 = vmatprep.mubr.bf16.mxu0 %v5438
      %5863 = vmatmul.mubr.bf16.gmra.mrb[0].mxu0 %v5039
      %v5864 = vpop.f32.mrb[0].mxu0
      %v5865 = vadd.f32 %v5632, %v5864
      %v5866 = vpop.f32.mrb[0].mxu0
      %v5867 = vpop.f32.mrb[0].mxu0
      %v5868 = vadd.f32 %v5635, %v5867
      %v5869 = vpop.f32.mrb[0].mxu0
      %5870 = vmatprep.mubr.bf16.mxu0 %v5441
      %5871 = vmatmul.mubr.bf16.gmra.mrb[0].mxu0 %v5053
      %v5872 = vpop.f32.mrb[0].mxu0
      %v5873 = vadd.f32 %v5640, %v5872
      %v5874 = vpop.f32.mrb[0].mxu0
      %v5875 = vpop.f32.mrb[0].mxu0
      %v5876 = vadd.f32 %v5643, %v5875
      %v5877 = vpop.f32.mrb[0].mxu0
      %5878 = vmatprep.mubr.bf16.mxu0 %v5444
      %5879 = vmatmul.mubr.bf16.gmra.mrb[0].mxu0 %v5067
      %v5880 = vpop.f32.mrb[0].mxu0
      %v5881 = vadd.f32 %v5648, %v5880
      %v5882 = vpop.f32.mrb[0].mxu0
      %v5883 = vpop.f32.mrb[0].mxu0
      %v5884 = vadd.f32 %v5651, %v5883
      %v5885 = vpop.f32.mrb[0].mxu0
      %5886 = vmatprep.mubr.bf16.mxu0 %v5447
      %5887 = vmatmul.mubr.bf16.gmra.mrb[0].mxu0 %v5081
      %v5888 = vpop.f32.mrb[0].mxu0
      %v5889 = vadd.f32 %v5656, %v5888
      %v5890 = vpop.f32.mrb[0].mxu0
      %v5891 = vpop.f32.mrb[0].mxu0
      %v5892 = vadd.f32 %v5659, %v5891
      %v5893 = vpop.f32.mrb[0].mxu0
      %5894 = vmatprep.mubr.bf16.mxu0 %v5450
      %5895 = vmatmul.mubr.bf16.gmra.mrb[0].mxu0 %v5095
      %v5896 = vpop.f32.mrb[0].mxu0
      %v5897 = vadd.f32 %v5664, %v5896
      %v5898 = vpop.f32.mrb[0].mxu0
      %v5899 = vpop.f32.mrb[0].mxu0
      %v5900 = vadd.f32 %v5667, %v5899
      %v5901 = vpop.f32.mrb[0].mxu0
      %5902 = vmatprep.mubr.bf16.mxu0 %v5453
      %5903 = vmatmul.mubr.bf16.gmra.mrb[0].mxu0 %v5109
      %v5904 = vpop.f32.mrb[0].mxu0
      %v5905 = vadd.f32 %v5672, %v5904
      %v5906 = vpop.f32.mrb[0].mxu0
      %v5907 = vpop.f32.mrb[0].mxu0
      %v5908 = vadd.f32 %v5675, %v5907
      %v5909 = vpop.f32.mrb[0].mxu0
      %5910 = vmatprep.mubr.bf16.mxu0 %v5456
      %5911 = vmatmul.mubr.bf16.gmra.mrb[0].mxu0 %v5123
      %v5912 = vpop.f32.mrb[0].mxu0
      %v5913 = vadd.f32 %v5680, %v5912
      %v5914 = vpop.f32.mrb[0].mxu0
      %v5915 = vpop.f32.mrb[0].mxu0
      %v5916 = vadd.f32 %v5683, %v5915
      %v5917 = vpop.f32.mrb[0].mxu0
      %5918 = vmatprep.mubr.bf16.mxu0 %v5459
      %5919 = vmatmul.mubr.bf16.gmra.mrb[0].mxu0 %v5137
      %v5920 = vpop.f32.mrb[0].mxu0
      %v5921 = vadd.f32 %v5688, %v5920
      %v5922 = vpop.f32.mrb[0].mxu0
      %v5923 = vpop.f32.mrb[0].mxu0
      %v5924 = vadd.f32 %v5691, %v5923
      %v5925 = vpop.f32.mrb[0].mxu0
      %5926 = vdwg.mxu0
      %vm5934 = vcmask 1045504
      %v5935 = vrot.slane %v5753, 2
      %v5936 = vrot.slane %v5756, 2
      %v5937 = vsel %vm5934, %v5935, %v5936
      %v5938 = vrot.slane %v5761, 2
      %v5939 = vsel %vm5934, %v5936, %v5938
      %v5940 = vrot.slane %v5764, 2
      %v5941 = vsel %vm5934, %v5938, %v5940
      %v5942 = vrot.slane %v5769, 2
      %v5943 = vsel %vm5934, %v5940, %v5942
      %v5944 = vrot.slane %v5772, 2
      %v5945 = vsel %vm5934, %v5942, %v5944
      %v5946 = vrot.slane %v5777, 2
      %v5947 = vsel %vm5934, %v5944, %v5946
      %5948 = vrot.lane.b32.xlu0 %v5937, 16
      %v5949 = vpop.permute.xlu0 %5948
      %5950 = vrot.lane.b32.xlu0 %v5939, 16
      %v5951 = vpop.permute.xlu0 %5950
      %5952 = vrot.lane.b32.xlu0 %v5941, 16
      %v5953 = vpop.permute.xlu0 %5952
      %5954 = vrot.lane.b32.xlu0 %v5943, 16
      %v5955 = vpop.permute.xlu0 %5954
      %5956 = vrot.lane.b32.xlu0 %v5945, 16
      %v5957 = vpop.permute.xlu0 %5956
      %5958 = vrot.lane.b32.xlu0 %v5947, 16
      %v5959 = vpop.permute.xlu0 %5958
      %5960 = vrot.lane.b32.xlu0 %v5946, 16
      %v5961 = vpop.permute.xlu0 %5960
      %vm5975 = vcmask 1043456
      %v5976 = vrot.slane %v5777, 4
      %v5977 = vrot.slane %v5780, 4
      %v5978 = vsel %vm5975, %v5976, %v5977
      %v5979 = vrot.slane %v5785, 4
      %v5980 = vsel %vm5975, %v5977, %v5979
      %v5981 = vrot.slane %v5788, 4
      %v5982 = vsel %vm5975, %v5979, %v5981
      %v5983 = vrot.slane %v5793, 4
      %v5984 = vsel %vm5975, %v5981, %v5983
      %v5985 = vrot.slane %v5796, 4
      %v5986 = vsel %vm5975, %v5983, %v5985
      %v5987 = vrot.slane %v5801, 4
      %v5988 = vsel %vm5975, %v5985, %v5987
      %5989 = vrot.lane.b32.xlu0 %v5978, 32
      %v5990 = vpop.permute.xlu0 %5989
      %5991 = vrot.lane.b32.xlu0 %v5980, 32
      %v5992 = vpop.permute.xlu0 %5991
      %5993 = vrot.lane.b32.xlu0 %v5982, 32
      %v5994 = vpop.permute.xlu0 %5993
      %5995 = vrot.lane.b32.xlu0 %v5984, 32
      %v5996 = vpop.permute.xlu0 %5995
      %5997 = vrot.lane.b32.xlu0 %v5986, 32
      %v5998 = vpop.permute.xlu0 %5997
      %5999 = vrot.lane.b32.xlu0 %v5988, 32
      %v6000 = vpop.permute.xlu0 %5999
      %6001 = vrot.lane.b32.xlu0 %v5987, 32
      %v6002 = vpop.permute.xlu0 %6001
      %vm6016 = vcmask 1041408
      %v6017 = vrot.slane %v5801, 6
      %v6018 = vrot.slane %v5804, 6
      %v6019 = vsel %vm6016, %v6017, %v6018
      %v6020 = vrot.slane %v5809, 6
      %v6021 = vsel %vm6016, %v6018, %v6020
      %v6022 = vrot.slane %v5812, 6
      %v6023 = vsel %vm6016, %v6020, %v6022
      %v6024 = vrot.slane %v5817, 6
      %v6025 = vsel %vm6016, %v6022, %v6024
      %v6026 = vrot.slane %v5820, 6
      %v6027 = vsel %vm6016, %v6024, %v6026
      %v6028 = vrot.slane %v5825, 6
      %v6029 = vsel %vm6016, %v6026, %v6028
      %6030 = vrot.lane.b32.xlu0 %v6019, 48
      %v6031 = vpop.permute.xlu0 %6030
      %6032 = vrot.lane.b32.xlu0 %v6021, 48
      %v6033 = vpop.permute.xlu0 %6032
      %6034 = vrot.lane.b32.xlu0 %v6023, 48
      %v6035 = vpop.permute.xlu0 %6034
      %6036 = vrot.lane.b32.xlu0 %v6025, 48
      %v6037 = vpop.permute.xlu0 %6036
      %6038 = vrot.lane.b32.xlu0 %v6027, 48
      %v6039 = vpop.permute.xlu0 %6038
      %6040 = vrot.lane.b32.xlu0 %v6029, 48
      %v6041 = vpop.permute.xlu0 %6040
      %6042 = vrot.lane.b32.xlu0 %v6028, 48
      %v6043 = vpop.permute.xlu0 %6042
      %6058 = vrot.lane.b32.xlu0 %v5828, 64
      %v6059 = vpop.permute.xlu0 %6058
      %6060 = vrot.lane.b32.xlu0 %v5833, 64
      %v6061 = vpop.permute.xlu0 %6060
      %6062 = vrot.lane.b32.xlu0 %v5836, 64
      %v6063 = vpop.permute.xlu0 %6062
      %6064 = vrot.lane.b32.xlu0 %v5841, 64
      %v6065 = vpop.permute.xlu0 %6064
      %6066 = vrot.lane.b32.xlu0 %v5844, 64
      %v6067 = vpop.permute.xlu0 %6066
      %6068 = vrot.lane.b32.xlu0 %v5849, 64
      %v6069 = vpop.permute.xlu0 %6068
      %6070 = vrot.lane.b32.xlu0 %v5852, 64
      %v6071 = vpop.permute.xlu0 %6070
      %v6085 = vrot.slane %v5852, 2
      %v6086 = vrot.slane %v5857, 2
      %v6087 = vsel %vm5934, %v6085, %v6086
      %v6088 = vrot.slane %v5860, 2
      %v6089 = vsel %vm5934, %v6086, %v6088
      %v6090 = vrot.slane %v5865, 2
      %v6091 = vsel %vm5934, %v6088, %v6090
      %v6092 = vrot.slane %v5868, 2
      %v6093 = vsel %vm5934, %v6090, %v6092
      %v6094 = vrot.slane %v5873, 2
      %v6095 = vsel %vm5934, %v6092, %v6094
      %v6096 = vrot.slane %v5876, 2
      %v6097 = vsel %vm5934, %v6094, %v6096
      %6098 = vrot.lane.b32.xlu0 %v6087, 80
      %v6099 = vpop.permute.xlu0 %6098
      %6100 = vrot.lane.b32.xlu0 %v6089, 80
      %v6101 = vpop.permute.xlu0 %6100
      %6102 = vrot.lane.b32.xlu0 %v6091, 80
      %v6103 = vpop.permute.xlu0 %6102
      %6104 = vrot.lane.b32.xlu0 %v6093, 80
      %v6105 = vpop.permute.xlu0 %6104
      %6106 = vrot.lane.b32.xlu0 %v6095, 80
      %v6107 = vpop.permute.xlu0 %6106
      %6108 = vrot.lane.b32.xlu0 %v6097, 80
      %v6109 = vpop.permute.xlu0 %6108
      %6110 = vrot.lane.b32.xlu0 %v6096, 80
      %v6111 = vpop.permute.xlu0 %6110
      %v6125 = vrot.slane %v5876, 4
      %v6126 = vrot.slane %v5881, 4
      %v6127 = vsel %vm5975, %v6125, %v6126
      %v6128 = vrot.slane %v5884, 4
      %v6129 = vsel %vm5975, %v6126, %v6128
      %v6130 = vrot.slane %v5889, 4
      %v6131 = vsel %vm5975, %v6128, %v6130
      %v6132 = vrot.slane %v5892, 4
      %v6133 = vsel %vm5975, %v6130, %v6132
      %v6134 = vrot.slane %v5897, 4
      %v6135 = vsel %vm5975, %v6132, %v6134
      %v6136 = vrot.slane %v5900, 4
      %v6137 = vsel %vm5975, %v6134, %v6136
      %6138 = vrot.lane.b32.xlu0 %v6127, 96
      %v6139 = vpop.permute.xlu0 %6138
      %6140 = vrot.lane.b32.xlu0 %v6129, 96
      %v6141 = vpop.permute.xlu0 %6140
      %6142 = vrot.lane.b32.xlu0 %v6131, 96
      %v6143 = vpop.permute.xlu0 %6142
      %6144 = vrot.lane.b32.xlu0 %v6133, 96
      %v6145 = vpop.permute.xlu0 %6144
      %6146 = vrot.lane.b32.xlu0 %v6135, 96
      %v6147 = vpop.permute.xlu0 %6146
      %6148 = vrot.lane.b32.xlu0 %v6137, 96
      %v6149 = vpop.permute.xlu0 %6148
      %6150 = vrot.lane.b32.xlu0 %v6136, 96
      %v6151 = vpop.permute.xlu0 %6150
      %v6165 = vrot.slane %v5900, 6
      %v6166 = vrot.slane %v5905, 6
      %v6167 = vsel %vm6016, %v6165, %v6166
      %v6168 = vrot.slane %v5908, 6
      %v6169 = vsel %vm6016, %v6166, %v6168
      %v6170 = vrot.slane %v5913, 6
      %v6171 = vsel %vm6016, %v6168, %v6170
      %v6172 = vrot.slane %v5916, 6
      %v6173 = vsel %vm6016, %v6170, %v6172
      %v6174 = vrot.slane %v5921, 6
      %v6175 = vsel %vm6016, %v6172, %v6174
      %v6176 = vrot.slane %v5924, 6
      %v6177 = vsel %vm6016, %v6174, %v6176
      %6178 = vrot.lane.b32.xlu0 %v6167, 112
      %v6179 = vpop.permute.xlu0 %6178
      %6180 = vrot.lane.b32.xlu0 %v6169, 112
      %v6181 = vpop.permute.xlu0 %6180
      %6182 = vrot.lane.b32.xlu0 %v6171, 112
      %v6183 = vpop.permute.xlu0 %6182
      %6184 = vrot.lane.b32.xlu0 %v6173, 112
      %v6185 = vpop.permute.xlu0 %6184
      %6186 = vrot.lane.b32.xlu0 %v6175, 112
      %v6187 = vpop.permute.xlu0 %6186
      %6188 = vrot.lane.b32.xlu0 %v6177, 112
      %v6189 = vpop.permute.xlu0 %6188
      %6190 = vrot.lane.b32.xlu0 %v6176, 112
      %v6191 = vpop.permute.xlu0 %6190
      %v6199 = vsel %vm2386, %v5729, %v5949
      %v6200 = vsel %vm2386, %v5732, %v5951
      %v6201 = vsel %vm2386, %v5737, %v5953
      %v6202 = vsel %vm2386, %v5740, %v5955
      %v6203 = vsel %vm2386, %v5745, %v5957
      %v6204 = vsel %vm2386, %v5748, %v5959
      %v6205 = vsel %vm2386, %v5753, %v5961
      %v6206 = vsel %vm2437, %v6199, %v5990
      %v6207 = vsel %vm2437, %v6200, %v5992
      %v6208 = vsel %vm2437, %v6201, %v5994
      %v6209 = vsel %vm2437, %v6202, %v5996
      %v6210 = vsel %vm2437, %v6203, %v5998
      %v6211 = vsel %vm2437, %v6204, %v6000
      %v6212 = vsel %vm2437, %v6205, %v6002
      %v6213 = vsel %vm2488, %v6206, %v6031
      %v6214 = vsel %vm2488, %v6207, %v6033
      %v6215 = vsel %vm2488, %v6208, %v6035
      %v6216 = vsel %vm2488, %v6209, %v6037
      %v6217 = vsel %vm2488, %v6210, %v6039
      %v6218 = vsel %vm2488, %v6211, %v6041
      %v6219 = vsel %vm2488, %v6212, %v6043
      %v6220 = vsel %vm2539, %v6213, %v6059
      %v6221 = vsel %vm2539, %v6214, %v6061
      %v6222 = vsel %vm2539, %v6215, %v6063
      %v6223 = vsel %vm2539, %v6216, %v6065
      %v6224 = vsel %vm2539, %v6217, %v6067
      %v6225 = vsel %vm2539, %v6218, %v6069
      %v6226 = vsel %vm2539, %v6219, %v6071
      %v6227 = vsel %vm2590, %v6220, %v6099
      %v6228 = vsel %vm2590, %v6221, %v6101
      %v6229 = vsel %vm2590, %v6222, %v6103
      %v6230 = vsel %vm2590, %v6223, %v6105
      %v6231 = vsel %vm2590, %v6224, %v6107
      %v6232 = vsel %vm2590, %v6225, %v6109
      %v6233 = vsel %vm2590, %v6226, %v6111
      %v6234 = vsel %vm2641, %v6227, %v6139
      %v6235 = vsel %vm2641, %v6228, %v6141
      %v6236 = vsel %vm2641, %v6229, %v6143
      %v6237 = vsel %vm2641, %v6230, %v6145
      %v6238 = vsel %vm2641, %v6231, %v6147
      %v6239 = vsel %vm2641, %v6232, %v6149
      %v6240 = vsel %vm2641, %v6233, %v6151
      %v6241 = vsel %vm2692, %v6234, %v6179
      %v6242 = vsel %vm2692, %v6235, %v6181
      %v6243 = vsel %vm2692, %v6236, %v6183
      %v6244 = vsel %vm2692, %v6237, %v6185
      %v6245 = vsel %vm2692, %v6238, %v6187
      %v6246 = vsel %vm2692, %v6239, %v6189
      %v6247 = vsel %vm2692, %v6240, %v6191
      %v6248 = vld [vmem:[%s2] sm:$0x1]
      %v6250 = vlaneseq
      %v6251 = vshrl.u32 %v6250, 7
      %v6252 = vsub.s32 0, %v6251
      %v6253 = vrot.slane %v6248, %v6252
      %v6255 = vadd.f32 %v6241, %v6253
      %v6256 = vadd.f32 %v6242, %v6253
      %v6257 = vadd.f32 %v6243, %v6253
      %v6258 = vadd.f32 %v6244, %v6253
      %v6259 = vadd.f32 %v6245, %v6253
      %v6260 = vadd.f32 %v6246, %v6253
      %v6261 = vadd.f32 %v6247, %v6253
      %v6262 = vld [vmem:[%s310] sm:$0xf]
      %v6263 = vld [vmem:[%s310 + $0x4] sm:$0xf]
      %v6264 = vld [vmem:[%s310 + $0x8] sm:$0xf]
      %v6265 = vld [vmem:[%s310 + $0xc] sm:$0xf]
      %v6266 = vld [vmem:[%s310 + $0x10] sm:$0xf]
      %v6267 = vld [vmem:[%s310 + $0x14] sm:$0xf]
      %v6268 = vld [vmem:[%s310 + $0x18] sm:$0x1]
      %v6269 = vunpack.c.l.bf16 %v6262
      %v6270 = vunpack.c.l.bf16 %v6263
      %v6271 = vunpack.c.l.bf16 %v6264
      %v6272 = vunpack.c.l.bf16 %v6265
      %v6273 = vunpack.c.l.bf16 %v6266
      %v6274 = vunpack.c.l.bf16 %v6267
      %v6275 = vunpack.c.l.bf16 %v6268
      %v6276 = vmul.f32 %v6255, %v6269
      %v6277 = vmul.f32 %v6256, %v6270
      %v6278 = vmul.f32 %v6257, %v6271
      %v6279 = vmul.f32 %v6258, %v6272
      %v6280 = vmul.f32 %v6259, %v6273
      %v6281 = vmul.f32 %v6260, %v6274
      %v6282 = vmul.f32 %v6261, %v6275
      %v6283 = vld [vmem:[%s319] sm:$0xf]
      %v6284 = vld [vmem:[%s319 + $0x4] sm:$0xf]
      %v6285 = vld [vmem:[%s319 + $0x8] sm:$0xf]
      %v6286 = vld [vmem:[%s319 + $0xc] sm:$0xf]
      %v6287 = vld [vmem:[%s319 + $0x10] sm:$0xf]
      %v6288 = vld [vmem:[%s319 + $0x14] sm:$0xf]
      %v6289 = vld [vmem:[%s319 + $0x18] sm:$0x1]
      %v6290 = vunpack.c.l.bf16 %v6283
      %v6291 = vunpack.c.l.bf16 %v6284
      %v6292 = vunpack.c.l.bf16 %v6285
      %v6293 = vunpack.c.l.bf16 %v6286
      %v6294 = vunpack.c.l.bf16 %v6287
      %v6295 = vunpack.c.l.bf16 %v6288
      %v6296 = vunpack.c.l.bf16 %v6289
      %v6297 = vadd.f32 %v6276, %v6290
      %v6298 = vadd.f32 %v6277, %v6291
      %v6299 = vadd.f32 %v6278, %v6292
      %v6300 = vadd.f32 %v6279, %v6293
      %v6301 = vadd.f32 %v6280, %v6294
      %v6302 = vadd.f32 %v6281, %v6295
      %v6303 = vadd.f32 %v6282, %v6296
      %vm6304 = vcmp.gt.f32.partialorder %v6297, 0.0
      %vm6305 = vcmp.gt.f32.partialorder %v6298, 0.0
      %vm6306 = vcmp.gt.f32.partialorder %v6299, 0.0
      %vm6307 = vcmp.gt.f32.partialorder %v6300, 0.0
      %vm6308 = vcmp.gt.f32.partialorder %v6301, 0.0
      %vm6309 = vcmp.gt.f32.partialorder %v6302, 0.0
      %vm6310 = vcmp.gt.f32.partialorder %v6303, 0.0
      %v6311 = vmul.f32 %v6297, 0.333
      %v6312 = vmul.f32 %v6298, 0.333
      %v6313 = vmul.f32 %v6299, 0.333
      %v6314 = vmul.f32 %v6300, 0.333
      %v6315 = vmul.f32 %v6301, 0.333
      %v6316 = vmul.f32 %v6302, 0.333
      %v6317 = vmul.f32 %v6303, 0.333
      %v6318 = vsel %vm6304, %v6297, %v6311
      %v6319 = vsel %vm6305, %v6298, %v6312
      %v6320 = vsel %vm6306, %v6299, %v6313
      %v6321 = vsel %vm6307, %v6300, %v6314
      %v6322 = vsel %vm6308, %v6301, %v6315
      %v6323 = vsel %vm6309, %v6302, %v6316
      %v6324 = vsel %vm6310, %v6303, %v6317
      %v6325 = vpack.c.bf16 %v6319, %v6318
      %v6326 = vpack.c.bf16 %v6321, %v6320
      %v6327 = vpack.c.bf16 %v6323, %v6322
      %v6328 = vpack.c.bf16 %v6324, %v6324
      %v6333 = vunpack.c.l.b16 %v6325
      %v6334 = vunpack.c.h.b16 %v6325
      %v6335 = vunpack.c.l.b16 %v6326
      %v6336 = vunpack.c.h.b16 %v6326
      %v6337 = vunpack.c.l.b16 %v6327
      %v6338 = vunpack.c.h.b16 %v6327
      %v6339 = vunpack.c.l.b16 %v6328
      %v6340 = vpack.c.b16 %v6333, %v6333
      %v6341 = vpack.c.b16 %v6334, %v6334
      %v6342 = vpack.c.b16 %v6335, %v6335
      %v6343 = vpack.c.b16 %v6336, %v6336
      %v6344 = vpack.c.b16 %v6337, %v6337
      %v6345 = vpack.c.b16 %v6338, %v6338
      %v6346 = vpack.c.b16 %v6339, %v6339
      %6354 = vst [vmem:[%s328] sm:$0xf] %v6340
      %6355 = vst [vmem:[%s328 + $0x4] sm:$0xf] %v6341
      %6356 = vst [vmem:[%s328 + $0x8] sm:$0xf] %v6342
      %6357 = vst [vmem:[%s328 + $0xc] sm:$0xf] %v6343
      %6358 = vst [vmem:[%s328 + $0x10] sm:$0xf] %v6344
      %6359 = vst [vmem:[%s328 + $0x14] sm:$0xf] %v6345
      %6360 = vst [vmem:[%s328 + $0x18] sm:$0x1] %v6346
      %p6361 = scmp.lt.s32.totalorder %s20, 1
      %s6362 = scalar_select %p6361, %s20, 1
      %p6363 = scmp.lt.s32.totalorder %s21, 1
      %s6364 = scalar_select %p6363, %s21, 1
      %s6365 = smul.addr %s6364, 7
      %s6366 = smul.addr %s6362, 14
      %s6367 = sadd.s32 %s6365, %s6366
      %s6368 = smul.addr %s6367, 4
      %s6369 = scalar_lea.vmem %s5, %s6368
      // Predicated region
      $region41: #{sparse_block_series.5} parent=39 // pred_check
        %p6370 = pneg %p174
      $region42: #{sparse_block_series.5} parent=39 // pred_check_branch
        %6372 = sbr.rel (%p6370) target = $region44
      $region43: #{sparse_block_series.5} parent=39 // pred_region
        _
      $region44: #{sparse_block_series.5} parent=39 // pred_fallthru
        _
    $region40: #{sparse_block_series.5} parent=5 // pred_fallthru
      _
    %p6373 = scmp.le.s32.totalorder 2, %s11
    // Predicated region
    $region45: #{sparse_block_series.5} parent=5 // pred_check
      %p6374 = pneg %p6373
    $region46: #{sparse_block_series.5} parent=5 // pred_check_branch
      %6376 = sbr.rel (%p6374) target = $region48
    $region47: #{sparse_block_series.5} parent=5 // pred_region
      %s6377 = ssub.s32 %s11, 2
      // Predicated region
      $region49: #{sparse_block_series.5} parent=47 // pred_check
        %p6378 = pneg %p180
      $region50: #{sparse_block_series.5} parent=47 // pred_check_branch
        %6380 = sbr.rel (%p6378) target = $region52
      $region51: #{sparse_block_series.5} parent=47 // pred_region
        %p6381 = scmp.lt.s32.totalorder %s22, 1
        %s6382 = scalar_select %p6381, %s22, 1
        %p6383 = scmp.lt.s32.totalorder %s23, 1
        %s6384 = scalar_select %p6383, %s23, 1
        %s6385 = smul.addr %s6384, 7
        %s6386 = smul.addr %s6382, 14
        %s6387 = sadd.s32 %s6385, %s6386
        %s6388 = smul.addr %s6387, 4
        %s6389 = scalar_lea.vmem %s5, %s6388
      $region52: #{sparse_block_series.5} parent=47 // pred_fallthru
        _
    $region48: #{sparse_block_series.5} parent=5 // pred_fallthru
      _
  $region6: #{sparse_block_series.5} parent=0 // loop_footer
    %s15 = sadd.s32 1, %s11
  $region7: #{sparse_block_series.5} parent=0 // loop_footer_branch
    %10 = sbr.rel target = $region3
  $region8: #{sparse_block_series.5} parent=0 // loop_exit
    _

</llo_original>
